<compile_context>
chip_gen: v7x
topology: tpu7x:2x2x1
jax: 0.10.0
libtpu: 0.0.40
codegen_flags: <defaults>
</compile_context>

<pallas_src>
import functools

import jax
import jax.numpy as jnp
from jax.experimental import pallas as pl
from jax.experimental.pallas import tpu as pltpu

EPS = 1e-5          # nn.BatchNorm2d default eps
LANE = 128          # TPU lane width; channel padding granularity


# ----------------------------------------------------------------------------
# Fused kernel: stage0 + block1..block5 + GAP + FC, one image per grid step.
# ----------------------------------------------------------------------------
def _repvgg_fused_kernel(x0_ref,
                         w0_ref, b0_ref, w1_ref, b1_ref, w2_ref, b2_ref,
                         w3_ref, b3_ref, w4_ref, b4_ref, w5_ref, b5_ref,
                         wfc_ref, bfc_ref,
                         o_ref,
                         act_a, act_b, act_c, act_d, *, h, w):
    f32 = jnp.float32
    bf16 = jnp.bfloat16

    # Zero the padded activation scratches every grid step.  Only the 1-pixel
    # conv border actually needs zeros, but a full zero is ~60 vreg stores
    # (negligible) and stays correct when the "parallel" batch axis is split
    # across TensorCores (a step-0-only init would miss the second core's
    # private scratch copy).
    act_a[...] = jnp.zeros_like(act_a)
    act_b[...] = jnp.zeros_like(act_b)
    act_c[...] = jnp.zeros_like(act_c)
    act_d[...] = jnp.zeros_like(act_d)

    def conv_s1(src, w_ref, b_ref, hh, ww):
        """Stride-1 3x3 conv: 9 accumulating tap matmuls over a padded scratch."""
        m = hh * ww
        cout = w_ref.shape[-1]
        acc = jnp.zeros((m, cout), f32)
        for t in range(9):
            kh, kw = divmod(t, 3)
            xt = src[:, kh:kh + hh, kw:kw + ww, :].reshape(m, LANE).astype(bf16)
            acc = acc + jnp.dot(xt, w_ref[t * LANE:(t + 1) * LANE, :],
                                preferred_element_type=f32)
        return jnp.maximum(acc + b_ref[...], 0.0)

    def conv_s2(src, w_ref, b_ref, ho, wo):
        """Stride-2 3x3 conv: stride-2 tap reads (pl.ds) from a padded scratch."""
        m = ho * wo
        cout = w_ref.shape[-1]
        acc = jnp.zeros((m, cout), f32)
        for t in range(9):
            kh, kw = divmod(t, 3)
            xt = src[:, pl.ds(kh, ho, 2), pl.ds(kw, wo, 2), :]
            xt = xt.reshape(m, LANE).astype(bf16)
            acc = acc + jnp.dot(xt, w_ref[t * LANE:(t + 1) * LANE, :],
                                preferred_element_type=f32)
        return jnp.maximum(acc + b_ref[...], 0.0)

    # --- stage0: glue packed 9 taps x 3 real channels into one K<=128 operand,
    # so this layer is a single MXU push (no zero-heavy per-tap matmuls).
    x0 = x0_ref[...].reshape(h * w, LANE)                         # bf16
    y0 = jnp.maximum(
        jnp.dot(x0, w0_ref[...], preferred_element_type=f32) + b0_ref[...], 0.0)
    act_a[:, 1:1 + h, 1:1 + w, :] = y0.reshape(1, h, w, LANE)

    # --- block1: stride 1 (1x1 + identity branches folded into the 3x3 kernel)
    y1 = conv_s1(act_a, w1_ref, b1_ref, h, w)
    act_b[:, 1:1 + h, 1:1 + w, :] = y1.reshape(1, h, w, LANE)

    # --- block2: stride 2, HxW -> H/2 x W/2
    h2, w2 = h // 2, w // 2
    y2 = conv_s2(act_b, w2_ref, b2_ref, h2, w2)
    act_c[:, 1:1 + h2, 1:1 + w2, :] = y2.reshape(1, h2, w2, LANE)

    # --- block3: stride 2 -> H/4 x W/4
    h3, w3 = h // 4, w // 4
    y3 = conv_s2(act_c, w3_ref, b3_ref, h3, w3)
    act_d[:, 1:1 + h3, 1:1 + w3, :] = y3.reshape(1, h3, w3, LANE)

    # --- block4: stride 2 -> H/8 x W/8; all output pixels together per tap.
    h4, w4 = h // 8, w // 8
    y4 = conv_s2(act_d, w4_ref, b4_ref, h4, w4).astype(bf16)      # (4, 256)

    # --- block5: stride 2, 2x2 -> 1x1; only the 4 taps hitting real pixels.
    # TODO(synk): blocks 1-3 still contract zero-padded K (Cin 24/48 padded to
    # 128 per tap); pack real channels / pair taps along K if MXU-bound.
    cin5 = w5_ref.shape[0] // (h4 * w4)
    cout5 = w5_ref.shape[-1]
    acc5 = jnp.zeros((1, cout5), f32)
    for p in range(h4 * w4):
        acc5 = acc5 + jnp.dot(y4[p:p + 1, :],
                              w5_ref[p * cin5:(p + 1) * cin5, :],
                              preferred_element_type=f32)
    y5 = jnp.maximum(acc5 + b5_ref[...], 0.0)

    # --- global average pool of a 1x1 map is the identity; fused FC epilogue.
    logits = jnp.dot(y5.astype(bf16), wfc_ref[...],
                     preferred_element_type=f32) + bfc_ref[...]   # (1, 128)
    # Output block is (1, 8, 128) so its last two dims satisfy (8,128) tiling;
    # replicate the logits row across the 8 sublanes, glue reads row 0.
    o_ref[...] = jnp.broadcast_to(logits.reshape(1, 1, LANE), (1, 8, LANE))


def _repvgg_call(patches, pk, h, w):
    n = patches.shape[0]
    kern = functools.partial(_repvgg_fused_kernel, h=h, w=w)
    weights = (pk["w0"], pk["b0"], pk["w1"], pk["b1"], pk["w2"], pk["b2"],
               pk["w3"], pk["b3"], pk["w4"], pk["b4"], pk["w5"], pk["b5"],
               pk["wfc"], pk["bfc"])

    def wspec(a):
        # Constant block index -> weights DMA'd once, stay VMEM-resident.
        return pl.BlockSpec(a.shape, lambda i: (0, 0))

    out = pl.pallas_call(
        kern,
        out_shape=jax.ShapeDtypeStruct((n, 8, LANE), jnp.float32),
        grid=(n,),
        in_specs=[pl.BlockSpec((1, h, w, LANE), lambda i: (i, 0, 0, 0))] +
                 [wspec(a) for a in weights],
        out_specs=pl.BlockSpec((1, 8, LANE), lambda i: (i, 0, 0)),
        scratch_shapes=[
            pltpu.VMEM((1, h + 2, w + 2, LANE), jnp.float32),            # stage0 out
            pltpu.VMEM((1, h + 2, w + 2, LANE), jnp.float32),            # block1 out
            pltpu.VMEM((1, h // 2 + 2, w // 2 + 2, LANE), jnp.float32),  # block2 out
            pltpu.VMEM((1, h // 4 + 2, w // 4 + 2, LANE), jnp.float32),  # block3 out
        ],
        compiler_params=pltpu.CompilerParams(
            dimension_semantics=("parallel",)),
    )(patches, *weights)
    return out[:, 0, :]


# ----------------------------------------------------------------------------
# Glue: stage0 im2col (tiny, one-off) — packs 9 taps x 3 channels into K<=128.
# ----------------------------------------------------------------------------
def _stage0_patches(x_nhwc):
    n, h, w, c = x_nhwc.shape
    assert 9 * c <= LANE
    xp = jnp.pad(x_nhwc, ((0, 0), (1, 1), (1, 1), (0, 0)))
    taps = [xp[:, kh:kh + h, kw:kw + w, :] for kh in range(3) for kw in range(3)]
    patches = jnp.concatenate(taps, axis=-1)                      # (n, h, w, 9c)
    patches = jnp.pad(patches, ((0, 0), (0, 0), (0, 0), (0, LANE - 9 * c)))
    return patches.astype(jnp.bfloat16)


# ----------------------------------------------------------------------------
# Parameter folding / packing (pure JAX, done once)
# ----------------------------------------------------------------------------
def _fold_bn(bn):
    std = jnp.sqrt(bn["var"] + EPS)
    scale = bn["gamma"] / std
    bias = bn["beta"] - bn["gamma"] * bn["mean"] / std
    return scale, bias


def _round_up(x, m):
    return (x + m - 1) // m * m


def _pad_axis(x, axis, size):
    pads = [(0, 0)] * x.ndim
    pads[axis] = (0, size - x.shape[axis])
    return jnp.pad(x, pads)


def _block_kernel_hwio(blk):
    """RepVGGBlock branch fusion: 3x3 + zero-padded 1x1 + identity (HWIO)."""
    w = blk["w3"] + jnp.pad(blk["w1"], ((1, 1), (1, 1), (0, 0), (0, 0)))
    if blk["use_identity"]:
        ci, co = w.shape[2], w.shape[3]
        w = w + jnp.zeros_like(w).at[1, 1].set(jnp.eye(ci, co, dtype=w.dtype))
    return w


def _conv_to_matmul(w_hwio, scale, bias):
    """Fold post-sum BN scale into the kernel, lane-pad channels, pack as a
    (9*Cin_pad, Cout_pad) bf16 matmul operand + (1, Cout_pad) f32 bias."""
    w = w_hwio * scale[None, None, None, :]
    cin, cout = w.shape[2], w.shape[3]
    cin_p, cout_p = _round_up(cin, LANE), _round_up(cout, LANE)
    w = _pad_axis(_pad_axis(w, 2, cin_p), 3, cout_p)
    wmat = w.reshape(9 * cin_p, cout_p).astype(jnp.bfloat16)
    b = _pad_axis(bias, 0, cout_p).reshape(1, cout_p).astype(jnp.float32)
    return wmat, b


def pack_params(params):
    blocks = params["blocks"]
    assert len(blocks) == 5 and [b["stride"] for b in blocks] == [1, 2, 2, 2, 2]
    packed = {}

    # stage0: pack the 9*3 = 27 real K rows of the im2col'd conv into a single
    # (128, 128) operand (instead of 9 taps each padded Cin 3 -> 128).
    s, b = _fold_bn(params["stage0"]["bn"])
    w0 = params["stage0"]["w"] * s[None, None, None, :]            # (3,3,3,C0)
    k0 = w0.shape[0] * w0.shape[1] * w0.shape[2]
    w0 = w0.reshape(k0, w0.shape[3])
    packed["w0"] = _pad_axis(_pad_axis(w0, 0, LANE), 1, LANE).astype(jnp.bfloat16)
    packed["b0"] = _pad_axis(b, 0, LANE).reshape(1, LANE).astype(jnp.float32)

    for idx in range(4):                                            # blocks 1..4
        s, b = _fold_bn(blocks[idx]["bn"])
        wmat, bias = _conv_to_matmul(_block_kernel_hwio(blocks[idx]), s, b)
        packed[f"w{idx + 1}"] = wmat
        packed[f"b{idx + 1}"] = bias

    # block5 (stride 2, 2x2 -> 1x1): only taps (1,1),(1,2),(2,1),(2,2) touch
    # real pixels; keep those 4, ordered by the input pixel they read.
    s, b = _fold_bn(blocks[4]["bn"])
    w5 = _block_kernel_hwio(blocks[4]) * s[None, None, None, :]
    c5i, c5o = w5.shape[2], w5.shape[3]
    packed["w5"] = w5[1:3, 1:3].reshape(4 * c5i, c5o).astype(jnp.bfloat16)
    packed["b5"] = b.reshape(1, c5o).astype(jnp.float32)

    # fc: pad the class dim to a full lane.
    packed["wfc"] = _pad_axis(params["fc_w"], 1, LANE).astype(jnp.bfloat16)
    packed["bfc"] = _pad_axis(params["fc_b"], 0, LANE).reshape(1, LANE).astype(jnp.float32)
    return packed


# ----------------------------------------------------------------------------
# Forward pass
# ----------------------------------------------------------------------------
@functools.partial(jax.jit, static_argnames=("num_classes",))
def repvgg_forward(packed, x_nhwc, num_classes=100):
    n, h, w, _ = x_nhwc.shape
    # TODO(synk): the fused kernel hard-codes the 16x16-input /
    # one-block-per-stage geometry used here; generalize for other resolutions
    # / num_blocks by tiling the early stages.
    assert h == 16 and w == 16 and num_classes <= LANE
    patches = _stage0_patches(x_nhwc.astype(jnp.float32))
    logits = _repvgg_call(patches, packed, h, w)
    return logits[:, :num_classes]


# ----------------------------------------------------------------------------
# Deterministic parameter construction (synthetic, no checkpoint)
# ----------------------------------------------------------------------------
def _bn_params(key, c):
    k1, k2, k3, k4 = jax.random.split(key, 4)
    return dict(
        gamma=1.0 + 0.1 * jax.random.normal(k1, (c,), jnp.float32),
        beta=0.1 * jax.random.normal(k2, (c,), jnp.float32),
        mean=0.1 * jax.random.normal(k3, (c,), jnp.float32),
        var=0.5 + 0.5 * jnp.abs(jax.random.normal(k4, (c,), jnp.float32)),
    )


def init_repvgg_params(key, num_blocks, num_classes=100,
                       width_multiplier=(0.75, 0.75, 0.75, 1)):
    keys = iter(jax.random.split(key, 256))
    in_ch = int(32 * width_multiplier[0])
    stage0 = dict(
        w=0.2 * jax.random.normal(next(keys), (3, 3, 3, in_ch), jnp.float32),
        bn=_bn_params(next(keys), in_ch),
    )
    stage_defs = [
        (int(32 * width_multiplier[0]), num_blocks[0], 1),
        (int(64 * width_multiplier[1]), num_blocks[1], 2),
        (int(128 * width_multiplier[2]), num_blocks[2], 2),
        (int(256 * width_multiplier[3]), num_blocks[3], 2),
        (int(256 * width_multiplier[3]), num_blocks[4], 2),
    ]
    blocks = []
    for out_ch, nb, first_stride in stage_defs:
        strides = [first_stride] + [1] * (nb - 1)
        for s in strides:
            blocks.append(dict(
                w3=0.1 * jax.random.normal(next(keys), (3, 3, in_ch, out_ch), jnp.float32),
                w1=0.1 * jax.random.normal(next(keys), (1, 1, in_ch, out_ch), jnp.float32),
                bn=_bn_params(next(keys), out_ch),
                stride=s,
                use_identity=(s == 1 and in_ch == out_ch),
            ))
            in_ch = out_ch
    fc_w = 0.05 * jax.random.normal(next(keys), (in_ch, num_classes), jnp.float32)
    fc_b = 0.01 * jax.random.normal(next(keys), (num_classes,), jnp.float32)
    # TODO(synk): grouped conv (groups > 1) path not exercised -- RepVGG() always
    # builds groups=1 blocks.
    return dict(stage0=stage0, blocks=blocks, fc_w=fc_w, fc_b=fc_b)


# ----------------------------------------------------------------------------
if __name__ == "__main__":
    key = jax.random.PRNGKey(0)
    kp, kx = jax.random.split(key)

    # RepVGG(num_blocks=[1,1,1,1,1], num_classes=100): channels 24,24,48,96,256,256
    params = init_repvgg_params(kp, num_blocks=[1, 1, 1, 1, 1], num_classes=100)
    packed = pack_params(params)

    # PyTorch input is NCHW (batch=2, C=3, H=16, W=16); transpose to NHWC.
    x_nchw = jax.random.normal(kx, (2, 3, 16, 16), jnp.float32)
    x_nhwc = jnp.transpose(x_nchw, (0, 2, 3, 1))

    logits = repvgg_forward(packed, x_nhwc, num_classes=100)
    logits = jax.block_until_ready(logits)
    assert logits.shape == (2, 100), logits.shape
    assert bool(jnp.all(jnp.isfinite(logits)))
    print("KERNEL_OK")
</pallas_src>

<mosaic_0001>
module attributes {stable_mosaic.version = 11 : i64} {
  func.func @_repvgg_fused_kernel(%arg0: i32, %arg1: memref<1x16x16x128xbf16, #tpu.memory_space<vmem>>, %arg2: memref<128x128xbf16, #tpu.memory_space<vmem>>, %arg3: memref<1x128xf32, #tpu.memory_space<vmem>>, %arg4: memref<1152x128xbf16, #tpu.memory_space<vmem>>, %arg5: memref<1x128xf32, #tpu.memory_space<vmem>>, %arg6: memref<1152x128xbf16, #tpu.memory_space<vmem>>, %arg7: memref<1x128xf32, #tpu.memory_space<vmem>>, %arg8: memref<1152x128xbf16, #tpu.memory_space<vmem>>, %arg9: memref<1x128xf32, #tpu.memory_space<vmem>>, %arg10: memref<1152x256xbf16, #tpu.memory_space<vmem>>, %arg11: memref<1x256xf32, #tpu.memory_space<vmem>>, %arg12: memref<1024x256xbf16, #tpu.memory_space<vmem>>, %arg13: memref<1x256xf32, #tpu.memory_space<vmem>>, %arg14: memref<256x128xbf16, #tpu.memory_space<vmem>>, %arg15: memref<1x128xf32, #tpu.memory_space<vmem>>, %arg16: memref<1x8x128xf32, #tpu.memory_space<vmem>>, %arg17: memref<1x18x18x128xf32, #tpu.memory_space<vmem>>, %arg18: memref<1x18x18x128xf32, #tpu.memory_space<vmem>>, %arg19: memref<1x10x10x128xf32, #tpu.memory_space<vmem>>, %arg20: memref<1x6x6x128xf32, #tpu.memory_space<vmem>>) attributes {dimension_semantics = [#tpu.dimension_semantics<parallel>], iteration_bounds = array<i64: 2>, scalar_prefetch = 0 : i64, scratch_operands = 4 : i64, tpu.core_type = #tpu.core_type<tc>, window_params = [{transform_indices = @transform_0, window_bounds = array<i64: 1, 16, 16, 128>}, {pipeline_mode = #tpu.pipeline_mode<synchronous>, transform_indices = @transform_1, window_bounds = array<i64: 128, 128>}, {pipeline_mode = #tpu.pipeline_mode<synchronous>, transform_indices = @transform_2, window_bounds = array<i64: 1, 128>}, {pipeline_mode = #tpu.pipeline_mode<synchronous>, transform_indices = @transform_3, window_bounds = array<i64: 1152, 128>}, {pipeline_mode = #tpu.pipeline_mode<synchronous>, transform_indices = @transform_4, window_bounds = array<i64: 1, 128>}, {pipeline_mode = #tpu.pipeline_mode<synchronous>, transform_indices = @transform_5, window_bounds = array<i64: 1152, 128>}, {pipeline_mode = #tpu.pipeline_mode<synchronous>, transform_indices = @transform_6, window_bounds = array<i64: 1, 128>}, {pipeline_mode = #tpu.pipeline_mode<synchronous>, transform_indices = @transform_7, window_bounds = array<i64: 1152, 128>}, {pipeline_mode = #tpu.pipeline_mode<synchronous>, transform_indices = @transform_8, window_bounds = array<i64: 1, 128>}, {pipeline_mode = #tpu.pipeline_mode<synchronous>, transform_indices = @transform_9, window_bounds = array<i64: 1152, 256>}, {pipeline_mode = #tpu.pipeline_mode<synchronous>, transform_indices = @transform_10, window_bounds = array<i64: 1, 256>}, {pipeline_mode = #tpu.pipeline_mode<synchronous>, transform_indices = @transform_11, window_bounds = array<i64: 1024, 256>}, {pipeline_mode = #tpu.pipeline_mode<synchronous>, transform_indices = @transform_12, window_bounds = array<i64: 1, 256>}, {pipeline_mode = #tpu.pipeline_mode<synchronous>, transform_indices = @transform_13, window_bounds = array<i64: 256, 128>}, {pipeline_mode = #tpu.pipeline_mode<synchronous>, transform_indices = @transform_14, window_bounds = array<i64: 1, 128>}, {transform_indices = @transform_15, window_bounds = array<i64: 1, 8, 128>}]} {
    %cst = arith.constant 0.000000e+00 : f32
    %0 = vector.broadcast %cst : f32 to vector<1x18x18x128xf32>
    %c0 = arith.constant 0 : index
    %c0_0 = arith.constant 0 : index
    %c0_1 = arith.constant 0 : index
    %c0_2 = arith.constant 0 : index
    %1 = vector.load %arg17[%c0, %c0_0, %c0_1, %c0_2] : memref<1x18x18x128xf32, #tpu.memory_space<vmem>>, vector<1x18x18x128xf32>
    tpu.vector_store %arg17[%c0, %c0_0, %c0_1, %c0_2], %0 {strides = array<i32>} : memref<1x18x18x128xf32, #tpu.memory_space<vmem>>, vector<1x18x18x128xf32>,
    %cst_3 = arith.constant 0.000000e+00 : f32
    %2 = vector.broadcast %cst_3 : f32 to vector<1x18x18x128xf32>
    %c0_4 = arith.constant 0 : index
    %c0_5 = arith.constant 0 : index
    %c0_6 = arith.constant 0 : index
    %c0_7 = arith.constant 0 : index
    %3 = vector.load %arg18[%c0_4, %c0_5, %c0_6, %c0_7] : memref<1x18x18x128xf32, #tpu.memory_space<vmem>>, vector<1x18x18x128xf32>
    tpu.vector_store %arg18[%c0_4, %c0_5, %c0_6, %c0_7], %2 {strides = array<i32>} : memref<1x18x18x128xf32, #tpu.memory_space<vmem>>, vector<1x18x18x128xf32>,
    %cst_8 = arith.constant 0.000000e+00 : f32
    %4 = vector.broadcast %cst_8 : f32 to vector<1x10x10x128xf32>
    %c0_9 = arith.constant 0 : index
    %c0_10 = arith.constant 0 : index
    %c0_11 = arith.constant 0 : index
    %c0_12 = arith.constant 0 : index
    %5 = vector.load %arg19[%c0_9, %c0_10, %c0_11, %c0_12] : memref<1x10x10x128xf32, #tpu.memory_space<vmem>>, vector<1x10x10x128xf32>
    tpu.vector_store %arg19[%c0_9, %c0_10, %c0_11, %c0_12], %4 {strides = array<i32>} : memref<1x10x10x128xf32, #tpu.memory_space<vmem>>, vector<1x10x10x128xf32>,
    %cst_13 = arith.constant 0.000000e+00 : f32
    %6 = vector.broadcast %cst_13 : f32 to vector<1x6x6x128xf32>
    %c0_14 = arith.constant 0 : index
    %c0_15 = arith.constant 0 : index
    %c0_16 = arith.constant 0 : index
    %c0_17 = arith.constant 0 : index
    %7 = vector.load %arg20[%c0_14, %c0_15, %c0_16, %c0_17] : memref<1x6x6x128xf32, #tpu.memory_space<vmem>>, vector<1x6x6x128xf32>
    tpu.vector_store %arg20[%c0_14, %c0_15, %c0_16, %c0_17], %6 {strides = array<i32>} : memref<1x6x6x128xf32, #tpu.memory_space<vmem>>, vector<1x6x6x128xf32>,
    %c0_18 = arith.constant 0 : index
    %c0_19 = arith.constant 0 : index
    %c0_20 = arith.constant 0 : index
    %c0_21 = arith.constant 0 : index
    %8 = vector.load %arg1[%c0_18, %c0_19, %c0_20, %c0_21] : memref<1x16x16x128xbf16, #tpu.memory_space<vmem>>, vector<1x16x16x128xbf16>
    %9 = vector.shape_cast %8 : vector<1x16x16x128xbf16> to vector<256x128xbf16>
    %c0_22 = arith.constant 0 : index
    %c0_23 = arith.constant 0 : index
    %10 = vector.load %arg2[%c0_22, %c0_23] : memref<128x128xbf16, #tpu.memory_space<vmem>>, vector<128x128xbf16>
    %cst_24 = arith.constant dense<0.000000e+00> : vector<256x128xf32>
    %11 = tpu.matmul %9, %10, %cst_24 {dimension_numbers = #tpu.dot_dimension_numbers<[1], [0], [0], [1], [0, 0, 1, 1], [], []>} : vector<256x128xbf16>, vector<128x128xbf16>, vector<256x128xf32> -> vector<256x128xf32>
    %c0_25 = arith.constant 0 : index
    %c0_26 = arith.constant 0 : index
    %12 = vector.load %arg3[%c0_25, %c0_26] : memref<1x128xf32, #tpu.memory_space<vmem>>, vector<1x128xf32>
    %13 = vector.broadcast %12 : vector<1x128xf32> to vector<256x128xf32>
    %14 = arith.addf %11, %13 : vector<256x128xf32>
    %cst_27 = arith.constant 0.000000e+00 : f32
    %15 = vector.broadcast %cst_27 : f32 to vector<256x128xf32>
    %16 = arith.maximumf %14, %15 : vector<256x128xf32>
    %17 = vector.shape_cast %16 : vector<256x128xf32> to vector<1x16x16x128xf32>
    %c0_28 = arith.constant 0 : index
    %c1 = arith.constant 1 : index
    %c1_29 = arith.constant 1 : index
    %c0_30 = arith.constant 0 : index
    %18 = vector.load %arg17[%c0_28, %c1, %c1_29, %c0_30] : memref<1x18x18x128xf32, #tpu.memory_space<vmem>>, vector<1x16x16x128xf32>
    tpu.vector_store %arg17[%c0_28, %c1, %c1_29, %c0_30], %17 {strides = array<i32>} : memref<1x18x18x128xf32, #tpu.memory_space<vmem>>, vector<1x16x16x128xf32>,
    %cst_31 = arith.constant 0.000000e+00 : f32
    %19 = vector.broadcast %cst_31 : f32 to vector<256x128xf32>
    %c0_32 = arith.constant 0 : index
    %c0_33 = arith.constant 0 : index
    %c0_34 = arith.constant 0 : index
    %c0_35 = arith.constant 0 : index
    %20 = vector.load %arg17[%c0_32, %c0_33, %c0_34, %c0_35] : memref<1x18x18x128xf32, #tpu.memory_space<vmem>>, vector<1x16x16x128xf32>
    %21 = vector.shape_cast %20 : vector<1x16x16x128xf32> to vector<256x128xf32>
    %22 = arith.truncf %21 : vector<256x128xf32> to vector<256x128xbf16>
    %c0_36 = arith.constant 0 : index
    %c0_37 = arith.constant 0 : index
    %23 = vector.load %arg4[%c0_36, %c0_37] : memref<1152x128xbf16, #tpu.memory_space<vmem>>, vector<128x128xbf16>
    %cst_38 = arith.constant dense<0.000000e+00> : vector<256x128xf32>
    %24 = tpu.matmul %22, %23, %cst_38 {dimension_numbers = #tpu.dot_dimension_numbers<[1], [0], [0], [1], [0, 0, 1, 1], [], []>} : vector<256x128xbf16>, vector<128x128xbf16>, vector<256x128xf32> -> vector<256x128xf32>
    %25 = arith.addf %19, %24 : vector<256x128xf32>
    %c0_39 = arith.constant 0 : index
    %c0_40 = arith.constant 0 : index
    %c1_41 = arith.constant 1 : index
    %c0_42 = arith.constant 0 : index
    %26 = vector.load %arg17[%c0_39, %c0_40, %c1_41, %c0_42] : memref<1x18x18x128xf32, #tpu.memory_space<vmem>>, vector<1x16x16x128xf32>
    %27 = vector.shape_cast %26 : vector<1x16x16x128xf32> to vector<256x128xf32>
    %28 = arith.truncf %27 : vector<256x128xf32> to vector<256x128xbf16>
    %c128 = arith.constant 128 : index
    %c0_43 = arith.constant 0 : index
    %29 = vector.load %arg4[%c128, %c0_43] : memref<1152x128xbf16, #tpu.memory_space<vmem>>, vector<128x128xbf16>
    %cst_44 = arith.constant dense<0.000000e+00> : vector<256x128xf32>
    %30 = tpu.matmul %28, %29, %cst_44 {dimension_numbers = #tpu.dot_dimension_numbers<[1], [0], [0], [1], [0, 0, 1, 1], [], []>} : vector<256x128xbf16>, vector<128x128xbf16>, vector<256x128xf32> -> vector<256x128xf32>
    %31 = arith.addf %25, %30 : vector<256x128xf32>
    %c0_45 = arith.constant 0 : index
    %c0_46 = arith.constant 0 : index
    %c2 = arith.constant 2 : index
    %c0_47 = arith.constant 0 : index
    %32 = vector.load %arg17[%c0_45, %c0_46, %c2, %c0_47] : memref<1x18x18x128xf32, #tpu.memory_space<vmem>>, vector<1x16x16x128xf32>
    %33 = vector.shape_cast %32 : vector<1x16x16x128xf32> to vector<256x128xf32>
    %34 = arith.truncf %33 : vector<256x128xf32> to vector<256x128xbf16>
    %c256 = arith.constant 256 : index
    %c0_48 = arith.constant 0 : index
    %35 = vector.load %arg4[%c256, %c0_48] : memref<1152x128xbf16, #tpu.memory_space<vmem>>, vector<128x128xbf16>
    %cst_49 = arith.constant dense<0.000000e+00> : vector<256x128xf32>
    %36 = tpu.matmul %34, %35, %cst_49 {dimension_numbers = #tpu.dot_dimension_numbers<[1], [0], [0], [1], [0, 0, 1, 1], [], []>} : vector<256x128xbf16>, vector<128x128xbf16>, vector<256x128xf32> -> vector<256x128xf32>
    %37 = arith.addf %31, %36 : vector<256x128xf32>
    %c0_50 = arith.constant 0 : index
    %c1_51 = arith.constant 1 : index
    %c0_52 = arith.constant 0 : index
    %c0_53 = arith.constant 0 : index
    %38 = vector.load %arg17[%c0_50, %c1_51, %c0_52, %c0_53] : memref<1x18x18x128xf32, #tpu.memory_space<vmem>>, vector<1x16x16x128xf32>
    %39 = vector.shape_cast %38 : vector<1x16x16x128xf32> to vector<256x128xf32>
    %40 = arith.truncf %39 : vector<256x128xf32> to vector<256x128xbf16>
    %c384 = arith.constant 384 : index
    %c0_54 = arith.constant 0 : index
    %41 = vector.load %arg4[%c384, %c0_54] : memref<1152x128xbf16, #tpu.memory_space<vmem>>, vector<128x128xbf16>
    %cst_55 = arith.constant dense<0.000000e+00> : vector<256x128xf32>
    %42 = tpu.matmul %40, %41, %cst_55 {dimension_numbers = #tpu.dot_dimension_numbers<[1], [0], [0], [1], [0, 0, 1, 1], [], []>} : vector<256x128xbf16>, vector<128x128xbf16>, vector<256x128xf32> -> vector<256x128xf32>
    %43 = arith.addf %37, %42 : vector<256x128xf32>
    %c0_56 = arith.constant 0 : index
    %c1_57 = arith.constant 1 : index
    %c1_58 = arith.constant 1 : index
    %c0_59 = arith.constant 0 : index
    %44 = vector.load %arg17[%c0_56, %c1_57, %c1_58, %c0_59] : memref<1x18x18x128xf32, #tpu.memory_space<vmem>>, vector<1x16x16x128xf32>
    %45 = vector.shape_cast %44 : vector<1x16x16x128xf32> to vector<256x128xf32>
    %46 = arith.truncf %45 : vector<256x128xf32> to vector<256x128xbf16>
    %c512 = arith.constant 512 : index
    %c0_60 = arith.constant 0 : index
    %47 = vector.load %arg4[%c512, %c0_60] : memref<1152x128xbf16, #tpu.memory_space<vmem>>, vector<128x128xbf16>
    %cst_61 = arith.constant dense<0.000000e+00> : vector<256x128xf32>
    %48 = tpu.matmul %46, %47, %cst_61 {dimension_numbers = #tpu.dot_dimension_numbers<[1], [0], [0], [1], [0, 0, 1, 1], [], []>} : vector<256x128xbf16>, vector<128x128xbf16>, vector<256x128xf32> -> vector<256x128xf32>
    %49 = arith.addf %43, %48 : vector<256x128xf32>
    %c0_62 = arith.constant 0 : index
    %c1_63 = arith.constant 1 : index
    %c2_64 = arith.constant 2 : index
    %c0_65 = arith.constant 0 : index
    %50 = vector.load %arg17[%c0_62, %c1_63, %c2_64, %c0_65] : memref<1x18x18x128xf32, #tpu.memory_space<vmem>>, vector<1x16x16x128xf32>
    %51 = vector.shape_cast %50 : vector<1x16x16x128xf32> to vector<256x128xf32>
    %52 = arith.truncf %51 : vector<256x128xf32> to vector<256x128xbf16>
    %c640 = arith.constant 640 : index
    %c0_66 = arith.constant 0 : index
    %53 = vector.load %arg4[%c640, %c0_66] : memref<1152x128xbf16, #tpu.memory_space<vmem>>, vector<128x128xbf16>
    %cst_67 = arith.constant dense<0.000000e+00> : vector<256x128xf32>
    %54 = tpu.matmul %52, %53, %cst_67 {dimension_numbers = #tpu.dot_dimension_numbers<[1], [0], [0], [1], [0, 0, 1, 1], [], []>} : vector<256x128xbf16>, vector<128x128xbf16>, vector<256x128xf32> -> vector<256x128xf32>
    %55 = arith.addf %49, %54 : vector<256x128xf32>
    %c0_68 = arith.constant 0 : index
    %c2_69 = arith.constant 2 : index
    %c0_70 = arith.constant 0 : index
    %c0_71 = arith.constant 0 : index
    %56 = vector.load %arg17[%c0_68, %c2_69, %c0_70, %c0_71] : memref<1x18x18x128xf32, #tpu.memory_space<vmem>>, vector<1x16x16x128xf32>
    %57 = vector.shape_cast %56 : vector<1x16x16x128xf32> to vector<256x128xf32>
    %58 = arith.truncf %57 : vector<256x128xf32> to vector<256x128xbf16>
    %c768 = arith.constant 768 : index
    %c0_72 = arith.constant 0 : index
    %59 = vector.load %arg4[%c768, %c0_72] : memref<1152x128xbf16, #tpu.memory_space<vmem>>, vector<128x128xbf16>
    %cst_73 = arith.constant dense<0.000000e+00> : vector<256x128xf32>
    %60 = tpu.matmul %58, %59, %cst_73 {dimension_numbers = #tpu.dot_dimension_numbers<[1], [0], [0], [1], [0, 0, 1, 1], [], []>} : vector<256x128xbf16>, vector<128x128xbf16>, vector<256x128xf32> -> vector<256x128xf32>
    %61 = arith.addf %55, %60 : vector<256x128xf32>
    %c0_74 = arith.constant 0 : index
    %c2_75 = arith.constant 2 : index
    %c1_76 = arith.constant 1 : index
    %c0_77 = arith.constant 0 : index
    %62 = vector.load %arg17[%c0_74, %c2_75, %c1_76, %c0_77] : memref<1x18x18x128xf32, #tpu.memory_space<vmem>>, vector<1x16x16x128xf32>
    %63 = vector.shape_cast %62 : vector<1x16x16x128xf32> to vector<256x128xf32>
    %64 = arith.truncf %63 : vector<256x128xf32> to vector<256x128xbf16>
    %c896 = arith.constant 896 : index
    %c0_78 = arith.constant 0 : index
    %65 = vector.load %arg4[%c896, %c0_78] : memref<1152x128xbf16, #tpu.memory_space<vmem>>, vector<128x128xbf16>
    %cst_79 = arith.constant dense<0.000000e+00> : vector<256x128xf32>
    %66 = tpu.matmul %64, %65, %cst_79 {dimension_numbers = #tpu.dot_dimension_numbers<[1], [0], [0], [1], [0, 0, 1, 1], [], []>} : vector<256x128xbf16>, vector<128x128xbf16>, vector<256x128xf32> -> vector<256x128xf32>
    %67 = arith.addf %61, %66 : vector<256x128xf32>
    %c0_80 = arith.constant 0 : index
    %c2_81 = arith.constant 2 : index
    %c2_82 = arith.constant 2 : index
    %c0_83 = arith.constant 0 : index
    %68 = vector.load %arg17[%c0_80, %c2_81, %c2_82, %c0_83] : memref<1x18x18x128xf32, #tpu.memory_space<vmem>>, vector<1x16x16x128xf32>
    %69 = vector.shape_cast %68 : vector<1x16x16x128xf32> to vector<256x128xf32>
    %70 = arith.truncf %69 : vector<256x128xf32> to vector<256x128xbf16>
    %c1024 = arith.constant 1024 : index
    %c0_84 = arith.constant 0 : index
    %71 = vector.load %arg4[%c1024, %c0_84] : memref<1152x128xbf16, #tpu.memory_space<vmem>>, vector<128x128xbf16>
    %cst_85 = arith.constant dense<0.000000e+00> : vector<256x128xf32>
    %72 = tpu.matmul %70, %71, %cst_85 {dimension_numbers = #tpu.dot_dimension_numbers<[1], [0], [0], [1], [0, 0, 1, 1], [], []>} : vector<256x128xbf16>, vector<128x128xbf16>, vector<256x128xf32> -> vector<256x128xf32>
    %73 = arith.addf %67, %72 : vector<256x128xf32>
    %c0_86 = arith.constant 0 : index
    %c0_87 = arith.constant 0 : index
    %74 = vector.load %arg5[%c0_86, %c0_87] : memref<1x128xf32, #tpu.memory_space<vmem>>, vector<1x128xf32>
    %75 = vector.broadcast %74 : vector<1x128xf32> to vector<256x128xf32>
    %76 = arith.addf %73, %75 : vector<256x128xf32>
    %cst_88 = arith.constant 0.000000e+00 : f32
    %77 = vector.broadcast %cst_88 : f32 to vector<256x128xf32>
    %78 = arith.maximumf %76, %77 : vector<256x128xf32>
    %79 = vector.shape_cast %78 : vector<256x128xf32> to vector<1x16x16x128xf32>
    %c0_89 = arith.constant 0 : index
    %c1_90 = arith.constant 1 : index
    %c1_91 = arith.constant 1 : index
    %c0_92 = arith.constant 0 : index
    %80 = vector.load %arg18[%c0_89, %c1_90, %c1_91, %c0_92] : memref<1x18x18x128xf32, #tpu.memory_space<vmem>>, vector<1x16x16x128xf32>
    tpu.vector_store %arg18[%c0_89, %c1_90, %c1_91, %c0_92], %79 {strides = array<i32>} : memref<1x18x18x128xf32, #tpu.memory_space<vmem>>, vector<1x16x16x128xf32>,
    %cst_93 = arith.constant 0.000000e+00 : f32
    %81 = vector.broadcast %cst_93 : f32 to vector<64x128xf32>
    %c0_94 = arith.constant 0 : index
    %c0_95 = arith.constant 0 : index
    %c0_96 = arith.constant 0 : index
    %c0_97 = arith.constant 0 : index
    %82 = tpu.strided_load %arg18[%c0_94, %c0_95, %c0_96, %c0_97] {strides = array<i32: 1, 2, 2, 1>} : memref<1x18x18x128xf32, #tpu.memory_space<vmem>>, vector<1x8x8x128xf32>
    %83 = vector.shape_cast %82 : vector<1x8x8x128xf32> to vector<64x128xf32>
    %84 = arith.truncf %83 : vector<64x128xf32> to vector<64x128xbf16>
    %c0_98 = arith.constant 0 : index
    %c0_99 = arith.constant 0 : index
    %85 = vector.load %arg6[%c0_98, %c0_99] : memref<1152x128xbf16, #tpu.memory_space<vmem>>, vector<128x128xbf16>
    %cst_100 = arith.constant dense<0.000000e+00> : vector<64x128xf32>
    %86 = tpu.matmul %84, %85, %cst_100 {dimension_numbers = #tpu.dot_dimension_numbers<[1], [0], [0], [1], [0, 0, 1, 1], [], []>} : vector<64x128xbf16>, vector<128x128xbf16>, vector<64x128xf32> -> vector<64x128xf32>
    %87 = arith.addf %81, %86 : vector<64x128xf32>
    %c0_101 = arith.constant 0 : index
    %c0_102 = arith.constant 0 : index
    %c1_103 = arith.constant 1 : index
    %c0_104 = arith.constant 0 : index
    %88 = tpu.strided_load %arg18[%c0_101, %c0_102, %c1_103, %c0_104] {strides = array<i32: 1, 2, 2, 1>} : memref<1x18x18x128xf32, #tpu.memory_space<vmem>>, vector<1x8x8x128xf32>
    %89 = vector.shape_cast %88 : vector<1x8x8x128xf32> to vector<64x128xf32>
    %90 = arith.truncf %89 : vector<64x128xf32> to vector<64x128xbf16>
    %c128_105 = arith.constant 128 : index
    %c0_106 = arith.constant 0 : index
    %91 = vector.load %arg6[%c128_105, %c0_106] : memref<1152x128xbf16, #tpu.memory_space<vmem>>, vector<128x128xbf16>
    %cst_107 = arith.constant dense<0.000000e+00> : vector<64x128xf32>
    %92 = tpu.matmul %90, %91, %cst_107 {dimension_numbers = #tpu.dot_dimension_numbers<[1], [0], [0], [1], [0, 0, 1, 1], [], []>} : vector<64x128xbf16>, vector<128x128xbf16>, vector<64x128xf32> -> vector<64x128xf32>
    %93 = arith.addf %87, %92 : vector<64x128xf32>
    %c0_108 = arith.constant 0 : index
    %c0_109 = arith.constant 0 : index
    %c2_110 = arith.constant 2 : index
    %c0_111 = arith.constant 0 : index
    %94 = tpu.strided_load %arg18[%c0_108, %c0_109, %c2_110, %c0_111] {strides = array<i32: 1, 2, 2, 1>} : memref<1x18x18x128xf32, #tpu.memory_space<vmem>>, vector<1x8x8x128xf32>
    %95 = vector.shape_cast %94 : vector<1x8x8x128xf32> to vector<64x128xf32>
    %96 = arith.truncf %95 : vector<64x128xf32> to vector<64x128xbf16>
    %c256_112 = arith.constant 256 : index
    %c0_113 = arith.constant 0 : index
    %97 = vector.load %arg6[%c256_112, %c0_113] : memref<1152x128xbf16, #tpu.memory_space<vmem>>, vector<128x128xbf16>
    %cst_114 = arith.constant dense<0.000000e+00> : vector<64x128xf32>
    %98 = tpu.matmul %96, %97, %cst_114 {dimension_numbers = #tpu.dot_dimension_numbers<[1], [0], [0], [1], [0, 0, 1, 1], [], []>} : vector<64x128xbf16>, vector<128x128xbf16>, vector<64x128xf32> -> vector<64x128xf32>
    %99 = arith.addf %93, %98 : vector<64x128xf32>
    %c0_115 = arith.constant 0 : index
    %c1_116 = arith.constant 1 : index
    %c0_117 = arith.constant 0 : index
    %c0_118 = arith.constant 0 : index
    %100 = tpu.strided_load %arg18[%c0_115, %c1_116, %c0_117, %c0_118] {strides = array<i32: 1, 2, 2, 1>} : memref<1x18x18x128xf32, #tpu.memory_space<vmem>>, vector<1x8x8x128xf32>
    %101 = vector.shape_cast %100 : vector<1x8x8x128xf32> to vector<64x128xf32>
    %102 = arith.truncf %101 : vector<64x128xf32> to vector<64x128xbf16>
    %c384_119 = arith.constant 384 : index
    %c0_120 = arith.constant 0 : index
    %103 = vector.load %arg6[%c384_119, %c0_120] : memref<1152x128xbf16, #tpu.memory_space<vmem>>, vector<128x128xbf16>
    %cst_121 = arith.constant dense<0.000000e+00> : vector<64x128xf32>
    %104 = tpu.matmul %102, %103, %cst_121 {dimension_numbers = #tpu.dot_dimension_numbers<[1], [0], [0], [1], [0, 0, 1, 1], [], []>} : vector<64x128xbf16>, vector<128x128xbf16>, vector<64x128xf32> -> vector<64x128xf32>
    %105 = arith.addf %99, %104 : vector<64x128xf32>
    %c0_122 = arith.constant 0 : index
    %c1_123 = arith.constant 1 : index
    %c1_124 = arith.constant 1 : index
    %c0_125 = arith.constant 0 : index
    %106 = tpu.strided_load %arg18[%c0_122, %c1_123, %c1_124, %c0_125] {strides = array<i32: 1, 2, 2, 1>} : memref<1x18x18x128xf32, #tpu.memory_space<vmem>>, vector<1x8x8x128xf32>
    %107 = vector.shape_cast %106 : vector<1x8x8x128xf32> to vector<64x128xf32>
    %108 = arith.truncf %107 : vector<64x128xf32> to vector<64x128xbf16>
    %c512_126 = arith.constant 512 : index
    %c0_127 = arith.constant 0 : index
    %109 = vector.load %arg6[%c512_126, %c0_127] : memref<1152x128xbf16, #tpu.memory_space<vmem>>, vector<128x128xbf16>
    %cst_128 = arith.constant dense<0.000000e+00> : vector<64x128xf32>
    %110 = tpu.matmul %108, %109, %cst_128 {dimension_numbers = #tpu.dot_dimension_numbers<[1], [0], [0], [1], [0, 0, 1, 1], [], []>} : vector<64x128xbf16>, vector<128x128xbf16>, vector<64x128xf32> -> vector<64x128xf32>
    %111 = arith.addf %105, %110 : vector<64x128xf32>
    %c0_129 = arith.constant 0 : index
    %c1_130 = arith.constant 1 : index
    %c2_131 = arith.constant 2 : index
    %c0_132 = arith.constant 0 : index
    %112 = tpu.strided_load %arg18[%c0_129, %c1_130, %c2_131, %c0_132] {strides = array<i32: 1, 2, 2, 1>} : memref<1x18x18x128xf32, #tpu.memory_space<vmem>>, vector<1x8x8x128xf32>
    %113 = vector.shape_cast %112 : vector<1x8x8x128xf32> to vector<64x128xf32>
    %114 = arith.truncf %113 : vector<64x128xf32> to vector<64x128xbf16>
    %c640_133 = arith.constant 640 : index
    %c0_134 = arith.constant 0 : index
    %115 = vector.load %arg6[%c640_133, %c0_134] : memref<1152x128xbf16, #tpu.memory_space<vmem>>, vector<128x128xbf16>
    %cst_135 = arith.constant dense<0.000000e+00> : vector<64x128xf32>
    %116 = tpu.matmul %114, %115, %cst_135 {dimension_numbers = #tpu.dot_dimension_numbers<[1], [0], [0], [1], [0, 0, 1, 1], [], []>} : vector<64x128xbf16>, vector<128x128xbf16>, vector<64x128xf32> -> vector<64x128xf32>
    %117 = arith.addf %111, %116 : vector<64x128xf32>
    %c0_136 = arith.constant 0 : index
    %c2_137 = arith.constant 2 : index
    %c0_138 = arith.constant 0 : index
    %c0_139 = arith.constant 0 : index
    %118 = tpu.strided_load %arg18[%c0_136, %c2_137, %c0_138, %c0_139] {strides = array<i32: 1, 2, 2, 1>} : memref<1x18x18x128xf32, #tpu.memory_space<vmem>>, vector<1x8x8x128xf32>
    %119 = vector.shape_cast %118 : vector<1x8x8x128xf32> to vector<64x128xf32>
    %120 = arith.truncf %119 : vector<64x128xf32> to vector<64x128xbf16>
    %c768_140 = arith.constant 768 : index
    %c0_141 = arith.constant 0 : index
    %121 = vector.load %arg6[%c768_140, %c0_141] : memref<1152x128xbf16, #tpu.memory_space<vmem>>, vector<128x128xbf16>
    %cst_142 = arith.constant dense<0.000000e+00> : vector<64x128xf32>
    %122 = tpu.matmul %120, %121, %cst_142 {dimension_numbers = #tpu.dot_dimension_numbers<[1], [0], [0], [1], [0, 0, 1, 1], [], []>} : vector<64x128xbf16>, vector<128x128xbf16>, vector<64x128xf32> -> vector<64x128xf32>
    %123 = arith.addf %117, %122 : vector<64x128xf32>
    %c0_143 = arith.constant 0 : index
    %c2_144 = arith.constant 2 : index
    %c1_145 = arith.constant 1 : index
    %c0_146 = arith.constant 0 : index
    %124 = tpu.strided_load %arg18[%c0_143, %c2_144, %c1_145, %c0_146] {strides = array<i32: 1, 2, 2, 1>} : memref<1x18x18x128xf32, #tpu.memory_space<vmem>>, vector<1x8x8x128xf32>
    %125 = vector.shape_cast %124 : vector<1x8x8x128xf32> to vector<64x128xf32>
    %126 = arith.truncf %125 : vector<64x128xf32> to vector<64x128xbf16>
    %c896_147 = arith.constant 896 : index
    %c0_148 = arith.constant 0 : index
    %127 = vector.load %arg6[%c896_147, %c0_148] : memref<1152x128xbf16, #tpu.memory_space<vmem>>, vector<128x128xbf16>
    %cst_149 = arith.constant dense<0.000000e+00> : vector<64x128xf32>
    %128 = tpu.matmul %126, %127, %cst_149 {dimension_numbers = #tpu.dot_dimension_numbers<[1], [0], [0], [1], [0, 0, 1, 1], [], []>} : vector<64x128xbf16>, vector<128x128xbf16>, vector<64x128xf32> -> vector<64x128xf32>
    %129 = arith.addf %123, %128 : vector<64x128xf32>
    %c0_150 = arith.constant 0 : index
    %c2_151 = arith.constant 2 : index
    %c2_152 = arith.constant 2 : index
    %c0_153 = arith.constant 0 : index
    %130 = tpu.strided_load %arg18[%c0_150, %c2_151, %c2_152, %c0_153] {strides = array<i32: 1, 2, 2, 1>} : memref<1x18x18x128xf32, #tpu.memory_space<vmem>>, vector<1x8x8x128xf32>
    %131 = vector.shape_cast %130 : vector<1x8x8x128xf32> to vector<64x128xf32>
    %132 = arith.truncf %131 : vector<64x128xf32> to vector<64x128xbf16>
    %c1024_154 = arith.constant 1024 : index
    %c0_155 = arith.constant 0 : index
    %133 = vector.load %arg6[%c1024_154, %c0_155] : memref<1152x128xbf16, #tpu.memory_space<vmem>>, vector<128x128xbf16>
    %cst_156 = arith.constant dense<0.000000e+00> : vector<64x128xf32>
    %134 = tpu.matmul %132, %133, %cst_156 {dimension_numbers = #tpu.dot_dimension_numbers<[1], [0], [0], [1], [0, 0, 1, 1], [], []>} : vector<64x128xbf16>, vector<128x128xbf16>, vector<64x128xf32> -> vector<64x128xf32>
    %135 = arith.addf %129, %134 : vector<64x128xf32>
    %c0_157 = arith.constant 0 : index
    %c0_158 = arith.constant 0 : index
    %136 = vector.load %arg7[%c0_157, %c0_158] : memref<1x128xf32, #tpu.memory_space<vmem>>, vector<1x128xf32>
    %137 = vector.broadcast %136 : vector<1x128xf32> to vector<64x128xf32>
    %138 = arith.addf %135, %137 : vector<64x128xf32>
    %cst_159 = arith.constant 0.000000e+00 : f32
    %139 = vector.broadcast %cst_159 : f32 to vector<64x128xf32>
    %140 = arith.maximumf %138, %139 : vector<64x128xf32>
    %141 = vector.shape_cast %140 : vector<64x128xf32> to vector<1x8x8x128xf32>
    %c0_160 = arith.constant 0 : index
    %c1_161 = arith.constant 1 : index
    %c1_162 = arith.constant 1 : index
    %c0_163 = arith.constant 0 : index
    %142 = vector.load %arg19[%c0_160, %c1_161, %c1_162, %c0_163] : memref<1x10x10x128xf32, #tpu.memory_space<vmem>>, vector<1x8x8x128xf32>
    tpu.vector_store %arg19[%c0_160, %c1_161, %c1_162, %c0_163], %141 {strides = array<i32>} : memref<1x10x10x128xf32, #tpu.memory_space<vmem>>, vector<1x8x8x128xf32>,
    %cst_164 = arith.constant 0.000000e+00 : f32
    %143 = vector.broadcast %cst_164 : f32 to vector<16x128xf32>
    %c0_165 = arith.constant 0 : index
    %c0_166 = arith.constant 0 : index
    %c0_167 = arith.constant 0 : index
    %c0_168 = arith.constant 0 : index
    %144 = tpu.strided_load %arg19[%c0_165, %c0_166, %c0_167, %c0_168] {strides = array<i32: 1, 2, 2, 1>} : memref<1x10x10x128xf32, #tpu.memory_space<vmem>>, vector<1x4x4x128xf32>
    %145 = vector.shape_cast %144 : vector<1x4x4x128xf32> to vector<16x128xf32>
    %146 = arith.truncf %145 : vector<16x128xf32> to vector<16x128xbf16>
    %c0_169 = arith.constant 0 : index
    %c0_170 = arith.constant 0 : index
    %147 = vector.load %arg8[%c0_169, %c0_170] : memref<1152x128xbf16, #tpu.memory_space<vmem>>, vector<128x128xbf16>
    %cst_171 = arith.constant dense<0.000000e+00> : vector<16x128xf32>
    %148 = tpu.matmul %146, %147, %cst_171 {dimension_numbers = #tpu.dot_dimension_numbers<[1], [0], [0], [1], [0, 0, 1, 1], [], []>} : vector<16x128xbf16>, vector<128x128xbf16>, vector<16x128xf32> -> vector<16x128xf32>
    %149 = arith.addf %143, %148 : vector<16x128xf32>
    %c0_172 = arith.constant 0 : index
    %c0_173 = arith.constant 0 : index
    %c1_174 = arith.constant 1 : index
    %c0_175 = arith.constant 0 : index
    %150 = tpu.strided_load %arg19[%c0_172, %c0_173, %c1_174, %c0_175] {strides = array<i32: 1, 2, 2, 1>} : memref<1x10x10x128xf32, #tpu.memory_space<vmem>>, vector<1x4x4x128xf32>
    %151 = vector.shape_cast %150 : vector<1x4x4x128xf32> to vector<16x128xf32>
    %152 = arith.truncf %151 : vector<16x128xf32> to vector<16x128xbf16>
    %c128_176 = arith.constant 128 : index
    %c0_177 = arith.constant 0 : index
    %153 = vector.load %arg8[%c128_176, %c0_177] : memref<1152x128xbf16, #tpu.memory_space<vmem>>, vector<128x128xbf16>
    %cst_178 = arith.constant dense<0.000000e+00> : vector<16x128xf32>
    %154 = tpu.matmul %152, %153, %cst_178 {dimension_numbers = #tpu.dot_dimension_numbers<[1], [0], [0], [1], [0, 0, 1, 1], [], []>} : vector<16x128xbf16>, vector<128x128xbf16>, vector<16x128xf32> -> vector<16x128xf32>
    %155 = arith.addf %149, %154 : vector<16x128xf32>
    %c0_179 = arith.constant 0 : index
    %c0_180 = arith.constant 0 : index
    %c2_181 = arith.constant 2 : index
    %c0_182 = arith.constant 0 : index
    %156 = tpu.strided_load %arg19[%c0_179, %c0_180, %c2_181, %c0_182] {strides = array<i32: 1, 2, 2, 1>} : memref<1x10x10x128xf32, #tpu.memory_space<vmem>>, vector<1x4x4x128xf32>
    %157 = vector.shape_cast %156 : vector<1x4x4x128xf32> to vector<16x128xf32>
    %158 = arith.truncf %157 : vector<16x128xf32> to vector<16x128xbf16>
    %c256_183 = arith.constant 256 : index
    %c0_184 = arith.constant 0 : index
    %159 = vector.load %arg8[%c256_183, %c0_184] : memref<1152x128xbf16, #tpu.memory_space<vmem>>, vector<128x128xbf16>
    %cst_185 = arith.constant dense<0.000000e+00> : vector<16x128xf32>
    %160 = tpu.matmul %158, %159, %cst_185 {dimension_numbers = #tpu.dot_dimension_numbers<[1], [0], [0], [1], [0, 0, 1, 1], [], []>} : vector<16x128xbf16>, vector<128x128xbf16>, vector<16x128xf32> -> vector<16x128xf32>
    %161 = arith.addf %155, %160 : vector<16x128xf32>
    %c0_186 = arith.constant 0 : index
    %c1_187 = arith.constant 1 : index
    %c0_188 = arith.constant 0 : index
    %c0_189 = arith.constant 0 : index
    %162 = tpu.strided_load %arg19[%c0_186, %c1_187, %c0_188, %c0_189] {strides = array<i32: 1, 2, 2, 1>} : memref<1x10x10x128xf32, #tpu.memory_space<vmem>>, vector<1x4x4x128xf32>
    %163 = vector.shape_cast %162 : vector<1x4x4x128xf32> to vector<16x128xf32>
    %164 = arith.truncf %163 : vector<16x128xf32> to vector<16x128xbf16>
    %c384_190 = arith.constant 384 : index
    %c0_191 = arith.constant 0 : index
    %165 = vector.load %arg8[%c384_190, %c0_191] : memref<1152x128xbf16, #tpu.memory_space<vmem>>, vector<128x128xbf16>
    %cst_192 = arith.constant dense<0.000000e+00> : vector<16x128xf32>
    %166 = tpu.matmul %164, %165, %cst_192 {dimension_numbers = #tpu.dot_dimension_numbers<[1], [0], [0], [1], [0, 0, 1, 1], [], []>} : vector<16x128xbf16>, vector<128x128xbf16>, vector<16x128xf32> -> vector<16x128xf32>
    %167 = arith.addf %161, %166 : vector<16x128xf32>
    %c0_193 = arith.constant 0 : index
    %c1_194 = arith.constant 1 : index
    %c1_195 = arith.constant 1 : index
    %c0_196 = arith.constant 0 : index
    %168 = tpu.strided_load %arg19[%c0_193, %c1_194, %c1_195, %c0_196] {strides = array<i32: 1, 2, 2, 1>} : memref<1x10x10x128xf32, #tpu.memory_space<vmem>>, vector<1x4x4x128xf32>
    %169 = vector.shape_cast %168 : vector<1x4x4x128xf32> to vector<16x128xf32>
    %170 = arith.truncf %169 : vector<16x128xf32> to vector<16x128xbf16>
    %c512_197 = arith.constant 512 : index
    %c0_198 = arith.constant 0 : index
    %171 = vector.load %arg8[%c512_197, %c0_198] : memref<1152x128xbf16, #tpu.memory_space<vmem>>, vector<128x128xbf16>
    %cst_199 = arith.constant dense<0.000000e+00> : vector<16x128xf32>
    %172 = tpu.matmul %170, %171, %cst_199 {dimension_numbers = #tpu.dot_dimension_numbers<[1], [0], [0], [1], [0, 0, 1, 1], [], []>} : vector<16x128xbf16>, vector<128x128xbf16>, vector<16x128xf32> -> vector<16x128xf32>
    %173 = arith.addf %167, %172 : vector<16x128xf32>
    %c0_200 = arith.constant 0 : index
    %c1_201 = arith.constant 1 : index
    %c2_202 = arith.constant 2 : index
    %c0_203 = arith.constant 0 : index
    %174 = tpu.strided_load %arg19[%c0_200, %c1_201, %c2_202, %c0_203] {strides = array<i32: 1, 2, 2, 1>} : memref<1x10x10x128xf32, #tpu.memory_space<vmem>>, vector<1x4x4x128xf32>
    %175 = vector.shape_cast %174 : vector<1x4x4x128xf32> to vector<16x128xf32>
    %176 = arith.truncf %175 : vector<16x128xf32> to vector<16x128xbf16>
    %c640_204 = arith.constant 640 : index
    %c0_205 = arith.constant 0 : index
    %177 = vector.load %arg8[%c640_204, %c0_205] : memref<1152x128xbf16, #tpu.memory_space<vmem>>, vector<128x128xbf16>
    %cst_206 = arith.constant dense<0.000000e+00> : vector<16x128xf32>
    %178 = tpu.matmul %176, %177, %cst_206 {dimension_numbers = #tpu.dot_dimension_numbers<[1], [0], [0], [1], [0, 0, 1, 1], [], []>} : vector<16x128xbf16>, vector<128x128xbf16>, vector<16x128xf32> -> vector<16x128xf32>
    %179 = arith.addf %173, %178 : vector<16x128xf32>
    %c0_207 = arith.constant 0 : index
    %c2_208 = arith.constant 2 : index
    %c0_209 = arith.constant 0 : index
    %c0_210 = arith.constant 0 : index
    %180 = tpu.strided_load %arg19[%c0_207, %c2_208, %c0_209, %c0_210] {strides = array<i32: 1, 2, 2, 1>} : memref<1x10x10x128xf32, #tpu.memory_space<vmem>>, vector<1x4x4x128xf32>
    %181 = vector.shape_cast %180 : vector<1x4x4x128xf32> to vector<16x128xf32>
    %182 = arith.truncf %181 : vector<16x128xf32> to vector<16x128xbf16>
    %c768_211 = arith.constant 768 : index
    %c0_212 = arith.constant 0 : index
    %183 = vector.load %arg8[%c768_211, %c0_212] : memref<1152x128xbf16, #tpu.memory_space<vmem>>, vector<128x128xbf16>
    %cst_213 = arith.constant dense<0.000000e+00> : vector<16x128xf32>
    %184 = tpu.matmul %182, %183, %cst_213 {dimension_numbers = #tpu.dot_dimension_numbers<[1], [0], [0], [1], [0, 0, 1, 1], [], []>} : vector<16x128xbf16>, vector<128x128xbf16>, vector<16x128xf32> -> vector<16x128xf32>
    %185 = arith.addf %179, %184 : vector<16x128xf32>
    %c0_214 = arith.constant 0 : index
    %c2_215 = arith.constant 2 : index
    %c1_216 = arith.constant 1 : index
    %c0_217 = arith.constant 0 : index
    %186 = tpu.strided_load %arg19[%c0_214, %c2_215, %c1_216, %c0_217] {strides = array<i32: 1, 2, 2, 1>} : memref<1x10x10x128xf32, #tpu.memory_space<vmem>>, vector<1x4x4x128xf32>
    %187 = vector.shape_cast %186 : vector<1x4x4x128xf32> to vector<16x128xf32>
    %188 = arith.truncf %187 : vector<16x128xf32> to vector<16x128xbf16>
    %c896_218 = arith.constant 896 : index
    %c0_219 = arith.constant 0 : index
    %189 = vector.load %arg8[%c896_218, %c0_219] : memref<1152x128xbf16, #tpu.memory_space<vmem>>, vector<128x128xbf16>
    %cst_220 = arith.constant dense<0.000000e+00> : vector<16x128xf32>
    %190 = tpu.matmul %188, %189, %cst_220 {dimension_numbers = #tpu.dot_dimension_numbers<[1], [0], [0], [1], [0, 0, 1, 1], [], []>} : vector<16x128xbf16>, vector<128x128xbf16>, vector<16x128xf32> -> vector<16x128xf32>
    %191 = arith.addf %185, %190 : vector<16x128xf32>
    %c0_221 = arith.constant 0 : index
    %c2_222 = arith.constant 2 : index
    %c2_223 = arith.constant 2 : index
    %c0_224 = arith.constant 0 : index
    %192 = tpu.strided_load %arg19[%c0_221, %c2_222, %c2_223, %c0_224] {strides = array<i32: 1, 2, 2, 1>} : memref<1x10x10x128xf32, #tpu.memory_space<vmem>>, vector<1x4x4x128xf32>
    %193 = vector.shape_cast %192 : vector<1x4x4x128xf32> to vector<16x128xf32>
    %194 = arith.truncf %193 : vector<16x128xf32> to vector<16x128xbf16>
    %c1024_225 = arith.constant 1024 : index
    %c0_226 = arith.constant 0 : index
    %195 = vector.load %arg8[%c1024_225, %c0_226] : memref<1152x128xbf16, #tpu.memory_space<vmem>>, vector<128x128xbf16>
    %cst_227 = arith.constant dense<0.000000e+00> : vector<16x128xf32>
    %196 = tpu.matmul %194, %195, %cst_227 {dimension_numbers = #tpu.dot_dimension_numbers<[1], [0], [0], [1], [0, 0, 1, 1], [], []>} : vector<16x128xbf16>, vector<128x128xbf16>, vector<16x128xf32> -> vector<16x128xf32>
    %197 = arith.addf %191, %196 : vector<16x128xf32>
    %c0_228 = arith.constant 0 : index
    %c0_229 = arith.constant 0 : index
    %198 = vector.load %arg9[%c0_228, %c0_229] : memref<1x128xf32, #tpu.memory_space<vmem>>, vector<1x128xf32>
    %199 = vector.broadcast %198 : vector<1x128xf32> to vector<16x128xf32>
    %200 = arith.addf %197, %199 : vector<16x128xf32>
    %cst_230 = arith.constant 0.000000e+00 : f32
    %201 = vector.broadcast %cst_230 : f32 to vector<16x128xf32>
    %202 = arith.maximumf %200, %201 : vector<16x128xf32>
    %203 = vector.shape_cast %202 : vector<16x128xf32> to vector<1x4x4x128xf32>
    %c0_231 = arith.constant 0 : index
    %c1_232 = arith.constant 1 : index
    %c1_233 = arith.constant 1 : index
    %c0_234 = arith.constant 0 : index
    %204 = vector.load %arg20[%c0_231, %c1_232, %c1_233, %c0_234] : memref<1x6x6x128xf32, #tpu.memory_space<vmem>>, vector<1x4x4x128xf32>
    tpu.vector_store %arg20[%c0_231, %c1_232, %c1_233, %c0_234], %203 {strides = array<i32>} : memref<1x6x6x128xf32, #tpu.memory_space<vmem>>, vector<1x4x4x128xf32>,
    %cst_235 = arith.constant 0.000000e+00 : f32
    %205 = vector.broadcast %cst_235 : f32 to vector<4x256xf32>
    %c0_236 = arith.constant 0 : index
    %c0_237 = arith.constant 0 : index
    %c0_238 = arith.constant 0 : index
    %c0_239 = arith.constant 0 : index
    %206 = tpu.strided_load %arg20[%c0_236, %c0_237, %c0_238, %c0_239] {strides = array<i32: 1, 2, 2, 1>} : memref<1x6x6x128xf32, #tpu.memory_space<vmem>>, vector<1x2x2x128xf32>
    %207 = vector.shape_cast %206 : vector<1x2x2x128xf32> to vector<4x128xf32>
    %208 = arith.truncf %207 : vector<4x128xf32> to vector<4x128xbf16>
    %c0_240 = arith.constant 0 : index
    %c0_241 = arith.constant 0 : index
    %209 = vector.load %arg10[%c0_240, %c0_241] : memref<1152x256xbf16, #tpu.memory_space<vmem>>, vector<128x256xbf16>
    %cst_242 = arith.constant dense<0.000000e+00> : vector<4x256xf32>
    %210 = tpu.matmul %208, %209, %cst_242 {dimension_numbers = #tpu.dot_dimension_numbers<[1], [0], [0], [1], [0, 0, 1, 1], [], []>} : vector<4x128xbf16>, vector<128x256xbf16>, vector<4x256xf32> -> vector<4x256xf32>
    %211 = arith.addf %205, %210 : vector<4x256xf32>
    %c0_243 = arith.constant 0 : index
    %c0_244 = arith.constant 0 : index
    %c1_245 = arith.constant 1 : index
    %c0_246 = arith.constant 0 : index
    %212 = tpu.strided_load %arg20[%c0_243, %c0_244, %c1_245, %c0_246] {strides = array<i32: 1, 2, 2, 1>} : memref<1x6x6x128xf32, #tpu.memory_space<vmem>>, vector<1x2x2x128xf32>
    %213 = vector.shape_cast %212 : vector<1x2x2x128xf32> to vector<4x128xf32>
    %214 = arith.truncf %213 : vector<4x128xf32> to vector<4x128xbf16>
    %c128_247 = arith.constant 128 : index
    %c0_248 = arith.constant 0 : index
    %215 = vector.load %arg10[%c128_247, %c0_248] : memref<1152x256xbf16, #tpu.memory_space<vmem>>, vector<128x256xbf16>
    %cst_249 = arith.constant dense<0.000000e+00> : vector<4x256xf32>
    %216 = tpu.matmul %214, %215, %cst_249 {dimension_numbers = #tpu.dot_dimension_numbers<[1], [0], [0], [1], [0, 0, 1, 1], [], []>} : vector<4x128xbf16>, vector<128x256xbf16>, vector<4x256xf32> -> vector<4x256xf32>
    %217 = arith.addf %211, %216 : vector<4x256xf32>
    %c0_250 = arith.constant 0 : index
    %c0_251 = arith.constant 0 : index
    %c2_252 = arith.constant 2 : index
    %c0_253 = arith.constant 0 : index
    %218 = tpu.strided_load %arg20[%c0_250, %c0_251, %c2_252, %c0_253] {strides = array<i32: 1, 2, 2, 1>} : memref<1x6x6x128xf32, #tpu.memory_space<vmem>>, vector<1x2x2x128xf32>
    %219 = vector.shape_cast %218 : vector<1x2x2x128xf32> to vector<4x128xf32>
    %220 = arith.truncf %219 : vector<4x128xf32> to vector<4x128xbf16>
    %c256_254 = arith.constant 256 : index
    %c0_255 = arith.constant 0 : index
    %221 = vector.load %arg10[%c256_254, %c0_255] : memref<1152x256xbf16, #tpu.memory_space<vmem>>, vector<128x256xbf16>
    %cst_256 = arith.constant dense<0.000000e+00> : vector<4x256xf32>
    %222 = tpu.matmul %220, %221, %cst_256 {dimension_numbers = #tpu.dot_dimension_numbers<[1], [0], [0], [1], [0, 0, 1, 1], [], []>} : vector<4x128xbf16>, vector<128x256xbf16>, vector<4x256xf32> -> vector<4x256xf32>
    %223 = arith.addf %217, %222 : vector<4x256xf32>
    %c0_257 = arith.constant 0 : index
    %c1_258 = arith.constant 1 : index
    %c0_259 = arith.constant 0 : index
    %c0_260 = arith.constant 0 : index
    %224 = tpu.strided_load %arg20[%c0_257, %c1_258, %c0_259, %c0_260] {strides = array<i32: 1, 2, 2, 1>} : memref<1x6x6x128xf32, #tpu.memory_space<vmem>>, vector<1x2x2x128xf32>
    %225 = vector.shape_cast %224 : vector<1x2x2x128xf32> to vector<4x128xf32>
    %226 = arith.truncf %225 : vector<4x128xf32> to vector<4x128xbf16>
    %c384_261 = arith.constant 384 : index
    %c0_262 = arith.constant 0 : index
    %227 = vector.load %arg10[%c384_261, %c0_262] : memref<1152x256xbf16, #tpu.memory_space<vmem>>, vector<128x256xbf16>
    %cst_263 = arith.constant dense<0.000000e+00> : vector<4x256xf32>
    %228 = tpu.matmul %226, %227, %cst_263 {dimension_numbers = #tpu.dot_dimension_numbers<[1], [0], [0], [1], [0, 0, 1, 1], [], []>} : vector<4x128xbf16>, vector<128x256xbf16>, vector<4x256xf32> -> vector<4x256xf32>
    %229 = arith.addf %223, %228 : vector<4x256xf32>
    %c0_264 = arith.constant 0 : index
    %c1_265 = arith.constant 1 : index
    %c1_266 = arith.constant 1 : index
    %c0_267 = arith.constant 0 : index
    %230 = tpu.strided_load %arg20[%c0_264, %c1_265, %c1_266, %c0_267] {strides = array<i32: 1, 2, 2, 1>} : memref<1x6x6x128xf32, #tpu.memory_space<vmem>>, vector<1x2x2x128xf32>
    %231 = vector.shape_cast %230 : vector<1x2x2x128xf32> to vector<4x128xf32>
    %232 = arith.truncf %231 : vector<4x128xf32> to vector<4x128xbf16>
    %c512_268 = arith.constant 512 : index
    %c0_269 = arith.constant 0 : index
    %233 = vector.load %arg10[%c512_268, %c0_269] : memref<1152x256xbf16, #tpu.memory_space<vmem>>, vector<128x256xbf16>
    %cst_270 = arith.constant dense<0.000000e+00> : vector<4x256xf32>
    %234 = tpu.matmul %232, %233, %cst_270 {dimension_numbers = #tpu.dot_dimension_numbers<[1], [0], [0], [1], [0, 0, 1, 1], [], []>} : vector<4x128xbf16>, vector<128x256xbf16>, vector<4x256xf32> -> vector<4x256xf32>
    %235 = arith.addf %229, %234 : vector<4x256xf32>
    %c0_271 = arith.constant 0 : index
    %c1_272 = arith.constant 1 : index
    %c2_273 = arith.constant 2 : index
    %c0_274 = arith.constant 0 : index
    %236 = tpu.strided_load %arg20[%c0_271, %c1_272, %c2_273, %c0_274] {strides = array<i32: 1, 2, 2, 1>} : memref<1x6x6x128xf32, #tpu.memory_space<vmem>>, vector<1x2x2x128xf32>
    %237 = vector.shape_cast %236 : vector<1x2x2x128xf32> to vector<4x128xf32>
    %238 = arith.truncf %237 : vector<4x128xf32> to vector<4x128xbf16>
    %c640_275 = arith.constant 640 : index
    %c0_276 = arith.constant 0 : index
    %239 = vector.load %arg10[%c640_275, %c0_276] : memref<1152x256xbf16, #tpu.memory_space<vmem>>, vector<128x256xbf16>
    %cst_277 = arith.constant dense<0.000000e+00> : vector<4x256xf32>
    %240 = tpu.matmul %238, %239, %cst_277 {dimension_numbers = #tpu.dot_dimension_numbers<[1], [0], [0], [1], [0, 0, 1, 1], [], []>} : vector<4x128xbf16>, vector<128x256xbf16>, vector<4x256xf32> -> vector<4x256xf32>
    %241 = arith.addf %235, %240 : vector<4x256xf32>
    %c0_278 = arith.constant 0 : index
    %c2_279 = arith.constant 2 : index
    %c0_280 = arith.constant 0 : index
    %c0_281 = arith.constant 0 : index
    %242 = tpu.strided_load %arg20[%c0_278, %c2_279, %c0_280, %c0_281] {strides = array<i32: 1, 2, 2, 1>} : memref<1x6x6x128xf32, #tpu.memory_space<vmem>>, vector<1x2x2x128xf32>
    %243 = vector.shape_cast %242 : vector<1x2x2x128xf32> to vector<4x128xf32>
    %244 = arith.truncf %243 : vector<4x128xf32> to vector<4x128xbf16>
    %c768_282 = arith.constant 768 : index
    %c0_283 = arith.constant 0 : index
    %245 = vector.load %arg10[%c768_282, %c0_283] : memref<1152x256xbf16, #tpu.memory_space<vmem>>, vector<128x256xbf16>
    %cst_284 = arith.constant dense<0.000000e+00> : vector<4x256xf32>
    %246 = tpu.matmul %244, %245, %cst_284 {dimension_numbers = #tpu.dot_dimension_numbers<[1], [0], [0], [1], [0, 0, 1, 1], [], []>} : vector<4x128xbf16>, vector<128x256xbf16>, vector<4x256xf32> -> vector<4x256xf32>
    %247 = arith.addf %241, %246 : vector<4x256xf32>
    %c0_285 = arith.constant 0 : index
    %c2_286 = arith.constant 2 : index
    %c1_287 = arith.constant 1 : index
    %c0_288 = arith.constant 0 : index
    %248 = tpu.strided_load %arg20[%c0_285, %c2_286, %c1_287, %c0_288] {strides = array<i32: 1, 2, 2, 1>} : memref<1x6x6x128xf32, #tpu.memory_space<vmem>>, vector<1x2x2x128xf32>
    %249 = vector.shape_cast %248 : vector<1x2x2x128xf32> to vector<4x128xf32>
    %250 = arith.truncf %249 : vector<4x128xf32> to vector<4x128xbf16>
    %c896_289 = arith.constant 896 : index
    %c0_290 = arith.constant 0 : index
    %251 = vector.load %arg10[%c896_289, %c0_290] : memref<1152x256xbf16, #tpu.memory_space<vmem>>, vector<128x256xbf16>
    %cst_291 = arith.constant dense<0.000000e+00> : vector<4x256xf32>
    %252 = tpu.matmul %250, %251, %cst_291 {dimension_numbers = #tpu.dot_dimension_numbers<[1], [0], [0], [1], [0, 0, 1, 1], [], []>} : vector<4x128xbf16>, vector<128x256xbf16>, vector<4x256xf32> -> vector<4x256xf32>
    %253 = arith.addf %247, %252 : vector<4x256xf32>
    %c0_292 = arith.constant 0 : index
    %c2_293 = arith.constant 2 : index
    %c2_294 = arith.constant 2 : index
    %c0_295 = arith.constant 0 : index
    %254 = tpu.strided_load %arg20[%c0_292, %c2_293, %c2_294, %c0_295] {strides = array<i32: 1, 2, 2, 1>} : memref<1x6x6x128xf32, #tpu.memory_space<vmem>>, vector<1x2x2x128xf32>
    %255 = vector.shape_cast %254 : vector<1x2x2x128xf32> to vector<4x128xf32>
    %256 = arith.truncf %255 : vector<4x128xf32> to vector<4x128xbf16>
    %c1024_296 = arith.constant 1024 : index
    %c0_297 = arith.constant 0 : index
    %257 = vector.load %arg10[%c1024_296, %c0_297] : memref<1152x256xbf16, #tpu.memory_space<vmem>>, vector<128x256xbf16>
    %cst_298 = arith.constant dense<0.000000e+00> : vector<4x256xf32>
    %258 = tpu.matmul %256, %257, %cst_298 {dimension_numbers = #tpu.dot_dimension_numbers<[1], [0], [0], [1], [0, 0, 1, 1], [], []>} : vector<4x128xbf16>, vector<128x256xbf16>, vector<4x256xf32> -> vector<4x256xf32>
    %259 = arith.addf %253, %258 : vector<4x256xf32>
    %c0_299 = arith.constant 0 : index
    %c0_300 = arith.constant 0 : index
    %260 = vector.load %arg11[%c0_299, %c0_300] : memref<1x256xf32, #tpu.memory_space<vmem>>, vector<1x256xf32>
    %261 = vector.broadcast %260 : vector<1x256xf32> to vector<4x256xf32>
    %262 = arith.addf %259, %261 : vector<4x256xf32>
    %cst_301 = arith.constant 0.000000e+00 : f32
    %263 = vector.broadcast %cst_301 : f32 to vector<4x256xf32>
    %264 = arith.maximumf %262, %263 : vector<4x256xf32>
    %265 = arith.truncf %264 : vector<4x256xf32> to vector<4x256xbf16>
    %cst_302 = arith.constant 0.000000e+00 : f32
    %266 = vector.broadcast %cst_302 : f32 to vector<1x256xf32>
    %267 = vector.extract_strided_slice %265 {offsets = [0, 0], sizes = [1, 256], strides = [1, 1]} : vector<4x256xbf16> to vector<1x256xbf16>
    %c0_303 = arith.constant 0 : index
    %c0_304 = arith.constant 0 : index
    %268 = vector.load %arg12[%c0_303, %c0_304] : memref<1024x256xbf16, #tpu.memory_space<vmem>>, vector<256x256xbf16>
    %cst_305 = arith.constant dense<0.000000e+00> : vector<1x256xf32>
    %269 = tpu.matmul %267, %268, %cst_305 {dimension_numbers = #tpu.dot_dimension_numbers<[1], [0], [0], [1], [0, 0, 1, 1], [], []>} : vector<1x256xbf16>, vector<256x256xbf16>, vector<1x256xf32> -> vector<1x256xf32>
    %270 = arith.addf %266, %269 : vector<1x256xf32>
    %271 = vector.extract_strided_slice %265 {offsets = [1, 0], sizes = [1, 256], strides = [1, 1]} : vector<4x256xbf16> to vector<1x256xbf16>
    %c256_306 = arith.constant 256 : index
    %c0_307 = arith.constant 0 : index
    %272 = vector.load %arg12[%c256_306, %c0_307] : memref<1024x256xbf16, #tpu.memory_space<vmem>>, vector<256x256xbf16>
    %cst_308 = arith.constant dense<0.000000e+00> : vector<1x256xf32>
    %273 = tpu.matmul %271, %272, %cst_308 {dimension_numbers = #tpu.dot_dimension_numbers<[1], [0], [0], [1], [0, 0, 1, 1], [], []>} : vector<1x256xbf16>, vector<256x256xbf16>, vector<1x256xf32> -> vector<1x256xf32>
    %274 = arith.addf %270, %273 : vector<1x256xf32>
    %275 = vector.extract_strided_slice %265 {offsets = [2, 0], sizes = [1, 256], strides = [1, 1]} : vector<4x256xbf16> to vector<1x256xbf16>
    %c512_309 = arith.constant 512 : index
    %c0_310 = arith.constant 0 : index
    %276 = vector.load %arg12[%c512_309, %c0_310] : memref<1024x256xbf16, #tpu.memory_space<vmem>>, vector<256x256xbf16>
    %cst_311 = arith.constant dense<0.000000e+00> : vector<1x256xf32>
    %277 = tpu.matmul %275, %276, %cst_311 {dimension_numbers = #tpu.dot_dimension_numbers<[1], [0], [0], [1], [0, 0, 1, 1], [], []>} : vector<1x256xbf16>, vector<256x256xbf16>, vector<1x256xf32> -> vector<1x256xf32>
    %278 = arith.addf %274, %277 : vector<1x256xf32>
    %279 = vector.extract_strided_slice %265 {offsets = [3, 0], sizes = [1, 256], strides = [1, 1]} : vector<4x256xbf16> to vector<1x256xbf16>
    %c768_312 = arith.constant 768 : index
    %c0_313 = arith.constant 0 : index
    %280 = vector.load %arg12[%c768_312, %c0_313] : memref<1024x256xbf16, #tpu.memory_space<vmem>>, vector<256x256xbf16>
    %cst_314 = arith.constant dense<0.000000e+00> : vector<1x256xf32>
    %281 = tpu.matmul %279, %280, %cst_314 {dimension_numbers = #tpu.dot_dimension_numbers<[1], [0], [0], [1], [0, 0, 1, 1], [], []>} : vector<1x256xbf16>, vector<256x256xbf16>, vector<1x256xf32> -> vector<1x256xf32>
    %282 = arith.addf %278, %281 : vector<1x256xf32>
    %c0_315 = arith.constant 0 : index
    %c0_316 = arith.constant 0 : index
    %283 = vector.load %arg13[%c0_315, %c0_316] : memref<1x256xf32, #tpu.memory_space<vmem>>, vector<1x256xf32>
    %284 = arith.addf %282, %283 : vector<1x256xf32>
    %cst_317 = arith.constant 0.000000e+00 : f32
    %285 = vector.broadcast %cst_317 : f32 to vector<1x256xf32>
    %286 = arith.maximumf %284, %285 : vector<1x256xf32>
    %287 = arith.truncf %286 : vector<1x256xf32> to vector<1x256xbf16>
    %c0_318 = arith.constant 0 : index
    %c0_319 = arith.constant 0 : index
    %288 = vector.load %arg14[%c0_318, %c0_319] : memref<256x128xbf16, #tpu.memory_space<vmem>>, vector<256x128xbf16>
    %cst_320 = arith.constant dense<0.000000e+00> : vector<1x128xf32>
    %289 = tpu.matmul %287, %288, %cst_320 {dimension_numbers = #tpu.dot_dimension_numbers<[1], [0], [0], [1], [0, 0, 1, 1], [], []>} : vector<1x256xbf16>, vector<256x128xbf16>, vector<1x128xf32> -> vector<1x128xf32>
    %c0_321 = arith.constant 0 : index
    %c0_322 = arith.constant 0 : index
    %290 = vector.load %arg15[%c0_321, %c0_322] : memref<1x128xf32, #tpu.memory_space<vmem>>, vector<1x128xf32>
    %291 = arith.addf %289, %290 : vector<1x128xf32>
    %292 = vector.shape_cast %291 : vector<1x128xf32> to vector<1x1x128xf32>
    %293 = vector.shape_cast %292 : vector<1x1x128xf32> to vector<1x1x128xf32>
    %294 = vector.broadcast %293 : vector<1x1x128xf32> to vector<1x8x128xf32>
    %c0_323 = arith.constant 0 : index
    %c0_324 = arith.constant 0 : index
    %c0_325 = arith.constant 0 : index
    %295 = vector.load %arg16[%c0_323, %c0_324, %c0_325] : memref<1x8x128xf32, #tpu.memory_space<vmem>>, vector<1x8x128xf32>
    tpu.vector_store %arg16[%c0_323, %c0_324, %c0_325], %294 {strides = array<i32>} : memref<1x8x128xf32, #tpu.memory_space<vmem>>, vector<1x8x128xf32>,
    return
  }
  func.func @transform_0(%arg0: i32) -> (i32, i32, i32, i32) {
    %c0_i32 = arith.constant 0 : i32
    %c0_i32_0 = arith.constant 0 : i32
    %c0_i32_1 = arith.constant 0 : i32
    %c0_i32_2 = arith.constant 0 : i32
    return %arg0, %c0_i32, %c0_i32_0, %c0_i32_1 : i32, i32, i32, i32
  }
  func.func @transform_1(%arg0: i32) -> (i32, i32) {
    %c0_i32 = arith.constant 0 : i32
    %c0_i32_0 = arith.constant 0 : i32
    %c0_i32_1 = arith.constant 0 : i32
    return %c0_i32, %c0_i32_0 : i32, i32
  }
  func.func @transform_2(%arg0: i32) -> (i32, i32) {
    %c0_i32 = arith.constant 0 : i32
    %c0_i32_0 = arith.constant 0 : i32
    %c0_i32_1 = arith.constant 0 : i32
    return %c0_i32, %c0_i32_0 : i32, i32
  }
  func.func @transform_3(%arg0: i32) -> (i32, i32) {
    %c0_i32 = arith.constant 0 : i32
    %c0_i32_0 = arith.constant 0 : i32
    %c0_i32_1 = arith.constant 0 : i32
    return %c0_i32, %c0_i32_0 : i32, i32
  }
  func.func @transform_4(%arg0: i32) -> (i32, i32) {
    %c0_i32 = arith.constant 0 : i32
    %c0_i32_0 = arith.constant 0 : i32
    %c0_i32_1 = arith.constant 0 : i32
    return %c0_i32, %c0_i32_0 : i32, i32
  }
  func.func @transform_5(%arg0: i32) -> (i32, i32) {
    %c0_i32 = arith.constant 0 : i32
    %c0_i32_0 = arith.constant 0 : i32
    %c0_i32_1 = arith.constant 0 : i32
    return %c0_i32, %c0_i32_0 : i32, i32
  }
  func.func @transform_6(%arg0: i32) -> (i32, i32) {
    %c0_i32 = arith.constant 0 : i32
    %c0_i32_0 = arith.constant 0 : i32
    %c0_i32_1 = arith.constant 0 : i32
    return %c0_i32, %c0_i32_0 : i32, i32
  }
  func.func @transform_7(%arg0: i32) -> (i32, i32) {
    %c0_i32 = arith.constant 0 : i32
    %c0_i32_0 = arith.constant 0 : i32
    %c0_i32_1 = arith.constant 0 : i32
    return %c0_i32, %c0_i32_0 : i32, i32
  }
  func.func @transform_8(%arg0: i32) -> (i32, i32) {
    %c0_i32 = arith.constant 0 : i32
    %c0_i32_0 = arith.constant 0 : i32
    %c0_i32_1 = arith.constant 0 : i32
    return %c0_i32, %c0_i32_0 : i32, i32
  }
  func.func @transform_9(%arg0: i32) -> (i32, i32) {
    %c0_i32 = arith.constant 0 : i32
    %c0_i32_0 = arith.constant 0 : i32
    %c0_i32_1 = arith.constant 0 : i32
    return %c0_i32, %c0_i32_0 : i32, i32
  }
  func.func @transform_10(%arg0: i32) -> (i32, i32) {
    %c0_i32 = arith.constant 0 : i32
    %c0_i32_0 = arith.constant 0 : i32
    %c0_i32_1 = arith.constant 0 : i32
    return %c0_i32, %c0_i32_0 : i32, i32
  }
  func.func @transform_11(%arg0: i32) -> (i32, i32) {
    %c0_i32 = arith.constant 0 : i32
    %c0_i32_0 = arith.constant 0 : i32
    %c0_i32_1 = arith.constant 0 : i32
    return %c0_i32, %c0_i32_0 : i32, i32
  }
  func.func @transform_12(%arg0: i32) -> (i32, i32) {
    %c0_i32 = arith.constant 0 : i32
    %c0_i32_0 = arith.constant 0 : i32
    %c0_i32_1 = arith.constant 0 : i32
    return %c0_i32, %c0_i32_0 : i32, i32
  }
  func.func @transform_13(%arg0: i32) -> (i32, i32) {
    %c0_i32 = arith.constant 0 : i32
    %c0_i32_0 = arith.constant 0 : i32
    %c0_i32_1 = arith.constant 0 : i32
    return %c0_i32, %c0_i32_0 : i32, i32
  }
  func.func @transform_14(%arg0: i32) -> (i32, i32) {
    %c0_i32 = arith.constant 0 : i32
    %c0_i32_0 = arith.constant 0 : i32
    %c0_i32_1 = arith.constant 0 : i32
    return %c0_i32, %c0_i32_0 : i32, i32
  }
  func.func @transform_15(%arg0: i32) -> (i32, i32, i32) {
    %c0_i32 = arith.constant 0 : i32
    %c0_i32_0 = arith.constant 0 : i32
    %c0_i32_1 = arith.constant 0 : i32
    return %arg0, %c0_i32, %c0_i32_0 : i32, i32, i32
  }
}

</mosaic_0001>

<llo_original>
// kernel: repvgg_forward.1
$region0: #{repvgg_forward.1}
  #allocation0 [shape = 'u32[]', space=smem, size = 0x4, offset = 0x4, fixed_abs, tag = 'smem constant byte address 0x4 - core index']
  #allocation1 [shape = 'u32[144,128]{1,0:T(1,128)}', space=vmem, size = 0x12000, scoped, tag = 'internal scratch']
  #allocation2 [shape = 'f32[1,18,18,128]{3,2,1,0:T(8,128)}', space=vmem, size = 0x36000, scoped, tag = 'scratch operand']
  #allocation3 [shape = 'f32[1,18,18,128]{3,2,1,0:T(8,128)}', space=vmem, size = 0x36000, scoped, tag = 'scratch operand']
  #allocation4 [shape = 'f32[1,10,10,128]{3,2,1,0:T(8,128)}', space=vmem, size = 0x14000, scoped, tag = 'scratch operand']
  #allocation5 [shape = 'f32[1,6,6,128]{3,2,1,0:T(8,128)}', space=vmem, size = 0x6000, scoped, tag = 'scratch operand']
  %s0 = inlined_call_operand.vmem [shape: bf16[2,16,16,128], index: 0, kind: input, shape index: {}]
  %s1 = inlined_call_operand.vmem [shape: bf16[128,128], index: 1, kind: input, shape index: {}]
  %s2 = inlined_call_operand.vmem [shape: f32[1,128], index: 2, kind: input, shape index: {}]
  %s3 = inlined_call_operand.vmem [shape: bf16[1152,128], index: 3, kind: input, shape index: {}]
  %s4 = inlined_call_operand.vmem [shape: f32[1,128], index: 4, kind: input, shape index: {}]
  %s5 = inlined_call_operand.vmem [shape: bf16[1152,128], index: 5, kind: input, shape index: {}]
  %s6 = inlined_call_operand.vmem [shape: f32[1,128], index: 6, kind: input, shape index: {}]
  %s7 = inlined_call_operand.vmem [shape: bf16[1152,128], index: 7, kind: input, shape index: {}]
  %s8 = inlined_call_operand.vmem [shape: f32[1,128], index: 8, kind: input, shape index: {}]
  %s9 = inlined_call_operand.vmem [shape: bf16[1152,256], index: 9, kind: input, shape index: {}]
  %s10 = inlined_call_operand.vmem [shape: f32[1,256], index: 10, kind: input, shape index: {}]
  %s11 = inlined_call_operand.vmem [shape: bf16[1024,256], index: 11, kind: input, shape index: {}]
  %s12 = inlined_call_operand.vmem [shape: f32[1,256], index: 12, kind: input, shape index: {}]
  %s13 = inlined_call_operand.vmem [shape: bf16[256,128], index: 13, kind: input, shape index: {}]
  %s14 = inlined_call_operand.vmem [shape: f32[1,128], index: 14, kind: input, shape index: {}]
  %s15 = inlined_call_operand.vmem [shape: f32[2,8,128], index: 15, kind: output, shape index: {}]
  %s16 = sld [smem:[#allocation0]]
  $region93: #{repvgg_forward.1} parent=0
    _
  %s18 = ssub.s32 1, %s16
  %s19 = scalar_select 0, %s18, %s16
  loop: start=0, step=1, limit=4
  $region2: #{repvgg_forward.1} parent=0 // loop_pre_header
    _
  $region3: #{repvgg_forward.1} parent=0 // loop_header
    %s21 = sphi 0, %s25
    %p22 = scmp.ge.s32.totalorder %s21, 4
    %s31 = sphi 0, %s33
    %s34 = sphi 0, %s31
    %s35 = sphi 0, %s34
    %s51 = sphi 0, %s35
    %s55 = sphi 0, %s55
    %s57 = sphi 0, %s55
    %s58 = sphi 0, %s57
    %s72 = sphi 0, %s58
    %s76 = sphi 0, %s76
    %s78 = sphi 0, %s76
    %s79 = sphi 0, %s78
    %s93 = sphi 0, %s79
    %s97 = sphi 0, %s97
    %s99 = sphi 0, %s97
    %s100 = sphi 0, %s99
    %s114 = sphi 0, %s100
    %s118 = sphi 0, %s118
    %s120 = sphi 0, %s118
    %s121 = sphi 0, %s120
    %s135 = sphi 0, %s121
    %s139 = sphi 0, %s139
    %s141 = sphi 0, %s139
    %s142 = sphi 0, %s141
    %s156 = sphi 0, %s142
    %s160 = sphi 0, %s160
    %s162 = sphi 0, %s160
    %s163 = sphi 0, %s162
    %s177 = sphi 0, %s163
    %s181 = sphi 0, %s181
    %s183 = sphi 0, %s181
    %s184 = sphi 0, %s183
    %s198 = sphi 0, %s184
    %s202 = sphi 0, %s202
    %s204 = sphi 0, %s202
    %s205 = sphi 0, %s204
    %s219 = sphi 0, %s205
    %s223 = sphi 0, %s223
    %s225 = sphi 0, %s223
    %s226 = sphi 0, %s225
    %s240 = sphi 0, %s226
    %s244 = sphi 0, %s244
    %s246 = sphi 0, %s244
    %s247 = sphi 0, %s246
    %s261 = sphi 0, %s247
    %s265 = sphi 0, %s265
    %s267 = sphi 0, %s265
    %s268 = sphi 0, %s267
    %s282 = sphi 0, %s268
    %s286 = sphi 0, %s286
    %s288 = sphi 0, %s286
    %s289 = sphi 0, %s288
    %s303 = sphi 0, %s289
    %s307 = sphi 0, %s307
    %s309 = sphi 0, %s307
    %s310 = sphi 0, %s309
    %s324 = sphi 0, %s310
    %s328 = sphi 0, %s328
    %s330 = sphi 0, %s328
    %s331 = sphi 0, %s330
    %s345 = sphi 0, %s331
    %s351 = sphi 0, %s353
    %s354 = sphi 0, %s351
    %s355 = sphi 0, %s354
    %s371 = sphi 0, %s355
  $region4: #{repvgg_forward.1} parent=0 // loop_header_branch
    %24 = sbr.rel (%p22) target = $region8
  $region5: #{repvgg_forward.1} parent=0 // loop_body
    %s26 = ssub.s32 %s21, 1
    %s27 = ssub.s32 %s21, 2
    %s28 = sadd.s32 %s21, 1
    %s29 = ssub.s32 %s21, %s28
    %p30 = scmp.eq.s32.totalorder %s29, 0
    %s32 = sadd.s32 %s31, 1
    %s33 = scalar_select %p30, %s31, %s32
    %p36 = pneg %p30
    %p37 = scmp.eq.s32.totalorder %s21, 1
    %p38 = por %p36, %p37
    %p39 = scmp.ne.s32.totalorder %s31, %s34
    %p40 = scmp.eq.s32.totalorder %s21, 0
    %p41 = por %p39, %p40
    %p42 = scmp.ne.s32.totalorder %s31, %s34
    %p43 = scmp.eq.s32.totalorder %s26, 1
    %p44 = por %p42, %p43
    %p45 = scmp.ne.s32.totalorder %s34, %s35
    %p46 = scmp.eq.s32.totalorder %s26, 0
    %p47 = por %p45, %p46
    %p48 = scmp.ne.s32.totalorder %s34, %s35
    %p49 = scmp.eq.s32.totalorder %s27, 1
    %p50 = por %p48, %p49
    %p52 = scmp.ne.s32.totalorder %s35, %s51
    %p53 = scmp.eq.s32.totalorder %s27, 0
    %p54 = por %p52, %p53
    %s56 = sadd.s32 %s55, 1
    %p59 = scmp.eq.s32.totalorder %s21, 1
    %p60 = scmp.ne.s32.totalorder %s55, %s57
    %p61 = scmp.eq.s32.totalorder %s21, 0
    %p62 = por %p60, %p61
    %p63 = scmp.ne.s32.totalorder %s55, %s57
    %p64 = scmp.eq.s32.totalorder %s26, 1
    %p65 = por %p63, %p64
    %p66 = scmp.ne.s32.totalorder %s57, %s58
    %p67 = scmp.eq.s32.totalorder %s26, 0
    %p68 = por %p66, %p67
    %p69 = scmp.ne.s32.totalorder %s57, %s58
    %p70 = scmp.eq.s32.totalorder %s27, 1
    %p71 = por %p69, %p70
    %p73 = scmp.ne.s32.totalorder %s58, %s72
    %p74 = scmp.eq.s32.totalorder %s27, 0
    %p75 = por %p73, %p74
    %s77 = sadd.s32 %s76, 1
    %p80 = scmp.eq.s32.totalorder %s21, 1
    %p81 = scmp.ne.s32.totalorder %s76, %s78
    %p82 = scmp.eq.s32.totalorder %s21, 0
    %p83 = por %p81, %p82
    %p84 = scmp.ne.s32.totalorder %s76, %s78
    %p85 = scmp.eq.s32.totalorder %s26, 1
    %p86 = por %p84, %p85
    %p87 = scmp.ne.s32.totalorder %s78, %s79
    %p88 = scmp.eq.s32.totalorder %s26, 0
    %p89 = por %p87, %p88
    %p90 = scmp.ne.s32.totalorder %s78, %s79
    %p91 = scmp.eq.s32.totalorder %s27, 1
    %p92 = por %p90, %p91
    %p94 = scmp.ne.s32.totalorder %s79, %s93
    %p95 = scmp.eq.s32.totalorder %s27, 0
    %p96 = por %p94, %p95
    %s98 = sadd.s32 %s97, 1
    %p101 = scmp.eq.s32.totalorder %s21, 1
    %p102 = scmp.ne.s32.totalorder %s97, %s99
    %p103 = scmp.eq.s32.totalorder %s21, 0
    %p104 = por %p102, %p103
    %p105 = scmp.ne.s32.totalorder %s97, %s99
    %p106 = scmp.eq.s32.totalorder %s26, 1
    %p107 = por %p105, %p106
    %p108 = scmp.ne.s32.totalorder %s99, %s100
    %p109 = scmp.eq.s32.totalorder %s26, 0
    %p110 = por %p108, %p109
    %p111 = scmp.ne.s32.totalorder %s99, %s100
    %p112 = scmp.eq.s32.totalorder %s27, 1
    %p113 = por %p111, %p112
    %p115 = scmp.ne.s32.totalorder %s100, %s114
    %p116 = scmp.eq.s32.totalorder %s27, 0
    %p117 = por %p115, %p116
    %s119 = sadd.s32 %s118, 1
    %p122 = scmp.eq.s32.totalorder %s21, 1
    %p123 = scmp.ne.s32.totalorder %s118, %s120
    %p124 = scmp.eq.s32.totalorder %s21, 0
    %p125 = por %p123, %p124
    %p126 = scmp.ne.s32.totalorder %s118, %s120
    %p127 = scmp.eq.s32.totalorder %s26, 1
    %p128 = por %p126, %p127
    %p129 = scmp.ne.s32.totalorder %s120, %s121
    %p130 = scmp.eq.s32.totalorder %s26, 0
    %p131 = por %p129, %p130
    %p132 = scmp.ne.s32.totalorder %s120, %s121
    %p133 = scmp.eq.s32.totalorder %s27, 1
    %p134 = por %p132, %p133
    %p136 = scmp.ne.s32.totalorder %s121, %s135
    %p137 = scmp.eq.s32.totalorder %s27, 0
    %p138 = por %p136, %p137
    %s140 = sadd.s32 %s139, 1
    %p143 = scmp.eq.s32.totalorder %s21, 1
    %p144 = scmp.ne.s32.totalorder %s139, %s141
    %p145 = scmp.eq.s32.totalorder %s21, 0
    %p146 = por %p144, %p145
    %p147 = scmp.ne.s32.totalorder %s139, %s141
    %p148 = scmp.eq.s32.totalorder %s26, 1
    %p149 = por %p147, %p148
    %p150 = scmp.ne.s32.totalorder %s141, %s142
    %p151 = scmp.eq.s32.totalorder %s26, 0
    %p152 = por %p150, %p151
    %p153 = scmp.ne.s32.totalorder %s141, %s142
    %p154 = scmp.eq.s32.totalorder %s27, 1
    %p155 = por %p153, %p154
    %p157 = scmp.ne.s32.totalorder %s142, %s156
    %p158 = scmp.eq.s32.totalorder %s27, 0
    %p159 = por %p157, %p158
    %s161 = sadd.s32 %s160, 1
    %p164 = scmp.eq.s32.totalorder %s21, 1
    %p165 = scmp.ne.s32.totalorder %s160, %s162
    %p166 = scmp.eq.s32.totalorder %s21, 0
    %p167 = por %p165, %p166
    %p168 = scmp.ne.s32.totalorder %s160, %s162
    %p169 = scmp.eq.s32.totalorder %s26, 1
    %p170 = por %p168, %p169
    %p171 = scmp.ne.s32.totalorder %s162, %s163
    %p172 = scmp.eq.s32.totalorder %s26, 0
    %p173 = por %p171, %p172
    %p174 = scmp.ne.s32.totalorder %s162, %s163
    %p175 = scmp.eq.s32.totalorder %s27, 1
    %p176 = por %p174, %p175
    %p178 = scmp.ne.s32.totalorder %s163, %s177
    %p179 = scmp.eq.s32.totalorder %s27, 0
    %p180 = por %p178, %p179
    %s182 = sadd.s32 %s181, 1
    %p185 = scmp.eq.s32.totalorder %s21, 1
    %p186 = scmp.ne.s32.totalorder %s181, %s183
    %p187 = scmp.eq.s32.totalorder %s21, 0
    %p188 = por %p186, %p187
    %p189 = scmp.ne.s32.totalorder %s181, %s183
    %p190 = scmp.eq.s32.totalorder %s26, 1
    %p191 = por %p189, %p190
    %p192 = scmp.ne.s32.totalorder %s183, %s184
    %p193 = scmp.eq.s32.totalorder %s26, 0
    %p194 = por %p192, %p193
    %p195 = scmp.ne.s32.totalorder %s183, %s184
    %p196 = scmp.eq.s32.totalorder %s27, 1
    %p197 = por %p195, %p196
    %p199 = scmp.ne.s32.totalorder %s184, %s198
    %p200 = scmp.eq.s32.totalorder %s27, 0
    %p201 = por %p199, %p200
    %s203 = sadd.s32 %s202, 1
    %p206 = scmp.eq.s32.totalorder %s21, 1
    %p207 = scmp.ne.s32.totalorder %s202, %s204
    %p208 = scmp.eq.s32.totalorder %s21, 0
    %p209 = por %p207, %p208
    %p210 = scmp.ne.s32.totalorder %s202, %s204
    %p211 = scmp.eq.s32.totalorder %s26, 1
    %p212 = por %p210, %p211
    %p213 = scmp.ne.s32.totalorder %s204, %s205
    %p214 = scmp.eq.s32.totalorder %s26, 0
    %p215 = por %p213, %p214
    %p216 = scmp.ne.s32.totalorder %s204, %s205
    %p217 = scmp.eq.s32.totalorder %s27, 1
    %p218 = por %p216, %p217
    %p220 = scmp.ne.s32.totalorder %s205, %s219
    %p221 = scmp.eq.s32.totalorder %s27, 0
    %p222 = por %p220, %p221
    %s224 = sadd.s32 %s223, 1
    %p227 = scmp.eq.s32.totalorder %s21, 1
    %p228 = scmp.ne.s32.totalorder %s223, %s225
    %p229 = scmp.eq.s32.totalorder %s21, 0
    %p230 = por %p228, %p229
    %p231 = scmp.ne.s32.totalorder %s223, %s225
    %p232 = scmp.eq.s32.totalorder %s26, 1
    %p233 = por %p231, %p232
    %p234 = scmp.ne.s32.totalorder %s225, %s226
    %p235 = scmp.eq.s32.totalorder %s26, 0
    %p236 = por %p234, %p235
    %p237 = scmp.ne.s32.totalorder %s225, %s226
    %p238 = scmp.eq.s32.totalorder %s27, 1
    %p239 = por %p237, %p238
    %p241 = scmp.ne.s32.totalorder %s226, %s240
    %p242 = scmp.eq.s32.totalorder %s27, 0
    %p243 = por %p241, %p242
    %s245 = sadd.s32 %s244, 1
    %p248 = scmp.eq.s32.totalorder %s21, 1
    %p249 = scmp.ne.s32.totalorder %s244, %s246
    %p250 = scmp.eq.s32.totalorder %s21, 0
    %p251 = por %p249, %p250
    %p252 = scmp.ne.s32.totalorder %s244, %s246
    %p253 = scmp.eq.s32.totalorder %s26, 1
    %p254 = por %p252, %p253
    %p255 = scmp.ne.s32.totalorder %s246, %s247
    %p256 = scmp.eq.s32.totalorder %s26, 0
    %p257 = por %p255, %p256
    %p258 = scmp.ne.s32.totalorder %s246, %s247
    %p259 = scmp.eq.s32.totalorder %s27, 1
    %p260 = por %p258, %p259
    %p262 = scmp.ne.s32.totalorder %s247, %s261
    %p263 = scmp.eq.s32.totalorder %s27, 0
    %p264 = por %p262, %p263
    %s266 = sadd.s32 %s265, 1
    %p269 = scmp.eq.s32.totalorder %s21, 1
    %p270 = scmp.ne.s32.totalorder %s265, %s267
    %p271 = scmp.eq.s32.totalorder %s21, 0
    %p272 = por %p270, %p271
    %p273 = scmp.ne.s32.totalorder %s265, %s267
    %p274 = scmp.eq.s32.totalorder %s26, 1
    %p275 = por %p273, %p274
    %p276 = scmp.ne.s32.totalorder %s267, %s268
    %p277 = scmp.eq.s32.totalorder %s26, 0
    %p278 = por %p276, %p277
    %p279 = scmp.ne.s32.totalorder %s267, %s268
    %p280 = scmp.eq.s32.totalorder %s27, 1
    %p281 = por %p279, %p280
    %p283 = scmp.ne.s32.totalorder %s268, %s282
    %p284 = scmp.eq.s32.totalorder %s27, 0
    %p285 = por %p283, %p284
    %s287 = sadd.s32 %s286, 1
    %p290 = scmp.eq.s32.totalorder %s21, 1
    %p291 = scmp.ne.s32.totalorder %s286, %s288
    %p292 = scmp.eq.s32.totalorder %s21, 0
    %p293 = por %p291, %p292
    %p294 = scmp.ne.s32.totalorder %s286, %s288
    %p295 = scmp.eq.s32.totalorder %s26, 1
    %p296 = por %p294, %p295
    %p297 = scmp.ne.s32.totalorder %s288, %s289
    %p298 = scmp.eq.s32.totalorder %s26, 0
    %p299 = por %p297, %p298
    %p300 = scmp.ne.s32.totalorder %s288, %s289
    %p301 = scmp.eq.s32.totalorder %s27, 1
    %p302 = por %p300, %p301
    %p304 = scmp.ne.s32.totalorder %s289, %s303
    %p305 = scmp.eq.s32.totalorder %s27, 0
    %p306 = por %p304, %p305
    %s308 = sadd.s32 %s307, 1
    %p311 = scmp.eq.s32.totalorder %s21, 1
    %p312 = scmp.ne.s32.totalorder %s307, %s309
    %p313 = scmp.eq.s32.totalorder %s21, 0
    %p314 = por %p312, %p313
    %p315 = scmp.ne.s32.totalorder %s307, %s309
    %p316 = scmp.eq.s32.totalorder %s26, 1
    %p317 = por %p315, %p316
    %p318 = scmp.ne.s32.totalorder %s309, %s310
    %p319 = scmp.eq.s32.totalorder %s26, 0
    %p320 = por %p318, %p319
    %p321 = scmp.ne.s32.totalorder %s309, %s310
    %p322 = scmp.eq.s32.totalorder %s27, 1
    %p323 = por %p321, %p322
    %p325 = scmp.ne.s32.totalorder %s310, %s324
    %p326 = scmp.eq.s32.totalorder %s27, 0
    %p327 = por %p325, %p326
    %s329 = sadd.s32 %s328, 1
    %p332 = scmp.eq.s32.totalorder %s21, 1
    %p333 = scmp.ne.s32.totalorder %s328, %s330
    %p334 = scmp.eq.s32.totalorder %s21, 0
    %p335 = por %p333, %p334
    %p336 = scmp.ne.s32.totalorder %s328, %s330
    %p337 = scmp.eq.s32.totalorder %s26, 1
    %p338 = por %p336, %p337
    %p339 = scmp.ne.s32.totalorder %s330, %s331
    %p340 = scmp.eq.s32.totalorder %s26, 0
    %p341 = por %p339, %p340
    %p342 = scmp.ne.s32.totalorder %s330, %s331
    %p343 = scmp.eq.s32.totalorder %s27, 1
    %p344 = por %p342, %p343
    %p346 = scmp.ne.s32.totalorder %s331, %s345
    %p347 = scmp.eq.s32.totalorder %s27, 0
    %p348 = por %p346, %p347
    %s349 = ssub.s32 %s21, %s28
    %p350 = scmp.eq.s32.totalorder %s349, 0
    %s352 = sadd.s32 %s351, 1
    %s353 = scalar_select %p350, %s351, %s352
    %p356 = pneg %p350
    %p357 = scmp.eq.s32.totalorder %s21, 1
    %p358 = por %p356, %p357
    %p359 = scmp.ne.s32.totalorder %s351, %s354
    %p360 = scmp.eq.s32.totalorder %s21, 0
    %p361 = por %p359, %p360
    %p362 = scmp.ne.s32.totalorder %s351, %s354
    %p363 = scmp.eq.s32.totalorder %s26, 1
    %p364 = por %p362, %p363
    %p365 = scmp.ne.s32.totalorder %s354, %s355
    %p366 = scmp.eq.s32.totalorder %s26, 0
    %p367 = por %p365, %p366
    %p368 = scmp.ne.s32.totalorder %s354, %s355
    %p369 = scmp.eq.s32.totalorder %s27, 1
    %p370 = por %p368, %p369
    %p372 = scmp.ne.s32.totalorder %s355, %s371
    %p373 = scmp.eq.s32.totalorder %s27, 0
    %p374 = por %p372, %p373
    %p375 = scmp.le.s32.totalorder 1, %s21
    %p376 = scmp.lt.s32.totalorder %s21, 3
    %p377 = pnand %p375, %p376
    %p378 = pneg %p377
    // Predicated region
    $region9: #{repvgg_forward.1} parent=5 // pred_check
      _
    $region10: #{repvgg_forward.1} parent=5 // pred_check_branch
      %380 = sbr.rel (%p377) target = $region12
    $region11: #{repvgg_forward.1} parent=5 // pred_region
      %s381 = ssub.s32 %s21, 1
      // Predicated region
      $region13: #{repvgg_forward.1} parent=11 // pred_check
        %p382 = pneg %p68
      $region14: #{repvgg_forward.1} parent=11 // pred_check_branch
        %384 = sbr.rel (%p382) target = $region16
      $region15: #{repvgg_forward.1} parent=11 // pred_region
        _
      $region16: #{repvgg_forward.1} parent=11 // pred_fallthru
        _
      // Predicated region
      $region17: #{repvgg_forward.1} parent=11 // pred_check
        %p385 = pneg %p89
      $region18: #{repvgg_forward.1} parent=11 // pred_check_branch
        %387 = sbr.rel (%p385) target = $region20
      $region19: #{repvgg_forward.1} parent=11 // pred_region
        _
      $region20: #{repvgg_forward.1} parent=11 // pred_fallthru
        _
      // Predicated region
      $region21: #{repvgg_forward.1} parent=11 // pred_check
        %p388 = pneg %p110
      $region22: #{repvgg_forward.1} parent=11 // pred_check_branch
        %390 = sbr.rel (%p388) target = $region24
      $region23: #{repvgg_forward.1} parent=11 // pred_region
        _
      $region24: #{repvgg_forward.1} parent=11 // pred_fallthru
        _
      // Predicated region
      $region25: #{repvgg_forward.1} parent=11 // pred_check
        %p391 = pneg %p131
      $region26: #{repvgg_forward.1} parent=11 // pred_check_branch
        %393 = sbr.rel (%p391) target = $region28
      $region27: #{repvgg_forward.1} parent=11 // pred_region
        _
      $region28: #{repvgg_forward.1} parent=11 // pred_fallthru
        _
      // Predicated region
      $region29: #{repvgg_forward.1} parent=11 // pred_check
        %p394 = pneg %p152
      $region30: #{repvgg_forward.1} parent=11 // pred_check_branch
        %396 = sbr.rel (%p394) target = $region32
      $region31: #{repvgg_forward.1} parent=11 // pred_region
        _
      $region32: #{repvgg_forward.1} parent=11 // pred_fallthru
        _
      // Predicated region
      $region33: #{repvgg_forward.1} parent=11 // pred_check
        %p397 = pneg %p173
      $region34: #{repvgg_forward.1} parent=11 // pred_check_branch
        %399 = sbr.rel (%p397) target = $region36
      $region35: #{repvgg_forward.1} parent=11 // pred_region
        _
      $region36: #{repvgg_forward.1} parent=11 // pred_fallthru
        _
      // Predicated region
      $region37: #{repvgg_forward.1} parent=11 // pred_check
        %p400 = pneg %p194
      $region38: #{repvgg_forward.1} parent=11 // pred_check_branch
        %402 = sbr.rel (%p400) target = $region40
      $region39: #{repvgg_forward.1} parent=11 // pred_region
        _
      $region40: #{repvgg_forward.1} parent=11 // pred_fallthru
        _
      // Predicated region
      $region41: #{repvgg_forward.1} parent=11 // pred_check
        %p403 = pneg %p215
      $region42: #{repvgg_forward.1} parent=11 // pred_check_branch
        %405 = sbr.rel (%p403) target = $region44
      $region43: #{repvgg_forward.1} parent=11 // pred_region
        _
      $region44: #{repvgg_forward.1} parent=11 // pred_fallthru
        _
      // Predicated region
      $region45: #{repvgg_forward.1} parent=11 // pred_check
        %p406 = pneg %p236
      $region46: #{repvgg_forward.1} parent=11 // pred_check_branch
        %408 = sbr.rel (%p406) target = $region48
      $region47: #{repvgg_forward.1} parent=11 // pred_region
        _
      $region48: #{repvgg_forward.1} parent=11 // pred_fallthru
        _
      // Predicated region
      $region49: #{repvgg_forward.1} parent=11 // pred_check
        %p409 = pneg %p257
      $region50: #{repvgg_forward.1} parent=11 // pred_check_branch
        %411 = sbr.rel (%p409) target = $region52
      $region51: #{repvgg_forward.1} parent=11 // pred_region
        _
      $region52: #{repvgg_forward.1} parent=11 // pred_fallthru
        _
      // Predicated region
      $region53: #{repvgg_forward.1} parent=11 // pred_check
        %p412 = pneg %p278
      $region54: #{repvgg_forward.1} parent=11 // pred_check_branch
        %414 = sbr.rel (%p412) target = $region56
      $region55: #{repvgg_forward.1} parent=11 // pred_region
        _
      $region56: #{repvgg_forward.1} parent=11 // pred_fallthru
        _
      // Predicated region
      $region57: #{repvgg_forward.1} parent=11 // pred_check
        %p415 = pneg %p299
      $region58: #{repvgg_forward.1} parent=11 // pred_check_branch
        %417 = sbr.rel (%p415) target = $region60
      $region59: #{repvgg_forward.1} parent=11 // pred_region
        _
      $region60: #{repvgg_forward.1} parent=11 // pred_fallthru
        _
      // Predicated region
      $region61: #{repvgg_forward.1} parent=11 // pred_check
        %p418 = pneg %p320
      $region62: #{repvgg_forward.1} parent=11 // pred_check_branch
        %420 = sbr.rel (%p418) target = $region64
      $region63: #{repvgg_forward.1} parent=11 // pred_region
        _
      $region64: #{repvgg_forward.1} parent=11 // pred_fallthru
        _
      // Predicated region
      $region65: #{repvgg_forward.1} parent=11 // pred_check
        %p421 = pneg %p341
      $region66: #{repvgg_forward.1} parent=11 // pred_check_branch
        %423 = sbr.rel (%p421) target = $region68
      $region67: #{repvgg_forward.1} parent=11 // pred_region
        _
      $region68: #{repvgg_forward.1} parent=11 // pred_fallthru
        _
    $region12: #{repvgg_forward.1} parent=5 // pred_fallthru
      _
    %p424 = scmp.lt.s32.totalorder %s21, 2
    // Predicated region
    $region69: #{repvgg_forward.1} parent=5 // pred_check
      %p425 = pneg %p424
    $region70: #{repvgg_forward.1} parent=5 // pred_check_branch
      %427 = sbr.rel (%p425) target = $region72
    $region71: #{repvgg_forward.1} parent=5 // pred_region
      // Predicated region
      $region73: #{repvgg_forward.1} parent=71 // pred_check
        %p428 = pneg %p41
      $region74: #{repvgg_forward.1} parent=71 // pred_check_branch
        %430 = sbr.rel (%p428) target = $region76
      $region75: #{repvgg_forward.1} parent=71 // pred_region
        %p431 = scmp.lt.s32.totalorder %s21, 1
        %s432 = scalar_select %p431, %s21, 1
        %s433 = smul.addr %s432, 32
        %s434 = smul.addr %s433, 4
        %s435 = scalar_lea.vmem %s0, %s434
      $region76: #{repvgg_forward.1} parent=71 // pred_fallthru
        _
    $region72: #{repvgg_forward.1} parent=5 // pred_fallthru
      _
    %p436 = scmp.le.s32.totalorder 1, %s21
    %p437 = scmp.lt.s32.totalorder %s21, 3
    %p438 = pnand %p436, %p437
    %p439 = pneg %p438
    // Predicated region
    $region77: #{repvgg_forward.1} parent=5 // pred_check
      _
    $region78: #{repvgg_forward.1} parent=5 // pred_check_branch
      %441 = sbr.rel (%p438) target = $region80
    $region79: #{repvgg_forward.1} parent=5 // pred_region
      %s442 = ssub.s32 %s21, 1
      %p443 = scmp.lt.s32.totalorder %s26, 1
      %s444 = scalar_select %p443, %s26, 1
      %s445 = smul.addr %s444, 32
      %s446 = smul.addr %s445, 4
      %s447 = scalar_lea.vmem %s0, %s446
      %p448 = pneg %p47
      %p449 = pneg %p44
      %p450 = pneg %p68
      %p451 = pneg %p65
      %p452 = pneg %p89
      %p453 = pneg %p86
      %p454 = pneg %p110
      %p455 = pneg %p107
      %p456 = pneg %p131
      %p457 = pneg %p128
      %p458 = pneg %p152
      %p459 = pneg %p149
      %p460 = pneg %p173
      %p461 = pneg %p170
      %p462 = pneg %p194
      %p463 = pneg %p191
      %p464 = pneg %p215
      %p465 = pneg %p212
      %p466 = pneg %p236
      %p467 = pneg %p233
      %p468 = pneg %p257
      %p469 = pneg %p254
      %p470 = pneg %p278
      %p471 = pneg %p275
      %p472 = pneg %p299
      %p473 = pneg %p296
      %p474 = pneg %p320
      %p475 = pneg %p317
      %p476 = pneg %p341
      %p477 = pneg %p338
      %p478 = pneg %p367
      %p479 = pneg %p364
      %p480 = scmp.lt.s32.totalorder %s26, 1
      %s481 = scalar_select %p480, %s26, 1
      %s482 = smul.addr %s481, 8
      %s483 = scalar_lea.vmem %s15, %s482
      %p484 = scmp.lt.s32.totalorder %s26, 1
      %s485 = scalar_select %p484, %s26, 1
      %s486 = smul.addr %s485, 32
      %s487 = smul.addr %s486, 4
      %s488 = scalar_lea.vmem %s0, %s487
      %p489 = scmp.lt.s32.totalorder %s26, 1
      %s490 = scalar_select %p489, %s26, 1
      %s491 = smul.addr %s490, 8
      %s492 = scalar_lea.vmem %s15, %s491
      %494 = vst [vmem:[#allocation2] sm:$0xff] 0.0
      %495 = vst [vmem:[#allocation2 + $0x8] sm:$0xff] 0.0
      %496 = vst [vmem:[#allocation2 + $0x10] sm:$0x3] 0.0
      %497 = vst [vmem:[#allocation2 + $0x18] sm:$0xff] 0.0
      %498 = vst [vmem:[#allocation2 + $0x20] sm:$0xff] 0.0
      %499 = vst [vmem:[#allocation2 + $0x28] sm:$0x3] 0.0
      %500 = vst [vmem:[#allocation2 + $0x30] sm:$0xff] 0.0
      %501 = vst [vmem:[#allocation2 + $0x38] sm:$0xff] 0.0
      %502 = vst [vmem:[#allocation2 + $0x40] sm:$0x3] 0.0
      %503 = vst [vmem:[#allocation2 + $0x48] sm:$0xff] 0.0
      %504 = vst [vmem:[#allocation2 + $0x50] sm:$0xff] 0.0
      %505 = vst [vmem:[#allocation2 + $0x58] sm:$0x3] 0.0
      %506 = vst [vmem:[#allocation2 + $0x60] sm:$0xff] 0.0
      %507 = vst [vmem:[#allocation2 + $0x68] sm:$0xff] 0.0
      %508 = vst [vmem:[#allocation2 + $0x70] sm:$0x3] 0.0
      %509 = vst [vmem:[#allocation2 + $0x78] sm:$0xff] 0.0
      %510 = vst [vmem:[#allocation2 + $0x80] sm:$0xff] 0.0
      %511 = vst [vmem:[#allocation2 + $0x88] sm:$0x3] 0.0
      %512 = vst [vmem:[#allocation2 + $0x90] sm:$0xff] 0.0
      %513 = vst [vmem:[#allocation2 + $0x98] sm:$0xff] 0.0
      %514 = vst [vmem:[#allocation2 + $0xa0] sm:$0x3] 0.0
      %515 = vst [vmem:[#allocation2 + $0xa8] sm:$0xff] 0.0
      %516 = vst [vmem:[#allocation2 + $0xb0] sm:$0xff] 0.0
      %517 = vst [vmem:[#allocation2 + $0xb8] sm:$0x3] 0.0
      %518 = vst [vmem:[#allocation2 + $0xc0] sm:$0xff] 0.0
      %519 = vst [vmem:[#allocation2 + $0xc8] sm:$0xff] 0.0
      %520 = vst [vmem:[#allocation2 + $0xd0] sm:$0x3] 0.0
      %521 = vst [vmem:[#allocation2 + $0xd8] sm:$0xff] 0.0
      %522 = vst [vmem:[#allocation2 + $0xe0] sm:$0xff] 0.0
      %523 = vst [vmem:[#allocation2 + $0xe8] sm:$0x3] 0.0
      %524 = vst [vmem:[#allocation2 + $0xf0] sm:$0xff] 0.0
      %525 = vst [vmem:[#allocation2 + $0xf8] sm:$0xff] 0.0
      %526 = vst [vmem:[#allocation2 + $0x100] sm:$0x3] 0.0
      %527 = vst [vmem:[#allocation2 + $0x108] sm:$0xff] 0.0
      %528 = vst [vmem:[#allocation2 + $0x110] sm:$0xff] 0.0
      %529 = vst [vmem:[#allocation2 + $0x118] sm:$0x3] 0.0
      %530 = vst [vmem:[#allocation2 + $0x120] sm:$0xff] 0.0
      %531 = vst [vmem:[#allocation2 + $0x128] sm:$0xff] 0.0
      %532 = vst [vmem:[#allocation2 + $0x130] sm:$0x3] 0.0
      %533 = vst [vmem:[#allocation2 + $0x138] sm:$0xff] 0.0
      %534 = vst [vmem:[#allocation2 + $0x140] sm:$0xff] 0.0
      %535 = vst [vmem:[#allocation2 + $0x148] sm:$0x3] 0.0
      %536 = vst [vmem:[#allocation2 + $0x150] sm:$0xff] 0.0
      %537 = vst [vmem:[#allocation2 + $0x158] sm:$0xff] 0.0
      %538 = vst [vmem:[#allocation2 + $0x160] sm:$0x3] 0.0
      %539 = vst [vmem:[#allocation2 + $0x168] sm:$0xff] 0.0
      %540 = vst [vmem:[#allocation2 + $0x170] sm:$0xff] 0.0
      %541 = vst [vmem:[#allocation2 + $0x178] sm:$0x3] 0.0
      %542 = vst [vmem:[#allocation2 + $0x180] sm:$0xff] 0.0
      %543 = vst [vmem:[#allocation2 + $0x188] sm:$0xff] 0.0
      %544 = vst [vmem:[#allocation2 + $0x190] sm:$0x3] 0.0
      %545 = vst [vmem:[#allocation2 + $0x198] sm:$0xff] 0.0
      %546 = vst [vmem:[#allocation2 + $0x1a0] sm:$0xff] 0.0
      %547 = vst [vmem:[#allocation2 + $0x1a8] sm:$0x3] 0.0
      %548 = vst [vmem:[#allocation3] sm:$0xff] 0.0
      %549 = vst [vmem:[#allocation3 + $0x8] sm:$0xff] 0.0
      %550 = vst [vmem:[#allocation3 + $0x10] sm:$0x3] 0.0
      %551 = vst [vmem:[#allocation3 + $0x18] sm:$0xff] 0.0
      %552 = vst [vmem:[#allocation3 + $0x20] sm:$0xff] 0.0
      %553 = vst [vmem:[#allocation3 + $0x28] sm:$0x3] 0.0
      %554 = vst [vmem:[#allocation3 + $0x30] sm:$0xff] 0.0
      %555 = vst [vmem:[#allocation3 + $0x38] sm:$0xff] 0.0
      %556 = vst [vmem:[#allocation3 + $0x40] sm:$0x3] 0.0
      %557 = vst [vmem:[#allocation3 + $0x48] sm:$0xff] 0.0
      %558 = vst [vmem:[#allocation3 + $0x50] sm:$0xff] 0.0
      %559 = vst [vmem:[#allocation3 + $0x58] sm:$0x3] 0.0
      %560 = vst [vmem:[#allocation3 + $0x60] sm:$0xff] 0.0
      %561 = vst [vmem:[#allocation3 + $0x68] sm:$0xff] 0.0
      %562 = vst [vmem:[#allocation3 + $0x70] sm:$0x3] 0.0
      %563 = vst [vmem:[#allocation3 + $0x78] sm:$0xff] 0.0
      %564 = vst [vmem:[#allocation3 + $0x80] sm:$0xff] 0.0
      %565 = vst [vmem:[#allocation3 + $0x88] sm:$0x3] 0.0
      %566 = vst [vmem:[#allocation3 + $0x90] sm:$0xff] 0.0
      %567 = vst [vmem:[#allocation3 + $0x98] sm:$0xff] 0.0
      %568 = vst [vmem:[#allocation3 + $0xa0] sm:$0x3] 0.0
      %569 = vst [vmem:[#allocation3 + $0xa8] sm:$0xff] 0.0
      %570 = vst [vmem:[#allocation3 + $0xb0] sm:$0xff] 0.0
      %571 = vst [vmem:[#allocation3 + $0xb8] sm:$0x3] 0.0
      %572 = vst [vmem:[#allocation3 + $0xc0] sm:$0xff] 0.0
      %573 = vst [vmem:[#allocation3 + $0xc8] sm:$0xff] 0.0
      %574 = vst [vmem:[#allocation3 + $0xd0] sm:$0x3] 0.0
      %575 = vst [vmem:[#allocation3 + $0xd8] sm:$0xff] 0.0
      %576 = vst [vmem:[#allocation3 + $0xe0] sm:$0xff] 0.0
      %577 = vst [vmem:[#allocation3 + $0xe8] sm:$0x3] 0.0
      %578 = vst [vmem:[#allocation3 + $0xf0] sm:$0xff] 0.0
      %579 = vst [vmem:[#allocation3 + $0xf8] sm:$0xff] 0.0
      %580 = vst [vmem:[#allocation3 + $0x100] sm:$0x3] 0.0
      %581 = vst [vmem:[#allocation3 + $0x108] sm:$0xff] 0.0
      %582 = vst [vmem:[#allocation3 + $0x110] sm:$0xff] 0.0
      %583 = vst [vmem:[#allocation3 + $0x118] sm:$0x3] 0.0
      %584 = vst [vmem:[#allocation3 + $0x120] sm:$0xff] 0.0
      %585 = vst [vmem:[#allocation3 + $0x128] sm:$0xff] 0.0
      %586 = vst [vmem:[#allocation3 + $0x130] sm:$0x3] 0.0
      %587 = vst [vmem:[#allocation3 + $0x138] sm:$0xff] 0.0
      %588 = vst [vmem:[#allocation3 + $0x140] sm:$0xff] 0.0
      %589 = vst [vmem:[#allocation3 + $0x148] sm:$0x3] 0.0
      %590 = vst [vmem:[#allocation3 + $0x150] sm:$0xff] 0.0
      %591 = vst [vmem:[#allocation3 + $0x158] sm:$0xff] 0.0
      %592 = vst [vmem:[#allocation3 + $0x160] sm:$0x3] 0.0
      %593 = vst [vmem:[#allocation3 + $0x168] sm:$0xff] 0.0
      %594 = vst [vmem:[#allocation3 + $0x170] sm:$0xff] 0.0
      %595 = vst [vmem:[#allocation3 + $0x178] sm:$0x3] 0.0
      %596 = vst [vmem:[#allocation3 + $0x180] sm:$0xff] 0.0
      %597 = vst [vmem:[#allocation3 + $0x188] sm:$0xff] 0.0
      %598 = vst [vmem:[#allocation3 + $0x190] sm:$0x3] 0.0
      %599 = vst [vmem:[#allocation3 + $0x198] sm:$0xff] 0.0
      %600 = vst [vmem:[#allocation3 + $0x1a0] sm:$0xff] 0.0
      %601 = vst [vmem:[#allocation3 + $0x1a8] sm:$0x3] 0.0
      %602 = vst [vmem:[#allocation4] sm:$0xff] 0.0
      %603 = vst [vmem:[#allocation4 + $0x8] sm:$0x3] 0.0
      %604 = vst [vmem:[#allocation4 + $0x10] sm:$0xff] 0.0
      %605 = vst [vmem:[#allocation4 + $0x18] sm:$0x3] 0.0
      %606 = vst [vmem:[#allocation4 + $0x20] sm:$0xff] 0.0
      %607 = vst [vmem:[#allocation4 + $0x28] sm:$0x3] 0.0
      %608 = vst [vmem:[#allocation4 + $0x30] sm:$0xff] 0.0
      %609 = vst [vmem:[#allocation4 + $0x38] sm:$0x3] 0.0
      %610 = vst [vmem:[#allocation4 + $0x40] sm:$0xff] 0.0
      %611 = vst [vmem:[#allocation4 + $0x48] sm:$0x3] 0.0
      %612 = vst [vmem:[#allocation4 + $0x50] sm:$0xff] 0.0
      %613 = vst [vmem:[#allocation4 + $0x58] sm:$0x3] 0.0
      %614 = vst [vmem:[#allocation4 + $0x60] sm:$0xff] 0.0
      %615 = vst [vmem:[#allocation4 + $0x68] sm:$0x3] 0.0
      %616 = vst [vmem:[#allocation4 + $0x70] sm:$0xff] 0.0
      %617 = vst [vmem:[#allocation4 + $0x78] sm:$0x3] 0.0
      %618 = vst [vmem:[#allocation4 + $0x80] sm:$0xff] 0.0
      %619 = vst [vmem:[#allocation4 + $0x88] sm:$0x3] 0.0
      %620 = vst [vmem:[#allocation4 + $0x90] sm:$0xff] 0.0
      %621 = vst [vmem:[#allocation4 + $0x98] sm:$0x3] 0.0
      %622 = vst [vmem:[#allocation5] sm:$0x3f] 0.0
      %623 = vst [vmem:[#allocation5 + $0x8] sm:$0x3f] 0.0
      %624 = vst [vmem:[#allocation5 + $0x10] sm:$0x3f] 0.0
      %625 = vst [vmem:[#allocation5 + $0x18] sm:$0x3f] 0.0
      %626 = vst [vmem:[#allocation5 + $0x20] sm:$0x3f] 0.0
      %627 = vst [vmem:[#allocation5 + $0x28] sm:$0x3f] 0.0
      %v628 = vld [vmem:[%s488] sm:$0xf]
      %v629 = vld [vmem:[%s488 + $0x4] sm:$0xf]
      %v630 = vld [vmem:[%s488 + $0x8] sm:$0xf]
      %v631 = vld [vmem:[%s488 + $0xc] sm:$0xf]
      %v632 = vld [vmem:[%s488 + $0x10] sm:$0xf]
      %v633 = vld [vmem:[%s488 + $0x14] sm:$0xf]
      %v634 = vld [vmem:[%s488 + $0x18] sm:$0xf]
      %v635 = vld [vmem:[%s488 + $0x1c] sm:$0xf]
      %v636 = vld [vmem:[%s488 + $0x20] sm:$0xf]
      %v637 = vld [vmem:[%s488 + $0x24] sm:$0xf]
      %v638 = vld [vmem:[%s488 + $0x28] sm:$0xf]
      %v639 = vld [vmem:[%s488 + $0x2c] sm:$0xf]
      %v640 = vld [vmem:[%s488 + $0x30] sm:$0xf]
      %v641 = vld [vmem:[%s488 + $0x34] sm:$0xf]
      %v642 = vld [vmem:[%s488 + $0x38] sm:$0xf]
      %v643 = vld [vmem:[%s488 + $0x3c] sm:$0xf]
      %v644 = vld [vmem:[%s488 + $0x40] sm:$0xf]
      %v645 = vld [vmem:[%s488 + $0x44] sm:$0xf]
      %v646 = vld [vmem:[%s488 + $0x48] sm:$0xf]
      %v647 = vld [vmem:[%s488 + $0x4c] sm:$0xf]
      %v648 = vld [vmem:[%s488 + $0x50] sm:$0xf]
      %v649 = vld [vmem:[%s488 + $0x54] sm:$0xf]
      %v650 = vld [vmem:[%s488 + $0x58] sm:$0xf]
      %v651 = vld [vmem:[%s488 + $0x5c] sm:$0xf]
      %v652 = vld [vmem:[%s488 + $0x60] sm:$0xf]
      %v653 = vld [vmem:[%s488 + $0x64] sm:$0xf]
      %v654 = vld [vmem:[%s488 + $0x68] sm:$0xf]
      %v655 = vld [vmem:[%s488 + $0x6c] sm:$0xf]
      %v656 = vld [vmem:[%s488 + $0x70] sm:$0xf]
      %v657 = vld [vmem:[%s488 + $0x74] sm:$0xf]
      %v658 = vld [vmem:[%s488 + $0x78] sm:$0xf]
      %v659 = vld [vmem:[%s488 + $0x7c] sm:$0xf]
      %v660 = vld [vmem:[%s1] sm:$0xf]
      %v661 = vld [vmem:[%s1 + $0x4] sm:$0xf]
      %v662 = vld [vmem:[%s1 + $0x8] sm:$0xf]
      %v663 = vld [vmem:[%s1 + $0xc] sm:$0xf]
      %v664 = vld [vmem:[%s1 + $0x10] sm:$0xf]
      %v665 = vld [vmem:[%s1 + $0x14] sm:$0xf]
      %v666 = vld [vmem:[%s1 + $0x18] sm:$0xf]
      %v667 = vld [vmem:[%s1 + $0x1c] sm:$0xf]
      %v668 = vld [vmem:[%s1 + $0x20] sm:$0xf]
      %v669 = vld [vmem:[%s1 + $0x24] sm:$0xf]
      %v670 = vld [vmem:[%s1 + $0x28] sm:$0xf]
      %v671 = vld [vmem:[%s1 + $0x2c] sm:$0xf]
      %v672 = vld [vmem:[%s1 + $0x30] sm:$0xf]
      %v673 = vld [vmem:[%s1 + $0x34] sm:$0xf]
      %v674 = vld [vmem:[%s1 + $0x38] sm:$0xf]
      %v675 = vld [vmem:[%s1 + $0x3c] sm:$0xf]
      %v676 = vld [vmem:[%s2] sm:$0x1]
      %v678 = vlaneseq
      %v679 = vshrl.u32 %v678, 7
      %v680 = vsub.s32 0, %v679
      %v681 = vrot.slane %v676, %v680
      %v715 = vunpack.c.l.b16 %v628
      %v716 = vunpack.c.l.b16 %v629
      %v717 = vunpack.c.l.b16 %v630
      %v718 = vunpack.c.l.b16 %v631
      %v719 = vunpack.c.l.b16 %v632
      %v720 = vunpack.c.l.b16 %v633
      %v721 = vunpack.c.l.b16 %v634
      %v722 = vunpack.c.l.b16 %v635
      %v723 = vunpack.c.l.b16 %v636
      %v724 = vunpack.c.l.b16 %v637
      %v725 = vunpack.c.l.b16 %v638
      %v726 = vunpack.c.l.b16 %v639
      %v727 = vunpack.c.l.b16 %v640
      %v728 = vunpack.c.l.b16 %v641
      %v729 = vunpack.c.l.b16 %v642
      %v730 = vunpack.c.l.b16 %v643
      %v731 = vunpack.c.l.b16 %v644
      %v732 = vunpack.c.l.b16 %v645
      %v733 = vunpack.c.l.b16 %v646
      %v734 = vunpack.c.l.b16 %v647
      %v735 = vunpack.c.l.b16 %v648
      %v736 = vunpack.c.l.b16 %v649
      %v737 = vunpack.c.l.b16 %v650
      %v738 = vunpack.c.l.b16 %v651
      %v739 = vunpack.c.l.b16 %v652
      %v740 = vunpack.c.l.b16 %v653
      %v741 = vunpack.c.l.b16 %v654
      %v742 = vunpack.c.l.b16 %v655
      %v743 = vunpack.c.l.b16 %v656
      %v744 = vunpack.c.l.b16 %v657
      %v745 = vunpack.c.l.b16 %v658
      %v746 = vunpack.c.l.b16 %v659
      %v747 = vpack.c.b16 %v716, %v715
      %v748 = vpack.c.b16 %v718, %v717
      %v749 = vpack.c.b16 %v720, %v719
      %v750 = vpack.c.b16 %v722, %v721
      %v751 = vpack.c.b16 %v724, %v723
      %v752 = vpack.c.b16 %v726, %v725
      %v753 = vpack.c.b16 %v728, %v727
      %v754 = vpack.c.b16 %v730, %v729
      %v755 = vpack.c.b16 %v732, %v731
      %v756 = vpack.c.b16 %v734, %v733
      %v757 = vpack.c.b16 %v736, %v735
      %v758 = vpack.c.b16 %v738, %v737
      %v759 = vpack.c.b16 %v740, %v739
      %v760 = vpack.c.b16 %v742, %v741
      %v761 = vpack.c.b16 %v744, %v743
      %v762 = vpack.c.b16 %v746, %v745
      %v795 = vunpack.c.l.b16 %v660
      %v796 = vunpack.c.l.b16 %v661
      %v797 = vunpack.c.l.b16 %v662
      %v798 = vunpack.c.l.b16 %v663
      %v799 = vunpack.c.l.b16 %v664
      %v800 = vunpack.c.l.b16 %v665
      %v801 = vunpack.c.l.b16 %v666
      %v802 = vunpack.c.l.b16 %v667
      %v803 = vunpack.c.l.b16 %v668
      %v804 = vunpack.c.l.b16 %v669
      %v805 = vunpack.c.l.b16 %v670
      %v806 = vunpack.c.l.b16 %v671
      %v807 = vunpack.c.l.b16 %v672
      %v808 = vunpack.c.l.b16 %v673
      %v809 = vunpack.c.l.b16 %v674
      %v810 = vunpack.c.l.b16 %v675
      %v811 = vpack.c.b16 %v796, %v795
      %v812 = vpack.c.b16 %v798, %v797
      %v813 = vpack.c.b16 %v800, %v799
      %v814 = vpack.c.b16 %v802, %v801
      %v815 = vpack.c.b16 %v804, %v803
      %v816 = vpack.c.b16 %v806, %v805
      %v817 = vpack.c.b16 %v808, %v807
      %v818 = vpack.c.b16 %v810, %v809
      %827 = vmatprep.subr.bf16.mxu0 0
      %828 = vmatpush1.bf16.msra.mxu0 %v811
      %829 = vmatprep.subr.bf16.mxu0 0
      %830 = vmatpush1.bf16.msra.mxu0 %v812
      %831 = vmatprep.subr.bf16.mxu0 0
      %832 = vmatpush1.bf16.msra.mxu0 %v813
      %833 = vmatprep.subr.bf16.mxu0 0
      %834 = vmatpush1.bf16.msra.mxu0 %v814
      %835 = vmatprep.subr.bf16.mxu0 0
      %836 = vmatpush1.bf16.msra.mxu0 %v815
      %837 = vmatprep.subr.bf16.mxu0 0
      %838 = vmatpush1.bf16.msra.mxu0 %v816
      %839 = vmatprep.subr.bf16.mxu0 0
      %840 = vmatpush1.bf16.msra.mxu0 %v817
      %841 = vmatprep.subr.bf16.mxu0 0
      %842 = vmatpush1.bf16.msra.mxu0 %v818
      %843 = vmatprep.subr.bf16.mxu0 0
      %844 = vmatpush1.bf16.msra.mxu0 0
      %845 = vmatprep.subr.bf16.mxu0 0
      %846 = vmatpush1.bf16.msra.mxu0 0
      %847 = vmatprep.subr.bf16.mxu0 0
      %848 = vmatpush1.bf16.msra.mxu0 0
      %849 = vmatprep.subr.bf16.mxu0 0
      %850 = vmatpush1.bf16.msra.mxu0 0
      %851 = vmatprep.subr.bf16.mxu0 0
      %852 = vmatpush1.bf16.msra.mxu0 0
      %853 = vmatprep.subr.bf16.mxu0 0
      %854 = vmatpush1.bf16.msra.mxu0 0
      %855 = vmatprep.subr.bf16.mxu0 0
      %856 = vmatpush1.bf16.msra.mxu0 0
      %857 = vmatprep.subr.bf16.mxu0 0
      %858 = vmatpush1.bf16.msra.mxu0 0
      %859 = vmatprep.mubr.bf16.mxu0 0
      %860 = vmatmul.mubr.bf16.gmra.mrb[0].mxu0 %v747
      %v861 = vpop.f32.mrb[0].mxu0
      %v862 = vadd.f32 %v681, %v861
      %v863 = vpop.f32.mrb[0].mxu0
      %v864 = vpop.f32.mrb[0].mxu0
      %v865 = vadd.f32 %v681, %v864
      %v866 = vpop.f32.mrb[0].mxu0
      %867 = vmatprep.mubr.bf16.mxu0 0
      %868 = vmatmul.mubr.bf16.gmra.mrb[0].mxu0 %v748
      %v869 = vpop.f32.mrb[0].mxu0
      %v870 = vadd.f32 %v681, %v869
      %v871 = vpop.f32.mrb[0].mxu0
      %v872 = vpop.f32.mrb[0].mxu0
      %v873 = vadd.f32 %v681, %v872
      %v874 = vpop.f32.mrb[0].mxu0
      %875 = vmatprep.mubr.bf16.mxu0 0
      %876 = vmatmul.mubr.bf16.gmra.mrb[0].mxu0 %v749
      %v877 = vpop.f32.mrb[0].mxu0
      %v878 = vadd.f32 %v681, %v877
      %v879 = vpop.f32.mrb[0].mxu0
      %v880 = vpop.f32.mrb[0].mxu0
      %v881 = vadd.f32 %v681, %v880
      %v882 = vpop.f32.mrb[0].mxu0
      %883 = vmatprep.mubr.bf16.mxu0 0
      %884 = vmatmul.mubr.bf16.gmra.mrb[0].mxu0 %v750
      %v885 = vpop.f32.mrb[0].mxu0
      %v886 = vadd.f32 %v681, %v885
      %v887 = vpop.f32.mrb[0].mxu0
      %v888 = vpop.f32.mrb[0].mxu0
      %v889 = vadd.f32 %v681, %v888
      %v890 = vpop.f32.mrb[0].mxu0
      %891 = vmatprep.mubr.bf16.mxu0 0
      %892 = vmatmul.mubr.bf16.gmra.mrb[0].mxu0 %v751
      %v893 = vpop.f32.mrb[0].mxu0
      %v894 = vadd.f32 %v681, %v893
      %v895 = vpop.f32.mrb[0].mxu0
      %v896 = vpop.f32.mrb[0].mxu0
      %v897 = vadd.f32 %v681, %v896
      %v898 = vpop.f32.mrb[0].mxu0
      %899 = vmatprep.mubr.bf16.mxu0 0
      %900 = vmatmul.mubr.bf16.gmra.mrb[0].mxu0 %v752
      %v901 = vpop.f32.mrb[0].mxu0
      %v902 = vadd.f32 %v681, %v901
      %v903 = vpop.f32.mrb[0].mxu0
      %v904 = vpop.f32.mrb[0].mxu0
      %v905 = vadd.f32 %v681, %v904
      %v906 = vpop.f32.mrb[0].mxu0
      %907 = vmatprep.mubr.bf16.mxu0 0
      %908 = vmatmul.mubr.bf16.gmra.mrb[0].mxu0 %v753
      %v909 = vpop.f32.mrb[0].mxu0
      %v910 = vadd.f32 %v681, %v909
      %v911 = vpop.f32.mrb[0].mxu0
      %v912 = vpop.f32.mrb[0].mxu0
      %v913 = vadd.f32 %v681, %v912
      %v914 = vpop.f32.mrb[0].mxu0
      %915 = vmatprep.mubr.bf16.mxu0 0
      %916 = vmatmul.mubr.bf16.gmra.mrb[0].mxu0 %v754
      %v917 = vpop.f32.mrb[0].mxu0
      %v918 = vadd.f32 %v681, %v917
      %v919 = vpop.f32.mrb[0].mxu0
      %v920 = vpop.f32.mrb[0].mxu0
      %v921 = vadd.f32 %v681, %v920
      %v922 = vpop.f32.mrb[0].mxu0
      %923 = vmatprep.mubr.bf16.mxu0 0
      %924 = vmatmul.mubr.bf16.gmra.mrb[0].mxu0 %v755
      %v925 = vpop.f32.mrb[0].mxu0
      %v926 = vadd.f32 %v681, %v925
      %v927 = vpop.f32.mrb[0].mxu0
      %v928 = vpop.f32.mrb[0].mxu0
      %v929 = vadd.f32 %v681, %v928
      %v930 = vpop.f32.mrb[0].mxu0
      %931 = vmatprep.mubr.bf16.mxu0 0
      %932 = vmatmul.mubr.bf16.gmra.mrb[0].mxu0 %v756
      %v933 = vpop.f32.mrb[0].mxu0
      %v934 = vadd.f32 %v681, %v933
      %v935 = vpop.f32.mrb[0].mxu0
      %v936 = vpop.f32.mrb[0].mxu0
      %v937 = vadd.f32 %v681, %v936
      %v938 = vpop.f32.mrb[0].mxu0
      %939 = vmatprep.mubr.bf16.mxu0 0
      %940 = vmatmul.mubr.bf16.gmra.mrb[0].mxu0 %v757
      %v941 = vpop.f32.mrb[0].mxu0
      %v942 = vadd.f32 %v681, %v941
      %v943 = vpop.f32.mrb[0].mxu0
      %v944 = vpop.f32.mrb[0].mxu0
      %v945 = vadd.f32 %v681, %v944
      %v946 = vpop.f32.mrb[0].mxu0
      %947 = vmatprep.mubr.bf16.mxu0 0
      %948 = vmatmul.mubr.bf16.gmra.mrb[0].mxu0 %v758
      %v949 = vpop.f32.mrb[0].mxu0
      %v950 = vadd.f32 %v681, %v949
      %v951 = vpop.f32.mrb[0].mxu0
      %v952 = vpop.f32.mrb[0].mxu0
      %v953 = vadd.f32 %v681, %v952
      %v954 = vpop.f32.mrb[0].mxu0
      %955 = vmatprep.mubr.bf16.mxu0 0
      %956 = vmatmul.mubr.bf16.gmra.mrb[0].mxu0 %v759
      %v957 = vpop.f32.mrb[0].mxu0
      %v958 = vadd.f32 %v681, %v957
      %v959 = vpop.f32.mrb[0].mxu0
      %v960 = vpop.f32.mrb[0].mxu0
      %v961 = vadd.f32 %v681, %v960
      %v962 = vpop.f32.mrb[0].mxu0
      %963 = vmatprep.mubr.bf16.mxu0 0
      %964 = vmatmul.mubr.bf16.gmra.mrb[0].mxu0 %v760
      %v965 = vpop.f32.mrb[0].mxu0
      %v966 = vadd.f32 %v681, %v965
      %v967 = vpop.f32.mrb[0].mxu0
      %v968 = vpop.f32.mrb[0].mxu0
      %v969 = vadd.f32 %v681, %v968
      %v970 = vpop.f32.mrb[0].mxu0
      %971 = vmatprep.mubr.bf16.mxu0 0
      %972 = vmatmul.mubr.bf16.gmra.mrb[0].mxu0 %v761
      %v973 = vpop.f32.mrb[0].mxu0
      %v974 = vadd.f32 %v681, %v973
      %v975 = vpop.f32.mrb[0].mxu0
      %v976 = vpop.f32.mrb[0].mxu0
      %v977 = vadd.f32 %v681, %v976
      %v978 = vpop.f32.mrb[0].mxu0
      %979 = vmatprep.mubr.bf16.mxu0 0
      %980 = vmatmul.mubr.bf16.gmra.mrb[0].mxu0 %v762
      %v981 = vpop.f32.mrb[0].mxu0
      %v982 = vadd.f32 %v681, %v981
      %v983 = vpop.f32.mrb[0].mxu0
      %v984 = vpop.f32.mrb[0].mxu0
      %v985 = vadd.f32 %v681, %v984
      %v986 = vpop.f32.mrb[0].mxu0
      %987 = vdwg.mxu0
      %v988 = vmax.f32 %v862, 0.0
      %v989 = vmax.f32 %v865, 0.0
      %v990 = vmax.f32 %v870, 0.0
      %v991 = vmax.f32 %v873, 0.0
      %v992 = vmax.f32 %v878, 0.0
      %v993 = vmax.f32 %v881, 0.0
      %v994 = vmax.f32 %v886, 0.0
      %v995 = vmax.f32 %v889, 0.0
      %v996 = vmax.f32 %v894, 0.0
      %v997 = vmax.f32 %v897, 0.0
      %v998 = vmax.f32 %v902, 0.0
      %v999 = vmax.f32 %v905, 0.0
      %v1000 = vmax.f32 %v910, 0.0
      %v1001 = vmax.f32 %v913, 0.0
      %v1002 = vmax.f32 %v918, 0.0
      %v1003 = vmax.f32 %v921, 0.0
      %v1004 = vmax.f32 %v926, 0.0
      %v1005 = vmax.f32 %v929, 0.0
      %v1006 = vmax.f32 %v934, 0.0
      %v1007 = vmax.f32 %v937, 0.0
      %v1008 = vmax.f32 %v942, 0.0
      %v1009 = vmax.f32 %v945, 0.0
      %v1010 = vmax.f32 %v950, 0.0
      %v1011 = vmax.f32 %v953, 0.0
      %v1012 = vmax.f32 %v958, 0.0
      %v1013 = vmax.f32 %v961, 0.0
      %v1014 = vmax.f32 %v966, 0.0
      %v1015 = vmax.f32 %v969, 0.0
      %v1016 = vmax.f32 %v974, 0.0
      %v1017 = vmax.f32 %v977, 0.0
      %v1018 = vmax.f32 %v982, 0.0
      %v1019 = vmax.f32 %v985, 0.0
      %s1020 = scalar_lea.vmem [#allocation2], 24
      %1021 = vst [vmem:[%s1020 + $0x1] sm:$0xff] %v988
      %1022 = vst [vmem:[%s1020 + $0x9] sm:$0xff] %v989
      %1023 = vst [vmem:[%s1020 + $0x19] sm:$0xff] %v990
      %1024 = vst [vmem:[%s1020 + $0x21] sm:$0xff] %v991
      %1025 = vst [vmem:[%s1020 + $0x31] sm:$0xff] %v992
      %1026 = vst [vmem:[%s1020 + $0x39] sm:$0xff] %v993
      %1027 = vst [vmem:[%s1020 + $0x49] sm:$0xff] %v994
      %1028 = vst [vmem:[%s1020 + $0x51] sm:$0xff] %v995
      %1029 = vst [vmem:[%s1020 + $0x61] sm:$0xff] %v996
      %1030 = vst [vmem:[%s1020 + $0x69] sm:$0xff] %v997
      %1031 = vst [vmem:[%s1020 + $0x79] sm:$0xff] %v998
      %1032 = vst [vmem:[%s1020 + $0x81] sm:$0xff] %v999
      %1033 = vst [vmem:[%s1020 + $0x91] sm:$0xff] %v1000
      %1034 = vst [vmem:[%s1020 + $0x99] sm:$0xff] %v1001
      %1035 = vst [vmem:[%s1020 + $0xa9] sm:$0xff] %v1002
      %1036 = vst [vmem:[%s1020 + $0xb1] sm:$0xff] %v1003
      %1037 = vst [vmem:[%s1020 + $0xc1] sm:$0xff] %v1004
      %1038 = vst [vmem:[%s1020 + $0xc9] sm:$0xff] %v1005
      %1039 = vst [vmem:[%s1020 + $0xd9] sm:$0xff] %v1006
      %1040 = vst [vmem:[%s1020 + $0xe1] sm:$0xff] %v1007
      %1041 = vst [vmem:[%s1020 + $0xf1] sm:$0xff] %v1008
      %1042 = vst [vmem:[%s1020 + $0xf9] sm:$0xff] %v1009
      %1043 = vst [vmem:[%s1020 + $0x109] sm:$0xff] %v1010
      %1044 = vst [vmem:[%s1020 + $0x111] sm:$0xff] %v1011
      %1045 = vst [vmem:[%s1020 + $0x121] sm:$0xff] %v1012
      %1046 = vst [vmem:[%s1020 + $0x129] sm:$0xff] %v1013
      %1047 = vst [vmem:[%s1020 + $0x139] sm:$0xff] %v1014
      %1048 = vst [vmem:[%s1020 + $0x141] sm:$0xff] %v1015
      %1049 = vst [vmem:[%s1020 + $0x151] sm:$0xff] %v1016
      %1050 = vst [vmem:[%s1020 + $0x159] sm:$0xff] %v1017
      %1051 = vst [vmem:[%s1020 + $0x169] sm:$0xff] %v1018
      %1052 = vst [vmem:[%s1020 + $0x171] sm:$0xff] %v1019
      %v1053 = vld [vmem:[#allocation2] sm:$0xff]
      %v1054 = vld [vmem:[#allocation2 + $0x8] sm:$0xff]
      %v1055 = vld [vmem:[#allocation2 + $0x18] sm:$0xff]
      %v1056 = vld [vmem:[#allocation2 + $0x20] sm:$0xff]
      %v1057 = vld [vmem:[#allocation2 + $0x30] sm:$0xff]
      %v1058 = vld [vmem:[#allocation2 + $0x38] sm:$0xff]
      %v1059 = vld [vmem:[#allocation2 + $0x48] sm:$0xff]
      %v1060 = vld [vmem:[#allocation2 + $0x50] sm:$0xff]
      %v1061 = vld [vmem:[#allocation2 + $0x60] sm:$0xff]
      %v1062 = vld [vmem:[#allocation2 + $0x68] sm:$0xff]
      %v1063 = vld [vmem:[#allocation2 + $0x78] sm:$0xff]
      %v1064 = vld [vmem:[#allocation2 + $0x80] sm:$0xff]
      %v1065 = vld [vmem:[#allocation2 + $0x90] sm:$0xff]
      %v1066 = vld [vmem:[#allocation2 + $0x98] sm:$0xff]
      %v1067 = vld [vmem:[#allocation2 + $0xa8] sm:$0xff]
      %v1068 = vld [vmem:[#allocation2 + $0xb0] sm:$0xff]
      %v1069 = vld [vmem:[#allocation2 + $0xc0] sm:$0xff]
      %v1070 = vld [vmem:[#allocation2 + $0xc8] sm:$0xff]
      %v1071 = vld [vmem:[#allocation2 + $0xd8] sm:$0xff]
      %v1072 = vld [vmem:[#allocation2 + $0xe0] sm:$0xff]
      %v1073 = vld [vmem:[#allocation2 + $0xf0] sm:$0xff]
      %v1074 = vld [vmem:[#allocation2 + $0xf8] sm:$0xff]
      %v1075 = vld [vmem:[#allocation2 + $0x108] sm:$0xff]
      %v1076 = vld [vmem:[#allocation2 + $0x110] sm:$0xff]
      %v1077 = vld [vmem:[#allocation2 + $0x120] sm:$0xff]
      %v1078 = vld [vmem:[#allocation2 + $0x128] sm:$0xff]
      %v1079 = vld [vmem:[#allocation2 + $0x138] sm:$0xff]
      %v1080 = vld [vmem:[#allocation2 + $0x140] sm:$0xff]
      %v1081 = vld [vmem:[#allocation2 + $0x150] sm:$0xff]
      %v1082 = vld [vmem:[#allocation2 + $0x158] sm:$0xff]
      %v1083 = vld [vmem:[#allocation2 + $0x168] sm:$0xff]
      %v1084 = vld [vmem:[#allocation2 + $0x170] sm:$0xff]
      %v1085 = vpack.c.bf16 %v1054, %v1053
      %v1086 = vpack.c.bf16 %v1056, %v1055
      %v1087 = vpack.c.bf16 %v1058, %v1057
      %v1088 = vpack.c.bf16 %v1060, %v1059
      %v1089 = vpack.c.bf16 %v1062, %v1061
      %v1090 = vpack.c.bf16 %v1064, %v1063
      %v1091 = vpack.c.bf16 %v1066, %v1065
      %v1092 = vpack.c.bf16 %v1068, %v1067
      %v1093 = vpack.c.bf16 %v1070, %v1069
      %v1094 = vpack.c.bf16 %v1072, %v1071
      %v1095 = vpack.c.bf16 %v1074, %v1073
      %v1096 = vpack.c.bf16 %v1076, %v1075
      %v1097 = vpack.c.bf16 %v1078, %v1077
      %v1098 = vpack.c.bf16 %v1080, %v1079
      %v1099 = vpack.c.bf16 %v1082, %v1081
      %v1100 = vpack.c.bf16 %v1084, %v1083
      %v1101 = vld [vmem:[%s3] sm:$0xf]
      %v1102 = vld [vmem:[%s3 + $0x4] sm:$0xf]
      %v1103 = vld [vmem:[%s3 + $0x8] sm:$0xf]
      %v1104 = vld [vmem:[%s3 + $0xc] sm:$0xf]
      %v1105 = vld [vmem:[%s3 + $0x10] sm:$0xf]
      %v1106 = vld [vmem:[%s3 + $0x14] sm:$0xf]
      %v1107 = vld [vmem:[%s3 + $0x18] sm:$0xf]
      %v1108 = vld [vmem:[%s3 + $0x1c] sm:$0xf]
      %v1109 = vld [vmem:[%s3 + $0x20] sm:$0xf]
      %v1110 = vld [vmem:[%s3 + $0x24] sm:$0xf]
      %v1111 = vld [vmem:[%s3 + $0x28] sm:$0xf]
      %v1112 = vld [vmem:[%s3 + $0x2c] sm:$0xf]
      %v1113 = vld [vmem:[%s3 + $0x30] sm:$0xf]
      %v1114 = vld [vmem:[%s3 + $0x34] sm:$0xf]
      %v1115 = vld [vmem:[%s3 + $0x38] sm:$0xf]
      %v1116 = vld [vmem:[%s3 + $0x3c] sm:$0xf]
      %v1117 = vld [vmem:[#allocation2 + $0x1] sm:$0xff]
      %v1118 = vld [vmem:[#allocation2 + $0x9] sm:$0xff]
      %v1119 = vld [vmem:[#allocation2 + $0x19] sm:$0xff]
      %v1120 = vld [vmem:[#allocation2 + $0x21] sm:$0xff]
      %v1121 = vld [vmem:[#allocation2 + $0x31] sm:$0xff]
      %v1122 = vld [vmem:[#allocation2 + $0x39] sm:$0xff]
      %v1123 = vld [vmem:[#allocation2 + $0x49] sm:$0xff]
      %v1124 = vld [vmem:[#allocation2 + $0x51] sm:$0xff]
      %v1125 = vld [vmem:[#allocation2 + $0x61] sm:$0xff]
      %v1126 = vld [vmem:[#allocation2 + $0x69] sm:$0xff]
      %v1127 = vld [vmem:[#allocation2 + $0x79] sm:$0xff]
      %v1128 = vld [vmem:[#allocation2 + $0x81] sm:$0xff]
      %v1129 = vld [vmem:[#allocation2 + $0x91] sm:$0xff]
      %v1130 = vld [vmem:[#allocation2 + $0x99] sm:$0xff]
      %v1131 = vld [vmem:[#allocation2 + $0xa9] sm:$0xff]
      %v1132 = vld [vmem:[#allocation2 + $0xb1] sm:$0xff]
      %v1133 = vld [vmem:[#allocation2 + $0xc1] sm:$0xff]
      %v1134 = vld [vmem:[#allocation2 + $0xc9] sm:$0xff]
      %v1135 = vld [vmem:[#allocation2 + $0xd9] sm:$0xff]
      %v1136 = vld [vmem:[#allocation2 + $0xe1] sm:$0xff]
      %v1137 = vld [vmem:[#allocation2 + $0xf1] sm:$0xff]
      %v1138 = vld [vmem:[#allocation2 + $0xf9] sm:$0xff]
      %v1139 = vld [vmem:[#allocation2 + $0x109] sm:$0xff]
      %v1140 = vld [vmem:[#allocation2 + $0x111] sm:$0xff]
      %v1141 = vld [vmem:[#allocation2 + $0x121] sm:$0xff]
      %v1142 = vld [vmem:[#allocation2 + $0x129] sm:$0xff]
      %v1143 = vld [vmem:[#allocation2 + $0x139] sm:$0xff]
      %v1144 = vld [vmem:[#allocation2 + $0x141] sm:$0xff]
      %v1145 = vld [vmem:[#allocation2 + $0x151] sm:$0xff]
      %v1146 = vld [vmem:[#allocation2 + $0x159] sm:$0xff]
      %v1147 = vld [vmem:[#allocation2 + $0x169] sm:$0xff]
      %v1148 = vld [vmem:[#allocation2 + $0x171] sm:$0xff]
      %v1149 = vpack.c.bf16 %v1118, %v1117
      %v1150 = vpack.c.bf16 %v1120, %v1119
      %v1151 = vpack.c.bf16 %v1122, %v1121
      %v1152 = vpack.c.bf16 %v1124, %v1123
      %v1153 = vpack.c.bf16 %v1126, %v1125
      %v1154 = vpack.c.bf16 %v1128, %v1127
      %v1155 = vpack.c.bf16 %v1130, %v1129
      %v1156 = vpack.c.bf16 %v1132, %v1131
      %v1157 = vpack.c.bf16 %v1134, %v1133
      %v1158 = vpack.c.bf16 %v1136, %v1135
      %v1159 = vpack.c.bf16 %v1138, %v1137
      %v1160 = vpack.c.bf16 %v1140, %v1139
      %v1161 = vpack.c.bf16 %v1142, %v1141
      %v1162 = vpack.c.bf16 %v1144, %v1143
      %v1163 = vpack.c.bf16 %v1146, %v1145
      %v1164 = vpack.c.bf16 %v1148, %v1147
      %v1165 = vld [vmem:[%s3 + $0x40] sm:$0xf]
      %v1166 = vld [vmem:[%s3 + $0x44] sm:$0xf]
      %v1167 = vld [vmem:[%s3 + $0x48] sm:$0xf]
      %v1168 = vld [vmem:[%s3 + $0x4c] sm:$0xf]
      %v1169 = vld [vmem:[%s3 + $0x50] sm:$0xf]
      %v1170 = vld [vmem:[%s3 + $0x54] sm:$0xf]
      %v1171 = vld [vmem:[%s3 + $0x58] sm:$0xf]
      %v1172 = vld [vmem:[%s3 + $0x5c] sm:$0xf]
      %v1173 = vld [vmem:[%s3 + $0x60] sm:$0xf]
      %v1174 = vld [vmem:[%s3 + $0x64] sm:$0xf]
      %v1175 = vld [vmem:[%s3 + $0x68] sm:$0xf]
      %v1176 = vld [vmem:[%s3 + $0x6c] sm:$0xf]
      %v1177 = vld [vmem:[%s3 + $0x70] sm:$0xf]
      %v1178 = vld [vmem:[%s3 + $0x74] sm:$0xf]
      %v1179 = vld [vmem:[%s3 + $0x78] sm:$0xf]
      %v1180 = vld [vmem:[%s3 + $0x7c] sm:$0xf]
      %v1197 = vunpack.c.l.b16 %v1165
      %v1198 = vunpack.c.l.b16 %v1166
      %v1199 = vunpack.c.l.b16 %v1167
      %v1200 = vunpack.c.l.b16 %v1168
      %v1201 = vunpack.c.l.b16 %v1169
      %v1202 = vunpack.c.l.b16 %v1170
      %v1203 = vunpack.c.l.b16 %v1171
      %v1204 = vunpack.c.l.b16 %v1172
      %v1205 = vunpack.c.l.b16 %v1173
      %v1206 = vunpack.c.l.b16 %v1174
      %v1207 = vunpack.c.l.b16 %v1175
      %v1208 = vunpack.c.l.b16 %v1176
      %v1209 = vunpack.c.l.b16 %v1177
      %v1210 = vunpack.c.l.b16 %v1178
      %v1211 = vunpack.c.l.b16 %v1179
      %v1212 = vunpack.c.l.b16 %v1180
      %v1213 = vpack.c.b16 %v1198, %v1197
      %v1214 = vpack.c.b16 %v1200, %v1199
      %v1215 = vpack.c.b16 %v1202, %v1201
      %v1216 = vpack.c.b16 %v1204, %v1203
      %v1217 = vpack.c.b16 %v1206, %v1205
      %v1218 = vpack.c.b16 %v1208, %v1207
      %v1219 = vpack.c.b16 %v1210, %v1209
      %v1220 = vpack.c.b16 %v1212, %v1211
      %1229 = vmatprep.subr.bf16.mxu0 0
      %1230 = vmatpush1.bf16.msra.mxu0 %v1213
      %1231 = vmatprep.subr.bf16.mxu0 0
      %1232 = vmatpush1.bf16.msra.mxu0 %v1214
      %1233 = vmatprep.subr.bf16.mxu0 0
      %1234 = vmatpush1.bf16.msra.mxu0 %v1215
      %1235 = vmatprep.subr.bf16.mxu0 0
      %1236 = vmatpush1.bf16.msra.mxu0 %v1216
      %1237 = vmatprep.subr.bf16.mxu0 0
      %1238 = vmatpush1.bf16.msra.mxu0 %v1217
      %1239 = vmatprep.subr.bf16.mxu0 0
      %1240 = vmatpush1.bf16.msra.mxu0 %v1218
      %1241 = vmatprep.subr.bf16.mxu0 0
      %1242 = vmatpush1.bf16.msra.mxu0 %v1219
      %1243 = vmatprep.subr.bf16.mxu0 0
      %1244 = vmatpush1.bf16.msra.mxu0 %v1220
      %1245 = vmatprep.subr.bf16.mxu0 0
      %1246 = vmatpush1.bf16.msra.mxu0 0
      %1247 = vmatprep.subr.bf16.mxu0 0
      %1248 = vmatpush1.bf16.msra.mxu0 0
      %1249 = vmatprep.subr.bf16.mxu0 0
      %1250 = vmatpush1.bf16.msra.mxu0 0
      %1251 = vmatprep.subr.bf16.mxu0 0
      %1252 = vmatpush1.bf16.msra.mxu0 0
      %1253 = vmatprep.subr.bf16.mxu0 0
      %1254 = vmatpush1.bf16.msra.mxu0 0
      %1255 = vmatprep.subr.bf16.mxu0 0
      %1256 = vmatpush1.bf16.msra.mxu0 0
      %1257 = vmatprep.subr.bf16.mxu0 0
      %1258 = vmatpush1.bf16.msra.mxu0 0
      %1259 = vmatprep.subr.bf16.mxu0 0
      %1260 = vmatpush1.bf16.msra.mxu0 0
      %1261 = vmatprep.mubr.bf16.mxu0 0
      %1262 = vmatmul.mubr.bf16.gmra.mrb[0].mxu0 %v1149
      %v1263 = vpop.f32.mrb[0].mxu0
      %v1264 = vadd.f32 0.0, %v1263
      %v1265 = vpop.f32.mrb[0].mxu0
      %v1266 = vpop.f32.mrb[0].mxu0
      %v1267 = vadd.f32 0.0, %v1266
      %v1268 = vpop.f32.mrb[0].mxu0
      %1269 = vmatprep.mubr.bf16.mxu0 0
      %1270 = vmatmul.mubr.bf16.gmra.mrb[0].mxu0 %v1150
      %v1271 = vpop.f32.mrb[0].mxu0
      %v1272 = vadd.f32 0.0, %v1271
      %v1273 = vpop.f32.mrb[0].mxu0
      %v1274 = vpop.f32.mrb[0].mxu0
      %v1275 = vadd.f32 0.0, %v1274
      %v1276 = vpop.f32.mrb[0].mxu0
      %1277 = vmatprep.mubr.bf16.mxu0 0
      %1278 = vmatmul.mubr.bf16.gmra.mrb[0].mxu0 %v1151
      %v1279 = vpop.f32.mrb[0].mxu0
      %v1280 = vadd.f32 0.0, %v1279
      %v1281 = vpop.f32.mrb[0].mxu0
      %v1282 = vpop.f32.mrb[0].mxu0
      %v1283 = vadd.f32 0.0, %v1282
      %v1284 = vpop.f32.mrb[0].mxu0
      %1285 = vmatprep.mubr.bf16.mxu0 0
      %1286 = vmatmul.mubr.bf16.gmra.mrb[0].mxu0 %v1152
      %v1287 = vpop.f32.mrb[0].mxu0
      %v1288 = vadd.f32 0.0, %v1287
      %v1289 = vpop.f32.mrb[0].mxu0
      %v1290 = vpop.f32.mrb[0].mxu0
      %v1291 = vadd.f32 0.0, %v1290
      %v1292 = vpop.f32.mrb[0].mxu0
      %1293 = vmatprep.mubr.bf16.mxu0 0
      %1294 = vmatmul.mubr.bf16.gmra.mrb[0].mxu0 %v1153
      %v1295 = vpop.f32.mrb[0].mxu0
      %v1296 = vadd.f32 0.0, %v1295
      %v1297 = vpop.f32.mrb[0].mxu0
      %v1298 = vpop.f32.mrb[0].mxu0
      %v1299 = vadd.f32 0.0, %v1298
      %v1300 = vpop.f32.mrb[0].mxu0
      %1301 = vmatprep.mubr.bf16.mxu0 0
      %1302 = vmatmul.mubr.bf16.gmra.mrb[0].mxu0 %v1154
      %v1303 = vpop.f32.mrb[0].mxu0
      %v1304 = vadd.f32 0.0, %v1303
      %v1305 = vpop.f32.mrb[0].mxu0
      %v1306 = vpop.f32.mrb[0].mxu0
      %v1307 = vadd.f32 0.0, %v1306
      %v1308 = vpop.f32.mrb[0].mxu0
      %1309 = vmatprep.mubr.bf16.mxu0 0
      %1310 = vmatmul.mubr.bf16.gmra.mrb[0].mxu0 %v1155
      %v1311 = vpop.f32.mrb[0].mxu0
      %v1312 = vadd.f32 0.0, %v1311
      %v1313 = vpop.f32.mrb[0].mxu0
      %v1314 = vpop.f32.mrb[0].mxu0
      %v1315 = vadd.f32 0.0, %v1314
      %v1316 = vpop.f32.mrb[0].mxu0
      %1317 = vmatprep.mubr.bf16.mxu0 0
      %1318 = vmatmul.mubr.bf16.gmra.mrb[0].mxu0 %v1156
      %v1319 = vpop.f32.mrb[0].mxu0
      %v1320 = vadd.f32 0.0, %v1319
      %v1321 = vpop.f32.mrb[0].mxu0
      %v1322 = vpop.f32.mrb[0].mxu0
      %v1323 = vadd.f32 0.0, %v1322
      %v1324 = vpop.f32.mrb[0].mxu0
      %1325 = vmatprep.mubr.bf16.mxu0 0
      %1326 = vmatmul.mubr.bf16.gmra.mrb[0].mxu0 %v1157
      %v1327 = vpop.f32.mrb[0].mxu0
      %v1328 = vadd.f32 0.0, %v1327
      %v1329 = vpop.f32.mrb[0].mxu0
      %v1330 = vpop.f32.mrb[0].mxu0
      %v1331 = vadd.f32 0.0, %v1330
      %v1332 = vpop.f32.mrb[0].mxu0
      %1333 = vmatprep.mubr.bf16.mxu0 0
      %1334 = vmatmul.mubr.bf16.gmra.mrb[0].mxu0 %v1158
      %v1335 = vpop.f32.mrb[0].mxu0
      %v1336 = vadd.f32 0.0, %v1335
      %v1337 = vpop.f32.mrb[0].mxu0
      %v1338 = vpop.f32.mrb[0].mxu0
      %v1339 = vadd.f32 0.0, %v1338
      %v1340 = vpop.f32.mrb[0].mxu0
      %1341 = vmatprep.mubr.bf16.mxu0 0
      %1342 = vmatmul.mubr.bf16.gmra.mrb[0].mxu0 %v1159
      %v1343 = vpop.f32.mrb[0].mxu0
      %v1344 = vadd.f32 0.0, %v1343
      %v1345 = vpop.f32.mrb[0].mxu0
      %v1346 = vpop.f32.mrb[0].mxu0
      %v1347 = vadd.f32 0.0, %v1346
      %v1348 = vpop.f32.mrb[0].mxu0
      %1349 = vmatprep.mubr.bf16.mxu0 0
      %1350 = vmatmul.mubr.bf16.gmra.mrb[0].mxu0 %v1160
      %v1351 = vpop.f32.mrb[0].mxu0
      %v1352 = vadd.f32 0.0, %v1351
      %v1353 = vpop.f32.mrb[0].mxu0
      %v1354 = vpop.f32.mrb[0].mxu0
      %v1355 = vadd.f32 0.0, %v1354
      %v1356 = vpop.f32.mrb[0].mxu0
      %1357 = vmatprep.mubr.bf16.mxu0 0
      %1358 = vmatmul.mubr.bf16.gmra.mrb[0].mxu0 %v1161
      %v1359 = vpop.f32.mrb[0].mxu0
      %v1360 = vadd.f32 0.0, %v1359
      %v1361 = vpop.f32.mrb[0].mxu0
      %v1362 = vpop.f32.mrb[0].mxu0
      %v1363 = vadd.f32 0.0, %v1362
      %v1364 = vpop.f32.mrb[0].mxu0
      %1365 = vmatprep.mubr.bf16.mxu0 0
      %1366 = vmatmul.mubr.bf16.gmra.mrb[0].mxu0 %v1162
      %v1367 = vpop.f32.mrb[0].mxu0
      %v1368 = vadd.f32 0.0, %v1367
      %v1369 = vpop.f32.mrb[0].mxu0
      %v1370 = vpop.f32.mrb[0].mxu0
      %v1371 = vadd.f32 0.0, %v1370
      %v1372 = vpop.f32.mrb[0].mxu0
      %1373 = vmatprep.mubr.bf16.mxu0 0
      %1374 = vmatmul.mubr.bf16.gmra.mrb[0].mxu0 %v1163
      %v1375 = vpop.f32.mrb[0].mxu0
      %v1376 = vadd.f32 0.0, %v1375
      %v1377 = vpop.f32.mrb[0].mxu0
      %v1378 = vpop.f32.mrb[0].mxu0
      %v1379 = vadd.f32 0.0, %v1378
      %v1380 = vpop.f32.mrb[0].mxu0
      %1381 = vmatprep.mubr.bf16.mxu0 0
      %1382 = vmatmul.mubr.bf16.gmra.mrb[0].mxu0 %v1164
      %v1383 = vpop.f32.mrb[0].mxu0
      %v1384 = vadd.f32 0.0, %v1383
      %v1385 = vpop.f32.mrb[0].mxu0
      %v1386 = vpop.f32.mrb[0].mxu0
      %v1387 = vadd.f32 0.0, %v1386
      %v1388 = vpop.f32.mrb[0].mxu0
      %1389 = vdwg.mxu0
      %v1406 = vunpack.c.l.b16 %v1101
      %v1407 = vunpack.c.l.b16 %v1102
      %v1408 = vunpack.c.l.b16 %v1103
      %v1409 = vunpack.c.l.b16 %v1104
      %v1410 = vunpack.c.l.b16 %v1105
      %v1411 = vunpack.c.l.b16 %v1106
      %v1412 = vunpack.c.l.b16 %v1107
      %v1413 = vunpack.c.l.b16 %v1108
      %v1414 = vunpack.c.l.b16 %v1109
      %v1415 = vunpack.c.l.b16 %v1110
      %v1416 = vunpack.c.l.b16 %v1111
      %v1417 = vunpack.c.l.b16 %v1112
      %v1418 = vunpack.c.l.b16 %v1113
      %v1419 = vunpack.c.l.b16 %v1114
      %v1420 = vunpack.c.l.b16 %v1115
      %v1421 = vunpack.c.l.b16 %v1116
      %v1422 = vpack.c.b16 %v1407, %v1406
      %v1423 = vpack.c.b16 %v1409, %v1408
      %v1424 = vpack.c.b16 %v1411, %v1410
      %v1425 = vpack.c.b16 %v1413, %v1412
      %v1426 = vpack.c.b16 %v1415, %v1414
      %v1427 = vpack.c.b16 %v1417, %v1416
      %v1428 = vpack.c.b16 %v1419, %v1418
      %v1429 = vpack.c.b16 %v1421, %v1420
      %1438 = vmatprep.subr.bf16.mxu0 0
      %1439 = vmatpush1.bf16.msra.mxu0 %v1422
      %1440 = vmatprep.subr.bf16.mxu0 0
      %1441 = vmatpush1.bf16.msra.mxu0 %v1423
      %1442 = vmatprep.subr.bf16.mxu0 0
      %1443 = vmatpush1.bf16.msra.mxu0 %v1424
      %1444 = vmatprep.subr.bf16.mxu0 0
      %1445 = vmatpush1.bf16.msra.mxu0 %v1425
      %1446 = vmatprep.subr.bf16.mxu0 0
      %1447 = vmatpush1.bf16.msra.mxu0 %v1426
      %1448 = vmatprep.subr.bf16.mxu0 0
      %1449 = vmatpush1.bf16.msra.mxu0 %v1427
      %1450 = vmatprep.subr.bf16.mxu0 0
      %1451 = vmatpush1.bf16.msra.mxu0 %v1428
      %1452 = vmatprep.subr.bf16.mxu0 0
      %1453 = vmatpush1.bf16.msra.mxu0 %v1429
      %1454 = vmatprep.subr.bf16.mxu0 0
      %1455 = vmatpush1.bf16.msra.mxu0 0
      %1456 = vmatprep.subr.bf16.mxu0 0
      %1457 = vmatpush1.bf16.msra.mxu0 0
      %1458 = vmatprep.subr.bf16.mxu0 0
      %1459 = vmatpush1.bf16.msra.mxu0 0
      %1460 = vmatprep.subr.bf16.mxu0 0
      %1461 = vmatpush1.bf16.msra.mxu0 0
      %1462 = vmatprep.subr.bf16.mxu0 0
      %1463 = vmatpush1.bf16.msra.mxu0 0
      %1464 = vmatprep.subr.bf16.mxu0 0
      %1465 = vmatpush1.bf16.msra.mxu0 0
      %1466 = vmatprep.subr.bf16.mxu0 0
      %1467 = vmatpush1.bf16.msra.mxu0 0
      %1468 = vmatprep.subr.bf16.mxu0 0
      %1469 = vmatpush1.bf16.msra.mxu0 0
      %1470 = vmatprep.mubr.bf16.mxu0 0
      %1471 = vmatmul.mubr.bf16.gmra.mrb[0].mxu0 %v1085
      %v1472 = vpop.f32.mrb[0].mxu0
      %v1473 = vadd.f32 %v1264, %v1472
      %v1474 = vpop.f32.mrb[0].mxu0
      %v1475 = vpop.f32.mrb[0].mxu0
      %v1476 = vadd.f32 %v1267, %v1475
      %v1477 = vpop.f32.mrb[0].mxu0
      %1478 = vmatprep.mubr.bf16.mxu0 0
      %1479 = vmatmul.mubr.bf16.gmra.mrb[0].mxu0 %v1086
      %v1480 = vpop.f32.mrb[0].mxu0
      %v1481 = vadd.f32 %v1272, %v1480
      %v1482 = vpop.f32.mrb[0].mxu0
      %v1483 = vpop.f32.mrb[0].mxu0
      %v1484 = vadd.f32 %v1275, %v1483
      %v1485 = vpop.f32.mrb[0].mxu0
      %1486 = vmatprep.mubr.bf16.mxu0 0
      %1487 = vmatmul.mubr.bf16.gmra.mrb[0].mxu0 %v1087
      %v1488 = vpop.f32.mrb[0].mxu0
      %v1489 = vadd.f32 %v1280, %v1488
      %v1490 = vpop.f32.mrb[0].mxu0
      %v1491 = vpop.f32.mrb[0].mxu0
      %v1492 = vadd.f32 %v1283, %v1491
      %v1493 = vpop.f32.mrb[0].mxu0
      %1494 = vmatprep.mubr.bf16.mxu0 0
      %1495 = vmatmul.mubr.bf16.gmra.mrb[0].mxu0 %v1088
      %v1496 = vpop.f32.mrb[0].mxu0
      %v1497 = vadd.f32 %v1288, %v1496
      %v1498 = vpop.f32.mrb[0].mxu0
      %v1499 = vpop.f32.mrb[0].mxu0
      %v1500 = vadd.f32 %v1291, %v1499
      %v1501 = vpop.f32.mrb[0].mxu0
      %1502 = vmatprep.mubr.bf16.mxu0 0
      %1503 = vmatmul.mubr.bf16.gmra.mrb[0].mxu0 %v1089
      %v1504 = vpop.f32.mrb[0].mxu0
      %v1505 = vadd.f32 %v1296, %v1504
      %v1506 = vpop.f32.mrb[0].mxu0
      %v1507 = vpop.f32.mrb[0].mxu0
      %v1508 = vadd.f32 %v1299, %v1507
      %v1509 = vpop.f32.mrb[0].mxu0
      %1510 = vmatprep.mubr.bf16.mxu0 0
      %1511 = vmatmul.mubr.bf16.gmra.mrb[0].mxu0 %v1090
      %v1512 = vpop.f32.mrb[0].mxu0
      %v1513 = vadd.f32 %v1304, %v1512
      %v1514 = vpop.f32.mrb[0].mxu0
      %v1515 = vpop.f32.mrb[0].mxu0
      %v1516 = vadd.f32 %v1307, %v1515
      %v1517 = vpop.f32.mrb[0].mxu0
      %1518 = vmatprep.mubr.bf16.mxu0 0
      %1519 = vmatmul.mubr.bf16.gmra.mrb[0].mxu0 %v1091
      %v1520 = vpop.f32.mrb[0].mxu0
      %v1521 = vadd.f32 %v1312, %v1520
      %v1522 = vpop.f32.mrb[0].mxu0
      %v1523 = vpop.f32.mrb[0].mxu0
      %v1524 = vadd.f32 %v1315, %v1523
      %v1525 = vpop.f32.mrb[0].mxu0
      %1526 = vmatprep.mubr.bf16.mxu0 0
      %1527 = vmatmul.mubr.bf16.gmra.mrb[0].mxu0 %v1092
      %v1528 = vpop.f32.mrb[0].mxu0
      %v1529 = vadd.f32 %v1320, %v1528
      %v1530 = vpop.f32.mrb[0].mxu0
      %v1531 = vpop.f32.mrb[0].mxu0
      %v1532 = vadd.f32 %v1323, %v1531
      %v1533 = vpop.f32.mrb[0].mxu0
      %1534 = vmatprep.mubr.bf16.mxu0 0
      %1535 = vmatmul.mubr.bf16.gmra.mrb[0].mxu0 %v1093
      %v1536 = vpop.f32.mrb[0].mxu0
      %v1537 = vadd.f32 %v1328, %v1536
      %v1538 = vpop.f32.mrb[0].mxu0
      %v1539 = vpop.f32.mrb[0].mxu0
      %v1540 = vadd.f32 %v1331, %v1539
      %v1541 = vpop.f32.mrb[0].mxu0
      %1542 = vmatprep.mubr.bf16.mxu0 0
      %1543 = vmatmul.mubr.bf16.gmra.mrb[0].mxu0 %v1094
      %v1544 = vpop.f32.mrb[0].mxu0
      %v1545 = vadd.f32 %v1336, %v1544
      %v1546 = vpop.f32.mrb[0].mxu0
      %v1547 = vpop.f32.mrb[0].mxu0
      %v1548 = vadd.f32 %v1339, %v1547
      %v1549 = vpop.f32.mrb[0].mxu0
      %1550 = vmatprep.mubr.bf16.mxu0 0
      %1551 = vmatmul.mubr.bf16.gmra.mrb[0].mxu0 %v1095
      %v1552 = vpop.f32.mrb[0].mxu0
      %v1553 = vadd.f32 %v1344, %v1552
      %v1554 = vpop.f32.mrb[0].mxu0
      %v1555 = vpop.f32.mrb[0].mxu0
      %v1556 = vadd.f32 %v1347, %v1555
      %v1557 = vpop.f32.mrb[0].mxu0
      %1558 = vmatprep.mubr.bf16.mxu0 0
      %1559 = vmatmul.mubr.bf16.gmra.mrb[0].mxu0 %v1096
      %v1560 = vpop.f32.mrb[0].mxu0
      %v1561 = vadd.f32 %v1352, %v1560
      %v1562 = vpop.f32.mrb[0].mxu0
      %v1563 = vpop.f32.mrb[0].mxu0
      %v1564 = vadd.f32 %v1355, %v1563
      %v1565 = vpop.f32.mrb[0].mxu0
      %1566 = vmatprep.mubr.bf16.mxu0 0
      %1567 = vmatmul.mubr.bf16.gmra.mrb[0].mxu0 %v1097
      %v1568 = vpop.f32.mrb[0].mxu0
      %v1569 = vadd.f32 %v1360, %v1568
      %v1570 = vpop.f32.mrb[0].mxu0
      %v1571 = vpop.f32.mrb[0].mxu0
      %v1572 = vadd.f32 %v1363, %v1571
      %v1573 = vpop.f32.mrb[0].mxu0
      %1574 = vmatprep.mubr.bf16.mxu0 0
      %1575 = vmatmul.mubr.bf16.gmra.mrb[0].mxu0 %v1098
      %v1576 = vpop.f32.mrb[0].mxu0
      %v1577 = vadd.f32 %v1368, %v1576
      %v1578 = vpop.f32.mrb[0].mxu0
      %v1579 = vpop.f32.mrb[0].mxu0
      %v1580 = vadd.f32 %v1371, %v1579
      %v1581 = vpop.f32.mrb[0].mxu0
      %1582 = vmatprep.mubr.bf16.mxu0 0
      %1583 = vmatmul.mubr.bf16.gmra.mrb[0].mxu0 %v1099
      %v1584 = vpop.f32.mrb[0].mxu0
      %v1585 = vadd.f32 %v1376, %v1584
      %v1586 = vpop.f32.mrb[0].mxu0
      %v1587 = vpop.f32.mrb[0].mxu0
      %v1588 = vadd.f32 %v1379, %v1587
      %v1589 = vpop.f32.mrb[0].mxu0
      %1590 = vmatprep.mubr.bf16.mxu0 0
      %1591 = vmatmul.mubr.bf16.gmra.mrb[0].mxu0 %v1100
      %v1592 = vpop.f32.mrb[0].mxu0
      %v1593 = vadd.f32 %v1384, %v1592
      %v1594 = vpop.f32.mrb[0].mxu0
      %v1595 = vpop.f32.mrb[0].mxu0
      %v1596 = vadd.f32 %v1387, %v1595
      %v1597 = vpop.f32.mrb[0].mxu0
      %1598 = vdwg.mxu0
      %v1599 = vld [vmem:[#allocation2 + $0x2] sm:$0xff]
      %v1600 = vld [vmem:[#allocation2 + $0xa] sm:$0xff]
      %v1601 = vld [vmem:[#allocation2 + $0x1a] sm:$0xff]
      %v1602 = vld [vmem:[#allocation2 + $0x22] sm:$0xff]
      %v1603 = vld [vmem:[#allocation2 + $0x32] sm:$0xff]
      %v1604 = vld [vmem:[#allocation2 + $0x3a] sm:$0xff]
      %v1605 = vld [vmem:[#allocation2 + $0x4a] sm:$0xff]
      %v1606 = vld [vmem:[#allocation2 + $0x52] sm:$0xff]
      %v1607 = vld [vmem:[#allocation2 + $0x62] sm:$0xff]
      %v1608 = vld [vmem:[#allocation2 + $0x6a] sm:$0xff]
      %v1609 = vld [vmem:[#allocation2 + $0x7a] sm:$0xff]
      %v1610 = vld [vmem:[#allocation2 + $0x82] sm:$0xff]
      %v1611 = vld [vmem:[#allocation2 + $0x92] sm:$0xff]
      %v1612 = vld [vmem:[#allocation2 + $0x9a] sm:$0xff]
      %v1613 = vld [vmem:[#allocation2 + $0xaa] sm:$0xff]
      %v1614 = vld [vmem:[#allocation2 + $0xb2] sm:$0xff]
      %v1615 = vld [vmem:[#allocation2 + $0xc2] sm:$0xff]
      %v1616 = vld [vmem:[#allocation2 + $0xca] sm:$0xff]
      %v1617 = vld [vmem:[#allocation2 + $0xda] sm:$0xff]
      %v1618 = vld [vmem:[#allocation2 + $0xe2] sm:$0xff]
      %v1619 = vld [vmem:[#allocation2 + $0xf2] sm:$0xff]
      %v1620 = vld [vmem:[#allocation2 + $0xfa] sm:$0xff]
      %v1621 = vld [vmem:[#allocation2 + $0x10a] sm:$0xff]
      %v1622 = vld [vmem:[#allocation2 + $0x112] sm:$0xff]
      %v1623 = vld [vmem:[#allocation2 + $0x122] sm:$0xff]
      %v1624 = vld [vmem:[#allocation2 + $0x12a] sm:$0xff]
      %v1625 = vld [vmem:[#allocation2 + $0x13a] sm:$0xff]
      %v1626 = vld [vmem:[#allocation2 + $0x142] sm:$0xff]
      %v1627 = vld [vmem:[#allocation2 + $0x152] sm:$0xff]
      %v1628 = vld [vmem:[#allocation2 + $0x15a] sm:$0xff]
      %v1629 = vld [vmem:[#allocation2 + $0x16a] sm:$0xff]
      %v1630 = vld [vmem:[#allocation2 + $0x172] sm:$0xff]
      %v1631 = vpack.c.bf16 %v1600, %v1599
      %v1632 = vpack.c.bf16 %v1602, %v1601
      %v1633 = vpack.c.bf16 %v1604, %v1603
      %v1634 = vpack.c.bf16 %v1606, %v1605
      %v1635 = vpack.c.bf16 %v1608, %v1607
      %v1636 = vpack.c.bf16 %v1610, %v1609
      %v1637 = vpack.c.bf16 %v1612, %v1611
      %v1638 = vpack.c.bf16 %v1614, %v1613
      %v1639 = vpack.c.bf16 %v1616, %v1615
      %v1640 = vpack.c.bf16 %v1618, %v1617
      %v1641 = vpack.c.bf16 %v1620, %v1619
      %v1642 = vpack.c.bf16 %v1622, %v1621
      %v1643 = vpack.c.bf16 %v1624, %v1623
      %v1644 = vpack.c.bf16 %v1626, %v1625
      %v1645 = vpack.c.bf16 %v1628, %v1627
      %v1646 = vpack.c.bf16 %v1630, %v1629
      %v1647 = vld [vmem:[%s3 + $0x80] sm:$0xf]
      %v1648 = vld [vmem:[%s3 + $0x84] sm:$0xf]
      %v1649 = vld [vmem:[%s3 + $0x88] sm:$0xf]
      %v1650 = vld [vmem:[%s3 + $0x8c] sm:$0xf]
      %v1651 = vld [vmem:[%s3 + $0x90] sm:$0xf]
      %v1652 = vld [vmem:[%s3 + $0x94] sm:$0xf]
      %v1653 = vld [vmem:[%s3 + $0x98] sm:$0xf]
      %v1654 = vld [vmem:[%s3 + $0x9c] sm:$0xf]
      %v1655 = vld [vmem:[%s3 + $0xa0] sm:$0xf]
      %v1656 = vld [vmem:[%s3 + $0xa4] sm:$0xf]
      %v1657 = vld [vmem:[%s3 + $0xa8] sm:$0xf]
      %v1658 = vld [vmem:[%s3 + $0xac] sm:$0xf]
      %v1659 = vld [vmem:[%s3 + $0xb0] sm:$0xf]
      %v1660 = vld [vmem:[%s3 + $0xb4] sm:$0xf]
      %v1661 = vld [vmem:[%s3 + $0xb8] sm:$0xf]
      %v1662 = vld [vmem:[%s3 + $0xbc] sm:$0xf]
      %v1679 = vunpack.c.l.b16 %v1647
      %v1680 = vunpack.c.l.b16 %v1648
      %v1681 = vunpack.c.l.b16 %v1649
      %v1682 = vunpack.c.l.b16 %v1650
      %v1683 = vunpack.c.l.b16 %v1651
      %v1684 = vunpack.c.l.b16 %v1652
      %v1685 = vunpack.c.l.b16 %v1653
      %v1686 = vunpack.c.l.b16 %v1654
      %v1687 = vunpack.c.l.b16 %v1655
      %v1688 = vunpack.c.l.b16 %v1656
      %v1689 = vunpack.c.l.b16 %v1657
      %v1690 = vunpack.c.l.b16 %v1658
      %v1691 = vunpack.c.l.b16 %v1659
      %v1692 = vunpack.c.l.b16 %v1660
      %v1693 = vunpack.c.l.b16 %v1661
      %v1694 = vunpack.c.l.b16 %v1662
      %v1695 = vpack.c.b16 %v1680, %v1679
      %v1696 = vpack.c.b16 %v1682, %v1681
      %v1697 = vpack.c.b16 %v1684, %v1683
      %v1698 = vpack.c.b16 %v1686, %v1685
      %v1699 = vpack.c.b16 %v1688, %v1687
      %v1700 = vpack.c.b16 %v1690, %v1689
      %v1701 = vpack.c.b16 %v1692, %v1691
      %v1702 = vpack.c.b16 %v1694, %v1693
      %1711 = vmatprep.subr.bf16.mxu0 0
      %1712 = vmatpush1.bf16.msra.mxu0 %v1695
      %1713 = vmatprep.subr.bf16.mxu0 0
      %1714 = vmatpush1.bf16.msra.mxu0 %v1696
      %1715 = vmatprep.subr.bf16.mxu0 0
      %1716 = vmatpush1.bf16.msra.mxu0 %v1697
      %1717 = vmatprep.subr.bf16.mxu0 0
      %1718 = vmatpush1.bf16.msra.mxu0 %v1698
      %1719 = vmatprep.subr.bf16.mxu0 0
      %1720 = vmatpush1.bf16.msra.mxu0 %v1699
      %1721 = vmatprep.subr.bf16.mxu0 0
      %1722 = vmatpush1.bf16.msra.mxu0 %v1700
      %1723 = vmatprep.subr.bf16.mxu0 0
      %1724 = vmatpush1.bf16.msra.mxu0 %v1701
      %1725 = vmatprep.subr.bf16.mxu0 0
      %1726 = vmatpush1.bf16.msra.mxu0 %v1702
      %1727 = vmatprep.subr.bf16.mxu0 0
      %1728 = vmatpush1.bf16.msra.mxu0 0
      %1729 = vmatprep.subr.bf16.mxu0 0
      %1730 = vmatpush1.bf16.msra.mxu0 0
      %1731 = vmatprep.subr.bf16.mxu0 0
      %1732 = vmatpush1.bf16.msra.mxu0 0
      %1733 = vmatprep.subr.bf16.mxu0 0
      %1734 = vmatpush1.bf16.msra.mxu0 0
      %1735 = vmatprep.subr.bf16.mxu0 0
      %1736 = vmatpush1.bf16.msra.mxu0 0
      %1737 = vmatprep.subr.bf16.mxu0 0
      %1738 = vmatpush1.bf16.msra.mxu0 0
      %1739 = vmatprep.subr.bf16.mxu0 0
      %1740 = vmatpush1.bf16.msra.mxu0 0
      %1741 = vmatprep.subr.bf16.mxu0 0
      %1742 = vmatpush1.bf16.msra.mxu0 0
      %1743 = vmatprep.mubr.bf16.mxu0 0
      %1744 = vmatmul.mubr.bf16.gmra.mrb[0].mxu0 %v1631
      %v1745 = vpop.f32.mrb[0].mxu0
      %v1746 = vadd.f32 0.0, %v1745
      %v1747 = vpop.f32.mrb[0].mxu0
      %v1748 = vpop.f32.mrb[0].mxu0
      %v1749 = vadd.f32 0.0, %v1748
      %v1750 = vpop.f32.mrb[0].mxu0
      %1751 = vmatprep.mubr.bf16.mxu0 0
      %1752 = vmatmul.mubr.bf16.gmra.mrb[0].mxu0 %v1632
      %v1753 = vpop.f32.mrb[0].mxu0
      %v1754 = vadd.f32 0.0, %v1753
      %v1755 = vpop.f32.mrb[0].mxu0
      %v1756 = vpop.f32.mrb[0].mxu0
      %v1757 = vadd.f32 0.0, %v1756
      %v1758 = vpop.f32.mrb[0].mxu0
      %1759 = vmatprep.mubr.bf16.mxu0 0
      %1760 = vmatmul.mubr.bf16.gmra.mrb[0].mxu0 %v1633
      %v1761 = vpop.f32.mrb[0].mxu0
      %v1762 = vadd.f32 0.0, %v1761
      %v1763 = vpop.f32.mrb[0].mxu0
      %v1764 = vpop.f32.mrb[0].mxu0
      %v1765 = vadd.f32 0.0, %v1764
      %v1766 = vpop.f32.mrb[0].mxu0
      %1767 = vmatprep.mubr.bf16.mxu0 0
      %1768 = vmatmul.mubr.bf16.gmra.mrb[0].mxu0 %v1634
      %v1769 = vpop.f32.mrb[0].mxu0
      %v1770 = vadd.f32 0.0, %v1769
      %v1771 = vpop.f32.mrb[0].mxu0
      %v1772 = vpop.f32.mrb[0].mxu0
      %v1773 = vadd.f32 0.0, %v1772
      %v1774 = vpop.f32.mrb[0].mxu0
      %1775 = vmatprep.mubr.bf16.mxu0 0
      %1776 = vmatmul.mubr.bf16.gmra.mrb[0].mxu0 %v1635
      %v1777 = vpop.f32.mrb[0].mxu0
      %v1778 = vadd.f32 0.0, %v1777
      %v1779 = vpop.f32.mrb[0].mxu0
      %v1780 = vpop.f32.mrb[0].mxu0
      %v1781 = vadd.f32 0.0, %v1780
      %v1782 = vpop.f32.mrb[0].mxu0
      %1783 = vmatprep.mubr.bf16.mxu0 0
      %1784 = vmatmul.mubr.bf16.gmra.mrb[0].mxu0 %v1636
      %v1785 = vpop.f32.mrb[0].mxu0
      %v1786 = vadd.f32 0.0, %v1785
      %v1787 = vpop.f32.mrb[0].mxu0
      %v1788 = vpop.f32.mrb[0].mxu0
      %v1789 = vadd.f32 0.0, %v1788
      %v1790 = vpop.f32.mrb[0].mxu0
      %1791 = vmatprep.mubr.bf16.mxu0 0
      %1792 = vmatmul.mubr.bf16.gmra.mrb[0].mxu0 %v1637
      %v1793 = vpop.f32.mrb[0].mxu0
      %v1794 = vadd.f32 0.0, %v1793
      %v1795 = vpop.f32.mrb[0].mxu0
      %v1796 = vpop.f32.mrb[0].mxu0
      %v1797 = vadd.f32 0.0, %v1796
      %v1798 = vpop.f32.mrb[0].mxu0
      %1799 = vmatprep.mubr.bf16.mxu0 0
      %1800 = vmatmul.mubr.bf16.gmra.mrb[0].mxu0 %v1638
      %v1801 = vpop.f32.mrb[0].mxu0
      %v1802 = vadd.f32 0.0, %v1801
      %v1803 = vpop.f32.mrb[0].mxu0
      %v1804 = vpop.f32.mrb[0].mxu0
      %v1805 = vadd.f32 0.0, %v1804
      %v1806 = vpop.f32.mrb[0].mxu0
      %1807 = vmatprep.mubr.bf16.mxu0 0
      %1808 = vmatmul.mubr.bf16.gmra.mrb[0].mxu0 %v1639
      %v1809 = vpop.f32.mrb[0].mxu0
      %v1810 = vadd.f32 0.0, %v1809
      %v1811 = vpop.f32.mrb[0].mxu0
      %v1812 = vpop.f32.mrb[0].mxu0
      %v1813 = vadd.f32 0.0, %v1812
      %v1814 = vpop.f32.mrb[0].mxu0
      %1815 = vmatprep.mubr.bf16.mxu0 0
      %1816 = vmatmul.mubr.bf16.gmra.mrb[0].mxu0 %v1640
      %v1817 = vpop.f32.mrb[0].mxu0
      %v1818 = vadd.f32 0.0, %v1817
      %v1819 = vpop.f32.mrb[0].mxu0
      %v1820 = vpop.f32.mrb[0].mxu0
      %v1821 = vadd.f32 0.0, %v1820
      %v1822 = vpop.f32.mrb[0].mxu0
      %1823 = vmatprep.mubr.bf16.mxu0 0
      %1824 = vmatmul.mubr.bf16.gmra.mrb[0].mxu0 %v1641
      %v1825 = vpop.f32.mrb[0].mxu0
      %v1826 = vadd.f32 0.0, %v1825
      %v1827 = vpop.f32.mrb[0].mxu0
      %v1828 = vpop.f32.mrb[0].mxu0
      %v1829 = vadd.f32 0.0, %v1828
      %v1830 = vpop.f32.mrb[0].mxu0
      %1831 = vmatprep.mubr.bf16.mxu0 0
      %1832 = vmatmul.mubr.bf16.gmra.mrb[0].mxu0 %v1642
      %v1833 = vpop.f32.mrb[0].mxu0
      %v1834 = vadd.f32 0.0, %v1833
      %v1835 = vpop.f32.mrb[0].mxu0
      %v1836 = vpop.f32.mrb[0].mxu0
      %v1837 = vadd.f32 0.0, %v1836
      %v1838 = vpop.f32.mrb[0].mxu0
      %1839 = vmatprep.mubr.bf16.mxu0 0
      %1840 = vmatmul.mubr.bf16.gmra.mrb[0].mxu0 %v1643
      %v1841 = vpop.f32.mrb[0].mxu0
      %v1842 = vadd.f32 0.0, %v1841
      %v1843 = vpop.f32.mrb[0].mxu0
      %v1844 = vpop.f32.mrb[0].mxu0
      %v1845 = vadd.f32 0.0, %v1844
      %v1846 = vpop.f32.mrb[0].mxu0
      %1847 = vmatprep.mubr.bf16.mxu0 0
      %1848 = vmatmul.mubr.bf16.gmra.mrb[0].mxu0 %v1644
      %v1849 = vpop.f32.mrb[0].mxu0
      %v1850 = vadd.f32 0.0, %v1849
      %v1851 = vpop.f32.mrb[0].mxu0
      %v1852 = vpop.f32.mrb[0].mxu0
      %v1853 = vadd.f32 0.0, %v1852
      %v1854 = vpop.f32.mrb[0].mxu0
      %1855 = vmatprep.mubr.bf16.mxu0 0
      %1856 = vmatmul.mubr.bf16.gmra.mrb[0].mxu0 %v1645
      %v1857 = vpop.f32.mrb[0].mxu0
      %v1858 = vadd.f32 0.0, %v1857
      %v1859 = vpop.f32.mrb[0].mxu0
      %v1860 = vpop.f32.mrb[0].mxu0
      %v1861 = vadd.f32 0.0, %v1860
      %v1862 = vpop.f32.mrb[0].mxu0
      %1863 = vmatprep.mubr.bf16.mxu0 0
      %1864 = vmatmul.mubr.bf16.gmra.mrb[0].mxu0 %v1646
      %v1865 = vpop.f32.mrb[0].mxu0
      %v1866 = vadd.f32 0.0, %v1865
      %v1867 = vpop.f32.mrb[0].mxu0
      %v1868 = vpop.f32.mrb[0].mxu0
      %v1869 = vadd.f32 0.0, %v1868
      %v1870 = vpop.f32.mrb[0].mxu0
      %1871 = vdwg.mxu0
      %v1872 = vadd.f32 %v1473, %v1746
      %v1873 = vadd.f32 %v1476, %v1749
      %v1874 = vadd.f32 %v1481, %v1754
      %v1875 = vadd.f32 %v1484, %v1757
      %v1876 = vadd.f32 %v1489, %v1762
      %v1877 = vadd.f32 %v1492, %v1765
      %v1878 = vadd.f32 %v1497, %v1770
      %v1879 = vadd.f32 %v1500, %v1773
      %v1880 = vadd.f32 %v1505, %v1778
      %v1881 = vadd.f32 %v1508, %v1781
      %v1882 = vadd.f32 %v1513, %v1786
      %v1883 = vadd.f32 %v1516, %v1789
      %v1884 = vadd.f32 %v1521, %v1794
      %v1885 = vadd.f32 %v1524, %v1797
      %v1886 = vadd.f32 %v1529, %v1802
      %v1887 = vadd.f32 %v1532, %v1805
      %v1888 = vadd.f32 %v1537, %v1810
      %v1889 = vadd.f32 %v1540, %v1813
      %v1890 = vadd.f32 %v1545, %v1818
      %v1891 = vadd.f32 %v1548, %v1821
      %v1892 = vadd.f32 %v1553, %v1826
      %v1893 = vadd.f32 %v1556, %v1829
      %v1894 = vadd.f32 %v1561, %v1834
      %v1895 = vadd.f32 %v1564, %v1837
      %v1896 = vadd.f32 %v1569, %v1842
      %v1897 = vadd.f32 %v1572, %v1845
      %v1898 = vadd.f32 %v1577, %v1850
      %v1899 = vadd.f32 %v1580, %v1853
      %v1900 = vadd.f32 %v1585, %v1858
      %v1901 = vadd.f32 %v1588, %v1861
      %v1902 = vadd.f32 %v1593, %v1866
      %v1903 = vadd.f32 %v1596, %v1869
      %v1904 = vld [vmem:[%s1020] sm:$0xff]
      %v1905 = vld [vmem:[%s1020 + $0x8] sm:$0xff]
      %v1906 = vld [vmem:[%s1020 + $0x18] sm:$0xff]
      %v1907 = vld [vmem:[%s1020 + $0x20] sm:$0xff]
      %v1908 = vld [vmem:[%s1020 + $0x30] sm:$0xff]
      %v1909 = vld [vmem:[%s1020 + $0x38] sm:$0xff]
      %v1910 = vld [vmem:[%s1020 + $0x48] sm:$0xff]
      %v1911 = vld [vmem:[%s1020 + $0x50] sm:$0xff]
      %v1912 = vld [vmem:[%s1020 + $0x60] sm:$0xff]
      %v1913 = vld [vmem:[%s1020 + $0x68] sm:$0xff]
      %v1914 = vld [vmem:[%s1020 + $0x78] sm:$0xff]
      %v1915 = vld [vmem:[%s1020 + $0x80] sm:$0xff]
      %v1916 = vld [vmem:[%s1020 + $0x90] sm:$0xff]
      %v1917 = vld [vmem:[%s1020 + $0x98] sm:$0xff]
      %v1918 = vld [vmem:[%s1020 + $0xa8] sm:$0xff]
      %v1919 = vld [vmem:[%s1020 + $0xb0] sm:$0xff]
      %v1920 = vld [vmem:[%s1020 + $0xc0] sm:$0xff]
      %v1921 = vld [vmem:[%s1020 + $0xc8] sm:$0xff]
      %v1922 = vld [vmem:[%s1020 + $0xd8] sm:$0xff]
      %v1923 = vld [vmem:[%s1020 + $0xe0] sm:$0xff]
      %v1924 = vld [vmem:[%s1020 + $0xf0] sm:$0xff]
      %v1925 = vld [vmem:[%s1020 + $0xf8] sm:$0xff]
      %v1926 = vld [vmem:[%s1020 + $0x108] sm:$0xff]
      %v1927 = vld [vmem:[%s1020 + $0x110] sm:$0xff]
      %v1928 = vld [vmem:[%s1020 + $0x120] sm:$0xff]
      %v1929 = vld [vmem:[%s1020 + $0x128] sm:$0xff]
      %v1930 = vld [vmem:[%s1020 + $0x138] sm:$0xff]
      %v1931 = vld [vmem:[%s1020 + $0x140] sm:$0xff]
      %v1932 = vld [vmem:[%s1020 + $0x150] sm:$0xff]
      %v1933 = vld [vmem:[%s1020 + $0x158] sm:$0xff]
      %v1934 = vld [vmem:[%s1020 + $0x168] sm:$0xff]
      %v1935 = vld [vmem:[%s1020 + $0x170] sm:$0xff]
      %v1936 = vpack.c.bf16 %v1905, %v1904
      %v1937 = vpack.c.bf16 %v1907, %v1906
      %v1938 = vpack.c.bf16 %v1909, %v1908
      %v1939 = vpack.c.bf16 %v1911, %v1910
      %v1940 = vpack.c.bf16 %v1913, %v1912
      %v1941 = vpack.c.bf16 %v1915, %v1914
      %v1942 = vpack.c.bf16 %v1917, %v1916
      %v1943 = vpack.c.bf16 %v1919, %v1918
      %v1944 = vpack.c.bf16 %v1921, %v1920
      %v1945 = vpack.c.bf16 %v1923, %v1922
      %v1946 = vpack.c.bf16 %v1925, %v1924
      %v1947 = vpack.c.bf16 %v1927, %v1926
      %v1948 = vpack.c.bf16 %v1929, %v1928
      %v1949 = vpack.c.bf16 %v1931, %v1930
      %v1950 = vpack.c.bf16 %v1933, %v1932
      %v1951 = vpack.c.bf16 %v1935, %v1934
      %v1952 = vld [vmem:[%s3 + $0xc0] sm:$0xf]
      %v1953 = vld [vmem:[%s3 + $0xc4] sm:$0xf]
      %v1954 = vld [vmem:[%s3 + $0xc8] sm:$0xf]
      %v1955 = vld [vmem:[%s3 + $0xcc] sm:$0xf]
      %v1956 = vld [vmem:[%s3 + $0xd0] sm:$0xf]
      %v1957 = vld [vmem:[%s3 + $0xd4] sm:$0xf]
      %v1958 = vld [vmem:[%s3 + $0xd8] sm:$0xf]
      %v1959 = vld [vmem:[%s3 + $0xdc] sm:$0xf]
      %v1960 = vld [vmem:[%s3 + $0xe0] sm:$0xf]
      %v1961 = vld [vmem:[%s3 + $0xe4] sm:$0xf]
      %v1962 = vld [vmem:[%s3 + $0xe8] sm:$0xf]
      %v1963 = vld [vmem:[%s3 + $0xec] sm:$0xf]
      %v1964 = vld [vmem:[%s3 + $0xf0] sm:$0xf]
      %v1965 = vld [vmem:[%s3 + $0xf4] sm:$0xf]
      %v1966 = vld [vmem:[%s3 + $0xf8] sm:$0xf]
      %v1967 = vld [vmem:[%s3 + $0xfc] sm:$0xf]
      %v1984 = vunpack.c.l.b16 %v1952
      %v1985 = vunpack.c.l.b16 %v1953
      %v1986 = vunpack.c.l.b16 %v1954
      %v1987 = vunpack.c.l.b16 %v1955
      %v1988 = vunpack.c.l.b16 %v1956
      %v1989 = vunpack.c.l.b16 %v1957
      %v1990 = vunpack.c.l.b16 %v1958
      %v1991 = vunpack.c.l.b16 %v1959
      %v1992 = vunpack.c.l.b16 %v1960
      %v1993 = vunpack.c.l.b16 %v1961
      %v1994 = vunpack.c.l.b16 %v1962
      %v1995 = vunpack.c.l.b16 %v1963
      %v1996 = vunpack.c.l.b16 %v1964
      %v1997 = vunpack.c.l.b16 %v1965
      %v1998 = vunpack.c.l.b16 %v1966
      %v1999 = vunpack.c.l.b16 %v1967
      %v2000 = vpack.c.b16 %v1985, %v1984
      %v2001 = vpack.c.b16 %v1987, %v1986
      %v2002 = vpack.c.b16 %v1989, %v1988
      %v2003 = vpack.c.b16 %v1991, %v1990
      %v2004 = vpack.c.b16 %v1993, %v1992
      %v2005 = vpack.c.b16 %v1995, %v1994
      %v2006 = vpack.c.b16 %v1997, %v1996
      %v2007 = vpack.c.b16 %v1999, %v1998
      %2016 = vmatprep.subr.bf16.mxu0 0
      %2017 = vmatpush1.bf16.msra.mxu0 %v2000
      %2018 = vmatprep.subr.bf16.mxu0 0
      %2019 = vmatpush1.bf16.msra.mxu0 %v2001
      %2020 = vmatprep.subr.bf16.mxu0 0
      %2021 = vmatpush1.bf16.msra.mxu0 %v2002
      %2022 = vmatprep.subr.bf16.mxu0 0
      %2023 = vmatpush1.bf16.msra.mxu0 %v2003
      %2024 = vmatprep.subr.bf16.mxu0 0
      %2025 = vmatpush1.bf16.msra.mxu0 %v2004
      %2026 = vmatprep.subr.bf16.mxu0 0
      %2027 = vmatpush1.bf16.msra.mxu0 %v2005
      %2028 = vmatprep.subr.bf16.mxu0 0
      %2029 = vmatpush1.bf16.msra.mxu0 %v2006
      %2030 = vmatprep.subr.bf16.mxu0 0
      %2031 = vmatpush1.bf16.msra.mxu0 %v2007
      %2032 = vmatprep.subr.bf16.mxu0 0
      %2033 = vmatpush1.bf16.msra.mxu0 0
      %2034 = vmatprep.subr.bf16.mxu0 0
      %2035 = vmatpush1.bf16.msra.mxu0 0
      %2036 = vmatprep.subr.bf16.mxu0 0
      %2037 = vmatpush1.bf16.msra.mxu0 0
      %2038 = vmatprep.subr.bf16.mxu0 0
      %2039 = vmatpush1.bf16.msra.mxu0 0
      %2040 = vmatprep.subr.bf16.mxu0 0
      %2041 = vmatpush1.bf16.msra.mxu0 0
      %2042 = vmatprep.subr.bf16.mxu0 0
      %2043 = vmatpush1.bf16.msra.mxu0 0
      %2044 = vmatprep.subr.bf16.mxu0 0
      %2045 = vmatpush1.bf16.msra.mxu0 0
      %2046 = vmatprep.subr.bf16.mxu0 0
      %2047 = vmatpush1.bf16.msra.mxu0 0
      %2048 = vmatprep.mubr.bf16.mxu0 0
      %2049 = vmatmul.mubr.bf16.gmra.mrb[0].mxu0 %v1936
      %v2050 = vpop.f32.mrb[0].mxu0
      %v2051 = vadd.f32 0.0, %v2050
      %v2052 = vpop.f32.mrb[0].mxu0
      %v2053 = vpop.f32.mrb[0].mxu0
      %v2054 = vadd.f32 0.0, %v2053
      %v2055 = vpop.f32.mrb[0].mxu0
      %2056 = vmatprep.mubr.bf16.mxu0 0
      %2057 = vmatmul.mubr.bf16.gmra.mrb[0].mxu0 %v1937
      %v2058 = vpop.f32.mrb[0].mxu0
      %v2059 = vadd.f32 0.0, %v2058
      %v2060 = vpop.f32.mrb[0].mxu0
      %v2061 = vpop.f32.mrb[0].mxu0
      %v2062 = vadd.f32 0.0, %v2061
      %v2063 = vpop.f32.mrb[0].mxu0
      %2064 = vmatprep.mubr.bf16.mxu0 0
      %2065 = vmatmul.mubr.bf16.gmra.mrb[0].mxu0 %v1938
      %v2066 = vpop.f32.mrb[0].mxu0
      %v2067 = vadd.f32 0.0, %v2066
      %v2068 = vpop.f32.mrb[0].mxu0
      %v2069 = vpop.f32.mrb[0].mxu0
      %v2070 = vadd.f32 0.0, %v2069
      %v2071 = vpop.f32.mrb[0].mxu0
      %2072 = vmatprep.mubr.bf16.mxu0 0
      %2073 = vmatmul.mubr.bf16.gmra.mrb[0].mxu0 %v1939
      %v2074 = vpop.f32.mrb[0].mxu0
      %v2075 = vadd.f32 0.0, %v2074
      %v2076 = vpop.f32.mrb[0].mxu0
      %v2077 = vpop.f32.mrb[0].mxu0
      %v2078 = vadd.f32 0.0, %v2077
      %v2079 = vpop.f32.mrb[0].mxu0
      %2080 = vmatprep.mubr.bf16.mxu0 0
      %2081 = vmatmul.mubr.bf16.gmra.mrb[0].mxu0 %v1940
      %v2082 = vpop.f32.mrb[0].mxu0
      %v2083 = vadd.f32 0.0, %v2082
      %v2084 = vpop.f32.mrb[0].mxu0
      %v2085 = vpop.f32.mrb[0].mxu0
      %v2086 = vadd.f32 0.0, %v2085
      %v2087 = vpop.f32.mrb[0].mxu0
      %2088 = vmatprep.mubr.bf16.mxu0 0
      %2089 = vmatmul.mubr.bf16.gmra.mrb[0].mxu0 %v1941
      %v2090 = vpop.f32.mrb[0].mxu0
      %v2091 = vadd.f32 0.0, %v2090
      %v2092 = vpop.f32.mrb[0].mxu0
      %v2093 = vpop.f32.mrb[0].mxu0
      %v2094 = vadd.f32 0.0, %v2093
      %v2095 = vpop.f32.mrb[0].mxu0
      %2096 = vmatprep.mubr.bf16.mxu0 0
      %2097 = vmatmul.mubr.bf16.gmra.mrb[0].mxu0 %v1942
      %v2098 = vpop.f32.mrb[0].mxu0
      %v2099 = vadd.f32 0.0, %v2098
      %v2100 = vpop.f32.mrb[0].mxu0
      %v2101 = vpop.f32.mrb[0].mxu0
      %v2102 = vadd.f32 0.0, %v2101
      %v2103 = vpop.f32.mrb[0].mxu0
      %2104 = vmatprep.mubr.bf16.mxu0 0
      %2105 = vmatmul.mubr.bf16.gmra.mrb[0].mxu0 %v1943
      %v2106 = vpop.f32.mrb[0].mxu0
      %v2107 = vadd.f32 0.0, %v2106
      %v2108 = vpop.f32.mrb[0].mxu0
      %v2109 = vpop.f32.mrb[0].mxu0
      %v2110 = vadd.f32 0.0, %v2109
      %v2111 = vpop.f32.mrb[0].mxu0
      %2112 = vmatprep.mubr.bf16.mxu0 0
      %2113 = vmatmul.mubr.bf16.gmra.mrb[0].mxu0 %v1944
      %v2114 = vpop.f32.mrb[0].mxu0
      %v2115 = vadd.f32 0.0, %v2114
      %v2116 = vpop.f32.mrb[0].mxu0
      %v2117 = vpop.f32.mrb[0].mxu0
      %v2118 = vadd.f32 0.0, %v2117
      %v2119 = vpop.f32.mrb[0].mxu0
      %2120 = vmatprep.mubr.bf16.mxu0 0
      %2121 = vmatmul.mubr.bf16.gmra.mrb[0].mxu0 %v1945
      %v2122 = vpop.f32.mrb[0].mxu0
      %v2123 = vadd.f32 0.0, %v2122
      %v2124 = vpop.f32.mrb[0].mxu0
      %v2125 = vpop.f32.mrb[0].mxu0
      %v2126 = vadd.f32 0.0, %v2125
      %v2127 = vpop.f32.mrb[0].mxu0
      %2128 = vmatprep.mubr.bf16.mxu0 0
      %2129 = vmatmul.mubr.bf16.gmra.mrb[0].mxu0 %v1946
      %v2130 = vpop.f32.mrb[0].mxu0
      %v2131 = vadd.f32 0.0, %v2130
      %v2132 = vpop.f32.mrb[0].mxu0
      %v2133 = vpop.f32.mrb[0].mxu0
      %v2134 = vadd.f32 0.0, %v2133
      %v2135 = vpop.f32.mrb[0].mxu0
      %2136 = vmatprep.mubr.bf16.mxu0 0
      %2137 = vmatmul.mubr.bf16.gmra.mrb[0].mxu0 %v1947
      %v2138 = vpop.f32.mrb[0].mxu0
      %v2139 = vadd.f32 0.0, %v2138
      %v2140 = vpop.f32.mrb[0].mxu0
      %v2141 = vpop.f32.mrb[0].mxu0
      %v2142 = vadd.f32 0.0, %v2141
      %v2143 = vpop.f32.mrb[0].mxu0
      %2144 = vmatprep.mubr.bf16.mxu0 0
      %2145 = vmatmul.mubr.bf16.gmra.mrb[0].mxu0 %v1948
      %v2146 = vpop.f32.mrb[0].mxu0
      %v2147 = vadd.f32 0.0, %v2146
      %v2148 = vpop.f32.mrb[0].mxu0
      %v2149 = vpop.f32.mrb[0].mxu0
      %v2150 = vadd.f32 0.0, %v2149
      %v2151 = vpop.f32.mrb[0].mxu0
      %2152 = vmatprep.mubr.bf16.mxu0 0
      %2153 = vmatmul.mubr.bf16.gmra.mrb[0].mxu0 %v1949
      %v2154 = vpop.f32.mrb[0].mxu0
      %v2155 = vadd.f32 0.0, %v2154
      %v2156 = vpop.f32.mrb[0].mxu0
      %v2157 = vpop.f32.mrb[0].mxu0
      %v2158 = vadd.f32 0.0, %v2157
      %v2159 = vpop.f32.mrb[0].mxu0
      %2160 = vmatprep.mubr.bf16.mxu0 0
      %2161 = vmatmul.mubr.bf16.gmra.mrb[0].mxu0 %v1950
      %v2162 = vpop.f32.mrb[0].mxu0
      %v2163 = vadd.f32 0.0, %v2162
      %v2164 = vpop.f32.mrb[0].mxu0
      %v2165 = vpop.f32.mrb[0].mxu0
      %v2166 = vadd.f32 0.0, %v2165
      %v2167 = vpop.f32.mrb[0].mxu0
      %2168 = vmatprep.mubr.bf16.mxu0 0
      %2169 = vmatmul.mubr.bf16.gmra.mrb[0].mxu0 %v1951
      %v2170 = vpop.f32.mrb[0].mxu0
      %v2171 = vadd.f32 0.0, %v2170
      %v2172 = vpop.f32.mrb[0].mxu0
      %v2173 = vpop.f32.mrb[0].mxu0
      %v2174 = vadd.f32 0.0, %v2173
      %v2175 = vpop.f32.mrb[0].mxu0
      %2176 = vdwg.mxu0
      %v2177 = vadd.f32 %v1872, %v2051
      %v2178 = vadd.f32 %v1873, %v2054
      %v2179 = vadd.f32 %v1874, %v2059
      %v2180 = vadd.f32 %v1875, %v2062
      %v2181 = vadd.f32 %v1876, %v2067
      %v2182 = vadd.f32 %v1877, %v2070
      %v2183 = vadd.f32 %v1878, %v2075
      %v2184 = vadd.f32 %v1879, %v2078
      %v2185 = vadd.f32 %v1880, %v2083
      %v2186 = vadd.f32 %v1881, %v2086
      %v2187 = vadd.f32 %v1882, %v2091
      %v2188 = vadd.f32 %v1883, %v2094
      %v2189 = vadd.f32 %v1884, %v2099
      %v2190 = vadd.f32 %v1885, %v2102
      %v2191 = vadd.f32 %v1886, %v2107
      %v2192 = vadd.f32 %v1887, %v2110
      %v2193 = vadd.f32 %v1888, %v2115
      %v2194 = vadd.f32 %v1889, %v2118
      %v2195 = vadd.f32 %v1890, %v2123
      %v2196 = vadd.f32 %v1891, %v2126
      %v2197 = vadd.f32 %v1892, %v2131
      %v2198 = vadd.f32 %v1893, %v2134
      %v2199 = vadd.f32 %v1894, %v2139
      %v2200 = vadd.f32 %v1895, %v2142
      %v2201 = vadd.f32 %v1896, %v2147
      %v2202 = vadd.f32 %v1897, %v2150
      %v2203 = vadd.f32 %v1898, %v2155
      %v2204 = vadd.f32 %v1899, %v2158
      %v2205 = vadd.f32 %v1900, %v2163
      %v2206 = vadd.f32 %v1901, %v2166
      %v2207 = vadd.f32 %v1902, %v2171
      %v2208 = vadd.f32 %v1903, %v2174
      %v2209 = vld [vmem:[%s1020 + $0x1] sm:$0xff]
      %v2210 = vld [vmem:[%s1020 + $0x9] sm:$0xff]
      %v2211 = vld [vmem:[%s1020 + $0x19] sm:$0xff]
      %v2212 = vld [vmem:[%s1020 + $0x21] sm:$0xff]
      %v2213 = vld [vmem:[%s1020 + $0x31] sm:$0xff]
      %v2214 = vld [vmem:[%s1020 + $0x39] sm:$0xff]
      %v2215 = vld [vmem:[%s1020 + $0x49] sm:$0xff]
      %v2216 = vld [vmem:[%s1020 + $0x51] sm:$0xff]
      %v2217 = vld [vmem:[%s1020 + $0x61] sm:$0xff]
      %v2218 = vld [vmem:[%s1020 + $0x69] sm:$0xff]
      %v2219 = vld [vmem:[%s1020 + $0x79] sm:$0xff]
      %v2220 = vld [vmem:[%s1020 + $0x81] sm:$0xff]
      %v2221 = vld [vmem:[%s1020 + $0x91] sm:$0xff]
      %v2222 = vld [vmem:[%s1020 + $0x99] sm:$0xff]
      %v2223 = vld [vmem:[%s1020 + $0xa9] sm:$0xff]
      %v2224 = vld [vmem:[%s1020 + $0xb1] sm:$0xff]
      %v2225 = vld [vmem:[%s1020 + $0xc1] sm:$0xff]
      %v2226 = vld [vmem:[%s1020 + $0xc9] sm:$0xff]
      %v2227 = vld [vmem:[%s1020 + $0xd9] sm:$0xff]
      %v2228 = vld [vmem:[%s1020 + $0xe1] sm:$0xff]
      %v2229 = vld [vmem:[%s1020 + $0xf1] sm:$0xff]
      %v2230 = vld [vmem:[%s1020 + $0xf9] sm:$0xff]
      %v2231 = vld [vmem:[%s1020 + $0x109] sm:$0xff]
      %v2232 = vld [vmem:[%s1020 + $0x111] sm:$0xff]
      %v2233 = vld [vmem:[%s1020 + $0x121] sm:$0xff]
      %v2234 = vld [vmem:[%s1020 + $0x129] sm:$0xff]
      %v2235 = vld [vmem:[%s1020 + $0x139] sm:$0xff]
      %v2236 = vld [vmem:[%s1020 + $0x141] sm:$0xff]
      %v2237 = vld [vmem:[%s1020 + $0x151] sm:$0xff]
      %v2238 = vld [vmem:[%s1020 + $0x159] sm:$0xff]
      %v2239 = vld [vmem:[%s1020 + $0x169] sm:$0xff]
      %v2240 = vld [vmem:[%s1020 + $0x171] sm:$0xff]
      %v2241 = vpack.c.bf16 %v2210, %v2209
      %v2242 = vpack.c.bf16 %v2212, %v2211
      %v2243 = vpack.c.bf16 %v2214, %v2213
      %v2244 = vpack.c.bf16 %v2216, %v2215
      %v2245 = vpack.c.bf16 %v2218, %v2217
      %v2246 = vpack.c.bf16 %v2220, %v2219
      %v2247 = vpack.c.bf16 %v2222, %v2221
      %v2248 = vpack.c.bf16 %v2224, %v2223
      %v2249 = vpack.c.bf16 %v2226, %v2225
      %v2250 = vpack.c.bf16 %v2228, %v2227
      %v2251 = vpack.c.bf16 %v2230, %v2229
      %v2252 = vpack.c.bf16 %v2232, %v2231
      %v2253 = vpack.c.bf16 %v2234, %v2233
      %v2254 = vpack.c.bf16 %v2236, %v2235
      %v2255 = vpack.c.bf16 %v2238, %v2237
      %v2256 = vpack.c.bf16 %v2240, %v2239
      %v2257 = vld [vmem:[%s3 + $0x100] sm:$0xf]
      %v2258 = vld [vmem:[%s3 + $0x104] sm:$0xf]
      %v2259 = vld [vmem:[%s3 + $0x108] sm:$0xf]
      %v2260 = vld [vmem:[%s3 + $0x10c] sm:$0xf]
      %v2261 = vld [vmem:[%s3 + $0x110] sm:$0xf]
      %v2262 = vld [vmem:[%s3 + $0x114] sm:$0xf]
      %v2263 = vld [vmem:[%s3 + $0x118] sm:$0xf]
      %v2264 = vld [vmem:[%s3 + $0x11c] sm:$0xf]
      %v2265 = vld [vmem:[%s3 + $0x120] sm:$0xf]
      %v2266 = vld [vmem:[%s3 + $0x124] sm:$0xf]
      %v2267 = vld [vmem:[%s3 + $0x128] sm:$0xf]
      %v2268 = vld [vmem:[%s3 + $0x12c] sm:$0xf]
      %v2269 = vld [vmem:[%s3 + $0x130] sm:$0xf]
      %v2270 = vld [vmem:[%s3 + $0x134] sm:$0xf]
      %v2271 = vld [vmem:[%s3 + $0x138] sm:$0xf]
      %v2272 = vld [vmem:[%s3 + $0x13c] sm:$0xf]
      %v2289 = vunpack.c.l.b16 %v2257
      %v2290 = vunpack.c.l.b16 %v2258
      %v2291 = vunpack.c.l.b16 %v2259
      %v2292 = vunpack.c.l.b16 %v2260
      %v2293 = vunpack.c.l.b16 %v2261
      %v2294 = vunpack.c.l.b16 %v2262
      %v2295 = vunpack.c.l.b16 %v2263
      %v2296 = vunpack.c.l.b16 %v2264
      %v2297 = vunpack.c.l.b16 %v2265
      %v2298 = vunpack.c.l.b16 %v2266
      %v2299 = vunpack.c.l.b16 %v2267
      %v2300 = vunpack.c.l.b16 %v2268
      %v2301 = vunpack.c.l.b16 %v2269
      %v2302 = vunpack.c.l.b16 %v2270
      %v2303 = vunpack.c.l.b16 %v2271
      %v2304 = vunpack.c.l.b16 %v2272
      %v2305 = vpack.c.b16 %v2290, %v2289
      %v2306 = vpack.c.b16 %v2292, %v2291
      %v2307 = vpack.c.b16 %v2294, %v2293
      %v2308 = vpack.c.b16 %v2296, %v2295
      %v2309 = vpack.c.b16 %v2298, %v2297
      %v2310 = vpack.c.b16 %v2300, %v2299
      %v2311 = vpack.c.b16 %v2302, %v2301
      %v2312 = vpack.c.b16 %v2304, %v2303
      %2321 = vmatprep.subr.bf16.mxu0 0
      %2322 = vmatpush1.bf16.msra.mxu0 %v2305
      %2323 = vmatprep.subr.bf16.mxu0 0
      %2324 = vmatpush1.bf16.msra.mxu0 %v2306
      %2325 = vmatprep.subr.bf16.mxu0 0
      %2326 = vmatpush1.bf16.msra.mxu0 %v2307
      %2327 = vmatprep.subr.bf16.mxu0 0
      %2328 = vmatpush1.bf16.msra.mxu0 %v2308
      %2329 = vmatprep.subr.bf16.mxu0 0
      %2330 = vmatpush1.bf16.msra.mxu0 %v2309
      %2331 = vmatprep.subr.bf16.mxu0 0
      %2332 = vmatpush1.bf16.msra.mxu0 %v2310
      %2333 = vmatprep.subr.bf16.mxu0 0
      %2334 = vmatpush1.bf16.msra.mxu0 %v2311
      %2335 = vmatprep.subr.bf16.mxu0 0
      %2336 = vmatpush1.bf16.msra.mxu0 %v2312
      %2337 = vmatprep.subr.bf16.mxu0 0
      %2338 = vmatpush1.bf16.msra.mxu0 0
      %2339 = vmatprep.subr.bf16.mxu0 0
      %2340 = vmatpush1.bf16.msra.mxu0 0
      %2341 = vmatprep.subr.bf16.mxu0 0
      %2342 = vmatpush1.bf16.msra.mxu0 0
      %2343 = vmatprep.subr.bf16.mxu0 0
      %2344 = vmatpush1.bf16.msra.mxu0 0
      %2345 = vmatprep.subr.bf16.mxu0 0
      %2346 = vmatpush1.bf16.msra.mxu0 0
      %2347 = vmatprep.subr.bf16.mxu0 0
      %2348 = vmatpush1.bf16.msra.mxu0 0
      %2349 = vmatprep.subr.bf16.mxu0 0
      %2350 = vmatpush1.bf16.msra.mxu0 0
      %2351 = vmatprep.subr.bf16.mxu0 0
      %2352 = vmatpush1.bf16.msra.mxu0 0
      %2353 = vmatprep.mubr.bf16.mxu0 0
      %2354 = vmatmul.mubr.bf16.gmra.mrb[0].mxu0 %v2241
      %v2355 = vpop.f32.mrb[0].mxu0
      %v2356 = vadd.f32 0.0, %v2355
      %v2357 = vpop.f32.mrb[0].mxu0
      %v2358 = vpop.f32.mrb[0].mxu0
      %v2359 = vadd.f32 0.0, %v2358
      %v2360 = vpop.f32.mrb[0].mxu0
      %2361 = vmatprep.mubr.bf16.mxu0 0
      %2362 = vmatmul.mubr.bf16.gmra.mrb[0].mxu0 %v2242
      %v2363 = vpop.f32.mrb[0].mxu0
      %v2364 = vadd.f32 0.0, %v2363
      %v2365 = vpop.f32.mrb[0].mxu0
      %v2366 = vpop.f32.mrb[0].mxu0
      %v2367 = vadd.f32 0.0, %v2366
      %v2368 = vpop.f32.mrb[0].mxu0
      %2369 = vmatprep.mubr.bf16.mxu0 0
      %2370 = vmatmul.mubr.bf16.gmra.mrb[0].mxu0 %v2243
      %v2371 = vpop.f32.mrb[0].mxu0
      %v2372 = vadd.f32 0.0, %v2371
      %v2373 = vpop.f32.mrb[0].mxu0
      %v2374 = vpop.f32.mrb[0].mxu0
      %v2375 = vadd.f32 0.0, %v2374
      %v2376 = vpop.f32.mrb[0].mxu0
      %2377 = vmatprep.mubr.bf16.mxu0 0
      %2378 = vmatmul.mubr.bf16.gmra.mrb[0].mxu0 %v2244
      %v2379 = vpop.f32.mrb[0].mxu0
      %v2380 = vadd.f32 0.0, %v2379
      %v2381 = vpop.f32.mrb[0].mxu0
      %v2382 = vpop.f32.mrb[0].mxu0
      %v2383 = vadd.f32 0.0, %v2382
      %v2384 = vpop.f32.mrb[0].mxu0
      %2385 = vmatprep.mubr.bf16.mxu0 0
      %2386 = vmatmul.mubr.bf16.gmra.mrb[0].mxu0 %v2245
      %v2387 = vpop.f32.mrb[0].mxu0
      %v2388 = vadd.f32 0.0, %v2387
      %v2389 = vpop.f32.mrb[0].mxu0
      %v2390 = vpop.f32.mrb[0].mxu0
      %v2391 = vadd.f32 0.0, %v2390
      %v2392 = vpop.f32.mrb[0].mxu0
      %2393 = vmatprep.mubr.bf16.mxu0 0
      %2394 = vmatmul.mubr.bf16.gmra.mrb[0].mxu0 %v2246
      %v2395 = vpop.f32.mrb[0].mxu0
      %v2396 = vadd.f32 0.0, %v2395
      %v2397 = vpop.f32.mrb[0].mxu0
      %v2398 = vpop.f32.mrb[0].mxu0
      %v2399 = vadd.f32 0.0, %v2398
      %v2400 = vpop.f32.mrb[0].mxu0
      %2401 = vmatprep.mubr.bf16.mxu0 0
      %2402 = vmatmul.mubr.bf16.gmra.mrb[0].mxu0 %v2247
      %v2403 = vpop.f32.mrb[0].mxu0
      %v2404 = vadd.f32 0.0, %v2403
      %v2405 = vpop.f32.mrb[0].mxu0
      %v2406 = vpop.f32.mrb[0].mxu0
      %v2407 = vadd.f32 0.0, %v2406
      %v2408 = vpop.f32.mrb[0].mxu0
      %2409 = vmatprep.mubr.bf16.mxu0 0
      %2410 = vmatmul.mubr.bf16.gmra.mrb[0].mxu0 %v2248
      %v2411 = vpop.f32.mrb[0].mxu0
      %v2412 = vadd.f32 0.0, %v2411
      %v2413 = vpop.f32.mrb[0].mxu0
      %v2414 = vpop.f32.mrb[0].mxu0
      %v2415 = vadd.f32 0.0, %v2414
      %v2416 = vpop.f32.mrb[0].mxu0
      %2417 = vmatprep.mubr.bf16.mxu0 0
      %2418 = vmatmul.mubr.bf16.gmra.mrb[0].mxu0 %v2249
      %v2419 = vpop.f32.mrb[0].mxu0
      %v2420 = vadd.f32 0.0, %v2419
      %v2421 = vpop.f32.mrb[0].mxu0
      %v2422 = vpop.f32.mrb[0].mxu0
      %v2423 = vadd.f32 0.0, %v2422
      %v2424 = vpop.f32.mrb[0].mxu0
      %2425 = vmatprep.mubr.bf16.mxu0 0
      %2426 = vmatmul.mubr.bf16.gmra.mrb[0].mxu0 %v2250
      %v2427 = vpop.f32.mrb[0].mxu0
      %v2428 = vadd.f32 0.0, %v2427
      %v2429 = vpop.f32.mrb[0].mxu0
      %v2430 = vpop.f32.mrb[0].mxu0
      %v2431 = vadd.f32 0.0, %v2430
      %v2432 = vpop.f32.mrb[0].mxu0
      %2433 = vmatprep.mubr.bf16.mxu0 0
      %2434 = vmatmul.mubr.bf16.gmra.mrb[0].mxu0 %v2251
      %v2435 = vpop.f32.mrb[0].mxu0
      %v2436 = vadd.f32 0.0, %v2435
      %v2437 = vpop.f32.mrb[0].mxu0
      %v2438 = vpop.f32.mrb[0].mxu0
      %v2439 = vadd.f32 0.0, %v2438
      %v2440 = vpop.f32.mrb[0].mxu0
      %2441 = vmatprep.mubr.bf16.mxu0 0
      %2442 = vmatmul.mubr.bf16.gmra.mrb[0].mxu0 %v2252
      %v2443 = vpop.f32.mrb[0].mxu0
      %v2444 = vadd.f32 0.0, %v2443
      %v2445 = vpop.f32.mrb[0].mxu0
      %v2446 = vpop.f32.mrb[0].mxu0
      %v2447 = vadd.f32 0.0, %v2446
      %v2448 = vpop.f32.mrb[0].mxu0
      %2449 = vmatprep.mubr.bf16.mxu0 0
      %2450 = vmatmul.mubr.bf16.gmra.mrb[0].mxu0 %v2253
      %v2451 = vpop.f32.mrb[0].mxu0
      %v2452 = vadd.f32 0.0, %v2451
      %v2453 = vpop.f32.mrb[0].mxu0
      %v2454 = vpop.f32.mrb[0].mxu0
      %v2455 = vadd.f32 0.0, %v2454
      %v2456 = vpop.f32.mrb[0].mxu0
      %2457 = vmatprep.mubr.bf16.mxu0 0
      %2458 = vmatmul.mubr.bf16.gmra.mrb[0].mxu0 %v2254
      %v2459 = vpop.f32.mrb[0].mxu0
      %v2460 = vadd.f32 0.0, %v2459
      %v2461 = vpop.f32.mrb[0].mxu0
      %v2462 = vpop.f32.mrb[0].mxu0
      %v2463 = vadd.f32 0.0, %v2462
      %v2464 = vpop.f32.mrb[0].mxu0
      %2465 = vmatprep.mubr.bf16.mxu0 0
      %2466 = vmatmul.mubr.bf16.gmra.mrb[0].mxu0 %v2255
      %v2467 = vpop.f32.mrb[0].mxu0
      %v2468 = vadd.f32 0.0, %v2467
      %v2469 = vpop.f32.mrb[0].mxu0
      %v2470 = vpop.f32.mrb[0].mxu0
      %v2471 = vadd.f32 0.0, %v2470
      %v2472 = vpop.f32.mrb[0].mxu0
      %2473 = vmatprep.mubr.bf16.mxu0 0
      %2474 = vmatmul.mubr.bf16.gmra.mrb[0].mxu0 %v2256
      %v2475 = vpop.f32.mrb[0].mxu0
      %v2476 = vadd.f32 0.0, %v2475
      %v2477 = vpop.f32.mrb[0].mxu0
      %v2478 = vpop.f32.mrb[0].mxu0
      %v2479 = vadd.f32 0.0, %v2478
      %v2480 = vpop.f32.mrb[0].mxu0
      %2481 = vdwg.mxu0
      %v2482 = vadd.f32 %v2177, %v2356
      %v2483 = vadd.f32 %v2178, %v2359
      %v2484 = vadd.f32 %v2179, %v2364
      %v2485 = vadd.f32 %v2180, %v2367
      %v2486 = vadd.f32 %v2181, %v2372
      %v2487 = vadd.f32 %v2182, %v2375
      %v2488 = vadd.f32 %v2183, %v2380
      %v2489 = vadd.f32 %v2184, %v2383
      %v2490 = vadd.f32 %v2185, %v2388
      %v2491 = vadd.f32 %v2186, %v2391
      %v2492 = vadd.f32 %v2187, %v2396
      %v2493 = vadd.f32 %v2188, %v2399
      %v2494 = vadd.f32 %v2189, %v2404
      %v2495 = vadd.f32 %v2190, %v2407
      %v2496 = vadd.f32 %v2191, %v2412
      %v2497 = vadd.f32 %v2192, %v2415
      %v2498 = vadd.f32 %v2193, %v2420
      %v2499 = vadd.f32 %v2194, %v2423
      %v2500 = vadd.f32 %v2195, %v2428
      %v2501 = vadd.f32 %v2196, %v2431
      %v2502 = vadd.f32 %v2197, %v2436
      %v2503 = vadd.f32 %v2198, %v2439
      %v2504 = vadd.f32 %v2199, %v2444
      %v2505 = vadd.f32 %v2200, %v2447
      %v2506 = vadd.f32 %v2201, %v2452
      %v2507 = vadd.f32 %v2202, %v2455
      %v2508 = vadd.f32 %v2203, %v2460
      %v2509 = vadd.f32 %v2204, %v2463
      %v2510 = vadd.f32 %v2205, %v2468
      %v2511 = vadd.f32 %v2206, %v2471
      %v2512 = vadd.f32 %v2207, %v2476
      %v2513 = vadd.f32 %v2208, %v2479
      %v2514 = vld [vmem:[%s1020 + $0x2] sm:$0xff]
      %v2515 = vld [vmem:[%s1020 + $0xa] sm:$0xff]
      %v2516 = vld [vmem:[%s1020 + $0x1a] sm:$0xff]
      %v2517 = vld [vmem:[%s1020 + $0x22] sm:$0xff]
      %v2518 = vld [vmem:[%s1020 + $0x32] sm:$0xff]
      %v2519 = vld [vmem:[%s1020 + $0x3a] sm:$0xff]
      %v2520 = vld [vmem:[%s1020 + $0x4a] sm:$0xff]
      %v2521 = vld [vmem:[%s1020 + $0x52] sm:$0xff]
      %v2522 = vld [vmem:[%s1020 + $0x62] sm:$0xff]
      %v2523 = vld [vmem:[%s1020 + $0x6a] sm:$0xff]
      %v2524 = vld [vmem:[%s1020 + $0x7a] sm:$0xff]
      %v2525 = vld [vmem:[%s1020 + $0x82] sm:$0xff]
      %v2526 = vld [vmem:[%s1020 + $0x92] sm:$0xff]
      %v2527 = vld [vmem:[%s1020 + $0x9a] sm:$0xff]
      %v2528 = vld [vmem:[%s1020 + $0xaa] sm:$0xff]
      %v2529 = vld [vmem:[%s1020 + $0xb2] sm:$0xff]
      %v2530 = vld [vmem:[%s1020 + $0xc2] sm:$0xff]
      %v2531 = vld [vmem:[%s1020 + $0xca] sm:$0xff]
      %v2532 = vld [vmem:[%s1020 + $0xda] sm:$0xff]
      %v2533 = vld [vmem:[%s1020 + $0xe2] sm:$0xff]
      %v2534 = vld [vmem:[%s1020 + $0xf2] sm:$0xff]
      %v2535 = vld [vmem:[%s1020 + $0xfa] sm:$0xff]
      %v2536 = vld [vmem:[%s1020 + $0x10a] sm:$0xff]
      %v2537 = vld [vmem:[%s1020 + $0x112] sm:$0xff]
      %v2538 = vld [vmem:[%s1020 + $0x122] sm:$0xff]
      %v2539 = vld [vmem:[%s1020 + $0x12a] sm:$0xff]
      %v2540 = vld [vmem:[%s1020 + $0x13a] sm:$0xff]
      %v2541 = vld [vmem:[%s1020 + $0x142] sm:$0xff]
      %v2542 = vld [vmem:[%s1020 + $0x152] sm:$0xff]
      %v2543 = vld [vmem:[%s1020 + $0x15a] sm:$0xff]
      %v2544 = vld [vmem:[%s1020 + $0x16a] sm:$0xff]
      %v2545 = vld [vmem:[%s1020 + $0x172] sm:$0xff]
      %v2546 = vpack.c.bf16 %v2515, %v2514
      %v2547 = vpack.c.bf16 %v2517, %v2516
      %v2548 = vpack.c.bf16 %v2519, %v2518
      %v2549 = vpack.c.bf16 %v2521, %v2520
      %v2550 = vpack.c.bf16 %v2523, %v2522
      %v2551 = vpack.c.bf16 %v2525, %v2524
      %v2552 = vpack.c.bf16 %v2527, %v2526
      %v2553 = vpack.c.bf16 %v2529, %v2528
      %v2554 = vpack.c.bf16 %v2531, %v2530
      %v2555 = vpack.c.bf16 %v2533, %v2532
      %v2556 = vpack.c.bf16 %v2535, %v2534
      %v2557 = vpack.c.bf16 %v2537, %v2536
      %v2558 = vpack.c.bf16 %v2539, %v2538
      %v2559 = vpack.c.bf16 %v2541, %v2540
      %v2560 = vpack.c.bf16 %v2543, %v2542
      %v2561 = vpack.c.bf16 %v2545, %v2544
      %v2562 = vld [vmem:[%s3 + $0x140] sm:$0xf]
      %v2563 = vld [vmem:[%s3 + $0x144] sm:$0xf]
      %v2564 = vld [vmem:[%s3 + $0x148] sm:$0xf]
      %v2565 = vld [vmem:[%s3 + $0x14c] sm:$0xf]
      %v2566 = vld [vmem:[%s3 + $0x150] sm:$0xf]
      %v2567 = vld [vmem:[%s3 + $0x154] sm:$0xf]
      %v2568 = vld [vmem:[%s3 + $0x158] sm:$0xf]
      %v2569 = vld [vmem:[%s3 + $0x15c] sm:$0xf]
      %v2570 = vld [vmem:[%s3 + $0x160] sm:$0xf]
      %v2571 = vld [vmem:[%s3 + $0x164] sm:$0xf]
      %v2572 = vld [vmem:[%s3 + $0x168] sm:$0xf]
      %v2573 = vld [vmem:[%s3 + $0x16c] sm:$0xf]
      %v2574 = vld [vmem:[%s3 + $0x170] sm:$0xf]
      %v2575 = vld [vmem:[%s3 + $0x174] sm:$0xf]
      %v2576 = vld [vmem:[%s3 + $0x178] sm:$0xf]
      %v2577 = vld [vmem:[%s3 + $0x17c] sm:$0xf]
      %v2594 = vunpack.c.l.b16 %v2562
      %v2595 = vunpack.c.l.b16 %v2563
      %v2596 = vunpack.c.l.b16 %v2564
      %v2597 = vunpack.c.l.b16 %v2565
      %v2598 = vunpack.c.l.b16 %v2566
      %v2599 = vunpack.c.l.b16 %v2567
      %v2600 = vunpack.c.l.b16 %v2568
      %v2601 = vunpack.c.l.b16 %v2569
      %v2602 = vunpack.c.l.b16 %v2570
      %v2603 = vunpack.c.l.b16 %v2571
      %v2604 = vunpack.c.l.b16 %v2572
      %v2605 = vunpack.c.l.b16 %v2573
      %v2606 = vunpack.c.l.b16 %v2574
      %v2607 = vunpack.c.l.b16 %v2575
      %v2608 = vunpack.c.l.b16 %v2576
      %v2609 = vunpack.c.l.b16 %v2577
      %v2610 = vpack.c.b16 %v2595, %v2594
      %v2611 = vpack.c.b16 %v2597, %v2596
      %v2612 = vpack.c.b16 %v2599, %v2598
      %v2613 = vpack.c.b16 %v2601, %v2600
      %v2614 = vpack.c.b16 %v2603, %v2602
      %v2615 = vpack.c.b16 %v2605, %v2604
      %v2616 = vpack.c.b16 %v2607, %v2606
      %v2617 = vpack.c.b16 %v2609, %v2608
      %2626 = vmatprep.subr.bf16.mxu0 0
      %2627 = vmatpush1.bf16.msra.mxu0 %v2610
      %2628 = vmatprep.subr.bf16.mxu0 0
      %2629 = vmatpush1.bf16.msra.mxu0 %v2611
      %2630 = vmatprep.subr.bf16.mxu0 0
      %2631 = vmatpush1.bf16.msra.mxu0 %v2612
      %2632 = vmatprep.subr.bf16.mxu0 0
      %2633 = vmatpush1.bf16.msra.mxu0 %v2613
      %2634 = vmatprep.subr.bf16.mxu0 0
      %2635 = vmatpush1.bf16.msra.mxu0 %v2614
      %2636 = vmatprep.subr.bf16.mxu0 0
      %2637 = vmatpush1.bf16.msra.mxu0 %v2615
      %2638 = vmatprep.subr.bf16.mxu0 0
      %2639 = vmatpush1.bf16.msra.mxu0 %v2616
      %2640 = vmatprep.subr.bf16.mxu0 0
      %2641 = vmatpush1.bf16.msra.mxu0 %v2617
      %2642 = vmatprep.subr.bf16.mxu0 0
      %2643 = vmatpush1.bf16.msra.mxu0 0
      %2644 = vmatprep.subr.bf16.mxu0 0
      %2645 = vmatpush1.bf16.msra.mxu0 0
      %2646 = vmatprep.subr.bf16.mxu0 0
      %2647 = vmatpush1.bf16.msra.mxu0 0
      %2648 = vmatprep.subr.bf16.mxu0 0
      %2649 = vmatpush1.bf16.msra.mxu0 0
      %2650 = vmatprep.subr.bf16.mxu0 0
      %2651 = vmatpush1.bf16.msra.mxu0 0
      %2652 = vmatprep.subr.bf16.mxu0 0
      %2653 = vmatpush1.bf16.msra.mxu0 0
      %2654 = vmatprep.subr.bf16.mxu0 0
      %2655 = vmatpush1.bf16.msra.mxu0 0
      %2656 = vmatprep.subr.bf16.mxu0 0
      %2657 = vmatpush1.bf16.msra.mxu0 0
      %2658 = vmatprep.mubr.bf16.mxu0 0
      %2659 = vmatmul.mubr.bf16.gmra.mrb[0].mxu0 %v2546
      %v2660 = vpop.f32.mrb[0].mxu0
      %v2661 = vadd.f32 0.0, %v2660
      %v2662 = vpop.f32.mrb[0].mxu0
      %v2663 = vpop.f32.mrb[0].mxu0
      %v2664 = vadd.f32 0.0, %v2663
      %v2665 = vpop.f32.mrb[0].mxu0
      %2666 = vmatprep.mubr.bf16.mxu0 0
      %2667 = vmatmul.mubr.bf16.gmra.mrb[0].mxu0 %v2547
      %v2668 = vpop.f32.mrb[0].mxu0
      %v2669 = vadd.f32 0.0, %v2668
      %v2670 = vpop.f32.mrb[0].mxu0
      %v2671 = vpop.f32.mrb[0].mxu0
      %v2672 = vadd.f32 0.0, %v2671
      %v2673 = vpop.f32.mrb[0].mxu0
      %2674 = vmatprep.mubr.bf16.mxu0 0
      %2675 = vmatmul.mubr.bf16.gmra.mrb[0].mxu0 %v2548
      %v2676 = vpop.f32.mrb[0].mxu0
      %v2677 = vadd.f32 0.0, %v2676
      %v2678 = vpop.f32.mrb[0].mxu0
      %v2679 = vpop.f32.mrb[0].mxu0
      %v2680 = vadd.f32 0.0, %v2679
      %v2681 = vpop.f32.mrb[0].mxu0
      %2682 = vmatprep.mubr.bf16.mxu0 0
      %2683 = vmatmul.mubr.bf16.gmra.mrb[0].mxu0 %v2549
      %v2684 = vpop.f32.mrb[0].mxu0
      %v2685 = vadd.f32 0.0, %v2684
      %v2686 = vpop.f32.mrb[0].mxu0
      %v2687 = vpop.f32.mrb[0].mxu0
      %v2688 = vadd.f32 0.0, %v2687
      %v2689 = vpop.f32.mrb[0].mxu0
      %2690 = vmatprep.mubr.bf16.mxu0 0
      %2691 = vmatmul.mubr.bf16.gmra.mrb[0].mxu0 %v2550
      %v2692 = vpop.f32.mrb[0].mxu0
      %v2693 = vadd.f32 0.0, %v2692
      %v2694 = vpop.f32.mrb[0].mxu0
      %v2695 = vpop.f32.mrb[0].mxu0
      %v2696 = vadd.f32 0.0, %v2695
      %v2697 = vpop.f32.mrb[0].mxu0
      %2698 = vmatprep.mubr.bf16.mxu0 0
      %2699 = vmatmul.mubr.bf16.gmra.mrb[0].mxu0 %v2551
      %v2700 = vpop.f32.mrb[0].mxu0
      %v2701 = vadd.f32 0.0, %v2700
      %v2702 = vpop.f32.mrb[0].mxu0
      %v2703 = vpop.f32.mrb[0].mxu0
      %v2704 = vadd.f32 0.0, %v2703
      %v2705 = vpop.f32.mrb[0].mxu0
      %2706 = vmatprep.mubr.bf16.mxu0 0
      %2707 = vmatmul.mubr.bf16.gmra.mrb[0].mxu0 %v2552
      %v2708 = vpop.f32.mrb[0].mxu0
      %v2709 = vadd.f32 0.0, %v2708
      %v2710 = vpop.f32.mrb[0].mxu0
      %v2711 = vpop.f32.mrb[0].mxu0
      %v2712 = vadd.f32 0.0, %v2711
      %v2713 = vpop.f32.mrb[0].mxu0
      %2714 = vmatprep.mubr.bf16.mxu0 0
      %2715 = vmatmul.mubr.bf16.gmra.mrb[0].mxu0 %v2553
      %v2716 = vpop.f32.mrb[0].mxu0
      %v2717 = vadd.f32 0.0, %v2716
      %v2718 = vpop.f32.mrb[0].mxu0
      %v2719 = vpop.f32.mrb[0].mxu0
      %v2720 = vadd.f32 0.0, %v2719
      %v2721 = vpop.f32.mrb[0].mxu0
      %2722 = vmatprep.mubr.bf16.mxu0 0
      %2723 = vmatmul.mubr.bf16.gmra.mrb[0].mxu0 %v2554
      %v2724 = vpop.f32.mrb[0].mxu0
      %v2725 = vadd.f32 0.0, %v2724
      %v2726 = vpop.f32.mrb[0].mxu0
      %v2727 = vpop.f32.mrb[0].mxu0
      %v2728 = vadd.f32 0.0, %v2727
      %v2729 = vpop.f32.mrb[0].mxu0
      %2730 = vmatprep.mubr.bf16.mxu0 0
      %2731 = vmatmul.mubr.bf16.gmra.mrb[0].mxu0 %v2555
      %v2732 = vpop.f32.mrb[0].mxu0
      %v2733 = vadd.f32 0.0, %v2732
      %v2734 = vpop.f32.mrb[0].mxu0
      %v2735 = vpop.f32.mrb[0].mxu0
      %v2736 = vadd.f32 0.0, %v2735
      %v2737 = vpop.f32.mrb[0].mxu0
      %2738 = vmatprep.mubr.bf16.mxu0 0
      %2739 = vmatmul.mubr.bf16.gmra.mrb[0].mxu0 %v2556
      %v2740 = vpop.f32.mrb[0].mxu0
      %v2741 = vadd.f32 0.0, %v2740
      %v2742 = vpop.f32.mrb[0].mxu0
      %v2743 = vpop.f32.mrb[0].mxu0
      %v2744 = vadd.f32 0.0, %v2743
      %v2745 = vpop.f32.mrb[0].mxu0
      %2746 = vmatprep.mubr.bf16.mxu0 0
      %2747 = vmatmul.mubr.bf16.gmra.mrb[0].mxu0 %v2557
      %v2748 = vpop.f32.mrb[0].mxu0
      %v2749 = vadd.f32 0.0, %v2748
      %v2750 = vpop.f32.mrb[0].mxu0
      %v2751 = vpop.f32.mrb[0].mxu0
      %v2752 = vadd.f32 0.0, %v2751
      %v2753 = vpop.f32.mrb[0].mxu0
      %2754 = vmatprep.mubr.bf16.mxu0 0
      %2755 = vmatmul.mubr.bf16.gmra.mrb[0].mxu0 %v2558
      %v2756 = vpop.f32.mrb[0].mxu0
      %v2757 = vadd.f32 0.0, %v2756
      %v2758 = vpop.f32.mrb[0].mxu0
      %v2759 = vpop.f32.mrb[0].mxu0
      %v2760 = vadd.f32 0.0, %v2759
      %v2761 = vpop.f32.mrb[0].mxu0
      %2762 = vmatprep.mubr.bf16.mxu0 0
      %2763 = vmatmul.mubr.bf16.gmra.mrb[0].mxu0 %v2559
      %v2764 = vpop.f32.mrb[0].mxu0
      %v2765 = vadd.f32 0.0, %v2764
      %v2766 = vpop.f32.mrb[0].mxu0
      %v2767 = vpop.f32.mrb[0].mxu0
      %v2768 = vadd.f32 0.0, %v2767
      %v2769 = vpop.f32.mrb[0].mxu0
      %2770 = vmatprep.mubr.bf16.mxu0 0
      %2771 = vmatmul.mubr.bf16.gmra.mrb[0].mxu0 %v2560
      %v2772 = vpop.f32.mrb[0].mxu0
      %v2773 = vadd.f32 0.0, %v2772
      %v2774 = vpop.f32.mrb[0].mxu0
      %v2775 = vpop.f32.mrb[0].mxu0
      %v2776 = vadd.f32 0.0, %v2775
      %v2777 = vpop.f32.mrb[0].mxu0
      %2778 = vmatprep.mubr.bf16.mxu0 0
      %2779 = vmatmul.mubr.bf16.gmra.mrb[0].mxu0 %v2561
      %v2780 = vpop.f32.mrb[0].mxu0
      %v2781 = vadd.f32 0.0, %v2780
      %v2782 = vpop.f32.mrb[0].mxu0
      %v2783 = vpop.f32.mrb[0].mxu0
      %v2784 = vadd.f32 0.0, %v2783
      %v2785 = vpop.f32.mrb[0].mxu0
      %2786 = vdwg.mxu0
      %v2787 = vadd.f32 %v2482, %v2661
      %v2788 = vadd.f32 %v2483, %v2664
      %v2789 = vadd.f32 %v2484, %v2669
      %v2790 = vadd.f32 %v2485, %v2672
      %v2791 = vadd.f32 %v2486, %v2677
      %v2792 = vadd.f32 %v2487, %v2680
      %v2793 = vadd.f32 %v2488, %v2685
      %v2794 = vadd.f32 %v2489, %v2688
      %v2795 = vadd.f32 %v2490, %v2693
      %v2796 = vadd.f32 %v2491, %v2696
      %v2797 = vadd.f32 %v2492, %v2701
      %v2798 = vadd.f32 %v2493, %v2704
      %v2799 = vadd.f32 %v2494, %v2709
      %v2800 = vadd.f32 %v2495, %v2712
      %v2801 = vadd.f32 %v2496, %v2717
      %v2802 = vadd.f32 %v2497, %v2720
      %v2803 = vadd.f32 %v2498, %v2725
      %v2804 = vadd.f32 %v2499, %v2728
      %v2805 = vadd.f32 %v2500, %v2733
      %v2806 = vadd.f32 %v2501, %v2736
      %v2807 = vadd.f32 %v2502, %v2741
      %v2808 = vadd.f32 %v2503, %v2744
      %v2809 = vadd.f32 %v2504, %v2749
      %v2810 = vadd.f32 %v2505, %v2752
      %v2811 = vadd.f32 %v2506, %v2757
      %v2812 = vadd.f32 %v2507, %v2760
      %v2813 = vadd.f32 %v2508, %v2765
      %v2814 = vadd.f32 %v2509, %v2768
      %v2815 = vadd.f32 %v2510, %v2773
      %v2816 = vadd.f32 %v2511, %v2776
      %v2817 = vadd.f32 %v2512, %v2781
      %v2818 = vadd.f32 %v2513, %v2784
      %s2819 = scalar_lea.vmem [#allocation2], 48
      %v2820 = vld [vmem:[%s2819] sm:$0xff]
      %v2821 = vld [vmem:[%s2819 + $0x8] sm:$0xff]
      %v2822 = vld [vmem:[%s2819 + $0x18] sm:$0xff]
      %v2823 = vld [vmem:[%s2819 + $0x20] sm:$0xff]
      %v2824 = vld [vmem:[%s2819 + $0x30] sm:$0xff]
      %v2825 = vld [vmem:[%s2819 + $0x38] sm:$0xff]
      %v2826 = vld [vmem:[%s2819 + $0x48] sm:$0xff]
      %v2827 = vld [vmem:[%s2819 + $0x50] sm:$0xff]
      %v2828 = vld [vmem:[%s2819 + $0x60] sm:$0xff]
      %v2829 = vld [vmem:[%s2819 + $0x68] sm:$0xff]
      %v2830 = vld [vmem:[%s2819 + $0x78] sm:$0xff]
      %v2831 = vld [vmem:[%s2819 + $0x80] sm:$0xff]
      %v2832 = vld [vmem:[%s2819 + $0x90] sm:$0xff]
      %v2833 = vld [vmem:[%s2819 + $0x98] sm:$0xff]
      %v2834 = vld [vmem:[%s2819 + $0xa8] sm:$0xff]
      %v2835 = vld [vmem:[%s2819 + $0xb0] sm:$0xff]
      %v2836 = vld [vmem:[%s2819 + $0xc0] sm:$0xff]
      %v2837 = vld [vmem:[%s2819 + $0xc8] sm:$0xff]
      %v2838 = vld [vmem:[%s2819 + $0xd8] sm:$0xff]
      %v2839 = vld [vmem:[%s2819 + $0xe0] sm:$0xff]
      %v2840 = vld [vmem:[%s2819 + $0xf0] sm:$0xff]
      %v2841 = vld [vmem:[%s2819 + $0xf8] sm:$0xff]
      %v2842 = vld [vmem:[%s2819 + $0x108] sm:$0xff]
      %v2843 = vld [vmem:[%s2819 + $0x110] sm:$0xff]
      %v2844 = vld [vmem:[%s2819 + $0x120] sm:$0xff]
      %v2845 = vld [vmem:[%s2819 + $0x128] sm:$0xff]
      %v2846 = vld [vmem:[%s2819 + $0x138] sm:$0xff]
      %v2847 = vld [vmem:[%s2819 + $0x140] sm:$0xff]
      %v2848 = vld [vmem:[%s2819 + $0x150] sm:$0xff]
      %v2849 = vld [vmem:[%s2819 + $0x158] sm:$0xff]
      %v2850 = vld [vmem:[%s2819 + $0x168] sm:$0xff]
      %v2851 = vld [vmem:[%s2819 + $0x170] sm:$0xff]
      %v2852 = vpack.c.bf16 %v2821, %v2820
      %v2853 = vpack.c.bf16 %v2823, %v2822
      %v2854 = vpack.c.bf16 %v2825, %v2824
      %v2855 = vpack.c.bf16 %v2827, %v2826
      %v2856 = vpack.c.bf16 %v2829, %v2828
      %v2857 = vpack.c.bf16 %v2831, %v2830
      %v2858 = vpack.c.bf16 %v2833, %v2832
      %v2859 = vpack.c.bf16 %v2835, %v2834
      %v2860 = vpack.c.bf16 %v2837, %v2836
      %v2861 = vpack.c.bf16 %v2839, %v2838
      %v2862 = vpack.c.bf16 %v2841, %v2840
      %v2863 = vpack.c.bf16 %v2843, %v2842
      %v2864 = vpack.c.bf16 %v2845, %v2844
      %v2865 = vpack.c.bf16 %v2847, %v2846
      %v2866 = vpack.c.bf16 %v2849, %v2848
      %v2867 = vpack.c.bf16 %v2851, %v2850
      %v2868 = vld [vmem:[%s3 + $0x180] sm:$0xf]
      %v2869 = vld [vmem:[%s3 + $0x184] sm:$0xf]
      %v2870 = vld [vmem:[%s3 + $0x188] sm:$0xf]
      %v2871 = vld [vmem:[%s3 + $0x18c] sm:$0xf]
      %v2872 = vld [vmem:[%s3 + $0x190] sm:$0xf]
      %v2873 = vld [vmem:[%s3 + $0x194] sm:$0xf]
      %v2874 = vld [vmem:[%s3 + $0x198] sm:$0xf]
      %v2875 = vld [vmem:[%s3 + $0x19c] sm:$0xf]
      %v2876 = vld [vmem:[%s3 + $0x1a0] sm:$0xf]
      %v2877 = vld [vmem:[%s3 + $0x1a4] sm:$0xf]
      %v2878 = vld [vmem:[%s3 + $0x1a8] sm:$0xf]
      %v2879 = vld [vmem:[%s3 + $0x1ac] sm:$0xf]
      %v2880 = vld [vmem:[%s3 + $0x1b0] sm:$0xf]
      %v2881 = vld [vmem:[%s3 + $0x1b4] sm:$0xf]
      %v2882 = vld [vmem:[%s3 + $0x1b8] sm:$0xf]
      %v2883 = vld [vmem:[%s3 + $0x1bc] sm:$0xf]
      %v2900 = vunpack.c.l.b16 %v2868
      %v2901 = vunpack.c.l.b16 %v2869
      %v2902 = vunpack.c.l.b16 %v2870
      %v2903 = vunpack.c.l.b16 %v2871
      %v2904 = vunpack.c.l.b16 %v2872
      %v2905 = vunpack.c.l.b16 %v2873
      %v2906 = vunpack.c.l.b16 %v2874
      %v2907 = vunpack.c.l.b16 %v2875
      %v2908 = vunpack.c.l.b16 %v2876
      %v2909 = vunpack.c.l.b16 %v2877
      %v2910 = vunpack.c.l.b16 %v2878
      %v2911 = vunpack.c.l.b16 %v2879
      %v2912 = vunpack.c.l.b16 %v2880
      %v2913 = vunpack.c.l.b16 %v2881
      %v2914 = vunpack.c.l.b16 %v2882
      %v2915 = vunpack.c.l.b16 %v2883
      %v2916 = vpack.c.b16 %v2901, %v2900
      %v2917 = vpack.c.b16 %v2903, %v2902
      %v2918 = vpack.c.b16 %v2905, %v2904
      %v2919 = vpack.c.b16 %v2907, %v2906
      %v2920 = vpack.c.b16 %v2909, %v2908
      %v2921 = vpack.c.b16 %v2911, %v2910
      %v2922 = vpack.c.b16 %v2913, %v2912
      %v2923 = vpack.c.b16 %v2915, %v2914
      %2932 = vmatprep.subr.bf16.mxu0 0
      %2933 = vmatpush1.bf16.msra.mxu0 %v2916
      %2934 = vmatprep.subr.bf16.mxu0 0
      %2935 = vmatpush1.bf16.msra.mxu0 %v2917
      %2936 = vmatprep.subr.bf16.mxu0 0
      %2937 = vmatpush1.bf16.msra.mxu0 %v2918
      %2938 = vmatprep.subr.bf16.mxu0 0
      %2939 = vmatpush1.bf16.msra.mxu0 %v2919
      %2940 = vmatprep.subr.bf16.mxu0 0
      %2941 = vmatpush1.bf16.msra.mxu0 %v2920
      %2942 = vmatprep.subr.bf16.mxu0 0
      %2943 = vmatpush1.bf16.msra.mxu0 %v2921
      %2944 = vmatprep.subr.bf16.mxu0 0
      %2945 = vmatpush1.bf16.msra.mxu0 %v2922
      %2946 = vmatprep.subr.bf16.mxu0 0
      %2947 = vmatpush1.bf16.msra.mxu0 %v2923
      %2948 = vmatprep.subr.bf16.mxu0 0
      %2949 = vmatpush1.bf16.msra.mxu0 0
      %2950 = vmatprep.subr.bf16.mxu0 0
      %2951 = vmatpush1.bf16.msra.mxu0 0
      %2952 = vmatprep.subr.bf16.mxu0 0
      %2953 = vmatpush1.bf16.msra.mxu0 0
      %2954 = vmatprep.subr.bf16.mxu0 0
      %2955 = vmatpush1.bf16.msra.mxu0 0
      %2956 = vmatprep.subr.bf16.mxu0 0
      %2957 = vmatpush1.bf16.msra.mxu0 0
      %2958 = vmatprep.subr.bf16.mxu0 0
      %2959 = vmatpush1.bf16.msra.mxu0 0
      %2960 = vmatprep.subr.bf16.mxu0 0
      %2961 = vmatpush1.bf16.msra.mxu0 0
      %2962 = vmatprep.subr.bf16.mxu0 0
      %2963 = vmatpush1.bf16.msra.mxu0 0
      %2964 = vmatprep.mubr.bf16.mxu0 0
      %2965 = vmatmul.mubr.bf16.gmra.mrb[0].mxu0 %v2852
      %v2966 = vpop.f32.mrb[0].mxu0
      %v2967 = vadd.f32 0.0, %v2966
      %v2968 = vpop.f32.mrb[0].mxu0
      %v2969 = vpop.f32.mrb[0].mxu0
      %v2970 = vadd.f32 0.0, %v2969
      %v2971 = vpop.f32.mrb[0].mxu0
      %2972 = vmatprep.mubr.bf16.mxu0 0
      %2973 = vmatmul.mubr.bf16.gmra.mrb[0].mxu0 %v2853
      %v2974 = vpop.f32.mrb[0].mxu0
      %v2975 = vadd.f32 0.0, %v2974
      %v2976 = vpop.f32.mrb[0].mxu0
      %v2977 = vpop.f32.mrb[0].mxu0
      %v2978 = vadd.f32 0.0, %v2977
      %v2979 = vpop.f32.mrb[0].mxu0
      %2980 = vmatprep.mubr.bf16.mxu0 0
      %2981 = vmatmul.mubr.bf16.gmra.mrb[0].mxu0 %v2854
      %v2982 = vpop.f32.mrb[0].mxu0
      %v2983 = vadd.f32 0.0, %v2982
      %v2984 = vpop.f32.mrb[0].mxu0
      %v2985 = vpop.f32.mrb[0].mxu0
      %v2986 = vadd.f32 0.0, %v2985
      %v2987 = vpop.f32.mrb[0].mxu0
      %2988 = vmatprep.mubr.bf16.mxu0 0
      %2989 = vmatmul.mubr.bf16.gmra.mrb[0].mxu0 %v2855
      %v2990 = vpop.f32.mrb[0].mxu0
      %v2991 = vadd.f32 0.0, %v2990
      %v2992 = vpop.f32.mrb[0].mxu0
      %v2993 = vpop.f32.mrb[0].mxu0
      %v2994 = vadd.f32 0.0, %v2993
      %v2995 = vpop.f32.mrb[0].mxu0
      %2996 = vmatprep.mubr.bf16.mxu0 0
      %2997 = vmatmul.mubr.bf16.gmra.mrb[0].mxu0 %v2856
      %v2998 = vpop.f32.mrb[0].mxu0
      %v2999 = vadd.f32 0.0, %v2998
      %v3000 = vpop.f32.mrb[0].mxu0
      %v3001 = vpop.f32.mrb[0].mxu0
      %v3002 = vadd.f32 0.0, %v3001
      %v3003 = vpop.f32.mrb[0].mxu0
      %3004 = vmatprep.mubr.bf16.mxu0 0
      %3005 = vmatmul.mubr.bf16.gmra.mrb[0].mxu0 %v2857
      %v3006 = vpop.f32.mrb[0].mxu0
      %v3007 = vadd.f32 0.0, %v3006
      %v3008 = vpop.f32.mrb[0].mxu0
      %v3009 = vpop.f32.mrb[0].mxu0
      %v3010 = vadd.f32 0.0, %v3009
      %v3011 = vpop.f32.mrb[0].mxu0
      %3012 = vmatprep.mubr.bf16.mxu0 0
      %3013 = vmatmul.mubr.bf16.gmra.mrb[0].mxu0 %v2858
      %v3014 = vpop.f32.mrb[0].mxu0
      %v3015 = vadd.f32 0.0, %v3014
      %v3016 = vpop.f32.mrb[0].mxu0
      %v3017 = vpop.f32.mrb[0].mxu0
      %v3018 = vadd.f32 0.0, %v3017
      %v3019 = vpop.f32.mrb[0].mxu0
      %3020 = vmatprep.mubr.bf16.mxu0 0
      %3021 = vmatmul.mubr.bf16.gmra.mrb[0].mxu0 %v2859
      %v3022 = vpop.f32.mrb[0].mxu0
      %v3023 = vadd.f32 0.0, %v3022
      %v3024 = vpop.f32.mrb[0].mxu0
      %v3025 = vpop.f32.mrb[0].mxu0
      %v3026 = vadd.f32 0.0, %v3025
      %v3027 = vpop.f32.mrb[0].mxu0
      %3028 = vmatprep.mubr.bf16.mxu0 0
      %3029 = vmatmul.mubr.bf16.gmra.mrb[0].mxu0 %v2860
      %v3030 = vpop.f32.mrb[0].mxu0
      %v3031 = vadd.f32 0.0, %v3030
      %v3032 = vpop.f32.mrb[0].mxu0
      %v3033 = vpop.f32.mrb[0].mxu0
      %v3034 = vadd.f32 0.0, %v3033
      %v3035 = vpop.f32.mrb[0].mxu0
      %3036 = vmatprep.mubr.bf16.mxu0 0
      %3037 = vmatmul.mubr.bf16.gmra.mrb[0].mxu0 %v2861
      %v3038 = vpop.f32.mrb[0].mxu0
      %v3039 = vadd.f32 0.0, %v3038
      %v3040 = vpop.f32.mrb[0].mxu0
      %v3041 = vpop.f32.mrb[0].mxu0
      %v3042 = vadd.f32 0.0, %v3041
      %v3043 = vpop.f32.mrb[0].mxu0
      %3044 = vmatprep.mubr.bf16.mxu0 0
      %3045 = vmatmul.mubr.bf16.gmra.mrb[0].mxu0 %v2862
      %v3046 = vpop.f32.mrb[0].mxu0
      %v3047 = vadd.f32 0.0, %v3046
      %v3048 = vpop.f32.mrb[0].mxu0
      %v3049 = vpop.f32.mrb[0].mxu0
      %v3050 = vadd.f32 0.0, %v3049
      %v3051 = vpop.f32.mrb[0].mxu0
      %3052 = vmatprep.mubr.bf16.mxu0 0
      %3053 = vmatmul.mubr.bf16.gmra.mrb[0].mxu0 %v2863
      %v3054 = vpop.f32.mrb[0].mxu0
      %v3055 = vadd.f32 0.0, %v3054
      %v3056 = vpop.f32.mrb[0].mxu0
      %v3057 = vpop.f32.mrb[0].mxu0
      %v3058 = vadd.f32 0.0, %v3057
      %v3059 = vpop.f32.mrb[0].mxu0
      %3060 = vmatprep.mubr.bf16.mxu0 0
      %3061 = vmatmul.mubr.bf16.gmra.mrb[0].mxu0 %v2864
      %v3062 = vpop.f32.mrb[0].mxu0
      %v3063 = vadd.f32 0.0, %v3062
      %v3064 = vpop.f32.mrb[0].mxu0
      %v3065 = vpop.f32.mrb[0].mxu0
      %v3066 = vadd.f32 0.0, %v3065
      %v3067 = vpop.f32.mrb[0].mxu0
      %3068 = vmatprep.mubr.bf16.mxu0 0
      %3069 = vmatmul.mubr.bf16.gmra.mrb[0].mxu0 %v2865
      %v3070 = vpop.f32.mrb[0].mxu0
      %v3071 = vadd.f32 0.0, %v3070
      %v3072 = vpop.f32.mrb[0].mxu0
      %v3073 = vpop.f32.mrb[0].mxu0
      %v3074 = vadd.f32 0.0, %v3073
      %v3075 = vpop.f32.mrb[0].mxu0
      %3076 = vmatprep.mubr.bf16.mxu0 0
      %3077 = vmatmul.mubr.bf16.gmra.mrb[0].mxu0 %v2866
      %v3078 = vpop.f32.mrb[0].mxu0
      %v3079 = vadd.f32 0.0, %v3078
      %v3080 = vpop.f32.mrb[0].mxu0
      %v3081 = vpop.f32.mrb[0].mxu0
      %v3082 = vadd.f32 0.0, %v3081
      %v3083 = vpop.f32.mrb[0].mxu0
      %3084 = vmatprep.mubr.bf16.mxu0 0
      %3085 = vmatmul.mubr.bf16.gmra.mrb[0].mxu0 %v2867
      %v3086 = vpop.f32.mrb[0].mxu0
      %v3087 = vadd.f32 0.0, %v3086
      %v3088 = vpop.f32.mrb[0].mxu0
      %v3089 = vpop.f32.mrb[0].mxu0
      %v3090 = vadd.f32 0.0, %v3089
      %v3091 = vpop.f32.mrb[0].mxu0
      %3092 = vdwg.mxu0
      %v3093 = vadd.f32 %v2787, %v2967
      %v3094 = vadd.f32 %v2788, %v2970
      %v3095 = vadd.f32 %v2789, %v2975
      %v3096 = vadd.f32 %v2790, %v2978
      %v3097 = vadd.f32 %v2791, %v2983
      %v3098 = vadd.f32 %v2792, %v2986
      %v3099 = vadd.f32 %v2793, %v2991
      %v3100 = vadd.f32 %v2794, %v2994
      %v3101 = vadd.f32 %v2795, %v2999
      %v3102 = vadd.f32 %v2796, %v3002
      %v3103 = vadd.f32 %v2797, %v3007
      %v3104 = vadd.f32 %v2798, %v3010
      %v3105 = vadd.f32 %v2799, %v3015
      %v3106 = vadd.f32 %v2800, %v3018
      %v3107 = vadd.f32 %v2801, %v3023
      %v3108 = vadd.f32 %v2802, %v3026
      %v3109 = vadd.f32 %v2803, %v3031
      %v3110 = vadd.f32 %v2804, %v3034
      %v3111 = vadd.f32 %v2805, %v3039
      %v3112 = vadd.f32 %v2806, %v3042
      %v3113 = vadd.f32 %v2807, %v3047
      %v3114 = vadd.f32 %v2808, %v3050
      %v3115 = vadd.f32 %v2809, %v3055
      %v3116 = vadd.f32 %v2810, %v3058
      %v3117 = vadd.f32 %v2811, %v3063
      %v3118 = vadd.f32 %v2812, %v3066
      %v3119 = vadd.f32 %v2813, %v3071
      %v3120 = vadd.f32 %v2814, %v3074
      %v3121 = vadd.f32 %v2815, %v3079
      %v3122 = vadd.f32 %v2816, %v3082
      %v3123 = vadd.f32 %v2817, %v3087
      %v3124 = vadd.f32 %v2818, %v3090
      %v3125 = vld [vmem:[%s2819 + $0x1] sm:$0xff]
      %v3126 = vld [vmem:[%s2819 + $0x9] sm:$0xff]
      %v3127 = vld [vmem:[%s2819 + $0x19] sm:$0xff]
      %v3128 = vld [vmem:[%s2819 + $0x21] sm:$0xff]
      %v3129 = vld [vmem:[%s2819 + $0x31] sm:$0xff]
      %v3130 = vld [vmem:[%s2819 + $0x39] sm:$0xff]
      %v3131 = vld [vmem:[%s2819 + $0x49] sm:$0xff]
      %v3132 = vld [vmem:[%s2819 + $0x51] sm:$0xff]
      %v3133 = vld [vmem:[%s2819 + $0x61] sm:$0xff]
      %v3134 = vld [vmem:[%s2819 + $0x69] sm:$0xff]
      %v3135 = vld [vmem:[%s2819 + $0x79] sm:$0xff]
      %v3136 = vld [vmem:[%s2819 + $0x81] sm:$0xff]
      %v3137 = vld [vmem:[%s2819 + $0x91] sm:$0xff]
      %v3138 = vld [vmem:[%s2819 + $0x99] sm:$0xff]
      %v3139 = vld [vmem:[%s2819 + $0xa9] sm:$0xff]
      %v3140 = vld [vmem:[%s2819 + $0xb1] sm:$0xff]
      %v3141 = vld [vmem:[%s2819 + $0xc1] sm:$0xff]
      %v3142 = vld [vmem:[%s2819 + $0xc9] sm:$0xff]
      %v3143 = vld [vmem:[%s2819 + $0xd9] sm:$0xff]
      %v3144 = vld [vmem:[%s2819 + $0xe1] sm:$0xff]
      %v3145 = vld [vmem:[%s2819 + $0xf1] sm:$0xff]
      %v3146 = vld [vmem:[%s2819 + $0xf9] sm:$0xff]
      %v3147 = vld [vmem:[%s2819 + $0x109] sm:$0xff]
      %v3148 = vld [vmem:[%s2819 + $0x111] sm:$0xff]
      %v3149 = vld [vmem:[%s2819 + $0x121] sm:$0xff]
      %v3150 = vld [vmem:[%s2819 + $0x129] sm:$0xff]
      %v3151 = vld [vmem:[%s2819 + $0x139] sm:$0xff]
      %v3152 = vld [vmem:[%s2819 + $0x141] sm:$0xff]
      %v3153 = vld [vmem:[%s2819 + $0x151] sm:$0xff]
      %v3154 = vld [vmem:[%s2819 + $0x159] sm:$0xff]
      %v3155 = vld [vmem:[%s2819 + $0x169] sm:$0xff]
      %v3156 = vld [vmem:[%s2819 + $0x171] sm:$0xff]
      %v3157 = vpack.c.bf16 %v3126, %v3125
      %v3158 = vpack.c.bf16 %v3128, %v3127
      %v3159 = vpack.c.bf16 %v3130, %v3129
      %v3160 = vpack.c.bf16 %v3132, %v3131
      %v3161 = vpack.c.bf16 %v3134, %v3133
      %v3162 = vpack.c.bf16 %v3136, %v3135
      %v3163 = vpack.c.bf16 %v3138, %v3137
      %v3164 = vpack.c.bf16 %v3140, %v3139
      %v3165 = vpack.c.bf16 %v3142, %v3141
      %v3166 = vpack.c.bf16 %v3144, %v3143
      %v3167 = vpack.c.bf16 %v3146, %v3145
      %v3168 = vpack.c.bf16 %v3148, %v3147
      %v3169 = vpack.c.bf16 %v3150, %v3149
      %v3170 = vpack.c.bf16 %v3152, %v3151
      %v3171 = vpack.c.bf16 %v3154, %v3153
      %v3172 = vpack.c.bf16 %v3156, %v3155
      %v3173 = vld [vmem:[%s3 + $0x1c0] sm:$0xf]
      %v3174 = vld [vmem:[%s3 + $0x1c4] sm:$0xf]
      %v3175 = vld [vmem:[%s3 + $0x1c8] sm:$0xf]
      %v3176 = vld [vmem:[%s3 + $0x1cc] sm:$0xf]
      %v3177 = vld [vmem:[%s3 + $0x1d0] sm:$0xf]
      %v3178 = vld [vmem:[%s3 + $0x1d4] sm:$0xf]
      %v3179 = vld [vmem:[%s3 + $0x1d8] sm:$0xf]
      %v3180 = vld [vmem:[%s3 + $0x1dc] sm:$0xf]
      %v3181 = vld [vmem:[%s3 + $0x1e0] sm:$0xf]
      %v3182 = vld [vmem:[%s3 + $0x1e4] sm:$0xf]
      %v3183 = vld [vmem:[%s3 + $0x1e8] sm:$0xf]
      %v3184 = vld [vmem:[%s3 + $0x1ec] sm:$0xf]
      %v3185 = vld [vmem:[%s3 + $0x1f0] sm:$0xf]
      %v3186 = vld [vmem:[%s3 + $0x1f4] sm:$0xf]
      %v3187 = vld [vmem:[%s3 + $0x1f8] sm:$0xf]
      %v3188 = vld [vmem:[%s3 + $0x1fc] sm:$0xf]
      %v3205 = vunpack.c.l.b16 %v3173
      %v3206 = vunpack.c.l.b16 %v3174
      %v3207 = vunpack.c.l.b16 %v3175
      %v3208 = vunpack.c.l.b16 %v3176
      %v3209 = vunpack.c.l.b16 %v3177
      %v3210 = vunpack.c.l.b16 %v3178
      %v3211 = vunpack.c.l.b16 %v3179
      %v3212 = vunpack.c.l.b16 %v3180
      %v3213 = vunpack.c.l.b16 %v3181
      %v3214 = vunpack.c.l.b16 %v3182
      %v3215 = vunpack.c.l.b16 %v3183
      %v3216 = vunpack.c.l.b16 %v3184
      %v3217 = vunpack.c.l.b16 %v3185
      %v3218 = vunpack.c.l.b16 %v3186
      %v3219 = vunpack.c.l.b16 %v3187
      %v3220 = vunpack.c.l.b16 %v3188
      %v3221 = vpack.c.b16 %v3206, %v3205
      %v3222 = vpack.c.b16 %v3208, %v3207
      %v3223 = vpack.c.b16 %v3210, %v3209
      %v3224 = vpack.c.b16 %v3212, %v3211
      %v3225 = vpack.c.b16 %v3214, %v3213
      %v3226 = vpack.c.b16 %v3216, %v3215
      %v3227 = vpack.c.b16 %v3218, %v3217
      %v3228 = vpack.c.b16 %v3220, %v3219
      %3237 = vmatprep.subr.bf16.mxu0 0
      %3238 = vmatpush1.bf16.msra.mxu0 %v3221
      %3239 = vmatprep.subr.bf16.mxu0 0
      %3240 = vmatpush1.bf16.msra.mxu0 %v3222
      %3241 = vmatprep.subr.bf16.mxu0 0
      %3242 = vmatpush1.bf16.msra.mxu0 %v3223
      %3243 = vmatprep.subr.bf16.mxu0 0
      %3244 = vmatpush1.bf16.msra.mxu0 %v3224
      %3245 = vmatprep.subr.bf16.mxu0 0
      %3246 = vmatpush1.bf16.msra.mxu0 %v3225
      %3247 = vmatprep.subr.bf16.mxu0 0
      %3248 = vmatpush1.bf16.msra.mxu0 %v3226
      %3249 = vmatprep.subr.bf16.mxu0 0
      %3250 = vmatpush1.bf16.msra.mxu0 %v3227
      %3251 = vmatprep.subr.bf16.mxu0 0
      %3252 = vmatpush1.bf16.msra.mxu0 %v3228
      %3253 = vmatprep.subr.bf16.mxu0 0
      %3254 = vmatpush1.bf16.msra.mxu0 0
      %3255 = vmatprep.subr.bf16.mxu0 0
      %3256 = vmatpush1.bf16.msra.mxu0 0
      %3257 = vmatprep.subr.bf16.mxu0 0
      %3258 = vmatpush1.bf16.msra.mxu0 0
      %3259 = vmatprep.subr.bf16.mxu0 0
      %3260 = vmatpush1.bf16.msra.mxu0 0
      %3261 = vmatprep.subr.bf16.mxu0 0
      %3262 = vmatpush1.bf16.msra.mxu0 0
      %3263 = vmatprep.subr.bf16.mxu0 0
      %3264 = vmatpush1.bf16.msra.mxu0 0
      %3265 = vmatprep.subr.bf16.mxu0 0
      %3266 = vmatpush1.bf16.msra.mxu0 0
      %3267 = vmatprep.subr.bf16.mxu0 0
      %3268 = vmatpush1.bf16.msra.mxu0 0
      %3269 = vmatprep.mubr.bf16.mxu0 0
      %3270 = vmatmul.mubr.bf16.gmra.mrb[0].mxu0 %v3157
      %v3271 = vpop.f32.mrb[0].mxu0
      %v3272 = vadd.f32 0.0, %v3271
      %v3273 = vpop.f32.mrb[0].mxu0
      %v3274 = vpop.f32.mrb[0].mxu0
      %v3275 = vadd.f32 0.0, %v3274
      %v3276 = vpop.f32.mrb[0].mxu0
      %3277 = vmatprep.mubr.bf16.mxu0 0
      %3278 = vmatmul.mubr.bf16.gmra.mrb[0].mxu0 %v3158
      %v3279 = vpop.f32.mrb[0].mxu0
      %v3280 = vadd.f32 0.0, %v3279
      %v3281 = vpop.f32.mrb[0].mxu0
      %v3282 = vpop.f32.mrb[0].mxu0
      %v3283 = vadd.f32 0.0, %v3282
      %v3284 = vpop.f32.mrb[0].mxu0
      %3285 = vmatprep.mubr.bf16.mxu0 0
      %3286 = vmatmul.mubr.bf16.gmra.mrb[0].mxu0 %v3159
      %v3287 = vpop.f32.mrb[0].mxu0
      %v3288 = vadd.f32 0.0, %v3287
      %v3289 = vpop.f32.mrb[0].mxu0
      %v3290 = vpop.f32.mrb[0].mxu0
      %v3291 = vadd.f32 0.0, %v3290
      %v3292 = vpop.f32.mrb[0].mxu0
      %3293 = vmatprep.mubr.bf16.mxu0 0
      %3294 = vmatmul.mubr.bf16.gmra.mrb[0].mxu0 %v3160
      %v3295 = vpop.f32.mrb[0].mxu0
      %v3296 = vadd.f32 0.0, %v3295
      %v3297 = vpop.f32.mrb[0].mxu0
      %v3298 = vpop.f32.mrb[0].mxu0
      %v3299 = vadd.f32 0.0, %v3298
      %v3300 = vpop.f32.mrb[0].mxu0
      %3301 = vmatprep.mubr.bf16.mxu0 0
      %3302 = vmatmul.mubr.bf16.gmra.mrb[0].mxu0 %v3161
      %v3303 = vpop.f32.mrb[0].mxu0
      %v3304 = vadd.f32 0.0, %v3303
      %v3305 = vpop.f32.mrb[0].mxu0
      %v3306 = vpop.f32.mrb[0].mxu0
      %v3307 = vadd.f32 0.0, %v3306
      %v3308 = vpop.f32.mrb[0].mxu0
      %3309 = vmatprep.mubr.bf16.mxu0 0
      %3310 = vmatmul.mubr.bf16.gmra.mrb[0].mxu0 %v3162
      %v3311 = vpop.f32.mrb[0].mxu0
      %v3312 = vadd.f32 0.0, %v3311
      %v3313 = vpop.f32.mrb[0].mxu0
      %v3314 = vpop.f32.mrb[0].mxu0
      %v3315 = vadd.f32 0.0, %v3314
      %v3316 = vpop.f32.mrb[0].mxu0
      %3317 = vmatprep.mubr.bf16.mxu0 0
      %3318 = vmatmul.mubr.bf16.gmra.mrb[0].mxu0 %v3163
      %v3319 = vpop.f32.mrb[0].mxu0
      %v3320 = vadd.f32 0.0, %v3319
      %v3321 = vpop.f32.mrb[0].mxu0
      %v3322 = vpop.f32.mrb[0].mxu0
      %v3323 = vadd.f32 0.0, %v3322
      %v3324 = vpop.f32.mrb[0].mxu0
      %3325 = vmatprep.mubr.bf16.mxu0 0
      %3326 = vmatmul.mubr.bf16.gmra.mrb[0].mxu0 %v3164
      %v3327 = vpop.f32.mrb[0].mxu0
      %v3328 = vadd.f32 0.0, %v3327
      %v3329 = vpop.f32.mrb[0].mxu0
      %v3330 = vpop.f32.mrb[0].mxu0
      %v3331 = vadd.f32 0.0, %v3330
      %v3332 = vpop.f32.mrb[0].mxu0
      %3333 = vmatprep.mubr.bf16.mxu0 0
      %3334 = vmatmul.mubr.bf16.gmra.mrb[0].mxu0 %v3165
      %v3335 = vpop.f32.mrb[0].mxu0
      %v3336 = vadd.f32 0.0, %v3335
      %v3337 = vpop.f32.mrb[0].mxu0
      %v3338 = vpop.f32.mrb[0].mxu0
      %v3339 = vadd.f32 0.0, %v3338
      %v3340 = vpop.f32.mrb[0].mxu0
      %3341 = vmatprep.mubr.bf16.mxu0 0
      %3342 = vmatmul.mubr.bf16.gmra.mrb[0].mxu0 %v3166
      %v3343 = vpop.f32.mrb[0].mxu0
      %v3344 = vadd.f32 0.0, %v3343
      %v3345 = vpop.f32.mrb[0].mxu0
      %v3346 = vpop.f32.mrb[0].mxu0
      %v3347 = vadd.f32 0.0, %v3346
      %v3348 = vpop.f32.mrb[0].mxu0
      %3349 = vmatprep.mubr.bf16.mxu0 0
      %3350 = vmatmul.mubr.bf16.gmra.mrb[0].mxu0 %v3167
      %v3351 = vpop.f32.mrb[0].mxu0
      %v3352 = vadd.f32 0.0, %v3351
      %v3353 = vpop.f32.mrb[0].mxu0
      %v3354 = vpop.f32.mrb[0].mxu0
      %v3355 = vadd.f32 0.0, %v3354
      %v3356 = vpop.f32.mrb[0].mxu0
      %3357 = vmatprep.mubr.bf16.mxu0 0
      %3358 = vmatmul.mubr.bf16.gmra.mrb[0].mxu0 %v3168
      %v3359 = vpop.f32.mrb[0].mxu0
      %v3360 = vadd.f32 0.0, %v3359
      %v3361 = vpop.f32.mrb[0].mxu0
      %v3362 = vpop.f32.mrb[0].mxu0
      %v3363 = vadd.f32 0.0, %v3362
      %v3364 = vpop.f32.mrb[0].mxu0
      %3365 = vmatprep.mubr.bf16.mxu0 0
      %3366 = vmatmul.mubr.bf16.gmra.mrb[0].mxu0 %v3169
      %v3367 = vpop.f32.mrb[0].mxu0
      %v3368 = vadd.f32 0.0, %v3367
      %v3369 = vpop.f32.mrb[0].mxu0
      %v3370 = vpop.f32.mrb[0].mxu0
      %v3371 = vadd.f32 0.0, %v3370
      %v3372 = vpop.f32.mrb[0].mxu0
      %3373 = vmatprep.mubr.bf16.mxu0 0
      %3374 = vmatmul.mubr.bf16.gmra.mrb[0].mxu0 %v3170
      %v3375 = vpop.f32.mrb[0].mxu0
      %v3376 = vadd.f32 0.0, %v3375
      %v3377 = vpop.f32.mrb[0].mxu0
      %v3378 = vpop.f32.mrb[0].mxu0
      %v3379 = vadd.f32 0.0, %v3378
      %v3380 = vpop.f32.mrb[0].mxu0
      %3381 = vmatprep.mubr.bf16.mxu0 0
      %3382 = vmatmul.mubr.bf16.gmra.mrb[0].mxu0 %v3171
      %v3383 = vpop.f32.mrb[0].mxu0
      %v3384 = vadd.f32 0.0, %v3383
      %v3385 = vpop.f32.mrb[0].mxu0
      %v3386 = vpop.f32.mrb[0].mxu0
      %v3387 = vadd.f32 0.0, %v3386
      %v3388 = vpop.f32.mrb[0].mxu0
      %3389 = vmatprep.mubr.bf16.mxu0 0
      %3390 = vmatmul.mubr.bf16.gmra.mrb[0].mxu0 %v3172
      %v3391 = vpop.f32.mrb[0].mxu0
      %v3392 = vadd.f32 0.0, %v3391
      %v3393 = vpop.f32.mrb[0].mxu0
      %v3394 = vpop.f32.mrb[0].mxu0
      %v3395 = vadd.f32 0.0, %v3394
      %v3396 = vpop.f32.mrb[0].mxu0
      %3397 = vdwg.mxu0
      %v3398 = vadd.f32 %v3093, %v3272
      %v3399 = vadd.f32 %v3094, %v3275
      %v3400 = vadd.f32 %v3095, %v3280
      %v3401 = vadd.f32 %v3096, %v3283
      %v3402 = vadd.f32 %v3097, %v3288
      %v3403 = vadd.f32 %v3098, %v3291
      %v3404 = vadd.f32 %v3099, %v3296
      %v3405 = vadd.f32 %v3100, %v3299
      %v3406 = vadd.f32 %v3101, %v3304
      %v3407 = vadd.f32 %v3102, %v3307
      %v3408 = vadd.f32 %v3103, %v3312
      %v3409 = vadd.f32 %v3104, %v3315
      %v3410 = vadd.f32 %v3105, %v3320
      %v3411 = vadd.f32 %v3106, %v3323
      %v3412 = vadd.f32 %v3107, %v3328
      %v3413 = vadd.f32 %v3108, %v3331
      %v3414 = vadd.f32 %v3109, %v3336
      %v3415 = vadd.f32 %v3110, %v3339
      %v3416 = vadd.f32 %v3111, %v3344
      %v3417 = vadd.f32 %v3112, %v3347
      %v3418 = vadd.f32 %v3113, %v3352
      %v3419 = vadd.f32 %v3114, %v3355
      %v3420 = vadd.f32 %v3115, %v3360
      %v3421 = vadd.f32 %v3116, %v3363
      %v3422 = vadd.f32 %v3117, %v3368
      %v3423 = vadd.f32 %v3118, %v3371
      %v3424 = vadd.f32 %v3119, %v3376
      %v3425 = vadd.f32 %v3120, %v3379
      %v3426 = vadd.f32 %v3121, %v3384
      %v3427 = vadd.f32 %v3122, %v3387
      %v3428 = vadd.f32 %v3123, %v3392
      %v3429 = vadd.f32 %v3124, %v3395
      %v3430 = vld [vmem:[%s2819 + $0x2] sm:$0xff]
      %v3431 = vld [vmem:[%s2819 + $0xa] sm:$0xff]
      %v3432 = vld [vmem:[%s2819 + $0x1a] sm:$0xff]
      %v3433 = vld [vmem:[%s2819 + $0x22] sm:$0xff]
      %v3434 = vld [vmem:[%s2819 + $0x32] sm:$0xff]
      %v3435 = vld [vmem:[%s2819 + $0x3a] sm:$0xff]
      %v3436 = vld [vmem:[%s2819 + $0x4a] sm:$0xff]
      %v3437 = vld [vmem:[%s2819 + $0x52] sm:$0xff]
      %v3438 = vld [vmem:[%s2819 + $0x62] sm:$0xff]
      %v3439 = vld [vmem:[%s2819 + $0x6a] sm:$0xff]
      %v3440 = vld [vmem:[%s2819 + $0x7a] sm:$0xff]
      %v3441 = vld [vmem:[%s2819 + $0x82] sm:$0xff]
      %v3442 = vld [vmem:[%s2819 + $0x92] sm:$0xff]
      %v3443 = vld [vmem:[%s2819 + $0x9a] sm:$0xff]
      %v3444 = vld [vmem:[%s2819 + $0xaa] sm:$0xff]
      %v3445 = vld [vmem:[%s2819 + $0xb2] sm:$0xff]
      %v3446 = vld [vmem:[%s2819 + $0xc2] sm:$0xff]
      %v3447 = vld [vmem:[%s2819 + $0xca] sm:$0xff]
      %v3448 = vld [vmem:[%s2819 + $0xda] sm:$0xff]
      %v3449 = vld [vmem:[%s2819 + $0xe2] sm:$0xff]
      %v3450 = vld [vmem:[%s2819 + $0xf2] sm:$0xff]
      %v3451 = vld [vmem:[%s2819 + $0xfa] sm:$0xff]
      %v3452 = vld [vmem:[%s2819 + $0x10a] sm:$0xff]
      %v3453 = vld [vmem:[%s2819 + $0x112] sm:$0xff]
      %v3454 = vld [vmem:[%s2819 + $0x122] sm:$0xff]
      %v3455 = vld [vmem:[%s2819 + $0x12a] sm:$0xff]
      %v3456 = vld [vmem:[%s2819 + $0x13a] sm:$0xff]
      %v3457 = vld [vmem:[%s2819 + $0x142] sm:$0xff]
      %v3458 = vld [vmem:[%s2819 + $0x152] sm:$0xff]
      %v3459 = vld [vmem:[%s2819 + $0x15a] sm:$0xff]
      %v3460 = vld [vmem:[%s2819 + $0x16a] sm:$0xff]
      %v3461 = vld [vmem:[%s2819 + $0x172] sm:$0xff]
      %v3462 = vpack.c.bf16 %v3431, %v3430
      %v3463 = vpack.c.bf16 %v3433, %v3432
      %v3464 = vpack.c.bf16 %v3435, %v3434
      %v3465 = vpack.c.bf16 %v3437, %v3436
      %v3466 = vpack.c.bf16 %v3439, %v3438
      %v3467 = vpack.c.bf16 %v3441, %v3440
      %v3468 = vpack.c.bf16 %v3443, %v3442
      %v3469 = vpack.c.bf16 %v3445, %v3444
      %v3470 = vpack.c.bf16 %v3447, %v3446
      %v3471 = vpack.c.bf16 %v3449, %v3448
      %v3472 = vpack.c.bf16 %v3451, %v3450
      %v3473 = vpack.c.bf16 %v3453, %v3452
      %v3474 = vpack.c.bf16 %v3455, %v3454
      %v3475 = vpack.c.bf16 %v3457, %v3456
      %v3476 = vpack.c.bf16 %v3459, %v3458
      %v3477 = vpack.c.bf16 %v3461, %v3460
      %v3478 = vld [vmem:[%s3 + $0x200] sm:$0xf]
      %v3479 = vld [vmem:[%s3 + $0x204] sm:$0xf]
      %v3480 = vld [vmem:[%s3 + $0x208] sm:$0xf]
      %v3481 = vld [vmem:[%s3 + $0x20c] sm:$0xf]
      %v3482 = vld [vmem:[%s3 + $0x210] sm:$0xf]
      %v3483 = vld [vmem:[%s3 + $0x214] sm:$0xf]
      %v3484 = vld [vmem:[%s3 + $0x218] sm:$0xf]
      %v3485 = vld [vmem:[%s3 + $0x21c] sm:$0xf]
      %v3486 = vld [vmem:[%s3 + $0x220] sm:$0xf]
      %v3487 = vld [vmem:[%s3 + $0x224] sm:$0xf]
      %v3488 = vld [vmem:[%s3 + $0x228] sm:$0xf]
      %v3489 = vld [vmem:[%s3 + $0x22c] sm:$0xf]
      %v3490 = vld [vmem:[%s3 + $0x230] sm:$0xf]
      %v3491 = vld [vmem:[%s3 + $0x234] sm:$0xf]
      %v3492 = vld [vmem:[%s3 + $0x238] sm:$0xf]
      %v3493 = vld [vmem:[%s3 + $0x23c] sm:$0xf]
      %v3510 = vunpack.c.l.b16 %v3478
      %v3511 = vunpack.c.l.b16 %v3479
      %v3512 = vunpack.c.l.b16 %v3480
      %v3513 = vunpack.c.l.b16 %v3481
      %v3514 = vunpack.c.l.b16 %v3482
      %v3515 = vunpack.c.l.b16 %v3483
      %v3516 = vunpack.c.l.b16 %v3484
      %v3517 = vunpack.c.l.b16 %v3485
      %v3518 = vunpack.c.l.b16 %v3486
      %v3519 = vunpack.c.l.b16 %v3487
      %v3520 = vunpack.c.l.b16 %v3488
      %v3521 = vunpack.c.l.b16 %v3489
      %v3522 = vunpack.c.l.b16 %v3490
      %v3523 = vunpack.c.l.b16 %v3491
      %v3524 = vunpack.c.l.b16 %v3492
      %v3525 = vunpack.c.l.b16 %v3493
      %v3526 = vpack.c.b16 %v3511, %v3510
      %v3527 = vpack.c.b16 %v3513, %v3512
      %v3528 = vpack.c.b16 %v3515, %v3514
      %v3529 = vpack.c.b16 %v3517, %v3516
      %v3530 = vpack.c.b16 %v3519, %v3518
      %v3531 = vpack.c.b16 %v3521, %v3520
      %v3532 = vpack.c.b16 %v3523, %v3522
      %v3533 = vpack.c.b16 %v3525, %v3524
      %3542 = vmatprep.subr.bf16.mxu0 0
      %3543 = vmatpush1.bf16.msra.mxu0 %v3526
      %3544 = vmatprep.subr.bf16.mxu0 0
      %3545 = vmatpush1.bf16.msra.mxu0 %v3527
      %3546 = vmatprep.subr.bf16.mxu0 0
      %3547 = vmatpush1.bf16.msra.mxu0 %v3528
      %3548 = vmatprep.subr.bf16.mxu0 0
      %3549 = vmatpush1.bf16.msra.mxu0 %v3529
      %3550 = vmatprep.subr.bf16.mxu0 0
      %3551 = vmatpush1.bf16.msra.mxu0 %v3530
      %3552 = vmatprep.subr.bf16.mxu0 0
      %3553 = vmatpush1.bf16.msra.mxu0 %v3531
      %3554 = vmatprep.subr.bf16.mxu0 0
      %3555 = vmatpush1.bf16.msra.mxu0 %v3532
      %3556 = vmatprep.subr.bf16.mxu0 0
      %3557 = vmatpush1.bf16.msra.mxu0 %v3533
      %3558 = vmatprep.subr.bf16.mxu0 0
      %3559 = vmatpush1.bf16.msra.mxu0 0
      %3560 = vmatprep.subr.bf16.mxu0 0
      %3561 = vmatpush1.bf16.msra.mxu0 0
      %3562 = vmatprep.subr.bf16.mxu0 0
      %3563 = vmatpush1.bf16.msra.mxu0 0
      %3564 = vmatprep.subr.bf16.mxu0 0
      %3565 = vmatpush1.bf16.msra.mxu0 0
      %3566 = vmatprep.subr.bf16.mxu0 0
      %3567 = vmatpush1.bf16.msra.mxu0 0
      %3568 = vmatprep.subr.bf16.mxu0 0
      %3569 = vmatpush1.bf16.msra.mxu0 0
      %3570 = vmatprep.subr.bf16.mxu0 0
      %3571 = vmatpush1.bf16.msra.mxu0 0
      %3572 = vmatprep.subr.bf16.mxu0 0
      %3573 = vmatpush1.bf16.msra.mxu0 0
      %3574 = vmatprep.mubr.bf16.mxu0 0
      %3575 = vmatmul.mubr.bf16.gmra.mrb[0].mxu0 %v3462
      %v3576 = vpop.f32.mrb[0].mxu0
      %v3577 = vadd.f32 0.0, %v3576
      %v3578 = vpop.f32.mrb[0].mxu0
      %v3579 = vpop.f32.mrb[0].mxu0
      %v3580 = vadd.f32 0.0, %v3579
      %v3581 = vpop.f32.mrb[0].mxu0
      %3582 = vmatprep.mubr.bf16.mxu0 0
      %3583 = vmatmul.mubr.bf16.gmra.mrb[0].mxu0 %v3463
      %v3584 = vpop.f32.mrb[0].mxu0
      %v3585 = vadd.f32 0.0, %v3584
      %v3586 = vpop.f32.mrb[0].mxu0
      %v3587 = vpop.f32.mrb[0].mxu0
      %v3588 = vadd.f32 0.0, %v3587
      %v3589 = vpop.f32.mrb[0].mxu0
      %3590 = vmatprep.mubr.bf16.mxu0 0
      %3591 = vmatmul.mubr.bf16.gmra.mrb[0].mxu0 %v3464
      %v3592 = vpop.f32.mrb[0].mxu0
      %v3593 = vadd.f32 0.0, %v3592
      %v3594 = vpop.f32.mrb[0].mxu0
      %v3595 = vpop.f32.mrb[0].mxu0
      %v3596 = vadd.f32 0.0, %v3595
      %v3597 = vpop.f32.mrb[0].mxu0
      %3598 = vmatprep.mubr.bf16.mxu0 0
      %3599 = vmatmul.mubr.bf16.gmra.mrb[0].mxu0 %v3465
      %v3600 = vpop.f32.mrb[0].mxu0
      %v3601 = vadd.f32 0.0, %v3600
      %v3602 = vpop.f32.mrb[0].mxu0
      %v3603 = vpop.f32.mrb[0].mxu0
      %v3604 = vadd.f32 0.0, %v3603
      %v3605 = vpop.f32.mrb[0].mxu0
      %3606 = vmatprep.mubr.bf16.mxu0 0
      %3607 = vmatmul.mubr.bf16.gmra.mrb[0].mxu0 %v3466
      %v3608 = vpop.f32.mrb[0].mxu0
      %v3609 = vadd.f32 0.0, %v3608
      %v3610 = vpop.f32.mrb[0].mxu0
      %v3611 = vpop.f32.mrb[0].mxu0
      %v3612 = vadd.f32 0.0, %v3611
      %v3613 = vpop.f32.mrb[0].mxu0
      %3614 = vmatprep.mubr.bf16.mxu0 0
      %3615 = vmatmul.mubr.bf16.gmra.mrb[0].mxu0 %v3467
      %v3616 = vpop.f32.mrb[0].mxu0
      %v3617 = vadd.f32 0.0, %v3616
      %v3618 = vpop.f32.mrb[0].mxu0
      %v3619 = vpop.f32.mrb[0].mxu0
      %v3620 = vadd.f32 0.0, %v3619
      %v3621 = vpop.f32.mrb[0].mxu0
      %3622 = vmatprep.mubr.bf16.mxu0 0
      %3623 = vmatmul.mubr.bf16.gmra.mrb[0].mxu0 %v3468
      %v3624 = vpop.f32.mrb[0].mxu0
      %v3625 = vadd.f32 0.0, %v3624
      %v3626 = vpop.f32.mrb[0].mxu0
      %v3627 = vpop.f32.mrb[0].mxu0
      %v3628 = vadd.f32 0.0, %v3627
      %v3629 = vpop.f32.mrb[0].mxu0
      %3630 = vmatprep.mubr.bf16.mxu0 0
      %3631 = vmatmul.mubr.bf16.gmra.mrb[0].mxu0 %v3469
      %v3632 = vpop.f32.mrb[0].mxu0
      %v3633 = vadd.f32 0.0, %v3632
      %v3634 = vpop.f32.mrb[0].mxu0
      %v3635 = vpop.f32.mrb[0].mxu0
      %v3636 = vadd.f32 0.0, %v3635
      %v3637 = vpop.f32.mrb[0].mxu0
      %3638 = vmatprep.mubr.bf16.mxu0 0
      %3639 = vmatmul.mubr.bf16.gmra.mrb[0].mxu0 %v3470
      %v3640 = vpop.f32.mrb[0].mxu0
      %v3641 = vadd.f32 0.0, %v3640
      %v3642 = vpop.f32.mrb[0].mxu0
      %v3643 = vpop.f32.mrb[0].mxu0
      %v3644 = vadd.f32 0.0, %v3643
      %v3645 = vpop.f32.mrb[0].mxu0
      %3646 = vmatprep.mubr.bf16.mxu0 0
      %3647 = vmatmul.mubr.bf16.gmra.mrb[0].mxu0 %v3471
      %v3648 = vpop.f32.mrb[0].mxu0
      %v3649 = vadd.f32 0.0, %v3648
      %v3650 = vpop.f32.mrb[0].mxu0
      %v3651 = vpop.f32.mrb[0].mxu0
      %v3652 = vadd.f32 0.0, %v3651
      %v3653 = vpop.f32.mrb[0].mxu0
      %3654 = vmatprep.mubr.bf16.mxu0 0
      %3655 = vmatmul.mubr.bf16.gmra.mrb[0].mxu0 %v3472
      %v3656 = vpop.f32.mrb[0].mxu0
      %v3657 = vadd.f32 0.0, %v3656
      %v3658 = vpop.f32.mrb[0].mxu0
      %v3659 = vpop.f32.mrb[0].mxu0
      %v3660 = vadd.f32 0.0, %v3659
      %v3661 = vpop.f32.mrb[0].mxu0
      %3662 = vmatprep.mubr.bf16.mxu0 0
      %3663 = vmatmul.mubr.bf16.gmra.mrb[0].mxu0 %v3473
      %v3664 = vpop.f32.mrb[0].mxu0
      %v3665 = vadd.f32 0.0, %v3664
      %v3666 = vpop.f32.mrb[0].mxu0
      %v3667 = vpop.f32.mrb[0].mxu0
      %v3668 = vadd.f32 0.0, %v3667
      %v3669 = vpop.f32.mrb[0].mxu0
      %3670 = vmatprep.mubr.bf16.mxu0 0
      %3671 = vmatmul.mubr.bf16.gmra.mrb[0].mxu0 %v3474
      %v3672 = vpop.f32.mrb[0].mxu0
      %v3673 = vadd.f32 0.0, %v3672
      %v3674 = vpop.f32.mrb[0].mxu0
      %v3675 = vpop.f32.mrb[0].mxu0
      %v3676 = vadd.f32 0.0, %v3675
      %v3677 = vpop.f32.mrb[0].mxu0
      %3678 = vmatprep.mubr.bf16.mxu0 0
      %3679 = vmatmul.mubr.bf16.gmra.mrb[0].mxu0 %v3475
      %v3680 = vpop.f32.mrb[0].mxu0
      %v3681 = vadd.f32 0.0, %v3680
      %v3682 = vpop.f32.mrb[0].mxu0
      %v3683 = vpop.f32.mrb[0].mxu0
      %v3684 = vadd.f32 0.0, %v3683
      %v3685 = vpop.f32.mrb[0].mxu0
      %3686 = vmatprep.mubr.bf16.mxu0 0
      %3687 = vmatmul.mubr.bf16.gmra.mrb[0].mxu0 %v3476
      %v3688 = vpop.f32.mrb[0].mxu0
      %v3689 = vadd.f32 0.0, %v3688
      %v3690 = vpop.f32.mrb[0].mxu0
      %v3691 = vpop.f32.mrb[0].mxu0
      %v3692 = vadd.f32 0.0, %v3691
      %v3693 = vpop.f32.mrb[0].mxu0
      %3694 = vmatprep.mubr.bf16.mxu0 0
      %3695 = vmatmul.mubr.bf16.gmra.mrb[0].mxu0 %v3477
      %v3696 = vpop.f32.mrb[0].mxu0
      %v3697 = vadd.f32 0.0, %v3696
      %v3698 = vpop.f32.mrb[0].mxu0
      %v3699 = vpop.f32.mrb[0].mxu0
      %v3700 = vadd.f32 0.0, %v3699
      %v3701 = vpop.f32.mrb[0].mxu0
      %3702 = vdwg.mxu0
      %v3703 = vadd.f32 %v3398, %v3577
      %v3704 = vadd.f32 %v3399, %v3580
      %v3705 = vadd.f32 %v3400, %v3585
      %v3706 = vadd.f32 %v3401, %v3588
      %v3707 = vadd.f32 %v3402, %v3593
      %v3708 = vadd.f32 %v3403, %v3596
      %v3709 = vadd.f32 %v3404, %v3601
      %v3710 = vadd.f32 %v3405, %v3604
      %v3711 = vadd.f32 %v3406, %v3609
      %v3712 = vadd.f32 %v3407, %v3612
      %v3713 = vadd.f32 %v3408, %v3617
      %v3714 = vadd.f32 %v3409, %v3620
      %v3715 = vadd.f32 %v3410, %v3625
      %v3716 = vadd.f32 %v3411, %v3628
      %v3717 = vadd.f32 %v3412, %v3633
      %v3718 = vadd.f32 %v3413, %v3636
      %v3719 = vadd.f32 %v3414, %v3641
      %v3720 = vadd.f32 %v3415, %v3644
      %v3721 = vadd.f32 %v3416, %v3649
      %v3722 = vadd.f32 %v3417, %v3652
      %v3723 = vadd.f32 %v3418, %v3657
      %v3724 = vadd.f32 %v3419, %v3660
      %v3725 = vadd.f32 %v3420, %v3665
      %v3726 = vadd.f32 %v3421, %v3668
      %v3727 = vadd.f32 %v3422, %v3673
      %v3728 = vadd.f32 %v3423, %v3676
      %v3729 = vadd.f32 %v3424, %v3681
      %v3730 = vadd.f32 %v3425, %v3684
      %v3731 = vadd.f32 %v3426, %v3689
      %v3732 = vadd.f32 %v3427, %v3692
      %v3733 = vadd.f32 %v3428, %v3697
      %v3734 = vadd.f32 %v3429, %v3700
      %v3735 = vld [vmem:[%s4] sm:$0x1]
      %v3737 = vlaneseq
      %v3738 = vshrl.u32 %v3737, 7
      %v3739 = vsub.s32 0, %v3738
      %v3740 = vrot.slane %v3735, %v3739
      %v3742 = vadd.f32 %v3703, %v3740
      %v3743 = vadd.f32 %v3704, %v3740
      %v3744 = vadd.f32 %v3705, %v3740
      %v3745 = vadd.f32 %v3706, %v3740
      %v3746 = vadd.f32 %v3707, %v3740
      %v3747 = vadd.f32 %v3708, %v3740
      %v3748 = vadd.f32 %v3709, %v3740
      %v3749 = vadd.f32 %v3710, %v3740
      %v3750 = vadd.f32 %v3711, %v3740
      %v3751 = vadd.f32 %v3712, %v3740
      %v3752 = vadd.f32 %v3713, %v3740
      %v3753 = vadd.f32 %v3714, %v3740
      %v3754 = vadd.f32 %v3715, %v3740
      %v3755 = vadd.f32 %v3716, %v3740
      %v3756 = vadd.f32 %v3717, %v3740
      %v3757 = vadd.f32 %v3718, %v3740
      %v3758 = vadd.f32 %v3719, %v3740
      %v3759 = vadd.f32 %v3720, %v3740
      %v3760 = vadd.f32 %v3721, %v3740
      %v3761 = vadd.f32 %v3722, %v3740
      %v3762 = vadd.f32 %v3723, %v3740
      %v3763 = vadd.f32 %v3724, %v3740
      %v3764 = vadd.f32 %v3725, %v3740
      %v3765 = vadd.f32 %v3726, %v3740
      %v3766 = vadd.f32 %v3727, %v3740
      %v3767 = vadd.f32 %v3728, %v3740
      %v3768 = vadd.f32 %v3729, %v3740
      %v3769 = vadd.f32 %v3730, %v3740
      %v3770 = vadd.f32 %v3731, %v3740
      %v3771 = vadd.f32 %v3732, %v3740
      %v3772 = vadd.f32 %v3733, %v3740
      %v3773 = vadd.f32 %v3734, %v3740
      %v3774 = vmax.f32 %v3742, 0.0
      %v3775 = vmax.f32 %v3743, 0.0
      %v3776 = vmax.f32 %v3744, 0.0
      %v3777 = vmax.f32 %v3745, 0.0
      %v3778 = vmax.f32 %v3746, 0.0
      %v3779 = vmax.f32 %v3747, 0.0
      %v3780 = vmax.f32 %v3748, 0.0
      %v3781 = vmax.f32 %v3749, 0.0
      %v3782 = vmax.f32 %v3750, 0.0
      %v3783 = vmax.f32 %v3751, 0.0
      %v3784 = vmax.f32 %v3752, 0.0
      %v3785 = vmax.f32 %v3753, 0.0
      %v3786 = vmax.f32 %v3754, 0.0
      %v3787 = vmax.f32 %v3755, 0.0
      %v3788 = vmax.f32 %v3756, 0.0
      %v3789 = vmax.f32 %v3757, 0.0
      %v3790 = vmax.f32 %v3758, 0.0
      %v3791 = vmax.f32 %v3759, 0.0
      %v3792 = vmax.f32 %v3760, 0.0
      %v3793 = vmax.f32 %v3761, 0.0
      %v3794 = vmax.f32 %v3762, 0.0
      %v3795 = vmax.f32 %v3763, 0.0
      %v3796 = vmax.f32 %v3764, 0.0
      %v3797 = vmax.f32 %v3765, 0.0
      %v3798 = vmax.f32 %v3766, 0.0
      %v3799 = vmax.f32 %v3767, 0.0
      %v3800 = vmax.f32 %v3768, 0.0
      %v3801 = vmax.f32 %v3769, 0.0
      %v3802 = vmax.f32 %v3770, 0.0
      %v3803 = vmax.f32 %v3771, 0.0
      %v3804 = vmax.f32 %v3772, 0.0
      %v3805 = vmax.f32 %v3773, 0.0
      %s3806 = scalar_lea.vmem [#allocation3], 24
      %3807 = vst [vmem:[%s3806 + $0x1] sm:$0xff] %v3774
      %3808 = vst [vmem:[%s3806 + $0x9] sm:$0xff] %v3775
      %3809 = vst [vmem:[%s3806 + $0x19] sm:$0xff] %v3776
      %3810 = vst [vmem:[%s3806 + $0x21] sm:$0xff] %v3777
      %3811 = vst [vmem:[%s3806 + $0x31] sm:$0xff] %v3778
      %3812 = vst [vmem:[%s3806 + $0x39] sm:$0xff] %v3779
      %3813 = vst [vmem:[%s3806 + $0x49] sm:$0xff] %v3780
      %3814 = vst [vmem:[%s3806 + $0x51] sm:$0xff] %v3781
      %3815 = vst [vmem:[%s3806 + $0x61] sm:$0xff] %v3782
      %3816 = vst [vmem:[%s3806 + $0x69] sm:$0xff] %v3783
      %3817 = vst [vmem:[%s3806 + $0x79] sm:$0xff] %v3784
      %3818 = vst [vmem:[%s3806 + $0x81] sm:$0xff] %v3785
      %3819 = vst [vmem:[%s3806 + $0x91] sm:$0xff] %v3786
      %3820 = vst [vmem:[%s3806 + $0x99] sm:$0xff] %v3787
      %3821 = vst [vmem:[%s3806 + $0xa9] sm:$0xff] %v3788
      %3822 = vst [vmem:[%s3806 + $0xb1] sm:$0xff] %v3789
      %3823 = vst [vmem:[%s3806 + $0xc1] sm:$0xff] %v3790
      %3824 = vst [vmem:[%s3806 + $0xc9] sm:$0xff] %v3791
      %3825 = vst [vmem:[%s3806 + $0xd9] sm:$0xff] %v3792
      %3826 = vst [vmem:[%s3806 + $0xe1] sm:$0xff] %v3793
      %3827 = vst [vmem:[%s3806 + $0xf1] sm:$0xff] %v3794
      %3828 = vst [vmem:[%s3806 + $0xf9] sm:$0xff] %v3795
      %3829 = vst [vmem:[%s3806 + $0x109] sm:$0xff] %v3796
      %3830 = vst [vmem:[%s3806 + $0x111] sm:$0xff] %v3797
      %3831 = vst [vmem:[%s3806 + $0x121] sm:$0xff] %v3798
      %3832 = vst [vmem:[%s3806 + $0x129] sm:$0xff] %v3799
      %3833 = vst [vmem:[%s3806 + $0x139] sm:$0xff] %v3800
      %3834 = vst [vmem:[%s3806 + $0x141] sm:$0xff] %v3801
      %3835 = vst [vmem:[%s3806 + $0x151] sm:$0xff] %v3802
      %3836 = vst [vmem:[%s3806 + $0x159] sm:$0xff] %v3803
      %3837 = vst [vmem:[%s3806 + $0x169] sm:$0xff] %v3804
      %3838 = vst [vmem:[%s3806 + $0x171] sm:$0xff] %v3805
      %v3839 = vld [vmem:[#allocation3] ss:$2 sm:$0xff]
      %s3840 = scalar_lea.vmem [#allocation3], 48
      %v3841 = vld [vmem:[%s3840] ss:$2 sm:$0xff]
      %s3842 = scalar_lea.vmem [#allocation3], 96
      %v3843 = vld [vmem:[%s3842] ss:$2 sm:$0xff]
      %s3844 = scalar_lea.vmem [#allocation3], 144
      %v3845 = vld [vmem:[%s3844] ss:$2 sm:$0xff]
      %s3846 = scalar_lea.vmem [#allocation3], 192
      %v3847 = vld [vmem:[%s3846] ss:$2 sm:$0xff]
      %s3848 = scalar_lea.vmem [#allocation3], 240
      %v3849 = vld [vmem:[%s3848] ss:$2 sm:$0xff]
      %s3850 = scalar_lea.vmem [#allocation3], 288
      %v3851 = vld [vmem:[%s3850] ss:$2 sm:$0xff]
      %s3852 = scalar_lea.vmem [#allocation3], 336
      %v3853 = vld [vmem:[%s3852] ss:$2 sm:$0xff]
      %v3854 = vpack.c.bf16 %v3841, %v3839
      %v3855 = vpack.c.bf16 %v3845, %v3843
      %v3856 = vpack.c.bf16 %v3849, %v3847
      %v3857 = vpack.c.bf16 %v3853, %v3851
      %v3858 = vld [vmem:[%s5] sm:$0xf]
      %v3859 = vld [vmem:[%s5 + $0x4] sm:$0xf]
      %v3860 = vld [vmem:[%s5 + $0x8] sm:$0xf]
      %v3861 = vld [vmem:[%s5 + $0xc] sm:$0xf]
      %v3862 = vld [vmem:[%s5 + $0x10] sm:$0xf]
      %v3863 = vld [vmem:[%s5 + $0x14] sm:$0xf]
      %v3864 = vld [vmem:[%s5 + $0x18] sm:$0xf]
      %v3865 = vld [vmem:[%s5 + $0x1c] sm:$0xf]
      %v3866 = vld [vmem:[%s5 + $0x20] sm:$0xf]
      %v3867 = vld [vmem:[%s5 + $0x24] sm:$0xf]
      %v3868 = vld [vmem:[%s5 + $0x28] sm:$0xf]
      %v3869 = vld [vmem:[%s5 + $0x2c] sm:$0xf]
      %v3870 = vld [vmem:[%s5 + $0x30] sm:$0xf]
      %v3871 = vld [vmem:[%s5 + $0x34] sm:$0xf]
      %v3872 = vld [vmem:[%s5 + $0x38] sm:$0xf]
      %v3873 = vld [vmem:[%s5 + $0x3c] sm:$0xf]
      %s3874 = scalar_lea.vmem [#allocation3], 1
      %v3875 = vld [vmem:[%s3874] ss:$2 sm:$0xff]
      %s3876 = scalar_lea.vmem [#allocation3], 49
      %v3877 = vld [vmem:[%s3876] ss:$2 sm:$0xff]
      %s3878 = scalar_lea.vmem [#allocation3], 97
      %v3879 = vld [vmem:[%s3878] ss:$2 sm:$0xff]
      %s3880 = scalar_lea.vmem [#allocation3], 145
      %v3881 = vld [vmem:[%s3880] ss:$2 sm:$0xff]
      %s3882 = scalar_lea.vmem [#allocation3], 193
      %v3883 = vld [vmem:[%s3882] ss:$2 sm:$0xff]
      %s3884 = scalar_lea.vmem [#allocation3], 241
      %v3885 = vld [vmem:[%s3884] ss:$2 sm:$0xff]
      %s3886 = scalar_lea.vmem [#allocation3], 289
      %v3887 = vld [vmem:[%s3886] ss:$2 sm:$0xff]
      %s3888 = scalar_lea.vmem [#allocation3], 337
      %v3889 = vld [vmem:[%s3888] ss:$2 sm:$0xff]
      %v3890 = vpack.c.bf16 %v3877, %v3875
      %v3891 = vpack.c.bf16 %v3881, %v3879
      %v3892 = vpack.c.bf16 %v3885, %v3883
      %v3893 = vpack.c.bf16 %v3889, %v3887
      %v3894 = vld [vmem:[%s5 + $0x40] sm:$0xf]
      %v3895 = vld [vmem:[%s5 + $0x44] sm:$0xf]
      %v3896 = vld [vmem:[%s5 + $0x48] sm:$0xf]
      %v3897 = vld [vmem:[%s5 + $0x4c] sm:$0xf]
      %v3898 = vld [vmem:[%s5 + $0x50] sm:$0xf]
      %v3899 = vld [vmem:[%s5 + $0x54] sm:$0xf]
      %v3900 = vld [vmem:[%s5 + $0x58] sm:$0xf]
      %v3901 = vld [vmem:[%s5 + $0x5c] sm:$0xf]
      %v3902 = vld [vmem:[%s5 + $0x60] sm:$0xf]
      %v3903 = vld [vmem:[%s5 + $0x64] sm:$0xf]
      %v3904 = vld [vmem:[%s5 + $0x68] sm:$0xf]
      %v3905 = vld [vmem:[%s5 + $0x6c] sm:$0xf]
      %v3906 = vld [vmem:[%s5 + $0x70] sm:$0xf]
      %v3907 = vld [vmem:[%s5 + $0x74] sm:$0xf]
      %v3908 = vld [vmem:[%s5 + $0x78] sm:$0xf]
      %v3909 = vld [vmem:[%s5 + $0x7c] sm:$0xf]
      %v3926 = vunpack.c.l.b16 %v3894
      %v3927 = vunpack.c.l.b16 %v3895
      %v3928 = vunpack.c.l.b16 %v3896
      %v3929 = vunpack.c.l.b16 %v3897
      %v3930 = vunpack.c.l.b16 %v3898
      %v3931 = vunpack.c.l.b16 %v3899
      %v3932 = vunpack.c.l.b16 %v3900
      %v3933 = vunpack.c.l.b16 %v3901
      %v3934 = vunpack.c.l.b16 %v3902
      %v3935 = vunpack.c.l.b16 %v3903
      %v3936 = vunpack.c.l.b16 %v3904
      %v3937 = vunpack.c.l.b16 %v3905
      %v3938 = vunpack.c.l.b16 %v3906
      %v3939 = vunpack.c.l.b16 %v3907
      %v3940 = vunpack.c.l.b16 %v3908
      %v3941 = vunpack.c.l.b16 %v3909
      %v3942 = vpack.c.b16 %v3927, %v3926
      %v3943 = vpack.c.b16 %v3929, %v3928
      %v3944 = vpack.c.b16 %v3931, %v3930
      %v3945 = vpack.c.b16 %v3933, %v3932
      %v3946 = vpack.c.b16 %v3935, %v3934
      %v3947 = vpack.c.b16 %v3937, %v3936
      %v3948 = vpack.c.b16 %v3939, %v3938
      %v3949 = vpack.c.b16 %v3941, %v3940
      %3958 = vmatprep.subr.bf16.mxu0 0
      %3959 = vmatpush1.bf16.msra.mxu0 %v3942
      %3960 = vmatprep.subr.bf16.mxu0 0
      %3961 = vmatpush1.bf16.msra.mxu0 %v3943
      %3962 = vmatprep.subr.bf16.mxu0 0
      %3963 = vmatpush1.bf16.msra.mxu0 %v3944
      %3964 = vmatprep.subr.bf16.mxu0 0
      %3965 = vmatpush1.bf16.msra.mxu0 %v3945
      %3966 = vmatprep.subr.bf16.mxu0 0
      %3967 = vmatpush1.bf16.msra.mxu0 %v3946
      %3968 = vmatprep.subr.bf16.mxu0 0
      %3969 = vmatpush1.bf16.msra.mxu0 %v3947
      %3970 = vmatprep.subr.bf16.mxu0 0
      %3971 = vmatpush1.bf16.msra.mxu0 %v3948
      %3972 = vmatprep.subr.bf16.mxu0 0
      %3973 = vmatpush1.bf16.msra.mxu0 %v3949
      %3974 = vmatprep.subr.bf16.mxu0 0
      %3975 = vmatpush1.bf16.msra.mxu0 0
      %3976 = vmatprep.subr.bf16.mxu0 0
      %3977 = vmatpush1.bf16.msra.mxu0 0
      %3978 = vmatprep.subr.bf16.mxu0 0
      %3979 = vmatpush1.bf16.msra.mxu0 0
      %3980 = vmatprep.subr.bf16.mxu0 0
      %3981 = vmatpush1.bf16.msra.mxu0 0
      %3982 = vmatprep.subr.bf16.mxu0 0
      %3983 = vmatpush1.bf16.msra.mxu0 0
      %3984 = vmatprep.subr.bf16.mxu0 0
      %3985 = vmatpush1.bf16.msra.mxu0 0
      %3986 = vmatprep.subr.bf16.mxu0 0
      %3987 = vmatpush1.bf16.msra.mxu0 0
      %3988 = vmatprep.subr.bf16.mxu0 0
      %3989 = vmatpush1.bf16.msra.mxu0 0
      %3990 = vmatprep.mubr.bf16.mxu0 0
      %3991 = vmatmul.mubr.bf16.gmra.mrb[0].mxu0 %v3890
      %v3992 = vpop.f32.mrb[0].mxu0
      %v3993 = vadd.f32 0.0, %v3992
      %v3994 = vpop.f32.mrb[0].mxu0
      %v3995 = vpop.f32.mrb[0].mxu0
      %v3996 = vadd.f32 0.0, %v3995
      %v3997 = vpop.f32.mrb[0].mxu0
      %3998 = vmatprep.mubr.bf16.mxu0 0
      %3999 = vmatmul.mubr.bf16.gmra.mrb[0].mxu0 %v3891
      %v4000 = vpop.f32.mrb[0].mxu0
      %v4001 = vadd.f32 0.0, %v4000
      %v4002 = vpop.f32.mrb[0].mxu0
      %v4003 = vpop.f32.mrb[0].mxu0
      %v4004 = vadd.f32 0.0, %v4003
      %v4005 = vpop.f32.mrb[0].mxu0
      %4006 = vmatprep.mubr.bf16.mxu0 0
      %4007 = vmatmul.mubr.bf16.gmra.mrb[0].mxu0 %v3892
      %v4008 = vpop.f32.mrb[0].mxu0
      %v4009 = vadd.f32 0.0, %v4008
      %v4010 = vpop.f32.mrb[0].mxu0
      %v4011 = vpop.f32.mrb[0].mxu0
      %v4012 = vadd.f32 0.0, %v4011
      %v4013 = vpop.f32.mrb[0].mxu0
      %4014 = vmatprep.mubr.bf16.mxu0 0
      %4015 = vmatmul.mubr.bf16.gmra.mrb[0].mxu0 %v3893
      %v4016 = vpop.f32.mrb[0].mxu0
      %v4017 = vadd.f32 0.0, %v4016
      %v4018 = vpop.f32.mrb[0].mxu0
      %v4019 = vpop.f32.mrb[0].mxu0
      %v4020 = vadd.f32 0.0, %v4019
      %v4021 = vpop.f32.mrb[0].mxu0
      %4022 = vdwg.mxu0
      %v4039 = vunpack.c.l.b16 %v3858
      %v4040 = vunpack.c.l.b16 %v3859
      %v4041 = vunpack.c.l.b16 %v3860
      %v4042 = vunpack.c.l.b16 %v3861
      %v4043 = vunpack.c.l.b16 %v3862
      %v4044 = vunpack.c.l.b16 %v3863
      %v4045 = vunpack.c.l.b16 %v3864
      %v4046 = vunpack.c.l.b16 %v3865
      %v4047 = vunpack.c.l.b16 %v3866
      %v4048 = vunpack.c.l.b16 %v3867
      %v4049 = vunpack.c.l.b16 %v3868
      %v4050 = vunpack.c.l.b16 %v3869
      %v4051 = vunpack.c.l.b16 %v3870
      %v4052 = vunpack.c.l.b16 %v3871
      %v4053 = vunpack.c.l.b16 %v3872
      %v4054 = vunpack.c.l.b16 %v3873
      %v4055 = vpack.c.b16 %v4040, %v4039
      %v4056 = vpack.c.b16 %v4042, %v4041
      %v4057 = vpack.c.b16 %v4044, %v4043
      %v4058 = vpack.c.b16 %v4046, %v4045
      %v4059 = vpack.c.b16 %v4048, %v4047
      %v4060 = vpack.c.b16 %v4050, %v4049
      %v4061 = vpack.c.b16 %v4052, %v4051
      %v4062 = vpack.c.b16 %v4054, %v4053
      %4071 = vmatprep.subr.bf16.mxu0 0
      %4072 = vmatpush1.bf16.msra.mxu0 %v4055
      %4073 = vmatprep.subr.bf16.mxu0 0
      %4074 = vmatpush1.bf16.msra.mxu0 %v4056
      %4075 = vmatprep.subr.bf16.mxu0 0
      %4076 = vmatpush1.bf16.msra.mxu0 %v4057
      %4077 = vmatprep.subr.bf16.mxu0 0
      %4078 = vmatpush1.bf16.msra.mxu0 %v4058
      %4079 = vmatprep.subr.bf16.mxu0 0
      %4080 = vmatpush1.bf16.msra.mxu0 %v4059
      %4081 = vmatprep.subr.bf16.mxu0 0
      %4082 = vmatpush1.bf16.msra.mxu0 %v4060
      %4083 = vmatprep.subr.bf16.mxu0 0
      %4084 = vmatpush1.bf16.msra.mxu0 %v4061
      %4085 = vmatprep.subr.bf16.mxu0 0
      %4086 = vmatpush1.bf16.msra.mxu0 %v4062
      %4087 = vmatprep.subr.bf16.mxu0 0
      %4088 = vmatpush1.bf16.msra.mxu0 0
      %4089 = vmatprep.subr.bf16.mxu0 0
      %4090 = vmatpush1.bf16.msra.mxu0 0
      %4091 = vmatprep.subr.bf16.mxu0 0
      %4092 = vmatpush1.bf16.msra.mxu0 0
      %4093 = vmatprep.subr.bf16.mxu0 0
      %4094 = vmatpush1.bf16.msra.mxu0 0
      %4095 = vmatprep.subr.bf16.mxu0 0
      %4096 = vmatpush1.bf16.msra.mxu0 0
      %4097 = vmatprep.subr.bf16.mxu0 0
      %4098 = vmatpush1.bf16.msra.mxu0 0
      %4099 = vmatprep.subr.bf16.mxu0 0
      %4100 = vmatpush1.bf16.msra.mxu0 0
      %4101 = vmatprep.subr.bf16.mxu0 0
      %4102 = vmatpush1.bf16.msra.mxu0 0
      %4103 = vmatprep.mubr.bf16.mxu0 0
      %4104 = vmatmul.mubr.bf16.gmra.mrb[0].mxu0 %v3854
      %v4105 = vpop.f32.mrb[0].mxu0
      %v4106 = vadd.f32 %v3993, %v4105
      %v4107 = vpop.f32.mrb[0].mxu0
      %v4108 = vpop.f32.mrb[0].mxu0
      %v4109 = vadd.f32 %v3996, %v4108
      %v4110 = vpop.f32.mrb[0].mxu0
      %4111 = vmatprep.mubr.bf16.mxu0 0
      %4112 = vmatmul.mubr.bf16.gmra.mrb[0].mxu0 %v3855
      %v4113 = vpop.f32.mrb[0].mxu0
      %v4114 = vadd.f32 %v4001, %v4113
      %v4115 = vpop.f32.mrb[0].mxu0
      %v4116 = vpop.f32.mrb[0].mxu0
      %v4117 = vadd.f32 %v4004, %v4116
      %v4118 = vpop.f32.mrb[0].mxu0
      %4119 = vmatprep.mubr.bf16.mxu0 0
      %4120 = vmatmul.mubr.bf16.gmra.mrb[0].mxu0 %v3856
      %v4121 = vpop.f32.mrb[0].mxu0
      %v4122 = vadd.f32 %v4009, %v4121
      %v4123 = vpop.f32.mrb[0].mxu0
      %v4124 = vpop.f32.mrb[0].mxu0
      %v4125 = vadd.f32 %v4012, %v4124
      %v4126 = vpop.f32.mrb[0].mxu0
      %4127 = vmatprep.mubr.bf16.mxu0 0
      %4128 = vmatmul.mubr.bf16.gmra.mrb[0].mxu0 %v3857
      %v4129 = vpop.f32.mrb[0].mxu0
      %v4130 = vadd.f32 %v4017, %v4129
      %v4131 = vpop.f32.mrb[0].mxu0
      %v4132 = vpop.f32.mrb[0].mxu0
      %v4133 = vadd.f32 %v4020, %v4132
      %v4134 = vpop.f32.mrb[0].mxu0
      %4135 = vdwg.mxu0
      %s4136 = scalar_lea.vmem [#allocation3], 2
      %v4137 = vld [vmem:[%s4136] ss:$2 sm:$0xff]
      %s4138 = scalar_lea.vmem [#allocation3], 50
      %v4139 = vld [vmem:[%s4138] ss:$2 sm:$0xff]
      %s4140 = scalar_lea.vmem [#allocation3], 98
      %v4141 = vld [vmem:[%s4140] ss:$2 sm:$0xff]
      %s4142 = scalar_lea.vmem [#allocation3], 146
      %v4143 = vld [vmem:[%s4142] ss:$2 sm:$0xff]
      %s4144 = scalar_lea.vmem [#allocation3], 194
      %v4145 = vld [vmem:[%s4144] ss:$2 sm:$0xff]
      %s4146 = scalar_lea.vmem [#allocation3], 242
      %v4147 = vld [vmem:[%s4146] ss:$2 sm:$0xff]
      %s4148 = scalar_lea.vmem [#allocation3], 290
      %v4149 = vld [vmem:[%s4148] ss:$2 sm:$0xff]
      %s4150 = scalar_lea.vmem [#allocation3], 338
      %v4151 = vld [vmem:[%s4150] ss:$2 sm:$0xff]
      %v4152 = vpack.c.bf16 %v4139, %v4137
      %v4153 = vpack.c.bf16 %v4143, %v4141
      %v4154 = vpack.c.bf16 %v4147, %v4145
      %v4155 = vpack.c.bf16 %v4151, %v4149
      %v4156 = vld [vmem:[%s5 + $0x80] sm:$0xf]
      %v4157 = vld [vmem:[%s5 + $0x84] sm:$0xf]
      %v4158 = vld [vmem:[%s5 + $0x88] sm:$0xf]
      %v4159 = vld [vmem:[%s5 + $0x8c] sm:$0xf]
      %v4160 = vld [vmem:[%s5 + $0x90] sm:$0xf]
      %v4161 = vld [vmem:[%s5 + $0x94] sm:$0xf]
      %v4162 = vld [vmem:[%s5 + $0x98] sm:$0xf]
      %v4163 = vld [vmem:[%s5 + $0x9c] sm:$0xf]
      %v4164 = vld [vmem:[%s5 + $0xa0] sm:$0xf]
      %v4165 = vld [vmem:[%s5 + $0xa4] sm:$0xf]
      %v4166 = vld [vmem:[%s5 + $0xa8] sm:$0xf]
      %v4167 = vld [vmem:[%s5 + $0xac] sm:$0xf]
      %v4168 = vld [vmem:[%s5 + $0xb0] sm:$0xf]
      %v4169 = vld [vmem:[%s5 + $0xb4] sm:$0xf]
      %v4170 = vld [vmem:[%s5 + $0xb8] sm:$0xf]
      %v4171 = vld [vmem:[%s5 + $0xbc] sm:$0xf]
      %v4188 = vunpack.c.l.b16 %v4156
      %v4189 = vunpack.c.l.b16 %v4157
      %v4190 = vunpack.c.l.b16 %v4158
      %v4191 = vunpack.c.l.b16 %v4159
      %v4192 = vunpack.c.l.b16 %v4160
      %v4193 = vunpack.c.l.b16 %v4161
      %v4194 = vunpack.c.l.b16 %v4162
      %v4195 = vunpack.c.l.b16 %v4163
      %v4196 = vunpack.c.l.b16 %v4164
      %v4197 = vunpack.c.l.b16 %v4165
      %v4198 = vunpack.c.l.b16 %v4166
      %v4199 = vunpack.c.l.b16 %v4167
      %v4200 = vunpack.c.l.b16 %v4168
      %v4201 = vunpack.c.l.b16 %v4169
      %v4202 = vunpack.c.l.b16 %v4170
      %v4203 = vunpack.c.l.b16 %v4171
      %v4204 = vpack.c.b16 %v4189, %v4188
      %v4205 = vpack.c.b16 %v4191, %v4190
      %v4206 = vpack.c.b16 %v4193, %v4192
      %v4207 = vpack.c.b16 %v4195, %v4194
      %v4208 = vpack.c.b16 %v4197, %v4196
      %v4209 = vpack.c.b16 %v4199, %v4198
      %v4210 = vpack.c.b16 %v4201, %v4200
      %v4211 = vpack.c.b16 %v4203, %v4202
      %4220 = vmatprep.subr.bf16.mxu0 0
      %4221 = vmatpush1.bf16.msra.mxu0 %v4204
      %4222 = vmatprep.subr.bf16.mxu0 0
      %4223 = vmatpush1.bf16.msra.mxu0 %v4205
      %4224 = vmatprep.subr.bf16.mxu0 0
      %4225 = vmatpush1.bf16.msra.mxu0 %v4206
      %4226 = vmatprep.subr.bf16.mxu0 0
      %4227 = vmatpush1.bf16.msra.mxu0 %v4207
      %4228 = vmatprep.subr.bf16.mxu0 0
      %4229 = vmatpush1.bf16.msra.mxu0 %v4208
      %4230 = vmatprep.subr.bf16.mxu0 0
      %4231 = vmatpush1.bf16.msra.mxu0 %v4209
      %4232 = vmatprep.subr.bf16.mxu0 0
      %4233 = vmatpush1.bf16.msra.mxu0 %v4210
      %4234 = vmatprep.subr.bf16.mxu0 0
      %4235 = vmatpush1.bf16.msra.mxu0 %v4211
      %4236 = vmatprep.subr.bf16.mxu0 0
      %4237 = vmatpush1.bf16.msra.mxu0 0
      %4238 = vmatprep.subr.bf16.mxu0 0
      %4239 = vmatpush1.bf16.msra.mxu0 0
      %4240 = vmatprep.subr.bf16.mxu0 0
      %4241 = vmatpush1.bf16.msra.mxu0 0
      %4242 = vmatprep.subr.bf16.mxu0 0
      %4243 = vmatpush1.bf16.msra.mxu0 0
      %4244 = vmatprep.subr.bf16.mxu0 0
      %4245 = vmatpush1.bf16.msra.mxu0 0
      %4246 = vmatprep.subr.bf16.mxu0 0
      %4247 = vmatpush1.bf16.msra.mxu0 0
      %4248 = vmatprep.subr.bf16.mxu0 0
      %4249 = vmatpush1.bf16.msra.mxu0 0
      %4250 = vmatprep.subr.bf16.mxu0 0
      %4251 = vmatpush1.bf16.msra.mxu0 0
      %4252 = vmatprep.mubr.bf16.mxu0 0
      %4253 = vmatmul.mubr.bf16.gmra.mrb[0].mxu0 %v4152
      %v4254 = vpop.f32.mrb[0].mxu0
      %v4255 = vadd.f32 0.0, %v4254
      %v4256 = vpop.f32.mrb[0].mxu0
      %v4257 = vpop.f32.mrb[0].mxu0
      %v4258 = vadd.f32 0.0, %v4257
      %v4259 = vpop.f32.mrb[0].mxu0
      %4260 = vmatprep.mubr.bf16.mxu0 0
      %4261 = vmatmul.mubr.bf16.gmra.mrb[0].mxu0 %v4153
      %v4262 = vpop.f32.mrb[0].mxu0
      %v4263 = vadd.f32 0.0, %v4262
      %v4264 = vpop.f32.mrb[0].mxu0
      %v4265 = vpop.f32.mrb[0].mxu0
      %v4266 = vadd.f32 0.0, %v4265
      %v4267 = vpop.f32.mrb[0].mxu0
      %4268 = vmatprep.mubr.bf16.mxu0 0
      %4269 = vmatmul.mubr.bf16.gmra.mrb[0].mxu0 %v4154
      %v4270 = vpop.f32.mrb[0].mxu0
      %v4271 = vadd.f32 0.0, %v4270
      %v4272 = vpop.f32.mrb[0].mxu0
      %v4273 = vpop.f32.mrb[0].mxu0
      %v4274 = vadd.f32 0.0, %v4273
      %v4275 = vpop.f32.mrb[0].mxu0
      %4276 = vmatprep.mubr.bf16.mxu0 0
      %4277 = vmatmul.mubr.bf16.gmra.mrb[0].mxu0 %v4155
      %v4278 = vpop.f32.mrb[0].mxu0
      %v4279 = vadd.f32 0.0, %v4278
      %v4280 = vpop.f32.mrb[0].mxu0
      %v4281 = vpop.f32.mrb[0].mxu0
      %v4282 = vadd.f32 0.0, %v4281
      %v4283 = vpop.f32.mrb[0].mxu0
      %4284 = vdwg.mxu0
      %v4285 = vadd.f32 %v4106, %v4255
      %v4286 = vadd.f32 %v4109, %v4258
      %v4287 = vadd.f32 %v4114, %v4263
      %v4288 = vadd.f32 %v4117, %v4266
      %v4289 = vadd.f32 %v4122, %v4271
      %v4290 = vadd.f32 %v4125, %v4274
      %v4291 = vadd.f32 %v4130, %v4279
      %v4292 = vadd.f32 %v4133, %v4282
      %v4293 = vld [vmem:[%s3806] ss:$2 sm:$0xff]
      %s4294 = scalar_lea.vmem %s3806, 48 [#allocation3]
      %v4295 = vld [vmem:[%s4294] ss:$2 sm:$0xff]
      %s4296 = scalar_lea.vmem %s3806, 96 [#allocation3]
      %v4297 = vld [vmem:[%s4296] ss:$2 sm:$0xff]
      %s4298 = scalar_lea.vmem %s3806, 144 [#allocation3]
      %v4299 = vld [vmem:[%s4298] ss:$2 sm:$0xff]
      %s4300 = scalar_lea.vmem %s3806, 192 [#allocation3]
      %v4301 = vld [vmem:[%s4300] ss:$2 sm:$0xff]
      %s4302 = scalar_lea.vmem %s3806, 240 [#allocation3]
      %v4303 = vld [vmem:[%s4302] ss:$2 sm:$0xff]
      %s4304 = scalar_lea.vmem %s3806, 288 [#allocation3]
      %v4305 = vld [vmem:[%s4304] ss:$2 sm:$0xff]
      %s4306 = scalar_lea.vmem %s3806, 336 [#allocation3]
      %v4307 = vld [vmem:[%s4306] ss:$2 sm:$0xff]
      %v4308 = vpack.c.bf16 %v4295, %v4293
      %v4309 = vpack.c.bf16 %v4299, %v4297
      %v4310 = vpack.c.bf16 %v4303, %v4301
      %v4311 = vpack.c.bf16 %v4307, %v4305
      %v4312 = vld [vmem:[%s5 + $0xc0] sm:$0xf]
      %v4313 = vld [vmem:[%s5 + $0xc4] sm:$0xf]
      %v4314 = vld [vmem:[%s5 + $0xc8] sm:$0xf]
      %v4315 = vld [vmem:[%s5 + $0xcc] sm:$0xf]
      %v4316 = vld [vmem:[%s5 + $0xd0] sm:$0xf]
      %v4317 = vld [vmem:[%s5 + $0xd4] sm:$0xf]
      %v4318 = vld [vmem:[%s5 + $0xd8] sm:$0xf]
      %v4319 = vld [vmem:[%s5 + $0xdc] sm:$0xf]
      %v4320 = vld [vmem:[%s5 + $0xe0] sm:$0xf]
      %v4321 = vld [vmem:[%s5 + $0xe4] sm:$0xf]
      %v4322 = vld [vmem:[%s5 + $0xe8] sm:$0xf]
      %v4323 = vld [vmem:[%s5 + $0xec] sm:$0xf]
      %v4324 = vld [vmem:[%s5 + $0xf0] sm:$0xf]
      %v4325 = vld [vmem:[%s5 + $0xf4] sm:$0xf]
      %v4326 = vld [vmem:[%s5 + $0xf8] sm:$0xf]
      %v4327 = vld [vmem:[%s5 + $0xfc] sm:$0xf]
      %v4344 = vunpack.c.l.b16 %v4312
      %v4345 = vunpack.c.l.b16 %v4313
      %v4346 = vunpack.c.l.b16 %v4314
      %v4347 = vunpack.c.l.b16 %v4315
      %v4348 = vunpack.c.l.b16 %v4316
      %v4349 = vunpack.c.l.b16 %v4317
      %v4350 = vunpack.c.l.b16 %v4318
      %v4351 = vunpack.c.l.b16 %v4319
      %v4352 = vunpack.c.l.b16 %v4320
      %v4353 = vunpack.c.l.b16 %v4321
      %v4354 = vunpack.c.l.b16 %v4322
      %v4355 = vunpack.c.l.b16 %v4323
      %v4356 = vunpack.c.l.b16 %v4324
      %v4357 = vunpack.c.l.b16 %v4325
      %v4358 = vunpack.c.l.b16 %v4326
      %v4359 = vunpack.c.l.b16 %v4327
      %v4360 = vpack.c.b16 %v4345, %v4344
      %v4361 = vpack.c.b16 %v4347, %v4346
      %v4362 = vpack.c.b16 %v4349, %v4348
      %v4363 = vpack.c.b16 %v4351, %v4350
      %v4364 = vpack.c.b16 %v4353, %v4352
      %v4365 = vpack.c.b16 %v4355, %v4354
      %v4366 = vpack.c.b16 %v4357, %v4356
      %v4367 = vpack.c.b16 %v4359, %v4358
      %4376 = vmatprep.subr.bf16.mxu0 0
      %4377 = vmatpush1.bf16.msra.mxu0 %v4360
      %4378 = vmatprep.subr.bf16.mxu0 0
      %4379 = vmatpush1.bf16.msra.mxu0 %v4361
      %4380 = vmatprep.subr.bf16.mxu0 0
      %4381 = vmatpush1.bf16.msra.mxu0 %v4362
      %4382 = vmatprep.subr.bf16.mxu0 0
      %4383 = vmatpush1.bf16.msra.mxu0 %v4363
      %4384 = vmatprep.subr.bf16.mxu0 0
      %4385 = vmatpush1.bf16.msra.mxu0 %v4364
      %4386 = vmatprep.subr.bf16.mxu0 0
      %4387 = vmatpush1.bf16.msra.mxu0 %v4365
      %4388 = vmatprep.subr.bf16.mxu0 0
      %4389 = vmatpush1.bf16.msra.mxu0 %v4366
      %4390 = vmatprep.subr.bf16.mxu0 0
      %4391 = vmatpush1.bf16.msra.mxu0 %v4367
      %4392 = vmatprep.subr.bf16.mxu0 0
      %4393 = vmatpush1.bf16.msra.mxu0 0
      %4394 = vmatprep.subr.bf16.mxu0 0
      %4395 = vmatpush1.bf16.msra.mxu0 0
      %4396 = vmatprep.subr.bf16.mxu0 0
      %4397 = vmatpush1.bf16.msra.mxu0 0
      %4398 = vmatprep.subr.bf16.mxu0 0
      %4399 = vmatpush1.bf16.msra.mxu0 0
      %4400 = vmatprep.subr.bf16.mxu0 0
      %4401 = vmatpush1.bf16.msra.mxu0 0
      %4402 = vmatprep.subr.bf16.mxu0 0
      %4403 = vmatpush1.bf16.msra.mxu0 0
      %4404 = vmatprep.subr.bf16.mxu0 0
      %4405 = vmatpush1.bf16.msra.mxu0 0
      %4406 = vmatprep.subr.bf16.mxu0 0
      %4407 = vmatpush1.bf16.msra.mxu0 0
      %4408 = vmatprep.mubr.bf16.mxu0 0
      %4409 = vmatmul.mubr.bf16.gmra.mrb[0].mxu0 %v4308
      %v4410 = vpop.f32.mrb[0].mxu0
      %v4411 = vadd.f32 0.0, %v4410
      %v4412 = vpop.f32.mrb[0].mxu0
      %v4413 = vpop.f32.mrb[0].mxu0
      %v4414 = vadd.f32 0.0, %v4413
      %v4415 = vpop.f32.mrb[0].mxu0
      %4416 = vmatprep.mubr.bf16.mxu0 0
      %4417 = vmatmul.mubr.bf16.gmra.mrb[0].mxu0 %v4309
      %v4418 = vpop.f32.mrb[0].mxu0
      %v4419 = vadd.f32 0.0, %v4418
      %v4420 = vpop.f32.mrb[0].mxu0
      %v4421 = vpop.f32.mrb[0].mxu0
      %v4422 = vadd.f32 0.0, %v4421
      %v4423 = vpop.f32.mrb[0].mxu0
      %4424 = vmatprep.mubr.bf16.mxu0 0
      %4425 = vmatmul.mubr.bf16.gmra.mrb[0].mxu0 %v4310
      %v4426 = vpop.f32.mrb[0].mxu0
      %v4427 = vadd.f32 0.0, %v4426
      %v4428 = vpop.f32.mrb[0].mxu0
      %v4429 = vpop.f32.mrb[0].mxu0
      %v4430 = vadd.f32 0.0, %v4429
      %v4431 = vpop.f32.mrb[0].mxu0
      %4432 = vmatprep.mubr.bf16.mxu0 0
      %4433 = vmatmul.mubr.bf16.gmra.mrb[0].mxu0 %v4311
      %v4434 = vpop.f32.mrb[0].mxu0
      %v4435 = vadd.f32 0.0, %v4434
      %v4436 = vpop.f32.mrb[0].mxu0
      %v4437 = vpop.f32.mrb[0].mxu0
      %v4438 = vadd.f32 0.0, %v4437
      %v4439 = vpop.f32.mrb[0].mxu0
      %4440 = vdwg.mxu0
      %v4441 = vadd.f32 %v4285, %v4411
      %v4442 = vadd.f32 %v4286, %v4414
      %v4443 = vadd.f32 %v4287, %v4419
      %v4444 = vadd.f32 %v4288, %v4422
      %v4445 = vadd.f32 %v4289, %v4427
      %v4446 = vadd.f32 %v4290, %v4430
      %v4447 = vadd.f32 %v4291, %v4435
      %v4448 = vadd.f32 %v4292, %v4438
      %s4449 = scalar_lea.vmem %s3806, 1 [#allocation3]
      %v4450 = vld [vmem:[%s4449] ss:$2 sm:$0xff]
      %s4451 = scalar_lea.vmem %s3806, 49 [#allocation3]
      %v4452 = vld [vmem:[%s4451] ss:$2 sm:$0xff]
      %s4453 = scalar_lea.vmem %s3806, 97 [#allocation3]
      %v4454 = vld [vmem:[%s4453] ss:$2 sm:$0xff]
      %s4455 = scalar_lea.vmem %s3806, 145 [#allocation3]
      %v4456 = vld [vmem:[%s4455] ss:$2 sm:$0xff]
      %s4457 = scalar_lea.vmem %s3806, 193 [#allocation3]
      %v4458 = vld [vmem:[%s4457] ss:$2 sm:$0xff]
      %s4459 = scalar_lea.vmem %s3806, 241 [#allocation3]
      %v4460 = vld [vmem:[%s4459] ss:$2 sm:$0xff]
      %s4461 = scalar_lea.vmem %s3806, 289 [#allocation3]
      %v4462 = vld [vmem:[%s4461] ss:$2 sm:$0xff]
      %s4463 = scalar_lea.vmem %s3806, 337 [#allocation3]
      %v4464 = vld [vmem:[%s4463] ss:$2 sm:$0xff]
      %v4465 = vpack.c.bf16 %v4452, %v4450
      %v4466 = vpack.c.bf16 %v4456, %v4454
      %v4467 = vpack.c.bf16 %v4460, %v4458
      %v4468 = vpack.c.bf16 %v4464, %v4462
      %v4469 = vld [vmem:[%s5 + $0x100] sm:$0xf]
      %v4470 = vld [vmem:[%s5 + $0x104] sm:$0xf]
      %v4471 = vld [vmem:[%s5 + $0x108] sm:$0xf]
      %v4472 = vld [vmem:[%s5 + $0x10c] sm:$0xf]
      %v4473 = vld [vmem:[%s5 + $0x110] sm:$0xf]
      %v4474 = vld [vmem:[%s5 + $0x114] sm:$0xf]
      %v4475 = vld [vmem:[%s5 + $0x118] sm:$0xf]
      %v4476 = vld [vmem:[%s5 + $0x11c] sm:$0xf]
      %v4477 = vld [vmem:[%s5 + $0x120] sm:$0xf]
      %v4478 = vld [vmem:[%s5 + $0x124] sm:$0xf]
      %v4479 = vld [vmem:[%s5 + $0x128] sm:$0xf]
      %v4480 = vld [vmem:[%s5 + $0x12c] sm:$0xf]
      %v4481 = vld [vmem:[%s5 + $0x130] sm:$0xf]
      %v4482 = vld [vmem:[%s5 + $0x134] sm:$0xf]
      %v4483 = vld [vmem:[%s5 + $0x138] sm:$0xf]
      %v4484 = vld [vmem:[%s5 + $0x13c] sm:$0xf]
      %v4501 = vunpack.c.l.b16 %v4469
      %v4502 = vunpack.c.l.b16 %v4470
      %v4503 = vunpack.c.l.b16 %v4471
      %v4504 = vunpack.c.l.b16 %v4472
      %v4505 = vunpack.c.l.b16 %v4473
      %v4506 = vunpack.c.l.b16 %v4474
      %v4507 = vunpack.c.l.b16 %v4475
      %v4508 = vunpack.c.l.b16 %v4476
      %v4509 = vunpack.c.l.b16 %v4477
      %v4510 = vunpack.c.l.b16 %v4478
      %v4511 = vunpack.c.l.b16 %v4479
      %v4512 = vunpack.c.l.b16 %v4480
      %v4513 = vunpack.c.l.b16 %v4481
      %v4514 = vunpack.c.l.b16 %v4482
      %v4515 = vunpack.c.l.b16 %v4483
      %v4516 = vunpack.c.l.b16 %v4484
      %v4517 = vpack.c.b16 %v4502, %v4501
      %v4518 = vpack.c.b16 %v4504, %v4503
      %v4519 = vpack.c.b16 %v4506, %v4505
      %v4520 = vpack.c.b16 %v4508, %v4507
      %v4521 = vpack.c.b16 %v4510, %v4509
      %v4522 = vpack.c.b16 %v4512, %v4511
      %v4523 = vpack.c.b16 %v4514, %v4513
      %v4524 = vpack.c.b16 %v4516, %v4515
      %4533 = vmatprep.subr.bf16.mxu0 0
      %4534 = vmatpush1.bf16.msra.mxu0 %v4517
      %4535 = vmatprep.subr.bf16.mxu0 0
      %4536 = vmatpush1.bf16.msra.mxu0 %v4518
      %4537 = vmatprep.subr.bf16.mxu0 0
      %4538 = vmatpush1.bf16.msra.mxu0 %v4519
      %4539 = vmatprep.subr.bf16.mxu0 0
      %4540 = vmatpush1.bf16.msra.mxu0 %v4520
      %4541 = vmatprep.subr.bf16.mxu0 0
      %4542 = vmatpush1.bf16.msra.mxu0 %v4521
      %4543 = vmatprep.subr.bf16.mxu0 0
      %4544 = vmatpush1.bf16.msra.mxu0 %v4522
      %4545 = vmatprep.subr.bf16.mxu0 0
      %4546 = vmatpush1.bf16.msra.mxu0 %v4523
      %4547 = vmatprep.subr.bf16.mxu0 0
      %4548 = vmatpush1.bf16.msra.mxu0 %v4524
      %4549 = vmatprep.subr.bf16.mxu0 0
      %4550 = vmatpush1.bf16.msra.mxu0 0
      %4551 = vmatprep.subr.bf16.mxu0 0
      %4552 = vmatpush1.bf16.msra.mxu0 0
      %4553 = vmatprep.subr.bf16.mxu0 0
      %4554 = vmatpush1.bf16.msra.mxu0 0
      %4555 = vmatprep.subr.bf16.mxu0 0
      %4556 = vmatpush1.bf16.msra.mxu0 0
      %4557 = vmatprep.subr.bf16.mxu0 0
      %4558 = vmatpush1.bf16.msra.mxu0 0
      %4559 = vmatprep.subr.bf16.mxu0 0
      %4560 = vmatpush1.bf16.msra.mxu0 0
      %4561 = vmatprep.subr.bf16.mxu0 0
      %4562 = vmatpush1.bf16.msra.mxu0 0
      %4563 = vmatprep.subr.bf16.mxu0 0
      %4564 = vmatpush1.bf16.msra.mxu0 0
      %4565 = vmatprep.mubr.bf16.mxu0 0
      %4566 = vmatmul.mubr.bf16.gmra.mrb[0].mxu0 %v4465
      %v4567 = vpop.f32.mrb[0].mxu0
      %v4568 = vadd.f32 0.0, %v4567
      %v4569 = vpop.f32.mrb[0].mxu0
      %v4570 = vpop.f32.mrb[0].mxu0
      %v4571 = vadd.f32 0.0, %v4570
      %v4572 = vpop.f32.mrb[0].mxu0
      %4573 = vmatprep.mubr.bf16.mxu0 0
      %4574 = vmatmul.mubr.bf16.gmra.mrb[0].mxu0 %v4466
      %v4575 = vpop.f32.mrb[0].mxu0
      %v4576 = vadd.f32 0.0, %v4575
      %v4577 = vpop.f32.mrb[0].mxu0
      %v4578 = vpop.f32.mrb[0].mxu0
      %v4579 = vadd.f32 0.0, %v4578
      %v4580 = vpop.f32.mrb[0].mxu0
      %4581 = vmatprep.mubr.bf16.mxu0 0
      %4582 = vmatmul.mubr.bf16.gmra.mrb[0].mxu0 %v4467
      %v4583 = vpop.f32.mrb[0].mxu0
      %v4584 = vadd.f32 0.0, %v4583
      %v4585 = vpop.f32.mrb[0].mxu0
      %v4586 = vpop.f32.mrb[0].mxu0
      %v4587 = vadd.f32 0.0, %v4586
      %v4588 = vpop.f32.mrb[0].mxu0
      %4589 = vmatprep.mubr.bf16.mxu0 0
      %4590 = vmatmul.mubr.bf16.gmra.mrb[0].mxu0 %v4468
      %v4591 = vpop.f32.mrb[0].mxu0
      %v4592 = vadd.f32 0.0, %v4591
      %v4593 = vpop.f32.mrb[0].mxu0
      %v4594 = vpop.f32.mrb[0].mxu0
      %v4595 = vadd.f32 0.0, %v4594
      %v4596 = vpop.f32.mrb[0].mxu0
      %4597 = vdwg.mxu0
      %v4598 = vadd.f32 %v4441, %v4568
      %v4599 = vadd.f32 %v4442, %v4571
      %v4600 = vadd.f32 %v4443, %v4576
      %v4601 = vadd.f32 %v4444, %v4579
      %v4602 = vadd.f32 %v4445, %v4584
      %v4603 = vadd.f32 %v4446, %v4587
      %v4604 = vadd.f32 %v4447, %v4592
      %v4605 = vadd.f32 %v4448, %v4595
      %s4606 = scalar_lea.vmem %s3806, 2 [#allocation3]
      %v4607 = vld [vmem:[%s4606] ss:$2 sm:$0xff]
      %s4608 = scalar_lea.vmem %s3806, 50 [#allocation3]
      %v4609 = vld [vmem:[%s4608] ss:$2 sm:$0xff]
      %s4610 = scalar_lea.vmem %s3806, 98 [#allocation3]
      %v4611 = vld [vmem:[%s4610] ss:$2 sm:$0xff]
      %s4612 = scalar_lea.vmem %s3806, 146 [#allocation3]
      %v4613 = vld [vmem:[%s4612] ss:$2 sm:$0xff]
      %s4614 = scalar_lea.vmem %s3806, 194 [#allocation3]
      %v4615 = vld [vmem:[%s4614] ss:$2 sm:$0xff]
      %s4616 = scalar_lea.vmem %s3806, 242 [#allocation3]
      %v4617 = vld [vmem:[%s4616] ss:$2 sm:$0xff]
      %s4618 = scalar_lea.vmem %s3806, 290 [#allocation3]
      %v4619 = vld [vmem:[%s4618] ss:$2 sm:$0xff]
      %s4620 = scalar_lea.vmem %s3806, 338 [#allocation3]
      %v4621 = vld [vmem:[%s4620] ss:$2 sm:$0xff]
      %v4622 = vpack.c.bf16 %v4609, %v4607
      %v4623 = vpack.c.bf16 %v4613, %v4611
      %v4624 = vpack.c.bf16 %v4617, %v4615
      %v4625 = vpack.c.bf16 %v4621, %v4619
      %v4626 = vld [vmem:[%s5 + $0x140] sm:$0xf]
      %v4627 = vld [vmem:[%s5 + $0x144] sm:$0xf]
      %v4628 = vld [vmem:[%s5 + $0x148] sm:$0xf]
      %v4629 = vld [vmem:[%s5 + $0x14c] sm:$0xf]
      %v4630 = vld [vmem:[%s5 + $0x150] sm:$0xf]
      %v4631 = vld [vmem:[%s5 + $0x154] sm:$0xf]
      %v4632 = vld [vmem:[%s5 + $0x158] sm:$0xf]
      %v4633 = vld [vmem:[%s5 + $0x15c] sm:$0xf]
      %v4634 = vld [vmem:[%s5 + $0x160] sm:$0xf]
      %v4635 = vld [vmem:[%s5 + $0x164] sm:$0xf]
      %v4636 = vld [vmem:[%s5 + $0x168] sm:$0xf]
      %v4637 = vld [vmem:[%s5 + $0x16c] sm:$0xf]
      %v4638 = vld [vmem:[%s5 + $0x170] sm:$0xf]
      %v4639 = vld [vmem:[%s5 + $0x174] sm:$0xf]
      %v4640 = vld [vmem:[%s5 + $0x178] sm:$0xf]
      %v4641 = vld [vmem:[%s5 + $0x17c] sm:$0xf]
      %v4658 = vunpack.c.l.b16 %v4626
      %v4659 = vunpack.c.l.b16 %v4627
      %v4660 = vunpack.c.l.b16 %v4628
      %v4661 = vunpack.c.l.b16 %v4629
      %v4662 = vunpack.c.l.b16 %v4630
      %v4663 = vunpack.c.l.b16 %v4631
      %v4664 = vunpack.c.l.b16 %v4632
      %v4665 = vunpack.c.l.b16 %v4633
      %v4666 = vunpack.c.l.b16 %v4634
      %v4667 = vunpack.c.l.b16 %v4635
      %v4668 = vunpack.c.l.b16 %v4636
      %v4669 = vunpack.c.l.b16 %v4637
      %v4670 = vunpack.c.l.b16 %v4638
      %v4671 = vunpack.c.l.b16 %v4639
      %v4672 = vunpack.c.l.b16 %v4640
      %v4673 = vunpack.c.l.b16 %v4641
      %v4674 = vpack.c.b16 %v4659, %v4658
      %v4675 = vpack.c.b16 %v4661, %v4660
      %v4676 = vpack.c.b16 %v4663, %v4662
      %v4677 = vpack.c.b16 %v4665, %v4664
      %v4678 = vpack.c.b16 %v4667, %v4666
      %v4679 = vpack.c.b16 %v4669, %v4668
      %v4680 = vpack.c.b16 %v4671, %v4670
      %v4681 = vpack.c.b16 %v4673, %v4672
      %4690 = vmatprep.subr.bf16.mxu0 0
      %4691 = vmatpush1.bf16.msra.mxu0 %v4674
      %4692 = vmatprep.subr.bf16.mxu0 0
      %4693 = vmatpush1.bf16.msra.mxu0 %v4675
      %4694 = vmatprep.subr.bf16.mxu0 0
      %4695 = vmatpush1.bf16.msra.mxu0 %v4676
      %4696 = vmatprep.subr.bf16.mxu0 0
      %4697 = vmatpush1.bf16.msra.mxu0 %v4677
      %4698 = vmatprep.subr.bf16.mxu0 0
      %4699 = vmatpush1.bf16.msra.mxu0 %v4678
      %4700 = vmatprep.subr.bf16.mxu0 0
      %4701 = vmatpush1.bf16.msra.mxu0 %v4679
      %4702 = vmatprep.subr.bf16.mxu0 0
      %4703 = vmatpush1.bf16.msra.mxu0 %v4680
      %4704 = vmatprep.subr.bf16.mxu0 0
      %4705 = vmatpush1.bf16.msra.mxu0 %v4681
      %4706 = vmatprep.subr.bf16.mxu0 0
      %4707 = vmatpush1.bf16.msra.mxu0 0
      %4708 = vmatprep.subr.bf16.mxu0 0
      %4709 = vmatpush1.bf16.msra.mxu0 0
      %4710 = vmatprep.subr.bf16.mxu0 0
      %4711 = vmatpush1.bf16.msra.mxu0 0
      %4712 = vmatprep.subr.bf16.mxu0 0
      %4713 = vmatpush1.bf16.msra.mxu0 0
      %4714 = vmatprep.subr.bf16.mxu0 0
      %4715 = vmatpush1.bf16.msra.mxu0 0
      %4716 = vmatprep.subr.bf16.mxu0 0
      %4717 = vmatpush1.bf16.msra.mxu0 0
      %4718 = vmatprep.subr.bf16.mxu0 0
      %4719 = vmatpush1.bf16.msra.mxu0 0
      %4720 = vmatprep.subr.bf16.mxu0 0
      %4721 = vmatpush1.bf16.msra.mxu0 0
      %4722 = vmatprep.mubr.bf16.mxu0 0
      %4723 = vmatmul.mubr.bf16.gmra.mrb[0].mxu0 %v4622
      %v4724 = vpop.f32.mrb[0].mxu0
      %v4725 = vadd.f32 0.0, %v4724
      %v4726 = vpop.f32.mrb[0].mxu0
      %v4727 = vpop.f32.mrb[0].mxu0
      %v4728 = vadd.f32 0.0, %v4727
      %v4729 = vpop.f32.mrb[0].mxu0
      %4730 = vmatprep.mubr.bf16.mxu0 0
      %4731 = vmatmul.mubr.bf16.gmra.mrb[0].mxu0 %v4623
      %v4732 = vpop.f32.mrb[0].mxu0
      %v4733 = vadd.f32 0.0, %v4732
      %v4734 = vpop.f32.mrb[0].mxu0
      %v4735 = vpop.f32.mrb[0].mxu0
      %v4736 = vadd.f32 0.0, %v4735
      %v4737 = vpop.f32.mrb[0].mxu0
      %4738 = vmatprep.mubr.bf16.mxu0 0
      %4739 = vmatmul.mubr.bf16.gmra.mrb[0].mxu0 %v4624
      %v4740 = vpop.f32.mrb[0].mxu0
      %v4741 = vadd.f32 0.0, %v4740
      %v4742 = vpop.f32.mrb[0].mxu0
      %v4743 = vpop.f32.mrb[0].mxu0
      %v4744 = vadd.f32 0.0, %v4743
      %v4745 = vpop.f32.mrb[0].mxu0
      %4746 = vmatprep.mubr.bf16.mxu0 0
      %4747 = vmatmul.mubr.bf16.gmra.mrb[0].mxu0 %v4625
      %v4748 = vpop.f32.mrb[0].mxu0
      %v4749 = vadd.f32 0.0, %v4748
      %v4750 = vpop.f32.mrb[0].mxu0
      %v4751 = vpop.f32.mrb[0].mxu0
      %v4752 = vadd.f32 0.0, %v4751
      %v4753 = vpop.f32.mrb[0].mxu0
      %4754 = vdwg.mxu0
      %v4755 = vadd.f32 %v4598, %v4725
      %v4756 = vadd.f32 %v4599, %v4728
      %v4757 = vadd.f32 %v4600, %v4733
      %v4758 = vadd.f32 %v4601, %v4736
      %v4759 = vadd.f32 %v4602, %v4741
      %v4760 = vadd.f32 %v4603, %v4744
      %v4761 = vadd.f32 %v4604, %v4749
      %v4762 = vadd.f32 %v4605, %v4752
      %s4763 = scalar_lea.vmem [#allocation3], 48
      %v4764 = vld [vmem:[%s4763] ss:$2 sm:$0xff]
      %s4765 = scalar_lea.vmem %s4763, 48 [#allocation3]
      %v4766 = vld [vmem:[%s4765] ss:$2 sm:$0xff]
      %s4767 = scalar_lea.vmem %s4763, 96 [#allocation3]
      %v4768 = vld [vmem:[%s4767] ss:$2 sm:$0xff]
      %s4769 = scalar_lea.vmem %s4763, 144 [#allocation3]
      %v4770 = vld [vmem:[%s4769] ss:$2 sm:$0xff]
      %s4771 = scalar_lea.vmem %s4763, 192 [#allocation3]
      %v4772 = vld [vmem:[%s4771] ss:$2 sm:$0xff]
      %s4773 = scalar_lea.vmem %s4763, 240 [#allocation3]
      %v4774 = vld [vmem:[%s4773] ss:$2 sm:$0xff]
      %s4775 = scalar_lea.vmem %s4763, 288 [#allocation3]
      %v4776 = vld [vmem:[%s4775] ss:$2 sm:$0xff]
      %s4777 = scalar_lea.vmem %s4763, 336 [#allocation3]
      %v4778 = vld [vmem:[%s4777] ss:$2 sm:$0xff]
      %v4779 = vpack.c.bf16 %v4766, %v4764
      %v4780 = vpack.c.bf16 %v4770, %v4768
      %v4781 = vpack.c.bf16 %v4774, %v4772
      %v4782 = vpack.c.bf16 %v4778, %v4776
      %v4783 = vld [vmem:[%s5 + $0x180] sm:$0xf]
      %v4784 = vld [vmem:[%s5 + $0x184] sm:$0xf]
      %v4785 = vld [vmem:[%s5 + $0x188] sm:$0xf]
      %v4786 = vld [vmem:[%s5 + $0x18c] sm:$0xf]
      %v4787 = vld [vmem:[%s5 + $0x190] sm:$0xf]
      %v4788 = vld [vmem:[%s5 + $0x194] sm:$0xf]
      %v4789 = vld [vmem:[%s5 + $0x198] sm:$0xf]
      %v4790 = vld [vmem:[%s5 + $0x19c] sm:$0xf]
      %v4791 = vld [vmem:[%s5 + $0x1a0] sm:$0xf]
      %v4792 = vld [vmem:[%s5 + $0x1a4] sm:$0xf]
      %v4793 = vld [vmem:[%s5 + $0x1a8] sm:$0xf]
      %v4794 = vld [vmem:[%s5 + $0x1ac] sm:$0xf]
      %v4795 = vld [vmem:[%s5 + $0x1b0] sm:$0xf]
      %v4796 = vld [vmem:[%s5 + $0x1b4] sm:$0xf]
      %v4797 = vld [vmem:[%s5 + $0x1b8] sm:$0xf]
      %v4798 = vld [vmem:[%s5 + $0x1bc] sm:$0xf]
      %v4815 = vunpack.c.l.b16 %v4783
      %v4816 = vunpack.c.l.b16 %v4784
      %v4817 = vunpack.c.l.b16 %v4785
      %v4818 = vunpack.c.l.b16 %v4786
      %v4819 = vunpack.c.l.b16 %v4787
      %v4820 = vunpack.c.l.b16 %v4788
      %v4821 = vunpack.c.l.b16 %v4789
      %v4822 = vunpack.c.l.b16 %v4790
      %v4823 = vunpack.c.l.b16 %v4791
      %v4824 = vunpack.c.l.b16 %v4792
      %v4825 = vunpack.c.l.b16 %v4793
      %v4826 = vunpack.c.l.b16 %v4794
      %v4827 = vunpack.c.l.b16 %v4795
      %v4828 = vunpack.c.l.b16 %v4796
      %v4829 = vunpack.c.l.b16 %v4797
      %v4830 = vunpack.c.l.b16 %v4798
      %v4831 = vpack.c.b16 %v4816, %v4815
      %v4832 = vpack.c.b16 %v4818, %v4817
      %v4833 = vpack.c.b16 %v4820, %v4819
      %v4834 = vpack.c.b16 %v4822, %v4821
      %v4835 = vpack.c.b16 %v4824, %v4823
      %v4836 = vpack.c.b16 %v4826, %v4825
      %v4837 = vpack.c.b16 %v4828, %v4827
      %v4838 = vpack.c.b16 %v4830, %v4829
      %4847 = vmatprep.subr.bf16.mxu0 0
      %4848 = vmatpush1.bf16.msra.mxu0 %v4831
      %4849 = vmatprep.subr.bf16.mxu0 0
      %4850 = vmatpush1.bf16.msra.mxu0 %v4832
      %4851 = vmatprep.subr.bf16.mxu0 0
      %4852 = vmatpush1.bf16.msra.mxu0 %v4833
      %4853 = vmatprep.subr.bf16.mxu0 0
      %4854 = vmatpush1.bf16.msra.mxu0 %v4834
      %4855 = vmatprep.subr.bf16.mxu0 0
      %4856 = vmatpush1.bf16.msra.mxu0 %v4835
      %4857 = vmatprep.subr.bf16.mxu0 0
      %4858 = vmatpush1.bf16.msra.mxu0 %v4836
      %4859 = vmatprep.subr.bf16.mxu0 0
      %4860 = vmatpush1.bf16.msra.mxu0 %v4837
      %4861 = vmatprep.subr.bf16.mxu0 0
      %4862 = vmatpush1.bf16.msra.mxu0 %v4838
      %4863 = vmatprep.subr.bf16.mxu0 0
      %4864 = vmatpush1.bf16.msra.mxu0 0
      %4865 = vmatprep.subr.bf16.mxu0 0
      %4866 = vmatpush1.bf16.msra.mxu0 0
      %4867 = vmatprep.subr.bf16.mxu0 0
      %4868 = vmatpush1.bf16.msra.mxu0 0
      %4869 = vmatprep.subr.bf16.mxu0 0
      %4870 = vmatpush1.bf16.msra.mxu0 0
      %4871 = vmatprep.subr.bf16.mxu0 0
      %4872 = vmatpush1.bf16.msra.mxu0 0
      %4873 = vmatprep.subr.bf16.mxu0 0
      %4874 = vmatpush1.bf16.msra.mxu0 0
      %4875 = vmatprep.subr.bf16.mxu0 0
      %4876 = vmatpush1.bf16.msra.mxu0 0
      %4877 = vmatprep.subr.bf16.mxu0 0
      %4878 = vmatpush1.bf16.msra.mxu0 0
      %4879 = vmatprep.mubr.bf16.mxu0 0
      %4880 = vmatmul.mubr.bf16.gmra.mrb[0].mxu0 %v4779
      %v4881 = vpop.f32.mrb[0].mxu0
      %v4882 = vadd.f32 0.0, %v4881
      %v4883 = vpop.f32.mrb[0].mxu0
      %v4884 = vpop.f32.mrb[0].mxu0
      %v4885 = vadd.f32 0.0, %v4884
      %v4886 = vpop.f32.mrb[0].mxu0
      %4887 = vmatprep.mubr.bf16.mxu0 0
      %4888 = vmatmul.mubr.bf16.gmra.mrb[0].mxu0 %v4780
      %v4889 = vpop.f32.mrb[0].mxu0
      %v4890 = vadd.f32 0.0, %v4889
      %v4891 = vpop.f32.mrb[0].mxu0
      %v4892 = vpop.f32.mrb[0].mxu0
      %v4893 = vadd.f32 0.0, %v4892
      %v4894 = vpop.f32.mrb[0].mxu0
      %4895 = vmatprep.mubr.bf16.mxu0 0
      %4896 = vmatmul.mubr.bf16.gmra.mrb[0].mxu0 %v4781
      %v4897 = vpop.f32.mrb[0].mxu0
      %v4898 = vadd.f32 0.0, %v4897
      %v4899 = vpop.f32.mrb[0].mxu0
      %v4900 = vpop.f32.mrb[0].mxu0
      %v4901 = vadd.f32 0.0, %v4900
      %v4902 = vpop.f32.mrb[0].mxu0
      %4903 = vmatprep.mubr.bf16.mxu0 0
      %4904 = vmatmul.mubr.bf16.gmra.mrb[0].mxu0 %v4782
      %v4905 = vpop.f32.mrb[0].mxu0
      %v4906 = vadd.f32 0.0, %v4905
      %v4907 = vpop.f32.mrb[0].mxu0
      %v4908 = vpop.f32.mrb[0].mxu0
      %v4909 = vadd.f32 0.0, %v4908
      %v4910 = vpop.f32.mrb[0].mxu0
      %4911 = vdwg.mxu0
      %v4912 = vadd.f32 %v4755, %v4882
      %v4913 = vadd.f32 %v4756, %v4885
      %v4914 = vadd.f32 %v4757, %v4890
      %v4915 = vadd.f32 %v4758, %v4893
      %v4916 = vadd.f32 %v4759, %v4898
      %v4917 = vadd.f32 %v4760, %v4901
      %v4918 = vadd.f32 %v4761, %v4906
      %v4919 = vadd.f32 %v4762, %v4909
      %s4920 = scalar_lea.vmem %s4763, 1 [#allocation3]
      %v4921 = vld [vmem:[%s4920] ss:$2 sm:$0xff]
      %s4922 = scalar_lea.vmem %s4763, 49 [#allocation3]
      %v4923 = vld [vmem:[%s4922] ss:$2 sm:$0xff]
      %s4924 = scalar_lea.vmem %s4763, 97 [#allocation3]
      %v4925 = vld [vmem:[%s4924] ss:$2 sm:$0xff]
      %s4926 = scalar_lea.vmem %s4763, 145 [#allocation3]
      %v4927 = vld [vmem:[%s4926] ss:$2 sm:$0xff]
      %s4928 = scalar_lea.vmem %s4763, 193 [#allocation3]
      %v4929 = vld [vmem:[%s4928] ss:$2 sm:$0xff]
      %s4930 = scalar_lea.vmem %s4763, 241 [#allocation3]
      %v4931 = vld [vmem:[%s4930] ss:$2 sm:$0xff]
      %s4932 = scalar_lea.vmem %s4763, 289 [#allocation3]
      %v4933 = vld [vmem:[%s4932] ss:$2 sm:$0xff]
      %s4934 = scalar_lea.vmem %s4763, 337 [#allocation3]
      %v4935 = vld [vmem:[%s4934] ss:$2 sm:$0xff]
      %v4936 = vpack.c.bf16 %v4923, %v4921
      %v4937 = vpack.c.bf16 %v4927, %v4925
      %v4938 = vpack.c.bf16 %v4931, %v4929
      %v4939 = vpack.c.bf16 %v4935, %v4933
      %v4940 = vld [vmem:[%s5 + $0x1c0] sm:$0xf]
      %v4941 = vld [vmem:[%s5 + $0x1c4] sm:$0xf]
      %v4942 = vld [vmem:[%s5 + $0x1c8] sm:$0xf]
      %v4943 = vld [vmem:[%s5 + $0x1cc] sm:$0xf]
      %v4944 = vld [vmem:[%s5 + $0x1d0] sm:$0xf]
      %v4945 = vld [vmem:[%s5 + $0x1d4] sm:$0xf]
      %v4946 = vld [vmem:[%s5 + $0x1d8] sm:$0xf]
      %v4947 = vld [vmem:[%s5 + $0x1dc] sm:$0xf]
      %v4948 = vld [vmem:[%s5 + $0x1e0] sm:$0xf]
      %v4949 = vld [vmem:[%s5 + $0x1e4] sm:$0xf]
      %v4950 = vld [vmem:[%s5 + $0x1e8] sm:$0xf]
      %v4951 = vld [vmem:[%s5 + $0x1ec] sm:$0xf]
      %v4952 = vld [vmem:[%s5 + $0x1f0] sm:$0xf]
      %v4953 = vld [vmem:[%s5 + $0x1f4] sm:$0xf]
      %v4954 = vld [vmem:[%s5 + $0x1f8] sm:$0xf]
      %v4955 = vld [vmem:[%s5 + $0x1fc] sm:$0xf]
      %v4972 = vunpack.c.l.b16 %v4940
      %v4973 = vunpack.c.l.b16 %v4941
      %v4974 = vunpack.c.l.b16 %v4942
      %v4975 = vunpack.c.l.b16 %v4943
      %v4976 = vunpack.c.l.b16 %v4944
      %v4977 = vunpack.c.l.b16 %v4945
      %v4978 = vunpack.c.l.b16 %v4946
      %v4979 = vunpack.c.l.b16 %v4947
      %v4980 = vunpack.c.l.b16 %v4948
      %v4981 = vunpack.c.l.b16 %v4949
      %v4982 = vunpack.c.l.b16 %v4950
      %v4983 = vunpack.c.l.b16 %v4951
      %v4984 = vunpack.c.l.b16 %v4952
      %v4985 = vunpack.c.l.b16 %v4953
      %v4986 = vunpack.c.l.b16 %v4954
      %v4987 = vunpack.c.l.b16 %v4955
      %v4988 = vpack.c.b16 %v4973, %v4972
      %v4989 = vpack.c.b16 %v4975, %v4974
      %v4990 = vpack.c.b16 %v4977, %v4976
      %v4991 = vpack.c.b16 %v4979, %v4978
      %v4992 = vpack.c.b16 %v4981, %v4980
      %v4993 = vpack.c.b16 %v4983, %v4982
      %v4994 = vpack.c.b16 %v4985, %v4984
      %v4995 = vpack.c.b16 %v4987, %v4986
      %5004 = vmatprep.subr.bf16.mxu0 0
      %5005 = vmatpush1.bf16.msra.mxu0 %v4988
      %5006 = vmatprep.subr.bf16.mxu0 0
      %5007 = vmatpush1.bf16.msra.mxu0 %v4989
      %5008 = vmatprep.subr.bf16.mxu0 0
      %5009 = vmatpush1.bf16.msra.mxu0 %v4990
      %5010 = vmatprep.subr.bf16.mxu0 0
      %5011 = vmatpush1.bf16.msra.mxu0 %v4991
      %5012 = vmatprep.subr.bf16.mxu0 0
      %5013 = vmatpush1.bf16.msra.mxu0 %v4992
      %5014 = vmatprep.subr.bf16.mxu0 0
      %5015 = vmatpush1.bf16.msra.mxu0 %v4993
      %5016 = vmatprep.subr.bf16.mxu0 0
      %5017 = vmatpush1.bf16.msra.mxu0 %v4994
      %5018 = vmatprep.subr.bf16.mxu0 0
      %5019 = vmatpush1.bf16.msra.mxu0 %v4995
      %5020 = vmatprep.subr.bf16.mxu0 0
      %5021 = vmatpush1.bf16.msra.mxu0 0
      %5022 = vmatprep.subr.bf16.mxu0 0
      %5023 = vmatpush1.bf16.msra.mxu0 0
      %5024 = vmatprep.subr.bf16.mxu0 0
      %5025 = vmatpush1.bf16.msra.mxu0 0
      %5026 = vmatprep.subr.bf16.mxu0 0
      %5027 = vmatpush1.bf16.msra.mxu0 0
      %5028 = vmatprep.subr.bf16.mxu0 0
      %5029 = vmatpush1.bf16.msra.mxu0 0
      %5030 = vmatprep.subr.bf16.mxu0 0
      %5031 = vmatpush1.bf16.msra.mxu0 0
      %5032 = vmatprep.subr.bf16.mxu0 0
      %5033 = vmatpush1.bf16.msra.mxu0 0
      %5034 = vmatprep.subr.bf16.mxu0 0
      %5035 = vmatpush1.bf16.msra.mxu0 0
      %5036 = vmatprep.mubr.bf16.mxu0 0
      %5037 = vmatmul.mubr.bf16.gmra.mrb[0].mxu0 %v4936
      %v5038 = vpop.f32.mrb[0].mxu0
      %v5039 = vadd.f32 0.0, %v5038
      %v5040 = vpop.f32.mrb[0].mxu0
      %v5041 = vpop.f32.mrb[0].mxu0
      %v5042 = vadd.f32 0.0, %v5041
      %v5043 = vpop.f32.mrb[0].mxu0
      %5044 = vmatprep.mubr.bf16.mxu0 0
      %5045 = vmatmul.mubr.bf16.gmra.mrb[0].mxu0 %v4937
      %v5046 = vpop.f32.mrb[0].mxu0
      %v5047 = vadd.f32 0.0, %v5046
      %v5048 = vpop.f32.mrb[0].mxu0
      %v5049 = vpop.f32.mrb[0].mxu0
      %v5050 = vadd.f32 0.0, %v5049
      %v5051 = vpop.f32.mrb[0].mxu0
      %5052 = vmatprep.mubr.bf16.mxu0 0
      %5053 = vmatmul.mubr.bf16.gmra.mrb[0].mxu0 %v4938
      %v5054 = vpop.f32.mrb[0].mxu0
      %v5055 = vadd.f32 0.0, %v5054
      %v5056 = vpop.f32.mrb[0].mxu0
      %v5057 = vpop.f32.mrb[0].mxu0
      %v5058 = vadd.f32 0.0, %v5057
      %v5059 = vpop.f32.mrb[0].mxu0
      %5060 = vmatprep.mubr.bf16.mxu0 0
      %5061 = vmatmul.mubr.bf16.gmra.mrb[0].mxu0 %v4939
      %v5062 = vpop.f32.mrb[0].mxu0
      %v5063 = vadd.f32 0.0, %v5062
      %v5064 = vpop.f32.mrb[0].mxu0
      %v5065 = vpop.f32.mrb[0].mxu0
      %v5066 = vadd.f32 0.0, %v5065
      %v5067 = vpop.f32.mrb[0].mxu0
      %5068 = vdwg.mxu0
      %v5069 = vadd.f32 %v4912, %v5039
      %v5070 = vadd.f32 %v4913, %v5042
      %v5071 = vadd.f32 %v4914, %v5047
      %v5072 = vadd.f32 %v4915, %v5050
      %v5073 = vadd.f32 %v4916, %v5055
      %v5074 = vadd.f32 %v4917, %v5058
      %v5075 = vadd.f32 %v4918, %v5063
      %v5076 = vadd.f32 %v4919, %v5066
      %s5077 = scalar_lea.vmem %s4763, 2 [#allocation3]
      %v5078 = vld [vmem:[%s5077] ss:$2 sm:$0xff]
      %s5079 = scalar_lea.vmem %s4763, 50 [#allocation3]
      %v5080 = vld [vmem:[%s5079] ss:$2 sm:$0xff]
      %s5081 = scalar_lea.vmem %s4763, 98 [#allocation3]
      %v5082 = vld [vmem:[%s5081] ss:$2 sm:$0xff]
      %s5083 = scalar_lea.vmem %s4763, 146 [#allocation3]
      %v5084 = vld [vmem:[%s5083] ss:$2 sm:$0xff]
      %s5085 = scalar_lea.vmem %s4763, 194 [#allocation3]
      %v5086 = vld [vmem:[%s5085] ss:$2 sm:$0xff]
      %s5087 = scalar_lea.vmem %s4763, 242 [#allocation3]
      %v5088 = vld [vmem:[%s5087] ss:$2 sm:$0xff]
      %s5089 = scalar_lea.vmem %s4763, 290 [#allocation3]
      %v5090 = vld [vmem:[%s5089] ss:$2 sm:$0xff]
      %s5091 = scalar_lea.vmem %s4763, 338 [#allocation3]
      %v5092 = vld [vmem:[%s5091] ss:$2 sm:$0xff]
      %v5093 = vpack.c.bf16 %v5080, %v5078
      %v5094 = vpack.c.bf16 %v5084, %v5082
      %v5095 = vpack.c.bf16 %v5088, %v5086
      %v5096 = vpack.c.bf16 %v5092, %v5090
      %v5097 = vld [vmem:[%s5 + $0x200] sm:$0xf]
      %v5098 = vld [vmem:[%s5 + $0x204] sm:$0xf]
      %v5099 = vld [vmem:[%s5 + $0x208] sm:$0xf]
      %v5100 = vld [vmem:[%s5 + $0x20c] sm:$0xf]
      %v5101 = vld [vmem:[%s5 + $0x210] sm:$0xf]
      %v5102 = vld [vmem:[%s5 + $0x214] sm:$0xf]
      %v5103 = vld [vmem:[%s5 + $0x218] sm:$0xf]
      %v5104 = vld [vmem:[%s5 + $0x21c] sm:$0xf]
      %v5105 = vld [vmem:[%s5 + $0x220] sm:$0xf]
      %v5106 = vld [vmem:[%s5 + $0x224] sm:$0xf]
      %v5107 = vld [vmem:[%s5 + $0x228] sm:$0xf]
      %v5108 = vld [vmem:[%s5 + $0x22c] sm:$0xf]
      %v5109 = vld [vmem:[%s5 + $0x230] sm:$0xf]
      %v5110 = vld [vmem:[%s5 + $0x234] sm:$0xf]
      %v5111 = vld [vmem:[%s5 + $0x238] sm:$0xf]
      %v5112 = vld [vmem:[%s5 + $0x23c] sm:$0xf]
      %v5129 = vunpack.c.l.b16 %v5097
      %v5130 = vunpack.c.l.b16 %v5098
      %v5131 = vunpack.c.l.b16 %v5099
      %v5132 = vunpack.c.l.b16 %v5100
      %v5133 = vunpack.c.l.b16 %v5101
      %v5134 = vunpack.c.l.b16 %v5102
      %v5135 = vunpack.c.l.b16 %v5103
      %v5136 = vunpack.c.l.b16 %v5104
      %v5137 = vunpack.c.l.b16 %v5105
      %v5138 = vunpack.c.l.b16 %v5106
      %v5139 = vunpack.c.l.b16 %v5107
      %v5140 = vunpack.c.l.b16 %v5108
      %v5141 = vunpack.c.l.b16 %v5109
      %v5142 = vunpack.c.l.b16 %v5110
      %v5143 = vunpack.c.l.b16 %v5111
      %v5144 = vunpack.c.l.b16 %v5112
      %v5145 = vpack.c.b16 %v5130, %v5129
      %v5146 = vpack.c.b16 %v5132, %v5131
      %v5147 = vpack.c.b16 %v5134, %v5133
      %v5148 = vpack.c.b16 %v5136, %v5135
      %v5149 = vpack.c.b16 %v5138, %v5137
      %v5150 = vpack.c.b16 %v5140, %v5139
      %v5151 = vpack.c.b16 %v5142, %v5141
      %v5152 = vpack.c.b16 %v5144, %v5143
      %5161 = vmatprep.subr.bf16.mxu0 0
      %5162 = vmatpush1.bf16.msra.mxu0 %v5145
      %5163 = vmatprep.subr.bf16.mxu0 0
      %5164 = vmatpush1.bf16.msra.mxu0 %v5146
      %5165 = vmatprep.subr.bf16.mxu0 0
      %5166 = vmatpush1.bf16.msra.mxu0 %v5147
      %5167 = vmatprep.subr.bf16.mxu0 0
      %5168 = vmatpush1.bf16.msra.mxu0 %v5148
      %5169 = vmatprep.subr.bf16.mxu0 0
      %5170 = vmatpush1.bf16.msra.mxu0 %v5149
      %5171 = vmatprep.subr.bf16.mxu0 0
      %5172 = vmatpush1.bf16.msra.mxu0 %v5150
      %5173 = vmatprep.subr.bf16.mxu0 0
      %5174 = vmatpush1.bf16.msra.mxu0 %v5151
      %5175 = vmatprep.subr.bf16.mxu0 0
      %5176 = vmatpush1.bf16.msra.mxu0 %v5152
      %5177 = vmatprep.subr.bf16.mxu0 0
      %5178 = vmatpush1.bf16.msra.mxu0 0
      %5179 = vmatprep.subr.bf16.mxu0 0
      %5180 = vmatpush1.bf16.msra.mxu0 0
      %5181 = vmatprep.subr.bf16.mxu0 0
      %5182 = vmatpush1.bf16.msra.mxu0 0
      %5183 = vmatprep.subr.bf16.mxu0 0
      %5184 = vmatpush1.bf16.msra.mxu0 0
      %5185 = vmatprep.subr.bf16.mxu0 0
      %5186 = vmatpush1.bf16.msra.mxu0 0
      %5187 = vmatprep.subr.bf16.mxu0 0
      %5188 = vmatpush1.bf16.msra.mxu0 0
      %5189 = vmatprep.subr.bf16.mxu0 0
      %5190 = vmatpush1.bf16.msra.mxu0 0
      %5191 = vmatprep.subr.bf16.mxu0 0
      %5192 = vmatpush1.bf16.msra.mxu0 0
      %5193 = vmatprep.mubr.bf16.mxu0 0
      %5194 = vmatmul.mubr.bf16.gmra.mrb[0].mxu0 %v5093
      %v5195 = vpop.f32.mrb[0].mxu0
      %v5196 = vadd.f32 0.0, %v5195
      %v5197 = vpop.f32.mrb[0].mxu0
      %v5198 = vpop.f32.mrb[0].mxu0
      %v5199 = vadd.f32 0.0, %v5198
      %v5200 = vpop.f32.mrb[0].mxu0
      %5201 = vmatprep.mubr.bf16.mxu0 0
      %5202 = vmatmul.mubr.bf16.gmra.mrb[0].mxu0 %v5094
      %v5203 = vpop.f32.mrb[0].mxu0
      %v5204 = vadd.f32 0.0, %v5203
      %v5205 = vpop.f32.mrb[0].mxu0
      %v5206 = vpop.f32.mrb[0].mxu0
      %v5207 = vadd.f32 0.0, %v5206
      %v5208 = vpop.f32.mrb[0].mxu0
      %5209 = vmatprep.mubr.bf16.mxu0 0
      %5210 = vmatmul.mubr.bf16.gmra.mrb[0].mxu0 %v5095
      %v5211 = vpop.f32.mrb[0].mxu0
      %v5212 = vadd.f32 0.0, %v5211
      %v5213 = vpop.f32.mrb[0].mxu0
      %v5214 = vpop.f32.mrb[0].mxu0
      %v5215 = vadd.f32 0.0, %v5214
      %v5216 = vpop.f32.mrb[0].mxu0
      %5217 = vmatprep.mubr.bf16.mxu0 0
      %5218 = vmatmul.mubr.bf16.gmra.mrb[0].mxu0 %v5096
      %v5219 = vpop.f32.mrb[0].mxu0
      %v5220 = vadd.f32 0.0, %v5219
      %v5221 = vpop.f32.mrb[0].mxu0
      %v5222 = vpop.f32.mrb[0].mxu0
      %v5223 = vadd.f32 0.0, %v5222
      %v5224 = vpop.f32.mrb[0].mxu0
      %5225 = vdwg.mxu0
      %v5226 = vadd.f32 %v5069, %v5196
      %v5227 = vadd.f32 %v5070, %v5199
      %v5228 = vadd.f32 %v5071, %v5204
      %v5229 = vadd.f32 %v5072, %v5207
      %v5230 = vadd.f32 %v5073, %v5212
      %v5231 = vadd.f32 %v5074, %v5215
      %v5232 = vadd.f32 %v5075, %v5220
      %v5233 = vadd.f32 %v5076, %v5223
      %v5234 = vld [vmem:[%s6] sm:$0x1]
      %v5236 = vlaneseq
      %v5237 = vshrl.u32 %v5236, 7
      %v5238 = vsub.s32 0, %v5237
      %v5239 = vrot.slane %v5234, %v5238
      %v5241 = vadd.f32 %v5226, %v5239
      %v5242 = vadd.f32 %v5227, %v5239
      %v5243 = vadd.f32 %v5228, %v5239
      %v5244 = vadd.f32 %v5229, %v5239
      %v5245 = vadd.f32 %v5230, %v5239
      %v5246 = vadd.f32 %v5231, %v5239
      %v5247 = vadd.f32 %v5232, %v5239
      %v5248 = vadd.f32 %v5233, %v5239
      %v5249 = vmax.f32 %v5241, 0.0
      %v5250 = vmax.f32 %v5242, 0.0
      %v5251 = vmax.f32 %v5243, 0.0
      %v5252 = vmax.f32 %v5244, 0.0
      %v5253 = vmax.f32 %v5245, 0.0
      %v5254 = vmax.f32 %v5246, 0.0
      %v5255 = vmax.f32 %v5247, 0.0
      %v5256 = vmax.f32 %v5248, 0.0
      %s5257 = scalar_lea.vmem [#allocation4], 16
      %5258 = vst [vmem:[%s5257 + $0x1] sm:$0xff] %v5249
      %5259 = vst [vmem:[%s5257 + $0x11] sm:$0xff] %v5250
      %5260 = vst [vmem:[%s5257 + $0x21] sm:$0xff] %v5251
      %5261 = vst [vmem:[%s5257 + $0x31] sm:$0xff] %v5252
      %5262 = vst [vmem:[%s5257 + $0x41] sm:$0xff] %v5253
      %5263 = vst [vmem:[%s5257 + $0x51] sm:$0xff] %v5254
      %5264 = vst [vmem:[%s5257 + $0x61] sm:$0xff] %v5255
      %5265 = vst [vmem:[%s5257 + $0x71] sm:$0xff] %v5256
      %v5266 = vld [vmem:[#allocation4] ss:$2 sm:$0xf]
      %s5267 = scalar_lea.vmem [#allocation4], 32
      %v5268 = vld [vmem:[%s5267] ss:$2 sm:$0xf]
      %s5269 = scalar_lea.vmem [#allocation4], 64
      %v5270 = vld [vmem:[%s5269] ss:$2 sm:$0xf]
      %s5271 = scalar_lea.vmem [#allocation4], 96
      %v5272 = vld [vmem:[%s5271] ss:$2 sm:$0xf]
      %v5277 = vcombine.low %v5266, %v5268
      %v5278 = vcombine.low %v5270, %v5272
      %v5281 = vpack.c.bf16 %v5278, %v5277
      %v5282 = vld [vmem:[%s7] sm:$0xf]
      %v5283 = vld [vmem:[%s7 + $0x4] sm:$0xf]
      %v5284 = vld [vmem:[%s7 + $0x8] sm:$0xf]
      %v5285 = vld [vmem:[%s7 + $0xc] sm:$0xf]
      %v5286 = vld [vmem:[%s7 + $0x10] sm:$0xf]
      %v5287 = vld [vmem:[%s7 + $0x14] sm:$0xf]
      %v5288 = vld [vmem:[%s7 + $0x18] sm:$0xf]
      %v5289 = vld [vmem:[%s7 + $0x1c] sm:$0xf]
      %v5290 = vld [vmem:[%s7 + $0x20] sm:$0xf]
      %v5291 = vld [vmem:[%s7 + $0x24] sm:$0xf]
      %v5292 = vld [vmem:[%s7 + $0x28] sm:$0xf]
      %v5293 = vld [vmem:[%s7 + $0x2c] sm:$0xf]
      %v5294 = vld [vmem:[%s7 + $0x30] sm:$0xf]
      %v5295 = vld [vmem:[%s7 + $0x34] sm:$0xf]
      %v5296 = vld [vmem:[%s7 + $0x38] sm:$0xf]
      %v5297 = vld [vmem:[%s7 + $0x3c] sm:$0xf]
      %s5298 = scalar_lea.vmem [#allocation4], 1
      %v5299 = vld [vmem:[%s5298] ss:$2 sm:$0xf]
      %s5300 = scalar_lea.vmem [#allocation4], 33
      %v5301 = vld [vmem:[%s5300] ss:$2 sm:$0xf]
      %s5302 = scalar_lea.vmem [#allocation4], 65
      %v5303 = vld [vmem:[%s5302] ss:$2 sm:$0xf]
      %s5304 = scalar_lea.vmem [#allocation4], 97
      %v5305 = vld [vmem:[%s5304] ss:$2 sm:$0xf]
      %v5310 = vcombine.low %v5299, %v5301
      %v5311 = vcombine.low %v5303, %v5305
      %v5314 = vpack.c.bf16 %v5311, %v5310
      %v5315 = vld [vmem:[%s7 + $0x40] sm:$0xf]
      %v5316 = vld [vmem:[%s7 + $0x44] sm:$0xf]
      %v5317 = vld [vmem:[%s7 + $0x48] sm:$0xf]
      %v5318 = vld [vmem:[%s7 + $0x4c] sm:$0xf]
      %v5319 = vld [vmem:[%s7 + $0x50] sm:$0xf]
      %v5320 = vld [vmem:[%s7 + $0x54] sm:$0xf]
      %v5321 = vld [vmem:[%s7 + $0x58] sm:$0xf]
      %v5322 = vld [vmem:[%s7 + $0x5c] sm:$0xf]
      %v5323 = vld [vmem:[%s7 + $0x60] sm:$0xf]
      %v5324 = vld [vmem:[%s7 + $0x64] sm:$0xf]
      %v5325 = vld [vmem:[%s7 + $0x68] sm:$0xf]
      %v5326 = vld [vmem:[%s7 + $0x6c] sm:$0xf]
      %v5327 = vld [vmem:[%s7 + $0x70] sm:$0xf]
      %v5328 = vld [vmem:[%s7 + $0x74] sm:$0xf]
      %v5329 = vld [vmem:[%s7 + $0x78] sm:$0xf]
      %v5330 = vld [vmem:[%s7 + $0x7c] sm:$0xf]
      %v5347 = vunpack.c.l.b16 %v5315
      %v5348 = vunpack.c.l.b16 %v5316
      %v5349 = vunpack.c.l.b16 %v5317
      %v5350 = vunpack.c.l.b16 %v5318
      %v5351 = vunpack.c.l.b16 %v5319
      %v5352 = vunpack.c.l.b16 %v5320
      %v5353 = vunpack.c.l.b16 %v5321
      %v5354 = vunpack.c.l.b16 %v5322
      %v5355 = vunpack.c.l.b16 %v5323
      %v5356 = vunpack.c.l.b16 %v5324
      %v5357 = vunpack.c.l.b16 %v5325
      %v5358 = vunpack.c.l.b16 %v5326
      %v5359 = vunpack.c.l.b16 %v5327
      %v5360 = vunpack.c.l.b16 %v5328
      %v5361 = vunpack.c.l.b16 %v5329
      %v5362 = vunpack.c.l.b16 %v5330
      %v5363 = vpack.c.b16 %v5348, %v5347
      %v5364 = vpack.c.b16 %v5350, %v5349
      %v5365 = vpack.c.b16 %v5352, %v5351
      %v5366 = vpack.c.b16 %v5354, %v5353
      %v5367 = vpack.c.b16 %v5356, %v5355
      %v5368 = vpack.c.b16 %v5358, %v5357
      %v5369 = vpack.c.b16 %v5360, %v5359
      %v5370 = vpack.c.b16 %v5362, %v5361
      %5379 = vmatprep.subr.bf16.mxu0 0
      %5380 = vmatpush1.bf16.msra.mxu0 %v5363
      %5381 = vmatprep.subr.bf16.mxu0 0
      %5382 = vmatpush1.bf16.msra.mxu0 %v5364
      %5383 = vmatprep.subr.bf16.mxu0 0
      %5384 = vmatpush1.bf16.msra.mxu0 %v5365
      %5385 = vmatprep.subr.bf16.mxu0 0
      %5386 = vmatpush1.bf16.msra.mxu0 %v5366
      %5387 = vmatprep.subr.bf16.mxu0 0
      %5388 = vmatpush1.bf16.msra.mxu0 %v5367
      %5389 = vmatprep.subr.bf16.mxu0 0
      %5390 = vmatpush1.bf16.msra.mxu0 %v5368
      %5391 = vmatprep.subr.bf16.mxu0 0
      %5392 = vmatpush1.bf16.msra.mxu0 %v5369
      %5393 = vmatprep.subr.bf16.mxu0 0
      %5394 = vmatpush1.bf16.msra.mxu0 %v5370
      %5395 = vmatprep.subr.bf16.mxu0 0
      %5396 = vmatpush1.bf16.msra.mxu0 0
      %5397 = vmatprep.subr.bf16.mxu0 0
      %5398 = vmatpush1.bf16.msra.mxu0 0
      %5399 = vmatprep.subr.bf16.mxu0 0
      %5400 = vmatpush1.bf16.msra.mxu0 0
      %5401 = vmatprep.subr.bf16.mxu0 0
      %5402 = vmatpush1.bf16.msra.mxu0 0
      %5403 = vmatprep.subr.bf16.mxu0 0
      %5404 = vmatpush1.bf16.msra.mxu0 0
      %5405 = vmatprep.subr.bf16.mxu0 0
      %5406 = vmatpush1.bf16.msra.mxu0 0
      %5407 = vmatprep.subr.bf16.mxu0 0
      %5408 = vmatpush1.bf16.msra.mxu0 0
      %5409 = vmatprep.subr.bf16.mxu0 0
      %5410 = vmatpush1.bf16.msra.mxu0 0
      %5411 = vmatprep.mubr.bf16.mxu0 0
      %5412 = vmatmul.mubr.bf16.gmra.mrb[0].mxu0 %v5314
      %v5413 = vpop.f32.mrb[0].mxu0
      %v5414 = vadd.f32 0.0, %v5413
      %v5415 = vpop.f32.mrb[0].mxu0
      %v5416 = vpop.f32.mrb[0].mxu0
      %v5417 = vadd.f32 0.0, %v5416
      %v5418 = vpop.f32.mrb[0].mxu0
      %5419 = vdwg.mxu0
      %v5436 = vunpack.c.l.b16 %v5282
      %v5437 = vunpack.c.l.b16 %v5283
      %v5438 = vunpack.c.l.b16 %v5284
      %v5439 = vunpack.c.l.b16 %v5285
      %v5440 = vunpack.c.l.b16 %v5286
      %v5441 = vunpack.c.l.b16 %v5287
      %v5442 = vunpack.c.l.b16 %v5288
      %v5443 = vunpack.c.l.b16 %v5289
      %v5444 = vunpack.c.l.b16 %v5290
      %v5445 = vunpack.c.l.b16 %v5291
      %v5446 = vunpack.c.l.b16 %v5292
      %v5447 = vunpack.c.l.b16 %v5293
      %v5448 = vunpack.c.l.b16 %v5294
      %v5449 = vunpack.c.l.b16 %v5295
      %v5450 = vunpack.c.l.b16 %v5296
      %v5451 = vunpack.c.l.b16 %v5297
      %v5452 = vpack.c.b16 %v5437, %v5436
      %v5453 = vpack.c.b16 %v5439, %v5438
      %v5454 = vpack.c.b16 %v5441, %v5440
      %v5455 = vpack.c.b16 %v5443, %v5442
      %v5456 = vpack.c.b16 %v5445, %v5444
      %v5457 = vpack.c.b16 %v5447, %v5446
      %v5458 = vpack.c.b16 %v5449, %v5448
      %v5459 = vpack.c.b16 %v5451, %v5450
      %5468 = vmatprep.subr.bf16.mxu0 0
      %5469 = vmatpush1.bf16.msra.mxu0 %v5452
      %5470 = vmatprep.subr.bf16.mxu0 0
      %5471 = vmatpush1.bf16.msra.mxu0 %v5453
      %5472 = vmatprep.subr.bf16.mxu0 0
      %5473 = vmatpush1.bf16.msra.mxu0 %v5454
      %5474 = vmatprep.subr.bf16.mxu0 0
      %5475 = vmatpush1.bf16.msra.mxu0 %v5455
      %5476 = vmatprep.subr.bf16.mxu0 0
      %5477 = vmatpush1.bf16.msra.mxu0 %v5456
      %5478 = vmatprep.subr.bf16.mxu0 0
      %5479 = vmatpush1.bf16.msra.mxu0 %v5457
      %5480 = vmatprep.subr.bf16.mxu0 0
      %5481 = vmatpush1.bf16.msra.mxu0 %v5458
      %5482 = vmatprep.subr.bf16.mxu0 0
      %5483 = vmatpush1.bf16.msra.mxu0 %v5459
      %5484 = vmatprep.subr.bf16.mxu0 0
      %5485 = vmatpush1.bf16.msra.mxu0 0
      %5486 = vmatprep.subr.bf16.mxu0 0
      %5487 = vmatpush1.bf16.msra.mxu0 0
      %5488 = vmatprep.subr.bf16.mxu0 0
      %5489 = vmatpush1.bf16.msra.mxu0 0
      %5490 = vmatprep.subr.bf16.mxu0 0
      %5491 = vmatpush1.bf16.msra.mxu0 0
      %5492 = vmatprep.subr.bf16.mxu0 0
      %5493 = vmatpush1.bf16.msra.mxu0 0
      %5494 = vmatprep.subr.bf16.mxu0 0
      %5495 = vmatpush1.bf16.msra.mxu0 0
      %5496 = vmatprep.subr.bf16.mxu0 0
      %5497 = vmatpush1.bf16.msra.mxu0 0
      %5498 = vmatprep.subr.bf16.mxu0 0
      %5499 = vmatpush1.bf16.msra.mxu0 0
      %5500 = vmatprep.mubr.bf16.mxu0 0
      %5501 = vmatmul.mubr.bf16.gmra.mrb[0].mxu0 %v5281
      %v5502 = vpop.f32.mrb[0].mxu0
      %v5503 = vadd.f32 %v5414, %v5502
      %v5504 = vpop.f32.mrb[0].mxu0
      %v5505 = vpop.f32.mrb[0].mxu0
      %v5506 = vadd.f32 %v5417, %v5505
      %v5507 = vpop.f32.mrb[0].mxu0
      %5508 = vdwg.mxu0
      %s5509 = scalar_lea.vmem [#allocation4], 2
      %v5510 = vld [vmem:[%s5509] ss:$2 sm:$0xf]
      %s5511 = scalar_lea.vmem [#allocation4], 34
      %v5512 = vld [vmem:[%s5511] ss:$2 sm:$0xf]
      %s5513 = scalar_lea.vmem [#allocation4], 66
      %v5514 = vld [vmem:[%s5513] ss:$2 sm:$0xf]
      %s5515 = scalar_lea.vmem [#allocation4], 98
      %v5516 = vld [vmem:[%s5515] ss:$2 sm:$0xf]
      %v5521 = vcombine.low %v5510, %v5512
      %v5522 = vcombine.low %v5514, %v5516
      %v5525 = vpack.c.bf16 %v5522, %v5521
      %v5526 = vld [vmem:[%s7 + $0x80] sm:$0xf]
      %v5527 = vld [vmem:[%s7 + $0x84] sm:$0xf]
      %v5528 = vld [vmem:[%s7 + $0x88] sm:$0xf]
      %v5529 = vld [vmem:[%s7 + $0x8c] sm:$0xf]
      %v5530 = vld [vmem:[%s7 + $0x90] sm:$0xf]
      %v5531 = vld [vmem:[%s7 + $0x94] sm:$0xf]
      %v5532 = vld [vmem:[%s7 + $0x98] sm:$0xf]
      %v5533 = vld [vmem:[%s7 + $0x9c] sm:$0xf]
      %v5534 = vld [vmem:[%s7 + $0xa0] sm:$0xf]
      %v5535 = vld [vmem:[%s7 + $0xa4] sm:$0xf]
      %v5536 = vld [vmem:[%s7 + $0xa8] sm:$0xf]
      %v5537 = vld [vmem:[%s7 + $0xac] sm:$0xf]
      %v5538 = vld [vmem:[%s7 + $0xb0] sm:$0xf]
      %v5539 = vld [vmem:[%s7 + $0xb4] sm:$0xf]
      %v5540 = vld [vmem:[%s7 + $0xb8] sm:$0xf]
      %v5541 = vld [vmem:[%s7 + $0xbc] sm:$0xf]
      %v5558 = vunpack.c.l.b16 %v5526
      %v5559 = vunpack.c.l.b16 %v5527
      %v5560 = vunpack.c.l.b16 %v5528
      %v5561 = vunpack.c.l.b16 %v5529
      %v5562 = vunpack.c.l.b16 %v5530
      %v5563 = vunpack.c.l.b16 %v5531
      %v5564 = vunpack.c.l.b16 %v5532
      %v5565 = vunpack.c.l.b16 %v5533
      %v5566 = vunpack.c.l.b16 %v5534
      %v5567 = vunpack.c.l.b16 %v5535
      %v5568 = vunpack.c.l.b16 %v5536
      %v5569 = vunpack.c.l.b16 %v5537
      %v5570 = vunpack.c.l.b16 %v5538
      %v5571 = vunpack.c.l.b16 %v5539
      %v5572 = vunpack.c.l.b16 %v5540
      %v5573 = vunpack.c.l.b16 %v5541
      %v5574 = vpack.c.b16 %v5559, %v5558
      %v5575 = vpack.c.b16 %v5561, %v5560
      %v5576 = vpack.c.b16 %v5563, %v5562
      %v5577 = vpack.c.b16 %v5565, %v5564
      %v5578 = vpack.c.b16 %v5567, %v5566
      %v5579 = vpack.c.b16 %v5569, %v5568
      %v5580 = vpack.c.b16 %v5571, %v5570
      %v5581 = vpack.c.b16 %v5573, %v5572
      %5590 = vmatprep.subr.bf16.mxu0 0
      %5591 = vmatpush1.bf16.msra.mxu0 %v5574
      %5592 = vmatprep.subr.bf16.mxu0 0
      %5593 = vmatpush1.bf16.msra.mxu0 %v5575
      %5594 = vmatprep.subr.bf16.mxu0 0
      %5595 = vmatpush1.bf16.msra.mxu0 %v5576
      %5596 = vmatprep.subr.bf16.mxu0 0
      %5597 = vmatpush1.bf16.msra.mxu0 %v5577
      %5598 = vmatprep.subr.bf16.mxu0 0
      %5599 = vmatpush1.bf16.msra.mxu0 %v5578
      %5600 = vmatprep.subr.bf16.mxu0 0
      %5601 = vmatpush1.bf16.msra.mxu0 %v5579
      %5602 = vmatprep.subr.bf16.mxu0 0
      %5603 = vmatpush1.bf16.msra.mxu0 %v5580
      %5604 = vmatprep.subr.bf16.mxu0 0
      %5605 = vmatpush1.bf16.msra.mxu0 %v5581
      %5606 = vmatprep.subr.bf16.mxu0 0
      %5607 = vmatpush1.bf16.msra.mxu0 0
      %5608 = vmatprep.subr.bf16.mxu0 0
      %5609 = vmatpush1.bf16.msra.mxu0 0
      %5610 = vmatprep.subr.bf16.mxu0 0
      %5611 = vmatpush1.bf16.msra.mxu0 0
      %5612 = vmatprep.subr.bf16.mxu0 0
      %5613 = vmatpush1.bf16.msra.mxu0 0
      %5614 = vmatprep.subr.bf16.mxu0 0
      %5615 = vmatpush1.bf16.msra.mxu0 0
      %5616 = vmatprep.subr.bf16.mxu0 0
      %5617 = vmatpush1.bf16.msra.mxu0 0
      %5618 = vmatprep.subr.bf16.mxu0 0
      %5619 = vmatpush1.bf16.msra.mxu0 0
      %5620 = vmatprep.subr.bf16.mxu0 0
      %5621 = vmatpush1.bf16.msra.mxu0 0
      %5622 = vmatprep.mubr.bf16.mxu0 0
      %5623 = vmatmul.mubr.bf16.gmra.mrb[0].mxu0 %v5525
      %v5624 = vpop.f32.mrb[0].mxu0
      %v5625 = vadd.f32 0.0, %v5624
      %v5626 = vpop.f32.mrb[0].mxu0
      %v5627 = vpop.f32.mrb[0].mxu0
      %v5628 = vadd.f32 0.0, %v5627
      %v5629 = vpop.f32.mrb[0].mxu0
      %5630 = vdwg.mxu0
      %v5631 = vadd.f32 %v5503, %v5625
      %v5632 = vadd.f32 %v5506, %v5628
      %v5633 = vld [vmem:[%s5257] ss:$2 sm:$0xf]
      %s5634 = scalar_lea.vmem %s5257, 32 [#allocation4]
      %v5635 = vld [vmem:[%s5634] ss:$2 sm:$0xf]
      %s5636 = scalar_lea.vmem %s5257, 64 [#allocation4]
      %v5637 = vld [vmem:[%s5636] ss:$2 sm:$0xf]
      %s5638 = scalar_lea.vmem %s5257, 96 [#allocation4]
      %v5639 = vld [vmem:[%s5638] ss:$2 sm:$0xf]
      %v5644 = vcombine.low %v5633, %v5635
      %v5645 = vcombine.low %v5637, %v5639
      %v5648 = vpack.c.bf16 %v5645, %v5644
      %v5649 = vld [vmem:[%s7 + $0xc0] sm:$0xf]
      %v5650 = vld [vmem:[%s7 + $0xc4] sm:$0xf]
      %v5651 = vld [vmem:[%s7 + $0xc8] sm:$0xf]
      %v5652 = vld [vmem:[%s7 + $0xcc] sm:$0xf]
      %v5653 = vld [vmem:[%s7 + $0xd0] sm:$0xf]
      %v5654 = vld [vmem:[%s7 + $0xd4] sm:$0xf]
      %v5655 = vld [vmem:[%s7 + $0xd8] sm:$0xf]
      %v5656 = vld [vmem:[%s7 + $0xdc] sm:$0xf]
      %v5657 = vld [vmem:[%s7 + $0xe0] sm:$0xf]
      %v5658 = vld [vmem:[%s7 + $0xe4] sm:$0xf]
      %v5659 = vld [vmem:[%s7 + $0xe8] sm:$0xf]
      %v5660 = vld [vmem:[%s7 + $0xec] sm:$0xf]
      %v5661 = vld [vmem:[%s7 + $0xf0] sm:$0xf]
      %v5662 = vld [vmem:[%s7 + $0xf4] sm:$0xf]
      %v5663 = vld [vmem:[%s7 + $0xf8] sm:$0xf]
      %v5664 = vld [vmem:[%s7 + $0xfc] sm:$0xf]
      %v5681 = vunpack.c.l.b16 %v5649
      %v5682 = vunpack.c.l.b16 %v5650
      %v5683 = vunpack.c.l.b16 %v5651
      %v5684 = vunpack.c.l.b16 %v5652
      %v5685 = vunpack.c.l.b16 %v5653
      %v5686 = vunpack.c.l.b16 %v5654
      %v5687 = vunpack.c.l.b16 %v5655
      %v5688 = vunpack.c.l.b16 %v5656
      %v5689 = vunpack.c.l.b16 %v5657
      %v5690 = vunpack.c.l.b16 %v5658
      %v5691 = vunpack.c.l.b16 %v5659
      %v5692 = vunpack.c.l.b16 %v5660
      %v5693 = vunpack.c.l.b16 %v5661
      %v5694 = vunpack.c.l.b16 %v5662
      %v5695 = vunpack.c.l.b16 %v5663
      %v5696 = vunpack.c.l.b16 %v5664
      %v5697 = vpack.c.b16 %v5682, %v5681
      %v5698 = vpack.c.b16 %v5684, %v5683
      %v5699 = vpack.c.b16 %v5686, %v5685
      %v5700 = vpack.c.b16 %v5688, %v5687
      %v5701 = vpack.c.b16 %v5690, %v5689
      %v5702 = vpack.c.b16 %v5692, %v5691
      %v5703 = vpack.c.b16 %v5694, %v5693
      %v5704 = vpack.c.b16 %v5696, %v5695
      %5713 = vmatprep.subr.bf16.mxu0 0
      %5714 = vmatpush1.bf16.msra.mxu0 %v5697
      %5715 = vmatprep.subr.bf16.mxu0 0
      %5716 = vmatpush1.bf16.msra.mxu0 %v5698
      %5717 = vmatprep.subr.bf16.mxu0 0
      %5718 = vmatpush1.bf16.msra.mxu0 %v5699
      %5719 = vmatprep.subr.bf16.mxu0 0
      %5720 = vmatpush1.bf16.msra.mxu0 %v5700
      %5721 = vmatprep.subr.bf16.mxu0 0
      %5722 = vmatpush1.bf16.msra.mxu0 %v5701
      %5723 = vmatprep.subr.bf16.mxu0 0
      %5724 = vmatpush1.bf16.msra.mxu0 %v5702
      %5725 = vmatprep.subr.bf16.mxu0 0
      %5726 = vmatpush1.bf16.msra.mxu0 %v5703
      %5727 = vmatprep.subr.bf16.mxu0 0
      %5728 = vmatpush1.bf16.msra.mxu0 %v5704
      %5729 = vmatprep.subr.bf16.mxu0 0
      %5730 = vmatpush1.bf16.msra.mxu0 0
      %5731 = vmatprep.subr.bf16.mxu0 0
      %5732 = vmatpush1.bf16.msra.mxu0 0
      %5733 = vmatprep.subr.bf16.mxu0 0
      %5734 = vmatpush1.bf16.msra.mxu0 0
      %5735 = vmatprep.subr.bf16.mxu0 0
      %5736 = vmatpush1.bf16.msra.mxu0 0
      %5737 = vmatprep.subr.bf16.mxu0 0
      %5738 = vmatpush1.bf16.msra.mxu0 0
      %5739 = vmatprep.subr.bf16.mxu0 0
      %5740 = vmatpush1.bf16.msra.mxu0 0
      %5741 = vmatprep.subr.bf16.mxu0 0
      %5742 = vmatpush1.bf16.msra.mxu0 0
      %5743 = vmatprep.subr.bf16.mxu0 0
      %5744 = vmatpush1.bf16.msra.mxu0 0
      %5745 = vmatprep.mubr.bf16.mxu0 0
      %5746 = vmatmul.mubr.bf16.gmra.mrb[0].mxu0 %v5648
      %v5747 = vpop.f32.mrb[0].mxu0
      %v5748 = vadd.f32 0.0, %v5747
      %v5749 = vpop.f32.mrb[0].mxu0
      %v5750 = vpop.f32.mrb[0].mxu0
      %v5751 = vadd.f32 0.0, %v5750
      %v5752 = vpop.f32.mrb[0].mxu0
      %5753 = vdwg.mxu0
      %v5754 = vadd.f32 %v5631, %v5748
      %v5755 = vadd.f32 %v5632, %v5751
      %s5756 = scalar_lea.vmem %s5257, 1 [#allocation4]
      %v5757 = vld [vmem:[%s5756] ss:$2 sm:$0xf]
      %s5758 = scalar_lea.vmem %s5257, 33 [#allocation4]
      %v5759 = vld [vmem:[%s5758] ss:$2 sm:$0xf]
      %s5760 = scalar_lea.vmem %s5257, 65 [#allocation4]
      %v5761 = vld [vmem:[%s5760] ss:$2 sm:$0xf]
      %s5762 = scalar_lea.vmem %s5257, 97 [#allocation4]
      %v5763 = vld [vmem:[%s5762] ss:$2 sm:$0xf]
      %v5768 = vcombine.low %v5757, %v5759
      %v5769 = vcombine.low %v5761, %v5763
      %v5772 = vpack.c.bf16 %v5769, %v5768
      %v5773 = vld [vmem:[%s7 + $0x100] sm:$0xf]
      %v5774 = vld [vmem:[%s7 + $0x104] sm:$0xf]
      %v5775 = vld [vmem:[%s7 + $0x108] sm:$0xf]
      %v5776 = vld [vmem:[%s7 + $0x10c] sm:$0xf]
      %v5777 = vld [vmem:[%s7 + $0x110] sm:$0xf]
      %v5778 = vld [vmem:[%s7 + $0x114] sm:$0xf]
      %v5779 = vld [vmem:[%s7 + $0x118] sm:$0xf]
      %v5780 = vld [vmem:[%s7 + $0x11c] sm:$0xf]
      %v5781 = vld [vmem:[%s7 + $0x120] sm:$0xf]
      %v5782 = vld [vmem:[%s7 + $0x124] sm:$0xf]
      %v5783 = vld [vmem:[%s7 + $0x128] sm:$0xf]
      %v5784 = vld [vmem:[%s7 + $0x12c] sm:$0xf]
      %v5785 = vld [vmem:[%s7 + $0x130] sm:$0xf]
      %v5786 = vld [vmem:[%s7 + $0x134] sm:$0xf]
      %v5787 = vld [vmem:[%s7 + $0x138] sm:$0xf]
      %v5788 = vld [vmem:[%s7 + $0x13c] sm:$0xf]
      %v5805 = vunpack.c.l.b16 %v5773
      %v5806 = vunpack.c.l.b16 %v5774
      %v5807 = vunpack.c.l.b16 %v5775
      %v5808 = vunpack.c.l.b16 %v5776
      %v5809 = vunpack.c.l.b16 %v5777
      %v5810 = vunpack.c.l.b16 %v5778
      %v5811 = vunpack.c.l.b16 %v5779
      %v5812 = vunpack.c.l.b16 %v5780
      %v5813 = vunpack.c.l.b16 %v5781
      %v5814 = vunpack.c.l.b16 %v5782
      %v5815 = vunpack.c.l.b16 %v5783
      %v5816 = vunpack.c.l.b16 %v5784
      %v5817 = vunpack.c.l.b16 %v5785
      %v5818 = vunpack.c.l.b16 %v5786
      %v5819 = vunpack.c.l.b16 %v5787
      %v5820 = vunpack.c.l.b16 %v5788
      %v5821 = vpack.c.b16 %v5806, %v5805
      %v5822 = vpack.c.b16 %v5808, %v5807
      %v5823 = vpack.c.b16 %v5810, %v5809
      %v5824 = vpack.c.b16 %v5812, %v5811
      %v5825 = vpack.c.b16 %v5814, %v5813
      %v5826 = vpack.c.b16 %v5816, %v5815
      %v5827 = vpack.c.b16 %v5818, %v5817
      %v5828 = vpack.c.b16 %v5820, %v5819
      %5837 = vmatprep.subr.bf16.mxu0 0
      %5838 = vmatpush1.bf16.msra.mxu0 %v5821
      %5839 = vmatprep.subr.bf16.mxu0 0
      %5840 = vmatpush1.bf16.msra.mxu0 %v5822
      %5841 = vmatprep.subr.bf16.mxu0 0
      %5842 = vmatpush1.bf16.msra.mxu0 %v5823
      %5843 = vmatprep.subr.bf16.mxu0 0
      %5844 = vmatpush1.bf16.msra.mxu0 %v5824
      %5845 = vmatprep.subr.bf16.mxu0 0
      %5846 = vmatpush1.bf16.msra.mxu0 %v5825
      %5847 = vmatprep.subr.bf16.mxu0 0
      %5848 = vmatpush1.bf16.msra.mxu0 %v5826
      %5849 = vmatprep.subr.bf16.mxu0 0
      %5850 = vmatpush1.bf16.msra.mxu0 %v5827
      %5851 = vmatprep.subr.bf16.mxu0 0
      %5852 = vmatpush1.bf16.msra.mxu0 %v5828
      %5853 = vmatprep.subr.bf16.mxu0 0
      %5854 = vmatpush1.bf16.msra.mxu0 0
      %5855 = vmatprep.subr.bf16.mxu0 0
      %5856 = vmatpush1.bf16.msra.mxu0 0
      %5857 = vmatprep.subr.bf16.mxu0 0
      %5858 = vmatpush1.bf16.msra.mxu0 0
      %5859 = vmatprep.subr.bf16.mxu0 0
      %5860 = vmatpush1.bf16.msra.mxu0 0
      %5861 = vmatprep.subr.bf16.mxu0 0
      %5862 = vmatpush1.bf16.msra.mxu0 0
      %5863 = vmatprep.subr.bf16.mxu0 0
      %5864 = vmatpush1.bf16.msra.mxu0 0
      %5865 = vmatprep.subr.bf16.mxu0 0
      %5866 = vmatpush1.bf16.msra.mxu0 0
      %5867 = vmatprep.subr.bf16.mxu0 0
      %5868 = vmatpush1.bf16.msra.mxu0 0
      %5869 = vmatprep.mubr.bf16.mxu0 0
      %5870 = vmatmul.mubr.bf16.gmra.mrb[0].mxu0 %v5772
      %v5871 = vpop.f32.mrb[0].mxu0
      %v5872 = vadd.f32 0.0, %v5871
      %v5873 = vpop.f32.mrb[0].mxu0
      %v5874 = vpop.f32.mrb[0].mxu0
      %v5875 = vadd.f32 0.0, %v5874
      %v5876 = vpop.f32.mrb[0].mxu0
      %5877 = vdwg.mxu0
      %v5878 = vadd.f32 %v5754, %v5872
      %v5879 = vadd.f32 %v5755, %v5875
      %s5880 = scalar_lea.vmem %s5257, 2 [#allocation4]
      %v5881 = vld [vmem:[%s5880] ss:$2 sm:$0xf]
      %s5882 = scalar_lea.vmem %s5257, 34 [#allocation4]
      %v5883 = vld [vmem:[%s5882] ss:$2 sm:$0xf]
      %s5884 = scalar_lea.vmem %s5257, 66 [#allocation4]
      %v5885 = vld [vmem:[%s5884] ss:$2 sm:$0xf]
      %s5886 = scalar_lea.vmem %s5257, 98 [#allocation4]
      %v5887 = vld [vmem:[%s5886] ss:$2 sm:$0xf]
      %v5892 = vcombine.low %v5881, %v5883
      %v5893 = vcombine.low %v5885, %v5887
      %v5896 = vpack.c.bf16 %v5893, %v5892
      %v5897 = vld [vmem:[%s7 + $0x140] sm:$0xf]
      %v5898 = vld [vmem:[%s7 + $0x144] sm:$0xf]
      %v5899 = vld [vmem:[%s7 + $0x148] sm:$0xf]
      %v5900 = vld [vmem:[%s7 + $0x14c] sm:$0xf]
      %v5901 = vld [vmem:[%s7 + $0x150] sm:$0xf]
      %v5902 = vld [vmem:[%s7 + $0x154] sm:$0xf]
      %v5903 = vld [vmem:[%s7 + $0x158] sm:$0xf]
      %v5904 = vld [vmem:[%s7 + $0x15c] sm:$0xf]
      %v5905 = vld [vmem:[%s7 + $0x160] sm:$0xf]
      %v5906 = vld [vmem:[%s7 + $0x164] sm:$0xf]
      %v5907 = vld [vmem:[%s7 + $0x168] sm:$0xf]
      %v5908 = vld [vmem:[%s7 + $0x16c] sm:$0xf]
      %v5909 = vld [vmem:[%s7 + $0x170] sm:$0xf]
      %v5910 = vld [vmem:[%s7 + $0x174] sm:$0xf]
      %v5911 = vld [vmem:[%s7 + $0x178] sm:$0xf]
      %v5912 = vld [vmem:[%s7 + $0x17c] sm:$0xf]
      %v5929 = vunpack.c.l.b16 %v5897
      %v5930 = vunpack.c.l.b16 %v5898
      %v5931 = vunpack.c.l.b16 %v5899
      %v5932 = vunpack.c.l.b16 %v5900
      %v5933 = vunpack.c.l.b16 %v5901
      %v5934 = vunpack.c.l.b16 %v5902
      %v5935 = vunpack.c.l.b16 %v5903
      %v5936 = vunpack.c.l.b16 %v5904
      %v5937 = vunpack.c.l.b16 %v5905
      %v5938 = vunpack.c.l.b16 %v5906
      %v5939 = vunpack.c.l.b16 %v5907
      %v5940 = vunpack.c.l.b16 %v5908
      %v5941 = vunpack.c.l.b16 %v5909
      %v5942 = vunpack.c.l.b16 %v5910
      %v5943 = vunpack.c.l.b16 %v5911
      %v5944 = vunpack.c.l.b16 %v5912
      %v5945 = vpack.c.b16 %v5930, %v5929
      %v5946 = vpack.c.b16 %v5932, %v5931
      %v5947 = vpack.c.b16 %v5934, %v5933
      %v5948 = vpack.c.b16 %v5936, %v5935
      %v5949 = vpack.c.b16 %v5938, %v5937
      %v5950 = vpack.c.b16 %v5940, %v5939
      %v5951 = vpack.c.b16 %v5942, %v5941
      %v5952 = vpack.c.b16 %v5944, %v5943
      %5961 = vmatprep.subr.bf16.mxu0 0
      %5962 = vmatpush1.bf16.msra.mxu0 %v5945
      %5963 = vmatprep.subr.bf16.mxu0 0
      %5964 = vmatpush1.bf16.msra.mxu0 %v5946
      %5965 = vmatprep.subr.bf16.mxu0 0
      %5966 = vmatpush1.bf16.msra.mxu0 %v5947
      %5967 = vmatprep.subr.bf16.mxu0 0
      %5968 = vmatpush1.bf16.msra.mxu0 %v5948
      %5969 = vmatprep.subr.bf16.mxu0 0
      %5970 = vmatpush1.bf16.msra.mxu0 %v5949
      %5971 = vmatprep.subr.bf16.mxu0 0
      %5972 = vmatpush1.bf16.msra.mxu0 %v5950
      %5973 = vmatprep.subr.bf16.mxu0 0
      %5974 = vmatpush1.bf16.msra.mxu0 %v5951
      %5975 = vmatprep.subr.bf16.mxu0 0
      %5976 = vmatpush1.bf16.msra.mxu0 %v5952
      %5977 = vmatprep.subr.bf16.mxu0 0
      %5978 = vmatpush1.bf16.msra.mxu0 0
      %5979 = vmatprep.subr.bf16.mxu0 0
      %5980 = vmatpush1.bf16.msra.mxu0 0
      %5981 = vmatprep.subr.bf16.mxu0 0
      %5982 = vmatpush1.bf16.msra.mxu0 0
      %5983 = vmatprep.subr.bf16.mxu0 0
      %5984 = vmatpush1.bf16.msra.mxu0 0
      %5985 = vmatprep.subr.bf16.mxu0 0
      %5986 = vmatpush1.bf16.msra.mxu0 0
      %5987 = vmatprep.subr.bf16.mxu0 0
      %5988 = vmatpush1.bf16.msra.mxu0 0
      %5989 = vmatprep.subr.bf16.mxu0 0
      %5990 = vmatpush1.bf16.msra.mxu0 0
      %5991 = vmatprep.subr.bf16.mxu0 0
      %5992 = vmatpush1.bf16.msra.mxu0 0
      %5993 = vmatprep.mubr.bf16.mxu0 0
      %5994 = vmatmul.mubr.bf16.gmra.mrb[0].mxu0 %v5896
      %v5995 = vpop.f32.mrb[0].mxu0
      %v5996 = vadd.f32 0.0, %v5995
      %v5997 = vpop.f32.mrb[0].mxu0
      %v5998 = vpop.f32.mrb[0].mxu0
      %v5999 = vadd.f32 0.0, %v5998
      %v6000 = vpop.f32.mrb[0].mxu0
      %6001 = vdwg.mxu0
      %v6002 = vadd.f32 %v5878, %v5996
      %v6003 = vadd.f32 %v5879, %v5999
      %s6004 = scalar_lea.vmem [#allocation4], 32
      %v6005 = vld [vmem:[%s6004] ss:$2 sm:$0xf]
      %s6006 = scalar_lea.vmem %s6004, 32 [#allocation4]
      %v6007 = vld [vmem:[%s6006] ss:$2 sm:$0xf]
      %s6008 = scalar_lea.vmem %s6004, 64 [#allocation4]
      %v6009 = vld [vmem:[%s6008] ss:$2 sm:$0xf]
      %s6010 = scalar_lea.vmem %s6004, 96 [#allocation4]
      %v6011 = vld [vmem:[%s6010] ss:$2 sm:$0xf]
      %v6016 = vcombine.low %v6005, %v6007
      %v6017 = vcombine.low %v6009, %v6011
      %v6020 = vpack.c.bf16 %v6017, %v6016
      %v6021 = vld [vmem:[%s7 + $0x180] sm:$0xf]
      %v6022 = vld [vmem:[%s7 + $0x184] sm:$0xf]
      %v6023 = vld [vmem:[%s7 + $0x188] sm:$0xf]
      %v6024 = vld [vmem:[%s7 + $0x18c] sm:$0xf]
      %v6025 = vld [vmem:[%s7 + $0x190] sm:$0xf]
      %v6026 = vld [vmem:[%s7 + $0x194] sm:$0xf]
      %v6027 = vld [vmem:[%s7 + $0x198] sm:$0xf]
      %v6028 = vld [vmem:[%s7 + $0x19c] sm:$0xf]
      %v6029 = vld [vmem:[%s7 + $0x1a0] sm:$0xf]
      %v6030 = vld [vmem:[%s7 + $0x1a4] sm:$0xf]
      %v6031 = vld [vmem:[%s7 + $0x1a8] sm:$0xf]
      %v6032 = vld [vmem:[%s7 + $0x1ac] sm:$0xf]
      %v6033 = vld [vmem:[%s7 + $0x1b0] sm:$0xf]
      %v6034 = vld [vmem:[%s7 + $0x1b4] sm:$0xf]
      %v6035 = vld [vmem:[%s7 + $0x1b8] sm:$0xf]
      %v6036 = vld [vmem:[%s7 + $0x1bc] sm:$0xf]
      %v6053 = vunpack.c.l.b16 %v6021
      %v6054 = vunpack.c.l.b16 %v6022
      %v6055 = vunpack.c.l.b16 %v6023
      %v6056 = vunpack.c.l.b16 %v6024
      %v6057 = vunpack.c.l.b16 %v6025
      %v6058 = vunpack.c.l.b16 %v6026
      %v6059 = vunpack.c.l.b16 %v6027
      %v6060 = vunpack.c.l.b16 %v6028
      %v6061 = vunpack.c.l.b16 %v6029
      %v6062 = vunpack.c.l.b16 %v6030
      %v6063 = vunpack.c.l.b16 %v6031
      %v6064 = vunpack.c.l.b16 %v6032
      %v6065 = vunpack.c.l.b16 %v6033
      %v6066 = vunpack.c.l.b16 %v6034
      %v6067 = vunpack.c.l.b16 %v6035
      %v6068 = vunpack.c.l.b16 %v6036
      %v6069 = vpack.c.b16 %v6054, %v6053
      %v6070 = vpack.c.b16 %v6056, %v6055
      %v6071 = vpack.c.b16 %v6058, %v6057
      %v6072 = vpack.c.b16 %v6060, %v6059
      %v6073 = vpack.c.b16 %v6062, %v6061
      %v6074 = vpack.c.b16 %v6064, %v6063
      %v6075 = vpack.c.b16 %v6066, %v6065
      %v6076 = vpack.c.b16 %v6068, %v6067
      %6085 = vmatprep.subr.bf16.mxu0 0
      %6086 = vmatpush1.bf16.msra.mxu0 %v6069
      %6087 = vmatprep.subr.bf16.mxu0 0
      %6088 = vmatpush1.bf16.msra.mxu0 %v6070
      %6089 = vmatprep.subr.bf16.mxu0 0
      %6090 = vmatpush1.bf16.msra.mxu0 %v6071
      %6091 = vmatprep.subr.bf16.mxu0 0
      %6092 = vmatpush1.bf16.msra.mxu0 %v6072
      %6093 = vmatprep.subr.bf16.mxu0 0
      %6094 = vmatpush1.bf16.msra.mxu0 %v6073
      %6095 = vmatprep.subr.bf16.mxu0 0
      %6096 = vmatpush1.bf16.msra.mxu0 %v6074
      %6097 = vmatprep.subr.bf16.mxu0 0
      %6098 = vmatpush1.bf16.msra.mxu0 %v6075
      %6099 = vmatprep.subr.bf16.mxu0 0
      %6100 = vmatpush1.bf16.msra.mxu0 %v6076
      %6101 = vmatprep.subr.bf16.mxu0 0
      %6102 = vmatpush1.bf16.msra.mxu0 0
      %6103 = vmatprep.subr.bf16.mxu0 0
      %6104 = vmatpush1.bf16.msra.mxu0 0
      %6105 = vmatprep.subr.bf16.mxu0 0
      %6106 = vmatpush1.bf16.msra.mxu0 0
      %6107 = vmatprep.subr.bf16.mxu0 0
      %6108 = vmatpush1.bf16.msra.mxu0 0
      %6109 = vmatprep.subr.bf16.mxu0 0
      %6110 = vmatpush1.bf16.msra.mxu0 0
      %6111 = vmatprep.subr.bf16.mxu0 0
      %6112 = vmatpush1.bf16.msra.mxu0 0
      %6113 = vmatprep.subr.bf16.mxu0 0
      %6114 = vmatpush1.bf16.msra.mxu0 0
      %6115 = vmatprep.subr.bf16.mxu0 0
      %6116 = vmatpush1.bf16.msra.mxu0 0
      %6117 = vmatprep.mubr.bf16.mxu0 0
      %6118 = vmatmul.mubr.bf16.gmra.mrb[0].mxu0 %v6020
      %v6119 = vpop.f32.mrb[0].mxu0
      %v6120 = vadd.f32 0.0, %v6119
      %v6121 = vpop.f32.mrb[0].mxu0
      %v6122 = vpop.f32.mrb[0].mxu0
      %v6123 = vadd.f32 0.0, %v6122
      %v6124 = vpop.f32.mrb[0].mxu0
      %6125 = vdwg.mxu0
      %v6126 = vadd.f32 %v6002, %v6120
      %v6127 = vadd.f32 %v6003, %v6123
      %s6128 = scalar_lea.vmem %s6004, 1 [#allocation4]
      %v6129 = vld [vmem:[%s6128] ss:$2 sm:$0xf]
      %s6130 = scalar_lea.vmem %s6004, 33 [#allocation4]
      %v6131 = vld [vmem:[%s6130] ss:$2 sm:$0xf]
      %s6132 = scalar_lea.vmem %s6004, 65 [#allocation4]
      %v6133 = vld [vmem:[%s6132] ss:$2 sm:$0xf]
      %s6134 = scalar_lea.vmem %s6004, 97 [#allocation4]
      %v6135 = vld [vmem:[%s6134] ss:$2 sm:$0xf]
      %v6140 = vcombine.low %v6129, %v6131
      %v6141 = vcombine.low %v6133, %v6135
      %v6144 = vpack.c.bf16 %v6141, %v6140
      %v6145 = vld [vmem:[%s7 + $0x1c0] sm:$0xf]
      %v6146 = vld [vmem:[%s7 + $0x1c4] sm:$0xf]
      %v6147 = vld [vmem:[%s7 + $0x1c8] sm:$0xf]
      %v6148 = vld [vmem:[%s7 + $0x1cc] sm:$0xf]
      %v6149 = vld [vmem:[%s7 + $0x1d0] sm:$0xf]
      %v6150 = vld [vmem:[%s7 + $0x1d4] sm:$0xf]
      %v6151 = vld [vmem:[%s7 + $0x1d8] sm:$0xf]
      %v6152 = vld [vmem:[%s7 + $0x1dc] sm:$0xf]
      %v6153 = vld [vmem:[%s7 + $0x1e0] sm:$0xf]
      %v6154 = vld [vmem:[%s7 + $0x1e4] sm:$0xf]
      %v6155 = vld [vmem:[%s7 + $0x1e8] sm:$0xf]
      %v6156 = vld [vmem:[%s7 + $0x1ec] sm:$0xf]
      %v6157 = vld [vmem:[%s7 + $0x1f0] sm:$0xf]
      %v6158 = vld [vmem:[%s7 + $0x1f4] sm:$0xf]
      %v6159 = vld [vmem:[%s7 + $0x1f8] sm:$0xf]
      %v6160 = vld [vmem:[%s7 + $0x1fc] sm:$0xf]
      %v6177 = vunpack.c.l.b16 %v6145
      %v6178 = vunpack.c.l.b16 %v6146
      %v6179 = vunpack.c.l.b16 %v6147
      %v6180 = vunpack.c.l.b16 %v6148
      %v6181 = vunpack.c.l.b16 %v6149
      %v6182 = vunpack.c.l.b16 %v6150
      %v6183 = vunpack.c.l.b16 %v6151
      %v6184 = vunpack.c.l.b16 %v6152
      %v6185 = vunpack.c.l.b16 %v6153
      %v6186 = vunpack.c.l.b16 %v6154
      %v6187 = vunpack.c.l.b16 %v6155
      %v6188 = vunpack.c.l.b16 %v6156
      %v6189 = vunpack.c.l.b16 %v6157
      %v6190 = vunpack.c.l.b16 %v6158
      %v6191 = vunpack.c.l.b16 %v6159
      %v6192 = vunpack.c.l.b16 %v6160
      %v6193 = vpack.c.b16 %v6178, %v6177
      %v6194 = vpack.c.b16 %v6180, %v6179
      %v6195 = vpack.c.b16 %v6182, %v6181
      %v6196 = vpack.c.b16 %v6184, %v6183
      %v6197 = vpack.c.b16 %v6186, %v6185
      %v6198 = vpack.c.b16 %v6188, %v6187
      %v6199 = vpack.c.b16 %v6190, %v6189
      %v6200 = vpack.c.b16 %v6192, %v6191
      %6209 = vmatprep.subr.bf16.mxu0 0
      %6210 = vmatpush1.bf16.msra.mxu0 %v6193
      %6211 = vmatprep.subr.bf16.mxu0 0
      %6212 = vmatpush1.bf16.msra.mxu0 %v6194
      %6213 = vmatprep.subr.bf16.mxu0 0
      %6214 = vmatpush1.bf16.msra.mxu0 %v6195
      %6215 = vmatprep.subr.bf16.mxu0 0
      %6216 = vmatpush1.bf16.msra.mxu0 %v6196
      %6217 = vmatprep.subr.bf16.mxu0 0
      %6218 = vmatpush1.bf16.msra.mxu0 %v6197
      %6219 = vmatprep.subr.bf16.mxu0 0
      %6220 = vmatpush1.bf16.msra.mxu0 %v6198
      %6221 = vmatprep.subr.bf16.mxu0 0
      %6222 = vmatpush1.bf16.msra.mxu0 %v6199
      %6223 = vmatprep.subr.bf16.mxu0 0
      %6224 = vmatpush1.bf16.msra.mxu0 %v6200
      %6225 = vmatprep.subr.bf16.mxu0 0
      %6226 = vmatpush1.bf16.msra.mxu0 0
      %6227 = vmatprep.subr.bf16.mxu0 0
      %6228 = vmatpush1.bf16.msra.mxu0 0
      %6229 = vmatprep.subr.bf16.mxu0 0
      %6230 = vmatpush1.bf16.msra.mxu0 0
      %6231 = vmatprep.subr.bf16.mxu0 0
      %6232 = vmatpush1.bf16.msra.mxu0 0
      %6233 = vmatprep.subr.bf16.mxu0 0
      %6234 = vmatpush1.bf16.msra.mxu0 0
      %6235 = vmatprep.subr.bf16.mxu0 0
      %6236 = vmatpush1.bf16.msra.mxu0 0
      %6237 = vmatprep.subr.bf16.mxu0 0
      %6238 = vmatpush1.bf16.msra.mxu0 0
      %6239 = vmatprep.subr.bf16.mxu0 0
      %6240 = vmatpush1.bf16.msra.mxu0 0
      %6241 = vmatprep.mubr.bf16.mxu0 0
      %6242 = vmatmul.mubr.bf16.gmra.mrb[0].mxu0 %v6144
      %v6243 = vpop.f32.mrb[0].mxu0
      %v6244 = vadd.f32 0.0, %v6243
      %v6245 = vpop.f32.mrb[0].mxu0
      %v6246 = vpop.f32.mrb[0].mxu0
      %v6247 = vadd.f32 0.0, %v6246
      %v6248 = vpop.f32.mrb[0].mxu0
      %6249 = vdwg.mxu0
      %v6250 = vadd.f32 %v6126, %v6244
      %v6251 = vadd.f32 %v6127, %v6247
      %s6252 = scalar_lea.vmem %s6004, 2 [#allocation4]
      %v6253 = vld [vmem:[%s6252] ss:$2 sm:$0xf]
      %s6254 = scalar_lea.vmem %s6004, 34 [#allocation4]
      %v6255 = vld [vmem:[%s6254] ss:$2 sm:$0xf]
      %s6256 = scalar_lea.vmem %s6004, 66 [#allocation4]
      %v6257 = vld [vmem:[%s6256] ss:$2 sm:$0xf]
      %s6258 = scalar_lea.vmem %s6004, 98 [#allocation4]
      %v6259 = vld [vmem:[%s6258] ss:$2 sm:$0xf]
      %v6264 = vcombine.low %v6253, %v6255
      %v6265 = vcombine.low %v6257, %v6259
      %v6268 = vpack.c.bf16 %v6265, %v6264
      %v6269 = vld [vmem:[%s7 + $0x200] sm:$0xf]
      %v6270 = vld [vmem:[%s7 + $0x204] sm:$0xf]
      %v6271 = vld [vmem:[%s7 + $0x208] sm:$0xf]
      %v6272 = vld [vmem:[%s7 + $0x20c] sm:$0xf]
      %v6273 = vld [vmem:[%s7 + $0x210] sm:$0xf]
      %v6274 = vld [vmem:[%s7 + $0x214] sm:$0xf]
      %v6275 = vld [vmem:[%s7 + $0x218] sm:$0xf]
      %v6276 = vld [vmem:[%s7 + $0x21c] sm:$0xf]
      %v6277 = vld [vmem:[%s7 + $0x220] sm:$0xf]
      %v6278 = vld [vmem:[%s7 + $0x224] sm:$0xf]
      %v6279 = vld [vmem:[%s7 + $0x228] sm:$0xf]
      %v6280 = vld [vmem:[%s7 + $0x22c] sm:$0xf]
      %v6281 = vld [vmem:[%s7 + $0x230] sm:$0xf]
      %v6282 = vld [vmem:[%s7 + $0x234] sm:$0xf]
      %v6283 = vld [vmem:[%s7 + $0x238] sm:$0xf]
      %v6284 = vld [vmem:[%s7 + $0x23c] sm:$0xf]
      %v6301 = vunpack.c.l.b16 %v6269
      %v6302 = vunpack.c.l.b16 %v6270
      %v6303 = vunpack.c.l.b16 %v6271
      %v6304 = vunpack.c.l.b16 %v6272
      %v6305 = vunpack.c.l.b16 %v6273
      %v6306 = vunpack.c.l.b16 %v6274
      %v6307 = vunpack.c.l.b16 %v6275
      %v6308 = vunpack.c.l.b16 %v6276
      %v6309 = vunpack.c.l.b16 %v6277
      %v6310 = vunpack.c.l.b16 %v6278
      %v6311 = vunpack.c.l.b16 %v6279
      %v6312 = vunpack.c.l.b16 %v6280
      %v6313 = vunpack.c.l.b16 %v6281
      %v6314 = vunpack.c.l.b16 %v6282
      %v6315 = vunpack.c.l.b16 %v6283
      %v6316 = vunpack.c.l.b16 %v6284
      %v6317 = vpack.c.b16 %v6302, %v6301
      %v6318 = vpack.c.b16 %v6304, %v6303
      %v6319 = vpack.c.b16 %v6306, %v6305
      %v6320 = vpack.c.b16 %v6308, %v6307
      %v6321 = vpack.c.b16 %v6310, %v6309
      %v6322 = vpack.c.b16 %v6312, %v6311
      %v6323 = vpack.c.b16 %v6314, %v6313
      %v6324 = vpack.c.b16 %v6316, %v6315
      %6333 = vmatprep.subr.bf16.mxu0 0
      %6334 = vmatpush1.bf16.msra.mxu0 %v6317
      %6335 = vmatprep.subr.bf16.mxu0 0
      %6336 = vmatpush1.bf16.msra.mxu0 %v6318
      %6337 = vmatprep.subr.bf16.mxu0 0
      %6338 = vmatpush1.bf16.msra.mxu0 %v6319
      %6339 = vmatprep.subr.bf16.mxu0 0
      %6340 = vmatpush1.bf16.msra.mxu0 %v6320
      %6341 = vmatprep.subr.bf16.mxu0 0
      %6342 = vmatpush1.bf16.msra.mxu0 %v6321
      %6343 = vmatprep.subr.bf16.mxu0 0
      %6344 = vmatpush1.bf16.msra.mxu0 %v6322
      %6345 = vmatprep.subr.bf16.mxu0 0
      %6346 = vmatpush1.bf16.msra.mxu0 %v6323
      %6347 = vmatprep.subr.bf16.mxu0 0
      %6348 = vmatpush1.bf16.msra.mxu0 %v6324
      %6349 = vmatprep.subr.bf16.mxu0 0
      %6350 = vmatpush1.bf16.msra.mxu0 0
      %6351 = vmatprep.subr.bf16.mxu0 0
      %6352 = vmatpush1.bf16.msra.mxu0 0
      %6353 = vmatprep.subr.bf16.mxu0 0
      %6354 = vmatpush1.bf16.msra.mxu0 0
      %6355 = vmatprep.subr.bf16.mxu0 0
      %6356 = vmatpush1.bf16.msra.mxu0 0
      %6357 = vmatprep.subr.bf16.mxu0 0
      %6358 = vmatpush1.bf16.msra.mxu0 0
      %6359 = vmatprep.subr.bf16.mxu0 0
      %6360 = vmatpush1.bf16.msra.mxu0 0
      %6361 = vmatprep.subr.bf16.mxu0 0
      %6362 = vmatpush1.bf16.msra.mxu0 0
      %6363 = vmatprep.subr.bf16.mxu0 0
      %6364 = vmatpush1.bf16.msra.mxu0 0
      %6365 = vmatprep.mubr.bf16.mxu0 0
      %6366 = vmatmul.mubr.bf16.gmra.mrb[0].mxu0 %v6268
      %v6367 = vpop.f32.mrb[0].mxu0
      %v6368 = vadd.f32 0.0, %v6367
      %v6369 = vpop.f32.mrb[0].mxu0
      %v6370 = vpop.f32.mrb[0].mxu0
      %v6371 = vadd.f32 0.0, %v6370
      %v6372 = vpop.f32.mrb[0].mxu0
      %6373 = vdwg.mxu0
      %v6374 = vadd.f32 %v6250, %v6368
      %v6375 = vadd.f32 %v6251, %v6371
      %v6376 = vld [vmem:[%s8] sm:$0x1]
      %v6378 = vlaneseq
      %v6379 = vshrl.u32 %v6378, 7
      %v6380 = vsub.s32 0, %v6379
      %v6381 = vrot.slane %v6376, %v6380
      %v6383 = vadd.f32 %v6374, %v6381
      %v6384 = vadd.f32 %v6375, %v6381
      %v6385 = vmax.f32 %v6383, 0.0
      %v6386 = vmax.f32 %v6384, 0.0
      %v6389 = vcombine.high %v6385, %v6385
      %v6390 = vcombine.high %v6386, %v6386
      %s6393 = scalar_lea.vmem [#allocation5], 8
      %6394 = vst [vmem:[%s6393 + $0x1] sm:$0xf] %v6385
      %6395 = vst [vmem:[%s6393 + $0x9] sm:$0xf] %v6389
      %6396 = vst [vmem:[%s6393 + $0x11] sm:$0xf] %v6386
      %6397 = vst [vmem:[%s6393 + $0x19] sm:$0xf] %v6390
      %v6398 = vld [vmem:[#allocation5] ss:$2 sm:$0x3]
      %s6399 = scalar_lea.vmem [#allocation5], 16
      %v6400 = vld [vmem:[%s6399] ss:$2 sm:$0x3]
      %v6403 = vcombine.low %v6398, %v6400
      %v6405 = vunpack.c.l.s4 1983009808
      %v6406 = vunpack.c.0.s8 %v6405
      %v6407 = vlaneseq
      %v6408 = vshrl.u32 %v6407, 7
      %v6409 = vsub.s32 %v6406, %v6408
      %v6410 = vrot.slane %v6403, %v6409
      %v6412 = vpack.c.bf16 %v6410, %v6410
      %v6413 = vld [vmem:[%s9] sm:$0xff]
      %v6414 = vld [vmem:[%s9 + $0x8] sm:$0xff]
      %v6415 = vld [vmem:[%s9 + $0x10] sm:$0xff]
      %v6416 = vld [vmem:[%s9 + $0x18] sm:$0xff]
      %v6417 = vld [vmem:[%s9 + $0x20] sm:$0xff]
      %v6418 = vld [vmem:[%s9 + $0x28] sm:$0xff]
      %v6419 = vld [vmem:[%s9 + $0x30] sm:$0xff]
      %v6420 = vld [vmem:[%s9 + $0x38] sm:$0xff]
      %v6421 = vld [vmem:[%s9 + $0x40] sm:$0xff]
      %v6422 = vld [vmem:[%s9 + $0x48] sm:$0xff]
      %v6423 = vld [vmem:[%s9 + $0x50] sm:$0xff]
      %v6424 = vld [vmem:[%s9 + $0x58] sm:$0xff]
      %v6425 = vld [vmem:[%s9 + $0x60] sm:$0xff]
      %v6426 = vld [vmem:[%s9 + $0x68] sm:$0xff]
      %v6427 = vld [vmem:[%s9 + $0x70] sm:$0xff]
      %v6428 = vld [vmem:[%s9 + $0x78] sm:$0xff]
      %s6429 = scalar_lea.vmem [#allocation5], 1
      %v6430 = vld [vmem:[%s6429] ss:$2 sm:$0x3]
      %s6431 = scalar_lea.vmem [#allocation5], 17
      %v6432 = vld [vmem:[%s6431] ss:$2 sm:$0x3]
      %v6435 = vcombine.low %v6430, %v6432
      %v6437 = vunpack.c.l.s4 1983009808
      %v6438 = vunpack.c.0.s8 %v6437
      %v6439 = vlaneseq
      %v6440 = vshrl.u32 %v6439, 7
      %v6441 = vsub.s32 %v6438, %v6440
      %v6442 = vrot.slane %v6435, %v6441
      %v6444 = vpack.c.bf16 %v6442, %v6442
      %v6445 = vld [vmem:[%s9 + $0x80] sm:$0xff]
      %v6446 = vld [vmem:[%s9 + $0x88] sm:$0xff]
      %v6447 = vld [vmem:[%s9 + $0x90] sm:$0xff]
      %v6448 = vld [vmem:[%s9 + $0x98] sm:$0xff]
      %v6449 = vld [vmem:[%s9 + $0xa0] sm:$0xff]
      %v6450 = vld [vmem:[%s9 + $0xa8] sm:$0xff]
      %v6451 = vld [vmem:[%s9 + $0xb0] sm:$0xff]
      %v6452 = vld [vmem:[%s9 + $0xb8] sm:$0xff]
      %v6453 = vld [vmem:[%s9 + $0xc0] sm:$0xff]
      %v6454 = vld [vmem:[%s9 + $0xc8] sm:$0xff]
      %v6455 = vld [vmem:[%s9 + $0xd0] sm:$0xff]
      %v6456 = vld [vmem:[%s9 + $0xd8] sm:$0xff]
      %v6457 = vld [vmem:[%s9 + $0xe0] sm:$0xff]
      %v6458 = vld [vmem:[%s9 + $0xe8] sm:$0xff]
      %v6459 = vld [vmem:[%s9 + $0xf0] sm:$0xff]
      %v6460 = vld [vmem:[%s9 + $0xf8] sm:$0xff]
      %v6477 = vunpack.c.l.b16 %v6445
      %v6478 = vunpack.c.h.b16 %v6445
      %v6479 = vunpack.c.l.b16 %v6446
      %v6480 = vunpack.c.h.b16 %v6446
      %v6481 = vunpack.c.l.b16 %v6447
      %v6482 = vunpack.c.h.b16 %v6447
      %v6483 = vunpack.c.l.b16 %v6448
      %v6484 = vunpack.c.h.b16 %v6448
      %v6485 = vunpack.c.l.b16 %v6449
      %v6486 = vunpack.c.h.b16 %v6449
      %v6487 = vunpack.c.l.b16 %v6450
      %v6488 = vunpack.c.h.b16 %v6450
      %v6489 = vunpack.c.l.b16 %v6451
      %v6490 = vunpack.c.h.b16 %v6451
      %v6491 = vunpack.c.l.b16 %v6452
      %v6492 = vunpack.c.h.b16 %v6452
      %v6493 = vunpack.c.l.b16 %v6453
      %v6494 = vunpack.c.h.b16 %v6453
      %v6495 = vunpack.c.l.b16 %v6454
      %v6496 = vunpack.c.h.b16 %v6454
      %v6497 = vunpack.c.l.b16 %v6455
      %v6498 = vunpack.c.h.b16 %v6455
      %v6499 = vunpack.c.l.b16 %v6456
      %v6500 = vunpack.c.h.b16 %v6456
      %v6501 = vunpack.c.l.b16 %v6457
      %v6502 = vunpack.c.h.b16 %v6457
      %v6503 = vunpack.c.l.b16 %v6458
      %v6504 = vunpack.c.h.b16 %v6458
      %v6505 = vunpack.c.l.b16 %v6459
      %v6506 = vunpack.c.h.b16 %v6459
      %v6507 = vunpack.c.l.b16 %v6460
      %v6508 = vunpack.c.h.b16 %v6460
      %v6509 = vpack.c.b16 %v6479, %v6477
      %v6510 = vpack.c.b16 %v6480, %v6478
      %v6511 = vpack.c.b16 %v6483, %v6481
      %v6512 = vpack.c.b16 %v6484, %v6482
      %v6513 = vpack.c.b16 %v6487, %v6485
      %v6514 = vpack.c.b16 %v6488, %v6486
      %v6515 = vpack.c.b16 %v6491, %v6489
      %v6516 = vpack.c.b16 %v6492, %v6490
      %v6517 = vpack.c.b16 %v6495, %v6493
      %v6518 = vpack.c.b16 %v6496, %v6494
      %v6519 = vpack.c.b16 %v6499, %v6497
      %v6520 = vpack.c.b16 %v6500, %v6498
      %v6521 = vpack.c.b16 %v6503, %v6501
      %v6522 = vpack.c.b16 %v6504, %v6502
      %v6523 = vpack.c.b16 %v6507, %v6505
      %v6524 = vpack.c.b16 %v6508, %v6506
      %6541 = vmatprep.subr.bf16.mxu0 %v6510
      %6542 = vmatpush1.bf16.msra.mxu0 %v6509
      %6543 = vmatprep.subr.bf16.mxu0 %v6512
      %6544 = vmatpush1.bf16.msra.mxu0 %v6511
      %6545 = vmatprep.subr.bf16.mxu0 %v6514
      %6546 = vmatpush1.bf16.msra.mxu0 %v6513
      %6547 = vmatprep.subr.bf16.mxu0 %v6516
      %6548 = vmatpush1.bf16.msra.mxu0 %v6515
      %6549 = vmatprep.subr.bf16.mxu0 %v6518
      %6550 = vmatpush1.bf16.msra.mxu0 %v6517
      %6551 = vmatprep.subr.bf16.mxu0 %v6520
      %6552 = vmatpush1.bf16.msra.mxu0 %v6519
      %6553 = vmatprep.subr.bf16.mxu0 %v6522
      %6554 = vmatpush1.bf16.msra.mxu0 %v6521
      %6555 = vmatprep.subr.bf16.mxu0 %v6524
      %6556 = vmatpush1.bf16.msra.mxu0 %v6523
      %6557 = vmatprep.subr.bf16.mxu0 0
      %6558 = vmatpush1.bf16.msra.mxu0 0
      %6559 = vmatprep.subr.bf16.mxu0 0
      %6560 = vmatpush1.bf16.msra.mxu0 0
      %6561 = vmatprep.subr.bf16.mxu0 0
      %6562 = vmatpush1.bf16.msra.mxu0 0
      %6563 = vmatprep.subr.bf16.mxu0 0
      %6564 = vmatpush1.bf16.msra.mxu0 0
      %6565 = vmatprep.subr.bf16.mxu0 0
      %6566 = vmatpush1.bf16.msra.mxu0 0
      %6567 = vmatprep.subr.bf16.mxu0 0
      %6568 = vmatpush1.bf16.msra.mxu0 0
      %6569 = vmatprep.subr.bf16.mxu0 0
      %6570 = vmatpush1.bf16.msra.mxu0 0
      %6571 = vmatprep.subr.bf16.mxu0 0
      %6572 = vmatpush1.bf16.msra.mxu0 0
      %6573 = vmatprep.mubr.bf16.mxu0 0
      %6574 = vmatmul.mubr.bf16.gmra.mrb[0].mxu0 %v6444
      %v6575 = vpop.f32.mrb[0].mxu0
      %v6576 = vadd.f32 0.0, %v6575
      %v6577 = vpop.f32.mrb[0].mxu0
      %v6578 = vadd.f32 0.0, %v6577
      %v6579 = vpop.f32.mrb[0].mxu0
      %v6580 = vpop.f32.mrb[0].mxu0
      %6581 = vdwg.mxu0
      %v6598 = vunpack.c.l.b16 %v6413
      %v6599 = vunpack.c.h.b16 %v6413
      %v6600 = vunpack.c.l.b16 %v6414
      %v6601 = vunpack.c.h.b16 %v6414
      %v6602 = vunpack.c.l.b16 %v6415
      %v6603 = vunpack.c.h.b16 %v6415
      %v6604 = vunpack.c.l.b16 %v6416
      %v6605 = vunpack.c.h.b16 %v6416
      %v6606 = vunpack.c.l.b16 %v6417
      %v6607 = vunpack.c.h.b16 %v6417
      %v6608 = vunpack.c.l.b16 %v6418
      %v6609 = vunpack.c.h.b16 %v6418
      %v6610 = vunpack.c.l.b16 %v6419
      %v6611 = vunpack.c.h.b16 %v6419
      %v6612 = vunpack.c.l.b16 %v6420
      %v6613 = vunpack.c.h.b16 %v6420
      %v6614 = vunpack.c.l.b16 %v6421
      %v6615 = vunpack.c.h.b16 %v6421
      %v6616 = vunpack.c.l.b16 %v6422
      %v6617 = vunpack.c.h.b16 %v6422
      %v6618 = vunpack.c.l.b16 %v6423
      %v6619 = vunpack.c.h.b16 %v6423
      %v6620 = vunpack.c.l.b16 %v6424
      %v6621 = vunpack.c.h.b16 %v6424
      %v6622 = vunpack.c.l.b16 %v6425
      %v6623 = vunpack.c.h.b16 %v6425
      %v6624 = vunpack.c.l.b16 %v6426
      %v6625 = vunpack.c.h.b16 %v6426
      %v6626 = vunpack.c.l.b16 %v6427
      %v6627 = vunpack.c.h.b16 %v6427
      %v6628 = vunpack.c.l.b16 %v6428
      %v6629 = vunpack.c.h.b16 %v6428
      %v6630 = vpack.c.b16 %v6600, %v6598
      %v6631 = vpack.c.b16 %v6601, %v6599
      %v6632 = vpack.c.b16 %v6604, %v6602
      %v6633 = vpack.c.b16 %v6605, %v6603
      %v6634 = vpack.c.b16 %v6608, %v6606
      %v6635 = vpack.c.b16 %v6609, %v6607
      %v6636 = vpack.c.b16 %v6612, %v6610
      %v6637 = vpack.c.b16 %v6613, %v6611
      %v6638 = vpack.c.b16 %v6616, %v6614
      %v6639 = vpack.c.b16 %v6617, %v6615
      %v6640 = vpack.c.b16 %v6620, %v6618
      %v6641 = vpack.c.b16 %v6621, %v6619
      %v6642 = vpack.c.b16 %v6624, %v6622
      %v6643 = vpack.c.b16 %v6625, %v6623
      %v6644 = vpack.c.b16 %v6628, %v6626
      %v6645 = vpack.c.b16 %v6629, %v6627
      %6662 = vmatprep.subr.bf16.mxu0 %v6631
      %6663 = vmatpush1.bf16.msra.mxu0 %v6630
      %6664 = vmatprep.subr.bf16.mxu0 %v6633
      %6665 = vmatpush1.bf16.msra.mxu0 %v6632
      %6666 = vmatprep.subr.bf16.mxu0 %v6635
      %6667 = vmatpush1.bf16.msra.mxu0 %v6634
      %6668 = vmatprep.subr.bf16.mxu0 %v6637
      %6669 = vmatpush1.bf16.msra.mxu0 %v6636
      %6670 = vmatprep.subr.bf16.mxu0 %v6639
      %6671 = vmatpush1.bf16.msra.mxu0 %v6638
      %6672 = vmatprep.subr.bf16.mxu0 %v6641
      %6673 = vmatpush1.bf16.msra.mxu0 %v6640
      %6674 = vmatprep.subr.bf16.mxu0 %v6643
      %6675 = vmatpush1.bf16.msra.mxu0 %v6642
      %6676 = vmatprep.subr.bf16.mxu0 %v6645
      %6677 = vmatpush1.bf16.msra.mxu0 %v6644
      %6678 = vmatprep.subr.bf16.mxu0 0
      %6679 = vmatpush1.bf16.msra.mxu0 0
      %6680 = vmatprep.subr.bf16.mxu0 0
      %6681 = vmatpush1.bf16.msra.mxu0 0
      %6682 = vmatprep.subr.bf16.mxu0 0
      %6683 = vmatpush1.bf16.msra.mxu0 0
      %6684 = vmatprep.subr.bf16.mxu0 0
      %6685 = vmatpush1.bf16.msra.mxu0 0
      %6686 = vmatprep.subr.bf16.mxu0 0
      %6687 = vmatpush1.bf16.msra.mxu0 0
      %6688 = vmatprep.subr.bf16.mxu0 0
      %6689 = vmatpush1.bf16.msra.mxu0 0
      %6690 = vmatprep.subr.bf16.mxu0 0
      %6691 = vmatpush1.bf16.msra.mxu0 0
      %6692 = vmatprep.subr.bf16.mxu0 0
      %6693 = vmatpush1.bf16.msra.mxu0 0
      %6694 = vmatprep.mubr.bf16.mxu0 0
      %6695 = vmatmul.mubr.bf16.gmra.mrb[0].mxu0 %v6412
      %v6696 = vpop.f32.mrb[0].mxu0
      %v6697 = vadd.f32 %v6576, %v6696
      %v6698 = vpop.f32.mrb[0].mxu0
      %v6699 = vadd.f32 %v6578, %v6698
      %v6700 = vpop.f32.mrb[0].mxu0
      %v6701 = vpop.f32.mrb[0].mxu0
      %6702 = vdwg.mxu0
      %s6703 = scalar_lea.vmem [#allocation5], 2
      %v6704 = vld [vmem:[%s6703] ss:$2 sm:$0x3]
      %s6705 = scalar_lea.vmem [#allocation5], 18
      %v6706 = vld [vmem:[%s6705] ss:$2 sm:$0x3]
      %v6709 = vcombine.low %v6704, %v6706
      %v6711 = vunpack.c.l.s4 1983009808
      %v6712 = vunpack.c.0.s8 %v6711
      %v6713 = vlaneseq
      %v6714 = vshrl.u32 %v6713, 7
      %v6715 = vsub.s32 %v6712, %v6714
      %v6716 = vrot.slane %v6709, %v6715
      %v6718 = vpack.c.bf16 %v6716, %v6716
      %v6719 = vld [vmem:[%s9 + $0x100] sm:$0xff]
      %v6720 = vld [vmem:[%s9 + $0x108] sm:$0xff]
      %v6721 = vld [vmem:[%s9 + $0x110] sm:$0xff]
      %v6722 = vld [vmem:[%s9 + $0x118] sm:$0xff]
      %v6723 = vld [vmem:[%s9 + $0x120] sm:$0xff]
      %v6724 = vld [vmem:[%s9 + $0x128] sm:$0xff]
      %v6725 = vld [vmem:[%s9 + $0x130] sm:$0xff]
      %v6726 = vld [vmem:[%s9 + $0x138] sm:$0xff]
      %v6727 = vld [vmem:[%s9 + $0x140] sm:$0xff]
      %v6728 = vld [vmem:[%s9 + $0x148] sm:$0xff]
      %v6729 = vld [vmem:[%s9 + $0x150] sm:$0xff]
      %v6730 = vld [vmem:[%s9 + $0x158] sm:$0xff]
      %v6731 = vld [vmem:[%s9 + $0x160] sm:$0xff]
      %v6732 = vld [vmem:[%s9 + $0x168] sm:$0xff]
      %v6733 = vld [vmem:[%s9 + $0x170] sm:$0xff]
      %v6734 = vld [vmem:[%s9 + $0x178] sm:$0xff]
      %v6751 = vunpack.c.l.b16 %v6719
      %v6752 = vunpack.c.h.b16 %v6719
      %v6753 = vunpack.c.l.b16 %v6720
      %v6754 = vunpack.c.h.b16 %v6720
      %v6755 = vunpack.c.l.b16 %v6721
      %v6756 = vunpack.c.h.b16 %v6721
      %v6757 = vunpack.c.l.b16 %v6722
      %v6758 = vunpack.c.h.b16 %v6722
      %v6759 = vunpack.c.l.b16 %v6723
      %v6760 = vunpack.c.h.b16 %v6723
      %v6761 = vunpack.c.l.b16 %v6724
      %v6762 = vunpack.c.h.b16 %v6724
      %v6763 = vunpack.c.l.b16 %v6725
      %v6764 = vunpack.c.h.b16 %v6725
      %v6765 = vunpack.c.l.b16 %v6726
      %v6766 = vunpack.c.h.b16 %v6726
      %v6767 = vunpack.c.l.b16 %v6727
      %v6768 = vunpack.c.h.b16 %v6727
      %v6769 = vunpack.c.l.b16 %v6728
      %v6770 = vunpack.c.h.b16 %v6728
      %v6771 = vunpack.c.l.b16 %v6729
      %v6772 = vunpack.c.h.b16 %v6729
      %v6773 = vunpack.c.l.b16 %v6730
      %v6774 = vunpack.c.h.b16 %v6730
      %v6775 = vunpack.c.l.b16 %v6731
      %v6776 = vunpack.c.h.b16 %v6731
      %v6777 = vunpack.c.l.b16 %v6732
      %v6778 = vunpack.c.h.b16 %v6732
      %v6779 = vunpack.c.l.b16 %v6733
      %v6780 = vunpack.c.h.b16 %v6733
      %v6781 = vunpack.c.l.b16 %v6734
      %v6782 = vunpack.c.h.b16 %v6734
      %v6783 = vpack.c.b16 %v6753, %v6751
      %v6784 = vpack.c.b16 %v6754, %v6752
      %v6785 = vpack.c.b16 %v6757, %v6755
      %v6786 = vpack.c.b16 %v6758, %v6756
      %v6787 = vpack.c.b16 %v6761, %v6759
      %v6788 = vpack.c.b16 %v6762, %v6760
      %v6789 = vpack.c.b16 %v6765, %v6763
      %v6790 = vpack.c.b16 %v6766, %v6764
      %v6791 = vpack.c.b16 %v6769, %v6767
      %v6792 = vpack.c.b16 %v6770, %v6768
      %v6793 = vpack.c.b16 %v6773, %v6771
      %v6794 = vpack.c.b16 %v6774, %v6772
      %v6795 = vpack.c.b16 %v6777, %v6775
      %v6796 = vpack.c.b16 %v6778, %v6776
      %v6797 = vpack.c.b16 %v6781, %v6779
      %v6798 = vpack.c.b16 %v6782, %v6780
      %6815 = vmatprep.subr.bf16.mxu0 %v6784
      %6816 = vmatpush1.bf16.msra.mxu0 %v6783
      %6817 = vmatprep.subr.bf16.mxu0 %v6786
      %6818 = vmatpush1.bf16.msra.mxu0 %v6785
      %6819 = vmatprep.subr.bf16.mxu0 %v6788
      %6820 = vmatpush1.bf16.msra.mxu0 %v6787
      %6821 = vmatprep.subr.bf16.mxu0 %v6790
      %6822 = vmatpush1.bf16.msra.mxu0 %v6789
      %6823 = vmatprep.subr.bf16.mxu0 %v6792
      %6824 = vmatpush1.bf16.msra.mxu0 %v6791
      %6825 = vmatprep.subr.bf16.mxu0 %v6794
      %6826 = vmatpush1.bf16.msra.mxu0 %v6793
      %6827 = vmatprep.subr.bf16.mxu0 %v6796
      %6828 = vmatpush1.bf16.msra.mxu0 %v6795
      %6829 = vmatprep.subr.bf16.mxu0 %v6798
      %6830 = vmatpush1.bf16.msra.mxu0 %v6797
      %6831 = vmatprep.subr.bf16.mxu0 0
      %6832 = vmatpush1.bf16.msra.mxu0 0
      %6833 = vmatprep.subr.bf16.mxu0 0
      %6834 = vmatpush1.bf16.msra.mxu0 0
      %6835 = vmatprep.subr.bf16.mxu0 0
      %6836 = vmatpush1.bf16.msra.mxu0 0
      %6837 = vmatprep.subr.bf16.mxu0 0
      %6838 = vmatpush1.bf16.msra.mxu0 0
      %6839 = vmatprep.subr.bf16.mxu0 0
      %6840 = vmatpush1.bf16.msra.mxu0 0
      %6841 = vmatprep.subr.bf16.mxu0 0
      %6842 = vmatpush1.bf16.msra.mxu0 0
      %6843 = vmatprep.subr.bf16.mxu0 0
      %6844 = vmatpush1.bf16.msra.mxu0 0
      %6845 = vmatprep.subr.bf16.mxu0 0
      %6846 = vmatpush1.bf16.msra.mxu0 0
      %6847 = vmatprep.mubr.bf16.mxu0 0
      %6848 = vmatmul.mubr.bf16.gmra.mrb[0].mxu0 %v6718
      %v6849 = vpop.f32.mrb[0].mxu0
      %v6850 = vadd.f32 0.0, %v6849
      %v6851 = vpop.f32.mrb[0].mxu0
      %v6852 = vadd.f32 0.0, %v6851
      %v6853 = vpop.f32.mrb[0].mxu0
      %v6854 = vpop.f32.mrb[0].mxu0
      %6855 = vdwg.mxu0
      %v6856 = vadd.f32 %v6697, %v6850
      %v6857 = vadd.f32 %v6699, %v6852
      %v6858 = vld [vmem:[%s6393] ss:$2 sm:$0x3]
      %s6859 = scalar_lea.vmem %s6393, 16 [#allocation5]
      %v6860 = vld [vmem:[%s6859] ss:$2 sm:$0x3]
      %v6863 = vcombine.low %v6858, %v6860
      %v6865 = vunpack.c.l.s4 1983009808
      %v6866 = vunpack.c.0.s8 %v6865
      %v6867 = vlaneseq
      %v6868 = vshrl.u32 %v6867, 7
      %v6869 = vsub.s32 %v6866, %v6868
      %v6870 = vrot.slane %v6863, %v6869
      %v6872 = vpack.c.bf16 %v6870, %v6870
      %v6873 = vld [vmem:[%s9 + $0x180] sm:$0xff]
      %v6874 = vld [vmem:[%s9 + $0x188] sm:$0xff]
      %v6875 = vld [vmem:[%s9 + $0x190] sm:$0xff]
      %v6876 = vld [vmem:[%s9 + $0x198] sm:$0xff]
      %v6877 = vld [vmem:[%s9 + $0x1a0] sm:$0xff]
      %v6878 = vld [vmem:[%s9 + $0x1a8] sm:$0xff]
      %v6879 = vld [vmem:[%s9 + $0x1b0] sm:$0xff]
      %v6880 = vld [vmem:[%s9 + $0x1b8] sm:$0xff]
      %v6881 = vld [vmem:[%s9 + $0x1c0] sm:$0xff]
      %v6882 = vld [vmem:[%s9 + $0x1c8] sm:$0xff]
      %v6883 = vld [vmem:[%s9 + $0x1d0] sm:$0xff]
      %v6884 = vld [vmem:[%s9 + $0x1d8] sm:$0xff]
      %v6885 = vld [vmem:[%s9 + $0x1e0] sm:$0xff]
      %v6886 = vld [vmem:[%s9 + $0x1e8] sm:$0xff]
      %v6887 = vld [vmem:[%s9 + $0x1f0] sm:$0xff]
      %v6888 = vld [vmem:[%s9 + $0x1f8] sm:$0xff]
      %v6905 = vunpack.c.l.b16 %v6873
      %v6906 = vunpack.c.h.b16 %v6873
      %v6907 = vunpack.c.l.b16 %v6874
      %v6908 = vunpack.c.h.b16 %v6874
      %v6909 = vunpack.c.l.b16 %v6875
      %v6910 = vunpack.c.h.b16 %v6875
      %v6911 = vunpack.c.l.b16 %v6876
      %v6912 = vunpack.c.h.b16 %v6876
      %v6913 = vunpack.c.l.b16 %v6877
      %v6914 = vunpack.c.h.b16 %v6877
      %v6915 = vunpack.c.l.b16 %v6878
      %v6916 = vunpack.c.h.b16 %v6878
      %v6917 = vunpack.c.l.b16 %v6879
      %v6918 = vunpack.c.h.b16 %v6879
      %v6919 = vunpack.c.l.b16 %v6880
      %v6920 = vunpack.c.h.b16 %v6880
      %v6921 = vunpack.c.l.b16 %v6881
      %v6922 = vunpack.c.h.b16 %v6881
      %v6923 = vunpack.c.l.b16 %v6882
      %v6924 = vunpack.c.h.b16 %v6882
      %v6925 = vunpack.c.l.b16 %v6883
      %v6926 = vunpack.c.h.b16 %v6883
      %v6927 = vunpack.c.l.b16 %v6884
      %v6928 = vunpack.c.h.b16 %v6884
      %v6929 = vunpack.c.l.b16 %v6885
      %v6930 = vunpack.c.h.b16 %v6885
      %v6931 = vunpack.c.l.b16 %v6886
      %v6932 = vunpack.c.h.b16 %v6886
      %v6933 = vunpack.c.l.b16 %v6887
      %v6934 = vunpack.c.h.b16 %v6887
      %v6935 = vunpack.c.l.b16 %v6888
      %v6936 = vunpack.c.h.b16 %v6888
      %v6937 = vpack.c.b16 %v6907, %v6905
      %v6938 = vpack.c.b16 %v6908, %v6906
      %v6939 = vpack.c.b16 %v6911, %v6909
      %v6940 = vpack.c.b16 %v6912, %v6910
      %v6941 = vpack.c.b16 %v6915, %v6913
      %v6942 = vpack.c.b16 %v6916, %v6914
      %v6943 = vpack.c.b16 %v6919, %v6917
      %v6944 = vpack.c.b16 %v6920, %v6918
      %v6945 = vpack.c.b16 %v6923, %v6921
      %v6946 = vpack.c.b16 %v6924, %v6922
      %v6947 = vpack.c.b16 %v6927, %v6925
      %v6948 = vpack.c.b16 %v6928, %v6926
      %v6949 = vpack.c.b16 %v6931, %v6929
      %v6950 = vpack.c.b16 %v6932, %v6930
      %v6951 = vpack.c.b16 %v6935, %v6933
      %v6952 = vpack.c.b16 %v6936, %v6934
      %6969 = vmatprep.subr.bf16.mxu0 %v6938
      %6970 = vmatpush1.bf16.msra.mxu0 %v6937
      %6971 = vmatprep.subr.bf16.mxu0 %v6940
      %6972 = vmatpush1.bf16.msra.mxu0 %v6939
      %6973 = vmatprep.subr.bf16.mxu0 %v6942
      %6974 = vmatpush1.bf16.msra.mxu0 %v6941
      %6975 = vmatprep.subr.bf16.mxu0 %v6944
      %6976 = vmatpush1.bf16.msra.mxu0 %v6943
      %6977 = vmatprep.subr.bf16.mxu0 %v6946
      %6978 = vmatpush1.bf16.msra.mxu0 %v6945
      %6979 = vmatprep.subr.bf16.mxu0 %v6948
      %6980 = vmatpush1.bf16.msra.mxu0 %v6947
      %6981 = vmatprep.subr.bf16.mxu0 %v6950
      %6982 = vmatpush1.bf16.msra.mxu0 %v6949
      %6983 = vmatprep.subr.bf16.mxu0 %v6952
      %6984 = vmatpush1.bf16.msra.mxu0 %v6951
      %6985 = vmatprep.subr.bf16.mxu0 0
      %6986 = vmatpush1.bf16.msra.mxu0 0
      %6987 = vmatprep.subr.bf16.mxu0 0
      %6988 = vmatpush1.bf16.msra.mxu0 0
      %6989 = vmatprep.subr.bf16.mxu0 0
      %6990 = vmatpush1.bf16.msra.mxu0 0
      %6991 = vmatprep.subr.bf16.mxu0 0
      %6992 = vmatpush1.bf16.msra.mxu0 0
      %6993 = vmatprep.subr.bf16.mxu0 0
      %6994 = vmatpush1.bf16.msra.mxu0 0
      %6995 = vmatprep.subr.bf16.mxu0 0
      %6996 = vmatpush1.bf16.msra.mxu0 0
      %6997 = vmatprep.subr.bf16.mxu0 0
      %6998 = vmatpush1.bf16.msra.mxu0 0
      %6999 = vmatprep.subr.bf16.mxu0 0
      %7000 = vmatpush1.bf16.msra.mxu0 0
      %7001 = vmatprep.mubr.bf16.mxu0 0
      %7002 = vmatmul.mubr.bf16.gmra.mrb[0].mxu0 %v6872
      %v7003 = vpop.f32.mrb[0].mxu0
      %v7004 = vadd.f32 0.0, %v7003
      %v7005 = vpop.f32.mrb[0].mxu0
      %v7006 = vadd.f32 0.0, %v7005
      %v7007 = vpop.f32.mrb[0].mxu0
      %v7008 = vpop.f32.mrb[0].mxu0
      %7009 = vdwg.mxu0
      %v7010 = vadd.f32 %v6856, %v7004
      %v7011 = vadd.f32 %v6857, %v7006
      %s7012 = scalar_lea.vmem %s6393, 1 [#allocation5]
      %v7013 = vld [vmem:[%s7012] ss:$2 sm:$0x3]
      %s7014 = scalar_lea.vmem %s6393, 17 [#allocation5]
      %v7015 = vld [vmem:[%s7014] ss:$2 sm:$0x3]
      %v7018 = vcombine.low %v7013, %v7015
      %v7020 = vunpack.c.l.s4 1983009808
      %v7021 = vunpack.c.0.s8 %v7020
      %v7022 = vlaneseq
      %v7023 = vshrl.u32 %v7022, 7
      %v7024 = vsub.s32 %v7021, %v7023
      %v7025 = vrot.slane %v7018, %v7024
      %v7027 = vpack.c.bf16 %v7025, %v7025
      %v7028 = vld [vmem:[%s9 + $0x200] sm:$0xff]
      %v7029 = vld [vmem:[%s9 + $0x208] sm:$0xff]
      %v7030 = vld [vmem:[%s9 + $0x210] sm:$0xff]
      %v7031 = vld [vmem:[%s9 + $0x218] sm:$0xff]
      %v7032 = vld [vmem:[%s9 + $0x220] sm:$0xff]
      %v7033 = vld [vmem:[%s9 + $0x228] sm:$0xff]
      %v7034 = vld [vmem:[%s9 + $0x230] sm:$0xff]
      %v7035 = vld [vmem:[%s9 + $0x238] sm:$0xff]
      %v7036 = vld [vmem:[%s9 + $0x240] sm:$0xff]
      %v7037 = vld [vmem:[%s9 + $0x248] sm:$0xff]
      %v7038 = vld [vmem:[%s9 + $0x250] sm:$0xff]
      %v7039 = vld [vmem:[%s9 + $0x258] sm:$0xff]
      %v7040 = vld [vmem:[%s9 + $0x260] sm:$0xff]
      %v7041 = vld [vmem:[%s9 + $0x268] sm:$0xff]
      %v7042 = vld [vmem:[%s9 + $0x270] sm:$0xff]
      %v7043 = vld [vmem:[%s9 + $0x278] sm:$0xff]
      %v7060 = vunpack.c.l.b16 %v7028
      %v7061 = vunpack.c.h.b16 %v7028
      %v7062 = vunpack.c.l.b16 %v7029
      %v7063 = vunpack.c.h.b16 %v7029
      %v7064 = vunpack.c.l.b16 %v7030
      %v7065 = vunpack.c.h.b16 %v7030
      %v7066 = vunpack.c.l.b16 %v7031
      %v7067 = vunpack.c.h.b16 %v7031
      %v7068 = vunpack.c.l.b16 %v7032
      %v7069 = vunpack.c.h.b16 %v7032
      %v7070 = vunpack.c.l.b16 %v7033
      %v7071 = vunpack.c.h.b16 %v7033
      %v7072 = vunpack.c.l.b16 %v7034
      %v7073 = vunpack.c.h.b16 %v7034
      %v7074 = vunpack.c.l.b16 %v7035
      %v7075 = vunpack.c.h.b16 %v7035
      %v7076 = vunpack.c.l.b16 %v7036
      %v7077 = vunpack.c.h.b16 %v7036
      %v7078 = vunpack.c.l.b16 %v7037
      %v7079 = vunpack.c.h.b16 %v7037
      %v7080 = vunpack.c.l.b16 %v7038
      %v7081 = vunpack.c.h.b16 %v7038
      %v7082 = vunpack.c.l.b16 %v7039
      %v7083 = vunpack.c.h.b16 %v7039
      %v7084 = vunpack.c.l.b16 %v7040
      %v7085 = vunpack.c.h.b16 %v7040
      %v7086 = vunpack.c.l.b16 %v7041
      %v7087 = vunpack.c.h.b16 %v7041
      %v7088 = vunpack.c.l.b16 %v7042
      %v7089 = vunpack.c.h.b16 %v7042
      %v7090 = vunpack.c.l.b16 %v7043
      %v7091 = vunpack.c.h.b16 %v7043
      %v7092 = vpack.c.b16 %v7062, %v7060
      %v7093 = vpack.c.b16 %v7063, %v7061
      %v7094 = vpack.c.b16 %v7066, %v7064
      %v7095 = vpack.c.b16 %v7067, %v7065
      %v7096 = vpack.c.b16 %v7070, %v7068
      %v7097 = vpack.c.b16 %v7071, %v7069
      %v7098 = vpack.c.b16 %v7074, %v7072
      %v7099 = vpack.c.b16 %v7075, %v7073
      %v7100 = vpack.c.b16 %v7078, %v7076
      %v7101 = vpack.c.b16 %v7079, %v7077
      %v7102 = vpack.c.b16 %v7082, %v7080
      %v7103 = vpack.c.b16 %v7083, %v7081
      %v7104 = vpack.c.b16 %v7086, %v7084
      %v7105 = vpack.c.b16 %v7087, %v7085
      %v7106 = vpack.c.b16 %v7090, %v7088
      %v7107 = vpack.c.b16 %v7091, %v7089
      %7124 = vmatprep.subr.bf16.mxu0 %v7093
      %7125 = vmatpush1.bf16.msra.mxu0 %v7092
      %7126 = vmatprep.subr.bf16.mxu0 %v7095
      %7127 = vmatpush1.bf16.msra.mxu0 %v7094
      %7128 = vmatprep.subr.bf16.mxu0 %v7097
      %7129 = vmatpush1.bf16.msra.mxu0 %v7096
      %7130 = vmatprep.subr.bf16.mxu0 %v7099
      %7131 = vmatpush1.bf16.msra.mxu0 %v7098
      %7132 = vmatprep.subr.bf16.mxu0 %v7101
      %7133 = vmatpush1.bf16.msra.mxu0 %v7100
      %7134 = vmatprep.subr.bf16.mxu0 %v7103
      %7135 = vmatpush1.bf16.msra.mxu0 %v7102
      %7136 = vmatprep.subr.bf16.mxu0 %v7105
      %7137 = vmatpush1.bf16.msra.mxu0 %v7104
      %7138 = vmatprep.subr.bf16.mxu0 %v7107
      %7139 = vmatpush1.bf16.msra.mxu0 %v7106
      %7140 = vmatprep.subr.bf16.mxu0 0
      %7141 = vmatpush1.bf16.msra.mxu0 0
      %7142 = vmatprep.subr.bf16.mxu0 0
      %7143 = vmatpush1.bf16.msra.mxu0 0
      %7144 = vmatprep.subr.bf16.mxu0 0
      %7145 = vmatpush1.bf16.msra.mxu0 0
      %7146 = vmatprep.subr.bf16.mxu0 0
      %7147 = vmatpush1.bf16.msra.mxu0 0
      %7148 = vmatprep.subr.bf16.mxu0 0
      %7149 = vmatpush1.bf16.msra.mxu0 0
      %7150 = vmatprep.subr.bf16.mxu0 0
      %7151 = vmatpush1.bf16.msra.mxu0 0
      %7152 = vmatprep.subr.bf16.mxu0 0
      %7153 = vmatpush1.bf16.msra.mxu0 0
      %7154 = vmatprep.subr.bf16.mxu0 0
      %7155 = vmatpush1.bf16.msra.mxu0 0
      %7156 = vmatprep.mubr.bf16.mxu0 0
      %7157 = vmatmul.mubr.bf16.gmra.mrb[0].mxu0 %v7027
      %v7158 = vpop.f32.mrb[0].mxu0
      %v7159 = vadd.f32 0.0, %v7158
      %v7160 = vpop.f32.mrb[0].mxu0
      %v7161 = vadd.f32 0.0, %v7160
      %v7162 = vpop.f32.mrb[0].mxu0
      %v7163 = vpop.f32.mrb[0].mxu0
      %7164 = vdwg.mxu0
      %v7165 = vadd.f32 %v7010, %v7159
      %v7166 = vadd.f32 %v7011, %v7161
      %s7167 = scalar_lea.vmem %s6393, 2 [#allocation5]
      %v7168 = vld [vmem:[%s7167] ss:$2 sm:$0x3]
      %s7169 = scalar_lea.vmem %s6393, 18 [#allocation5]
      %v7170 = vld [vmem:[%s7169] ss:$2 sm:$0x3]
      %v7173 = vcombine.low %v7168, %v7170
      %v7175 = vunpack.c.l.s4 1983009808
      %v7176 = vunpack.c.0.s8 %v7175
      %v7177 = vlaneseq
      %v7178 = vshrl.u32 %v7177, 7
      %v7179 = vsub.s32 %v7176, %v7178
      %v7180 = vrot.slane %v7173, %v7179
      %v7182 = vpack.c.bf16 %v7180, %v7180
      %v7183 = vld [vmem:[%s9 + $0x280] sm:$0xff]
      %v7184 = vld [vmem:[%s9 + $0x288] sm:$0xff]
      %v7185 = vld [vmem:[%s9 + $0x290] sm:$0xff]
      %v7186 = vld [vmem:[%s9 + $0x298] sm:$0xff]
      %v7187 = vld [vmem:[%s9 + $0x2a0] sm:$0xff]
      %v7188 = vld [vmem:[%s9 + $0x2a8] sm:$0xff]
      %v7189 = vld [vmem:[%s9 + $0x2b0] sm:$0xff]
      %v7190 = vld [vmem:[%s9 + $0x2b8] sm:$0xff]
      %v7191 = vld [vmem:[%s9 + $0x2c0] sm:$0xff]
      %v7192 = vld [vmem:[%s9 + $0x2c8] sm:$0xff]
      %v7193 = vld [vmem:[%s9 + $0x2d0] sm:$0xff]
      %v7194 = vld [vmem:[%s9 + $0x2d8] sm:$0xff]
      %v7195 = vld [vmem:[%s9 + $0x2e0] sm:$0xff]
      %v7196 = vld [vmem:[%s9 + $0x2e8] sm:$0xff]
      %v7197 = vld [vmem:[%s9 + $0x2f0] sm:$0xff]
      %v7198 = vld [vmem:[%s9 + $0x2f8] sm:$0xff]
      %v7215 = vunpack.c.l.b16 %v7183
      %v7216 = vunpack.c.h.b16 %v7183
      %v7217 = vunpack.c.l.b16 %v7184
      %v7218 = vunpack.c.h.b16 %v7184
      %v7219 = vunpack.c.l.b16 %v7185
      %v7220 = vunpack.c.h.b16 %v7185
      %v7221 = vunpack.c.l.b16 %v7186
      %v7222 = vunpack.c.h.b16 %v7186
      %v7223 = vunpack.c.l.b16 %v7187
      %v7224 = vunpack.c.h.b16 %v7187
      %v7225 = vunpack.c.l.b16 %v7188
      %v7226 = vunpack.c.h.b16 %v7188
      %v7227 = vunpack.c.l.b16 %v7189
      %v7228 = vunpack.c.h.b16 %v7189
      %v7229 = vunpack.c.l.b16 %v7190
      %v7230 = vunpack.c.h.b16 %v7190
      %v7231 = vunpack.c.l.b16 %v7191
      %v7232 = vunpack.c.h.b16 %v7191
      %v7233 = vunpack.c.l.b16 %v7192
      %v7234 = vunpack.c.h.b16 %v7192
      %v7235 = vunpack.c.l.b16 %v7193
      %v7236 = vunpack.c.h.b16 %v7193
      %v7237 = vunpack.c.l.b16 %v7194
      %v7238 = vunpack.c.h.b16 %v7194
      %v7239 = vunpack.c.l.b16 %v7195
      %v7240 = vunpack.c.h.b16 %v7195
      %v7241 = vunpack.c.l.b16 %v7196
      %v7242 = vunpack.c.h.b16 %v7196
      %v7243 = vunpack.c.l.b16 %v7197
      %v7244 = vunpack.c.h.b16 %v7197
      %v7245 = vunpack.c.l.b16 %v7198
      %v7246 = vunpack.c.h.b16 %v7198
      %v7247 = vpack.c.b16 %v7217, %v7215
      %v7248 = vpack.c.b16 %v7218, %v7216
      %v7249 = vpack.c.b16 %v7221, %v7219
      %v7250 = vpack.c.b16 %v7222, %v7220
      %v7251 = vpack.c.b16 %v7225, %v7223
      %v7252 = vpack.c.b16 %v7226, %v7224
      %v7253 = vpack.c.b16 %v7229, %v7227
      %v7254 = vpack.c.b16 %v7230, %v7228
      %v7255 = vpack.c.b16 %v7233, %v7231
      %v7256 = vpack.c.b16 %v7234, %v7232
      %v7257 = vpack.c.b16 %v7237, %v7235
      %v7258 = vpack.c.b16 %v7238, %v7236
      %v7259 = vpack.c.b16 %v7241, %v7239
      %v7260 = vpack.c.b16 %v7242, %v7240
      %v7261 = vpack.c.b16 %v7245, %v7243
      %v7262 = vpack.c.b16 %v7246, %v7244
      %7279 = vmatprep.subr.bf16.mxu0 %v7248
      %7280 = vmatpush1.bf16.msra.mxu0 %v7247
      %7281 = vmatprep.subr.bf16.mxu0 %v7250
      %7282 = vmatpush1.bf16.msra.mxu0 %v7249
      %7283 = vmatprep.subr.bf16.mxu0 %v7252
      %7284 = vmatpush1.bf16.msra.mxu0 %v7251
      %7285 = vmatprep.subr.bf16.mxu0 %v7254
      %7286 = vmatpush1.bf16.msra.mxu0 %v7253
      %7287 = vmatprep.subr.bf16.mxu0 %v7256
      %7288 = vmatpush1.bf16.msra.mxu0 %v7255
      %7289 = vmatprep.subr.bf16.mxu0 %v7258
      %7290 = vmatpush1.bf16.msra.mxu0 %v7257
      %7291 = vmatprep.subr.bf16.mxu0 %v7260
      %7292 = vmatpush1.bf16.msra.mxu0 %v7259
      %7293 = vmatprep.subr.bf16.mxu0 %v7262
      %7294 = vmatpush1.bf16.msra.mxu0 %v7261
      %7295 = vmatprep.subr.bf16.mxu0 0
      %7296 = vmatpush1.bf16.msra.mxu0 0
      %7297 = vmatprep.subr.bf16.mxu0 0
      %7298 = vmatpush1.bf16.msra.mxu0 0
      %7299 = vmatprep.subr.bf16.mxu0 0
      %7300 = vmatpush1.bf16.msra.mxu0 0
      %7301 = vmatprep.subr.bf16.mxu0 0
      %7302 = vmatpush1.bf16.msra.mxu0 0
      %7303 = vmatprep.subr.bf16.mxu0 0
      %7304 = vmatpush1.bf16.msra.mxu0 0
      %7305 = vmatprep.subr.bf16.mxu0 0
      %7306 = vmatpush1.bf16.msra.mxu0 0
      %7307 = vmatprep.subr.bf16.mxu0 0
      %7308 = vmatpush1.bf16.msra.mxu0 0
      %7309 = vmatprep.subr.bf16.mxu0 0
      %7310 = vmatpush1.bf16.msra.mxu0 0
      %7311 = vmatprep.mubr.bf16.mxu0 0
      %7312 = vmatmul.mubr.bf16.gmra.mrb[0].mxu0 %v7182
      %v7313 = vpop.f32.mrb[0].mxu0
      %v7314 = vadd.f32 0.0, %v7313
      %v7315 = vpop.f32.mrb[0].mxu0
      %v7316 = vadd.f32 0.0, %v7315
      %v7317 = vpop.f32.mrb[0].mxu0
      %v7318 = vpop.f32.mrb[0].mxu0
      %7319 = vdwg.mxu0
      %v7320 = vadd.f32 %v7165, %v7314
      %v7321 = vadd.f32 %v7166, %v7316
      %s7322 = scalar_lea.vmem [#allocation5], 16
      %v7323 = vld [vmem:[%s7322] ss:$2 sm:$0x3]
      %s7324 = scalar_lea.vmem %s7322, 16 [#allocation5]
      %v7325 = vld [vmem:[%s7324] ss:$2 sm:$0x3]
      %v7328 = vcombine.low %v7323, %v7325
      %v7330 = vunpack.c.l.s4 1983009808
      %v7331 = vunpack.c.0.s8 %v7330
      %v7332 = vlaneseq
      %v7333 = vshrl.u32 %v7332, 7
      %v7334 = vsub.s32 %v7331, %v7333
      %v7335 = vrot.slane %v7328, %v7334
      %v7337 = vpack.c.bf16 %v7335, %v7335
      %v7338 = vld [vmem:[%s9 + $0x300] sm:$0xff]
      %v7339 = vld [vmem:[%s9 + $0x308] sm:$0xff]
      %v7340 = vld [vmem:[%s9 + $0x310] sm:$0xff]
      %v7341 = vld [vmem:[%s9 + $0x318] sm:$0xff]
      %v7342 = vld [vmem:[%s9 + $0x320] sm:$0xff]
      %v7343 = vld [vmem:[%s9 + $0x328] sm:$0xff]
      %v7344 = vld [vmem:[%s9 + $0x330] sm:$0xff]
      %v7345 = vld [vmem:[%s9 + $0x338] sm:$0xff]
      %v7346 = vld [vmem:[%s9 + $0x340] sm:$0xff]
      %v7347 = vld [vmem:[%s9 + $0x348] sm:$0xff]
      %v7348 = vld [vmem:[%s9 + $0x350] sm:$0xff]
      %v7349 = vld [vmem:[%s9 + $0x358] sm:$0xff]
      %v7350 = vld [vmem:[%s9 + $0x360] sm:$0xff]
      %v7351 = vld [vmem:[%s9 + $0x368] sm:$0xff]
      %v7352 = vld [vmem:[%s9 + $0x370] sm:$0xff]
      %v7353 = vld [vmem:[%s9 + $0x378] sm:$0xff]
      %v7370 = vunpack.c.l.b16 %v7338
      %v7371 = vunpack.c.h.b16 %v7338
      %v7372 = vunpack.c.l.b16 %v7339
      %v7373 = vunpack.c.h.b16 %v7339
      %v7374 = vunpack.c.l.b16 %v7340
      %v7375 = vunpack.c.h.b16 %v7340
      %v7376 = vunpack.c.l.b16 %v7341
      %v7377 = vunpack.c.h.b16 %v7341
      %v7378 = vunpack.c.l.b16 %v7342
      %v7379 = vunpack.c.h.b16 %v7342
      %v7380 = vunpack.c.l.b16 %v7343
      %v7381 = vunpack.c.h.b16 %v7343
      %v7382 = vunpack.c.l.b16 %v7344
      %v7383 = vunpack.c.h.b16 %v7344
      %v7384 = vunpack.c.l.b16 %v7345
      %v7385 = vunpack.c.h.b16 %v7345
      %v7386 = vunpack.c.l.b16 %v7346
      %v7387 = vunpack.c.h.b16 %v7346
      %v7388 = vunpack.c.l.b16 %v7347
      %v7389 = vunpack.c.h.b16 %v7347
      %v7390 = vunpack.c.l.b16 %v7348
      %v7391 = vunpack.c.h.b16 %v7348
      %v7392 = vunpack.c.l.b16 %v7349
      %v7393 = vunpack.c.h.b16 %v7349
      %v7394 = vunpack.c.l.b16 %v7350
      %v7395 = vunpack.c.h.b16 %v7350
      %v7396 = vunpack.c.l.b16 %v7351
      %v7397 = vunpack.c.h.b16 %v7351
      %v7398 = vunpack.c.l.b16 %v7352
      %v7399 = vunpack.c.h.b16 %v7352
      %v7400 = vunpack.c.l.b16 %v7353
      %v7401 = vunpack.c.h.b16 %v7353
      %v7402 = vpack.c.b16 %v7372, %v7370
      %v7403 = vpack.c.b16 %v7373, %v7371
      %v7404 = vpack.c.b16 %v7376, %v7374
      %v7405 = vpack.c.b16 %v7377, %v7375
      %v7406 = vpack.c.b16 %v7380, %v7378
      %v7407 = vpack.c.b16 %v7381, %v7379
      %v7408 = vpack.c.b16 %v7384, %v7382
      %v7409 = vpack.c.b16 %v7385, %v7383
      %v7410 = vpack.c.b16 %v7388, %v7386
      %v7411 = vpack.c.b16 %v7389, %v7387
      %v7412 = vpack.c.b16 %v7392, %v7390
      %v7413 = vpack.c.b16 %v7393, %v7391
      %v7414 = vpack.c.b16 %v7396, %v7394
      %v7415 = vpack.c.b16 %v7397, %v7395
      %v7416 = vpack.c.b16 %v7400, %v7398
      %v7417 = vpack.c.b16 %v7401, %v7399
      %7434 = vmatprep.subr.bf16.mxu0 %v7403
      %7435 = vmatpush1.bf16.msra.mxu0 %v7402
      %7436 = vmatprep.subr.bf16.mxu0 %v7405
      %7437 = vmatpush1.bf16.msra.mxu0 %v7404
      %7438 = vmatprep.subr.bf16.mxu0 %v7407
      %7439 = vmatpush1.bf16.msra.mxu0 %v7406
      %7440 = vmatprep.subr.bf16.mxu0 %v7409
      %7441 = vmatpush1.bf16.msra.mxu0 %v7408
      %7442 = vmatprep.subr.bf16.mxu0 %v7411
      %7443 = vmatpush1.bf16.msra.mxu0 %v7410
      %7444 = vmatprep.subr.bf16.mxu0 %v7413
      %7445 = vmatpush1.bf16.msra.mxu0 %v7412
      %7446 = vmatprep.subr.bf16.mxu0 %v7415
      %7447 = vmatpush1.bf16.msra.mxu0 %v7414
      %7448 = vmatprep.subr.bf16.mxu0 %v7417
      %7449 = vmatpush1.bf16.msra.mxu0 %v7416
      %7450 = vmatprep.subr.bf16.mxu0 0
      %7451 = vmatpush1.bf16.msra.mxu0 0
      %7452 = vmatprep.subr.bf16.mxu0 0
      %7453 = vmatpush1.bf16.msra.mxu0 0
      %7454 = vmatprep.subr.bf16.mxu0 0
      %7455 = vmatpush1.bf16.msra.mxu0 0
      %7456 = vmatprep.subr.bf16.mxu0 0
      %7457 = vmatpush1.bf16.msra.mxu0 0
      %7458 = vmatprep.subr.bf16.mxu0 0
      %7459 = vmatpush1.bf16.msra.mxu0 0
      %7460 = vmatprep.subr.bf16.mxu0 0
      %7461 = vmatpush1.bf16.msra.mxu0 0
      %7462 = vmatprep.subr.bf16.mxu0 0
      %7463 = vmatpush1.bf16.msra.mxu0 0
      %7464 = vmatprep.subr.bf16.mxu0 0
      %7465 = vmatpush1.bf16.msra.mxu0 0
      %7466 = vmatprep.mubr.bf16.mxu0 0
      %7467 = vmatmul.mubr.bf16.gmra.mrb[0].mxu0 %v7337
      %v7468 = vpop.f32.mrb[0].mxu0
      %v7469 = vadd.f32 0.0, %v7468
      %v7470 = vpop.f32.mrb[0].mxu0
      %v7471 = vadd.f32 0.0, %v7470
      %v7472 = vpop.f32.mrb[0].mxu0
      %v7473 = vpop.f32.mrb[0].mxu0
      %7474 = vdwg.mxu0
      %v7475 = vadd.f32 %v7320, %v7469
      %v7476 = vadd.f32 %v7321, %v7471
      %s7477 = scalar_lea.vmem %s7322, 1 [#allocation5]
      %v7478 = vld [vmem:[%s7477] ss:$2 sm:$0x3]
      %s7479 = scalar_lea.vmem %s7322, 17 [#allocation5]
      %v7480 = vld [vmem:[%s7479] ss:$2 sm:$0x3]
      %v7483 = vcombine.low %v7478, %v7480
      %v7485 = vunpack.c.l.s4 1983009808
      %v7486 = vunpack.c.0.s8 %v7485
      %v7487 = vlaneseq
      %v7488 = vshrl.u32 %v7487, 7
      %v7489 = vsub.s32 %v7486, %v7488
      %v7490 = vrot.slane %v7483, %v7489
      %v7492 = vpack.c.bf16 %v7490, %v7490
      %v7493 = vld [vmem:[%s9 + $0x380] sm:$0xff]
      %v7494 = vld [vmem:[%s9 + $0x388] sm:$0xff]
      %v7495 = vld [vmem:[%s9 + $0x390] sm:$0xff]
      %v7496 = vld [vmem:[%s9 + $0x398] sm:$0xff]
      %v7497 = vld [vmem:[%s9 + $0x3a0] sm:$0xff]
      %v7498 = vld [vmem:[%s9 + $0x3a8] sm:$0xff]
      %v7499 = vld [vmem:[%s9 + $0x3b0] sm:$0xff]
      %v7500 = vld [vmem:[%s9 + $0x3b8] sm:$0xff]
      %v7501 = vld [vmem:[%s9 + $0x3c0] sm:$0xff]
      %v7502 = vld [vmem:[%s9 + $0x3c8] sm:$0xff]
      %v7503 = vld [vmem:[%s9 + $0x3d0] sm:$0xff]
      %v7504 = vld [vmem:[%s9 + $0x3d8] sm:$0xff]
      %v7505 = vld [vmem:[%s9 + $0x3e0] sm:$0xff]
      %v7506 = vld [vmem:[%s9 + $0x3e8] sm:$0xff]
      %v7507 = vld [vmem:[%s9 + $0x3f0] sm:$0xff]
      %v7508 = vld [vmem:[%s9 + $0x3f8] sm:$0xff]
      %v7525 = vunpack.c.l.b16 %v7493
      %v7526 = vunpack.c.h.b16 %v7493
      %v7527 = vunpack.c.l.b16 %v7494
      %v7528 = vunpack.c.h.b16 %v7494
      %v7529 = vunpack.c.l.b16 %v7495
      %v7530 = vunpack.c.h.b16 %v7495
      %v7531 = vunpack.c.l.b16 %v7496
      %v7532 = vunpack.c.h.b16 %v7496
      %v7533 = vunpack.c.l.b16 %v7497
      %v7534 = vunpack.c.h.b16 %v7497
      %v7535 = vunpack.c.l.b16 %v7498
      %v7536 = vunpack.c.h.b16 %v7498
      %v7537 = vunpack.c.l.b16 %v7499
      %v7538 = vunpack.c.h.b16 %v7499
      %v7539 = vunpack.c.l.b16 %v7500
      %v7540 = vunpack.c.h.b16 %v7500
      %v7541 = vunpack.c.l.b16 %v7501
      %v7542 = vunpack.c.h.b16 %v7501
      %v7543 = vunpack.c.l.b16 %v7502
      %v7544 = vunpack.c.h.b16 %v7502
      %v7545 = vunpack.c.l.b16 %v7503
      %v7546 = vunpack.c.h.b16 %v7503
      %v7547 = vunpack.c.l.b16 %v7504
      %v7548 = vunpack.c.h.b16 %v7504
      %v7549 = vunpack.c.l.b16 %v7505
      %v7550 = vunpack.c.h.b16 %v7505
      %v7551 = vunpack.c.l.b16 %v7506
      %v7552 = vunpack.c.h.b16 %v7506
      %v7553 = vunpack.c.l.b16 %v7507
      %v7554 = vunpack.c.h.b16 %v7507
      %v7555 = vunpack.c.l.b16 %v7508
      %v7556 = vunpack.c.h.b16 %v7508
      %v7557 = vpack.c.b16 %v7527, %v7525
      %v7558 = vpack.c.b16 %v7528, %v7526
      %v7559 = vpack.c.b16 %v7531, %v7529
      %v7560 = vpack.c.b16 %v7532, %v7530
      %v7561 = vpack.c.b16 %v7535, %v7533
      %v7562 = vpack.c.b16 %v7536, %v7534
      %v7563 = vpack.c.b16 %v7539, %v7537
      %v7564 = vpack.c.b16 %v7540, %v7538
      %v7565 = vpack.c.b16 %v7543, %v7541
      %v7566 = vpack.c.b16 %v7544, %v7542
      %v7567 = vpack.c.b16 %v7547, %v7545
      %v7568 = vpack.c.b16 %v7548, %v7546
      %v7569 = vpack.c.b16 %v7551, %v7549
      %v7570 = vpack.c.b16 %v7552, %v7550
      %v7571 = vpack.c.b16 %v7555, %v7553
      %v7572 = vpack.c.b16 %v7556, %v7554
      %7589 = vmatprep.subr.bf16.mxu0 %v7558
      %7590 = vmatpush1.bf16.msra.mxu0 %v7557
      %7591 = vmatprep.subr.bf16.mxu0 %v7560
      %7592 = vmatpush1.bf16.msra.mxu0 %v7559
      %7593 = vmatprep.subr.bf16.mxu0 %v7562
      %7594 = vmatpush1.bf16.msra.mxu0 %v7561
      %7595 = vmatprep.subr.bf16.mxu0 %v7564
      %7596 = vmatpush1.bf16.msra.mxu0 %v7563
      %7597 = vmatprep.subr.bf16.mxu0 %v7566
      %7598 = vmatpush1.bf16.msra.mxu0 %v7565
      %7599 = vmatprep.subr.bf16.mxu0 %v7568
      %7600 = vmatpush1.bf16.msra.mxu0 %v7567
      %7601 = vmatprep.subr.bf16.mxu0 %v7570
      %7602 = vmatpush1.bf16.msra.mxu0 %v7569
      %7603 = vmatprep.subr.bf16.mxu0 %v7572
      %7604 = vmatpush1.bf16.msra.mxu0 %v7571
      %7605 = vmatprep.subr.bf16.mxu0 0
      %7606 = vmatpush1.bf16.msra.mxu0 0
      %7607 = vmatprep.subr.bf16.mxu0 0
      %7608 = vmatpush1.bf16.msra.mxu0 0
      %7609 = vmatprep.subr.bf16.mxu0 0
      %7610 = vmatpush1.bf16.msra.mxu0 0
      %7611 = vmatprep.subr.bf16.mxu0 0
      %7612 = vmatpush1.bf16.msra.mxu0 0
      %7613 = vmatprep.subr.bf16.mxu0 0
      %7614 = vmatpush1.bf16.msra.mxu0 0
      %7615 = vmatprep.subr.bf16.mxu0 0
      %7616 = vmatpush1.bf16.msra.mxu0 0
      %7617 = vmatprep.subr.bf16.mxu0 0
      %7618 = vmatpush1.bf16.msra.mxu0 0
      %7619 = vmatprep.subr.bf16.mxu0 0
      %7620 = vmatpush1.bf16.msra.mxu0 0
      %7621 = vmatprep.mubr.bf16.mxu0 0
      %7622 = vmatmul.mubr.bf16.gmra.mrb[0].mxu0 %v7492
      %v7623 = vpop.f32.mrb[0].mxu0
      %v7624 = vadd.f32 0.0, %v7623
      %v7625 = vpop.f32.mrb[0].mxu0
      %v7626 = vadd.f32 0.0, %v7625
      %v7627 = vpop.f32.mrb[0].mxu0
      %v7628 = vpop.f32.mrb[0].mxu0
      %7629 = vdwg.mxu0
      %v7630 = vadd.f32 %v7475, %v7624
      %v7631 = vadd.f32 %v7476, %v7626
      %s7632 = scalar_lea.vmem %s7322, 2 [#allocation5]
      %v7633 = vld [vmem:[%s7632] ss:$2 sm:$0x3]
      %s7634 = scalar_lea.vmem %s7322, 18 [#allocation5]
      %v7635 = vld [vmem:[%s7634] ss:$2 sm:$0x3]
      %v7638 = vcombine.low %v7633, %v7635
      %v7640 = vunpack.c.l.s4 1983009808
      %v7641 = vunpack.c.0.s8 %v7640
      %v7642 = vlaneseq
      %v7643 = vshrl.u32 %v7642, 7
      %v7644 = vsub.s32 %v7641, %v7643
      %v7645 = vrot.slane %v7638, %v7644
      %v7647 = vpack.c.bf16 %v7645, %v7645
      %v7648 = vld [vmem:[%s9 + $0x400] sm:$0xff]
      %v7649 = vld [vmem:[%s9 + $0x408] sm:$0xff]
      %v7650 = vld [vmem:[%s9 + $0x410] sm:$0xff]
      %v7651 = vld [vmem:[%s9 + $0x418] sm:$0xff]
      %v7652 = vld [vmem:[%s9 + $0x420] sm:$0xff]
      %v7653 = vld [vmem:[%s9 + $0x428] sm:$0xff]
      %v7654 = vld [vmem:[%s9 + $0x430] sm:$0xff]
      %v7655 = vld [vmem:[%s9 + $0x438] sm:$0xff]
      %v7656 = vld [vmem:[%s9 + $0x440] sm:$0xff]
      %v7657 = vld [vmem:[%s9 + $0x448] sm:$0xff]
      %v7658 = vld [vmem:[%s9 + $0x450] sm:$0xff]
      %v7659 = vld [vmem:[%s9 + $0x458] sm:$0xff]
      %v7660 = vld [vmem:[%s9 + $0x460] sm:$0xff]
      %v7661 = vld [vmem:[%s9 + $0x468] sm:$0xff]
      %v7662 = vld [vmem:[%s9 + $0x470] sm:$0xff]
      %v7663 = vld [vmem:[%s9 + $0x478] sm:$0xff]
      %v7680 = vunpack.c.l.b16 %v7648
      %v7681 = vunpack.c.h.b16 %v7648
      %v7682 = vunpack.c.l.b16 %v7649
      %v7683 = vunpack.c.h.b16 %v7649
      %v7684 = vunpack.c.l.b16 %v7650
      %v7685 = vunpack.c.h.b16 %v7650
      %v7686 = vunpack.c.l.b16 %v7651
      %v7687 = vunpack.c.h.b16 %v7651
      %v7688 = vunpack.c.l.b16 %v7652
      %v7689 = vunpack.c.h.b16 %v7652
      %v7690 = vunpack.c.l.b16 %v7653
      %v7691 = vunpack.c.h.b16 %v7653
      %v7692 = vunpack.c.l.b16 %v7654
      %v7693 = vunpack.c.h.b16 %v7654
      %v7694 = vunpack.c.l.b16 %v7655
      %v7695 = vunpack.c.h.b16 %v7655
      %v7696 = vunpack.c.l.b16 %v7656
      %v7697 = vunpack.c.h.b16 %v7656
      %v7698 = vunpack.c.l.b16 %v7657
      %v7699 = vunpack.c.h.b16 %v7657
      %v7700 = vunpack.c.l.b16 %v7658
      %v7701 = vunpack.c.h.b16 %v7658
      %v7702 = vunpack.c.l.b16 %v7659
      %v7703 = vunpack.c.h.b16 %v7659
      %v7704 = vunpack.c.l.b16 %v7660
      %v7705 = vunpack.c.h.b16 %v7660
      %v7706 = vunpack.c.l.b16 %v7661
      %v7707 = vunpack.c.h.b16 %v7661
      %v7708 = vunpack.c.l.b16 %v7662
      %v7709 = vunpack.c.h.b16 %v7662
      %v7710 = vunpack.c.l.b16 %v7663
      %v7711 = vunpack.c.h.b16 %v7663
      %v7712 = vpack.c.b16 %v7682, %v7680
      %v7713 = vpack.c.b16 %v7683, %v7681
      %v7714 = vpack.c.b16 %v7686, %v7684
      %v7715 = vpack.c.b16 %v7687, %v7685
      %v7716 = vpack.c.b16 %v7690, %v7688
      %v7717 = vpack.c.b16 %v7691, %v7689
      %v7718 = vpack.c.b16 %v7694, %v7692
      %v7719 = vpack.c.b16 %v7695, %v7693
      %v7720 = vpack.c.b16 %v7698, %v7696
      %v7721 = vpack.c.b16 %v7699, %v7697
      %v7722 = vpack.c.b16 %v7702, %v7700
      %v7723 = vpack.c.b16 %v7703, %v7701
      %v7724 = vpack.c.b16 %v7706, %v7704
      %v7725 = vpack.c.b16 %v7707, %v7705
      %v7726 = vpack.c.b16 %v7710, %v7708
      %v7727 = vpack.c.b16 %v7711, %v7709
      %7744 = vmatprep.subr.bf16.mxu0 %v7713
      %7745 = vmatpush1.bf16.msra.mxu0 %v7712
      %7746 = vmatprep.subr.bf16.mxu0 %v7715
      %7747 = vmatpush1.bf16.msra.mxu0 %v7714
      %7748 = vmatprep.subr.bf16.mxu0 %v7717
      %7749 = vmatpush1.bf16.msra.mxu0 %v7716
      %7750 = vmatprep.subr.bf16.mxu0 %v7719
      %7751 = vmatpush1.bf16.msra.mxu0 %v7718
      %7752 = vmatprep.subr.bf16.mxu0 %v7721
      %7753 = vmatpush1.bf16.msra.mxu0 %v7720
      %7754 = vmatprep.subr.bf16.mxu0 %v7723
      %7755 = vmatpush1.bf16.msra.mxu0 %v7722
      %7756 = vmatprep.subr.bf16.mxu0 %v7725
      %7757 = vmatpush1.bf16.msra.mxu0 %v7724
      %7758 = vmatprep.subr.bf16.mxu0 %v7727
      %7759 = vmatpush1.bf16.msra.mxu0 %v7726
      %7760 = vmatprep.subr.bf16.mxu0 0
      %7761 = vmatpush1.bf16.msra.mxu0 0
      %7762 = vmatprep.subr.bf16.mxu0 0
      %7763 = vmatpush1.bf16.msra.mxu0 0
      %7764 = vmatprep.subr.bf16.mxu0 0
      %7765 = vmatpush1.bf16.msra.mxu0 0
      %7766 = vmatprep.subr.bf16.mxu0 0
      %7767 = vmatpush1.bf16.msra.mxu0 0
      %7768 = vmatprep.subr.bf16.mxu0 0
      %7769 = vmatpush1.bf16.msra.mxu0 0
      %7770 = vmatprep.subr.bf16.mxu0 0
      %7771 = vmatpush1.bf16.msra.mxu0 0
      %7772 = vmatprep.subr.bf16.mxu0 0
      %7773 = vmatpush1.bf16.msra.mxu0 0
      %7774 = vmatprep.subr.bf16.mxu0 0
      %7775 = vmatpush1.bf16.msra.mxu0 0
      %7776 = vmatprep.mubr.bf16.mxu0 0
      %7777 = vmatmul.mubr.bf16.gmra.mrb[0].mxu0 %v7647
      %v7778 = vpop.f32.mrb[0].mxu0
      %v7779 = vadd.f32 0.0, %v7778
      %v7780 = vpop.f32.mrb[0].mxu0
      %v7781 = vadd.f32 0.0, %v7780
      %v7782 = vpop.f32.mrb[0].mxu0
      %v7783 = vpop.f32.mrb[0].mxu0
      %7784 = vdwg.mxu0
      %v7785 = vadd.f32 %v7630, %v7779
      %v7786 = vadd.f32 %v7631, %v7781
      %v7787 = vld [vmem:[%s10] sm:$0x3]
      %v7789 = vlaneseq
      %v7790 = vshrl.u32 %v7789, 7
      %v7791 = vsub.s32 0, %v7790
      %v7792 = vrot.slane %v7787, %v7791
      %v7793 = vlaneseq
      %v7794 = vshrl.u32 %v7793, 7
      %v7795 = vsub.s32 1, %v7794
      %v7796 = vrot.slane %v7787, %v7795
      %v7799 = vadd.f32 %v7785, %v7792
      %v7800 = vadd.f32 %v7786, %v7796
      %v7801 = vmax.f32 %v7799, 0.0
      %v7802 = vmax.f32 %v7800, 0.0
      %v7803 = vpack.c.bf16 %v7801, %v7801
      %v7804 = vpack.c.bf16 %v7802, %v7802
      %v7805 = vld [vmem:[%s11] sm:$0xff]
      %v7806 = vld [vmem:[%s11 + $0x8] sm:$0xff]
      %v7807 = vld [vmem:[%s11 + $0x10] sm:$0xff]
      %v7808 = vld [vmem:[%s11 + $0x18] sm:$0xff]
      %v7809 = vld [vmem:[%s11 + $0x20] sm:$0xff]
      %v7810 = vld [vmem:[%s11 + $0x28] sm:$0xff]
      %v7811 = vld [vmem:[%s11 + $0x30] sm:$0xff]
      %v7812 = vld [vmem:[%s11 + $0x38] sm:$0xff]
      %v7813 = vld [vmem:[%s11 + $0x40] sm:$0xff]
      %v7814 = vld [vmem:[%s11 + $0x48] sm:$0xff]
      %v7815 = vld [vmem:[%s11 + $0x50] sm:$0xff]
      %v7816 = vld [vmem:[%s11 + $0x58] sm:$0xff]
      %v7817 = vld [vmem:[%s11 + $0x60] sm:$0xff]
      %v7818 = vld [vmem:[%s11 + $0x68] sm:$0xff]
      %v7819 = vld [vmem:[%s11 + $0x70] sm:$0xff]
      %v7820 = vld [vmem:[%s11 + $0x78] sm:$0xff]
      %v7821 = vld [vmem:[%s11 + $0x80] sm:$0xff]
      %v7822 = vld [vmem:[%s11 + $0x88] sm:$0xff]
      %v7823 = vld [vmem:[%s11 + $0x90] sm:$0xff]
      %v7824 = vld [vmem:[%s11 + $0x98] sm:$0xff]
      %v7825 = vld [vmem:[%s11 + $0xa0] sm:$0xff]
      %v7826 = vld [vmem:[%s11 + $0xa8] sm:$0xff]
      %v7827 = vld [vmem:[%s11 + $0xb0] sm:$0xff]
      %v7828 = vld [vmem:[%s11 + $0xb8] sm:$0xff]
      %v7829 = vld [vmem:[%s11 + $0xc0] sm:$0xff]
      %v7830 = vld [vmem:[%s11 + $0xc8] sm:$0xff]
      %v7831 = vld [vmem:[%s11 + $0xd0] sm:$0xff]
      %v7832 = vld [vmem:[%s11 + $0xd8] sm:$0xff]
      %v7833 = vld [vmem:[%s11 + $0xe0] sm:$0xff]
      %v7834 = vld [vmem:[%s11 + $0xe8] sm:$0xff]
      %v7835 = vld [vmem:[%s11 + $0xf0] sm:$0xff]
      %v7836 = vld [vmem:[%s11 + $0xf8] sm:$0xff]
      %v7837 = vld [vmem:[%s11 + $0x100] sm:$0xff]
      %v7838 = vld [vmem:[%s11 + $0x108] sm:$0xff]
      %v7839 = vld [vmem:[%s11 + $0x110] sm:$0xff]
      %v7840 = vld [vmem:[%s11 + $0x118] sm:$0xff]
      %v7841 = vld [vmem:[%s11 + $0x120] sm:$0xff]
      %v7842 = vld [vmem:[%s11 + $0x128] sm:$0xff]
      %v7843 = vld [vmem:[%s11 + $0x130] sm:$0xff]
      %v7844 = vld [vmem:[%s11 + $0x138] sm:$0xff]
      %v7845 = vld [vmem:[%s11 + $0x140] sm:$0xff]
      %v7846 = vld [vmem:[%s11 + $0x148] sm:$0xff]
      %v7847 = vld [vmem:[%s11 + $0x150] sm:$0xff]
      %v7848 = vld [vmem:[%s11 + $0x158] sm:$0xff]
      %v7849 = vld [vmem:[%s11 + $0x160] sm:$0xff]
      %v7850 = vld [vmem:[%s11 + $0x168] sm:$0xff]
      %v7851 = vld [vmem:[%s11 + $0x170] sm:$0xff]
      %v7852 = vld [vmem:[%s11 + $0x178] sm:$0xff]
      %v7853 = vld [vmem:[%s11 + $0x180] sm:$0xff]
      %v7854 = vld [vmem:[%s11 + $0x188] sm:$0xff]
      %v7855 = vld [vmem:[%s11 + $0x190] sm:$0xff]
      %v7856 = vld [vmem:[%s11 + $0x198] sm:$0xff]
      %v7857 = vld [vmem:[%s11 + $0x1a0] sm:$0xff]
      %v7858 = vld [vmem:[%s11 + $0x1a8] sm:$0xff]
      %v7859 = vld [vmem:[%s11 + $0x1b0] sm:$0xff]
      %v7860 = vld [vmem:[%s11 + $0x1b8] sm:$0xff]
      %v7861 = vld [vmem:[%s11 + $0x1c0] sm:$0xff]
      %v7862 = vld [vmem:[%s11 + $0x1c8] sm:$0xff]
      %v7863 = vld [vmem:[%s11 + $0x1d0] sm:$0xff]
      %v7864 = vld [vmem:[%s11 + $0x1d8] sm:$0xff]
      %v7865 = vld [vmem:[%s11 + $0x1e0] sm:$0xff]
      %v7866 = vld [vmem:[%s11 + $0x1e8] sm:$0xff]
      %v7867 = vld [vmem:[%s11 + $0x1f0] sm:$0xff]
      %v7868 = vld [vmem:[%s11 + $0x1f8] sm:$0xff]
      %v7870 = vshrl.u32 %v7803, 16
      %v7873 = vshrl.u32 %v7804, 16
      %v7909 = vunpack.c.l.b16 %v7837
      %v7910 = vunpack.c.h.b16 %v7837
      %v7911 = vunpack.c.l.b16 %v7838
      %v7912 = vunpack.c.h.b16 %v7838
      %v7913 = vunpack.c.l.b16 %v7839
      %v7914 = vunpack.c.h.b16 %v7839
      %v7915 = vunpack.c.l.b16 %v7840
      %v7916 = vunpack.c.h.b16 %v7840
      %v7917 = vunpack.c.l.b16 %v7841
      %v7918 = vunpack.c.h.b16 %v7841
      %v7919 = vunpack.c.l.b16 %v7842
      %v7920 = vunpack.c.h.b16 %v7842
      %v7921 = vunpack.c.l.b16 %v7843
      %v7922 = vunpack.c.h.b16 %v7843
      %v7923 = vunpack.c.l.b16 %v7844
      %v7924 = vunpack.c.h.b16 %v7844
      %v7925 = vunpack.c.l.b16 %v7845
      %v7926 = vunpack.c.h.b16 %v7845
      %v7927 = vunpack.c.l.b16 %v7846
      %v7928 = vunpack.c.h.b16 %v7846
      %v7929 = vunpack.c.l.b16 %v7847
      %v7930 = vunpack.c.h.b16 %v7847
      %v7931 = vunpack.c.l.b16 %v7848
      %v7932 = vunpack.c.h.b16 %v7848
      %v7933 = vunpack.c.l.b16 %v7849
      %v7934 = vunpack.c.h.b16 %v7849
      %v7935 = vunpack.c.l.b16 %v7850
      %v7936 = vunpack.c.h.b16 %v7850
      %v7937 = vunpack.c.l.b16 %v7851
      %v7938 = vunpack.c.h.b16 %v7851
      %v7939 = vunpack.c.l.b16 %v7852
      %v7940 = vunpack.c.h.b16 %v7852
      %v7941 = vunpack.c.l.b16 %v7853
      %v7942 = vunpack.c.h.b16 %v7853
      %v7943 = vunpack.c.l.b16 %v7854
      %v7944 = vunpack.c.h.b16 %v7854
      %v7945 = vunpack.c.l.b16 %v7855
      %v7946 = vunpack.c.h.b16 %v7855
      %v7947 = vunpack.c.l.b16 %v7856
      %v7948 = vunpack.c.h.b16 %v7856
      %v7949 = vunpack.c.l.b16 %v7857
      %v7950 = vunpack.c.h.b16 %v7857
      %v7951 = vunpack.c.l.b16 %v7858
      %v7952 = vunpack.c.h.b16 %v7858
      %v7953 = vunpack.c.l.b16 %v7859
      %v7954 = vunpack.c.h.b16 %v7859
      %v7955 = vunpack.c.l.b16 %v7860
      %v7956 = vunpack.c.h.b16 %v7860
      %v7957 = vunpack.c.l.b16 %v7861
      %v7958 = vunpack.c.h.b16 %v7861
      %v7959 = vunpack.c.l.b16 %v7862
      %v7960 = vunpack.c.h.b16 %v7862
      %v7961 = vunpack.c.l.b16 %v7863
      %v7962 = vunpack.c.h.b16 %v7863
      %v7963 = vunpack.c.l.b16 %v7864
      %v7964 = vunpack.c.h.b16 %v7864
      %v7965 = vunpack.c.l.b16 %v7865
      %v7966 = vunpack.c.h.b16 %v7865
      %v7967 = vunpack.c.l.b16 %v7866
      %v7968 = vunpack.c.h.b16 %v7866
      %v7969 = vunpack.c.l.b16 %v7867
      %v7970 = vunpack.c.h.b16 %v7867
      %v7971 = vunpack.c.l.b16 %v7868
      %v7972 = vunpack.c.h.b16 %v7868
      %v7973 = vpack.c.b16 %v7911, %v7909
      %v7974 = vpack.c.b16 %v7912, %v7910
      %v7975 = vpack.c.b16 %v7915, %v7913
      %v7976 = vpack.c.b16 %v7916, %v7914
      %v7977 = vpack.c.b16 %v7919, %v7917
      %v7978 = vpack.c.b16 %v7920, %v7918
      %v7979 = vpack.c.b16 %v7923, %v7921
      %v7980 = vpack.c.b16 %v7924, %v7922
      %v7981 = vpack.c.b16 %v7927, %v7925
      %v7982 = vpack.c.b16 %v7928, %v7926
      %v7983 = vpack.c.b16 %v7931, %v7929
      %v7984 = vpack.c.b16 %v7932, %v7930
      %v7985 = vpack.c.b16 %v7935, %v7933
      %v7986 = vpack.c.b16 %v7936, %v7934
      %v7987 = vpack.c.b16 %v7939, %v7937
      %v7988 = vpack.c.b16 %v7940, %v7938
      %v7989 = vpack.c.b16 %v7943, %v7941
      %v7990 = vpack.c.b16 %v7944, %v7942
      %v7991 = vpack.c.b16 %v7947, %v7945
      %v7992 = vpack.c.b16 %v7948, %v7946
      %v7993 = vpack.c.b16 %v7951, %v7949
      %v7994 = vpack.c.b16 %v7952, %v7950
      %v7995 = vpack.c.b16 %v7955, %v7953
      %v7996 = vpack.c.b16 %v7956, %v7954
      %v7997 = vpack.c.b16 %v7959, %v7957
      %v7998 = vpack.c.b16 %v7960, %v7958
      %v7999 = vpack.c.b16 %v7963, %v7961
      %v8000 = vpack.c.b16 %v7964, %v7962
      %v8001 = vpack.c.b16 %v7967, %v7965
      %v8002 = vpack.c.b16 %v7968, %v7966
      %v8003 = vpack.c.b16 %v7971, %v7969
      %v8004 = vpack.c.b16 %v7972, %v7970
      %8037 = vmatprep.subr.bf16.mxu0 %v7974
      %8038 = vmatpush1.bf16.msra.mxu0 %v7973
      %8039 = vmatprep.subr.bf16.mxu0 %v7976
      %8040 = vmatpush1.bf16.msra.mxu0 %v7975
      %8041 = vmatprep.subr.bf16.mxu0 %v7978
      %8042 = vmatpush1.bf16.msra.mxu0 %v7977
      %8043 = vmatprep.subr.bf16.mxu0 %v7980
      %8044 = vmatpush1.bf16.msra.mxu0 %v7979
      %8045 = vmatprep.subr.bf16.mxu0 %v7982
      %8046 = vmatpush1.bf16.msra.mxu0 %v7981
      %8047 = vmatprep.subr.bf16.mxu0 %v7984
      %8048 = vmatpush1.bf16.msra.mxu0 %v7983
      %8049 = vmatprep.subr.bf16.mxu0 %v7986
      %8050 = vmatpush1.bf16.msra.mxu0 %v7985
      %8051 = vmatprep.subr.bf16.mxu0 %v7988
      %8052 = vmatpush1.bf16.msra.mxu0 %v7987
      %8053 = vmatprep.subr.bf16.mxu0 %v7990
      %8054 = vmatpush1.bf16.msra.mxu0 %v7989
      %8055 = vmatprep.subr.bf16.mxu0 %v7992
      %8056 = vmatpush1.bf16.msra.mxu0 %v7991
      %8057 = vmatprep.subr.bf16.mxu0 %v7994
      %8058 = vmatpush1.bf16.msra.mxu0 %v7993
      %8059 = vmatprep.subr.bf16.mxu0 %v7996
      %8060 = vmatpush1.bf16.msra.mxu0 %v7995
      %8061 = vmatprep.subr.bf16.mxu0 %v7998
      %8062 = vmatpush1.bf16.msra.mxu0 %v7997
      %8063 = vmatprep.subr.bf16.mxu0 %v8000
      %8064 = vmatpush1.bf16.msra.mxu0 %v7999
      %8065 = vmatprep.subr.bf16.mxu0 %v8002
      %8066 = vmatpush1.bf16.msra.mxu0 %v8001
      %8067 = vmatprep.subr.bf16.mxu0 %v8004
      %8068 = vmatpush1.bf16.msra.mxu0 %v8003
      %8069 = vmatprep.mubr.bf16.mxu0 %v7873
      %8070 = vmatmul.mubr.bf16.gmra.mrb[0].mxu0 %v7870
      %v8071 = vpop.f32.mrb[0].mxu0
      %v8072 = vadd.f32 0.0, %v8071
      %v8073 = vpop.f32.mrb[0].mxu0
      %v8074 = vadd.f32 0.0, %v8073
      %v8075 = vpop.f32.mrb[0].mxu0
      %v8076 = vpop.f32.mrb[0].mxu0
      %8077 = vdwg.mxu0
      %v8110 = vunpack.c.l.b16 %v7805
      %v8111 = vunpack.c.h.b16 %v7805
      %v8112 = vunpack.c.l.b16 %v7806
      %v8113 = vunpack.c.h.b16 %v7806
      %v8114 = vunpack.c.l.b16 %v7807
      %v8115 = vunpack.c.h.b16 %v7807
      %v8116 = vunpack.c.l.b16 %v7808
      %v8117 = vunpack.c.h.b16 %v7808
      %v8118 = vunpack.c.l.b16 %v7809
      %v8119 = vunpack.c.h.b16 %v7809
      %v8120 = vunpack.c.l.b16 %v7810
      %v8121 = vunpack.c.h.b16 %v7810
      %v8122 = vunpack.c.l.b16 %v7811
      %v8123 = vunpack.c.h.b16 %v7811
      %v8124 = vunpack.c.l.b16 %v7812
      %v8125 = vunpack.c.h.b16 %v7812
      %v8126 = vunpack.c.l.b16 %v7813
      %v8127 = vunpack.c.h.b16 %v7813
      %v8128 = vunpack.c.l.b16 %v7814
      %v8129 = vunpack.c.h.b16 %v7814
      %v8130 = vunpack.c.l.b16 %v7815
      %v8131 = vunpack.c.h.b16 %v7815
      %v8132 = vunpack.c.l.b16 %v7816
      %v8133 = vunpack.c.h.b16 %v7816
      %v8134 = vunpack.c.l.b16 %v7817
      %v8135 = vunpack.c.h.b16 %v7817
      %v8136 = vunpack.c.l.b16 %v7818
      %v8137 = vunpack.c.h.b16 %v7818
      %v8138 = vunpack.c.l.b16 %v7819
      %v8139 = vunpack.c.h.b16 %v7819
      %v8140 = vunpack.c.l.b16 %v7820
      %v8141 = vunpack.c.h.b16 %v7820
      %v8142 = vunpack.c.l.b16 %v7821
      %v8143 = vunpack.c.h.b16 %v7821
      %v8144 = vunpack.c.l.b16 %v7822
      %v8145 = vunpack.c.h.b16 %v7822
      %v8146 = vunpack.c.l.b16 %v7823
      %v8147 = vunpack.c.h.b16 %v7823
      %v8148 = vunpack.c.l.b16 %v7824
      %v8149 = vunpack.c.h.b16 %v7824
      %v8150 = vunpack.c.l.b16 %v7825
      %v8151 = vunpack.c.h.b16 %v7825
      %v8152 = vunpack.c.l.b16 %v7826
      %v8153 = vunpack.c.h.b16 %v7826
      %v8154 = vunpack.c.l.b16 %v7827
      %v8155 = vunpack.c.h.b16 %v7827
      %v8156 = vunpack.c.l.b16 %v7828
      %v8157 = vunpack.c.h.b16 %v7828
      %v8158 = vunpack.c.l.b16 %v7829
      %v8159 = vunpack.c.h.b16 %v7829
      %v8160 = vunpack.c.l.b16 %v7830
      %v8161 = vunpack.c.h.b16 %v7830
      %v8162 = vunpack.c.l.b16 %v7831
      %v8163 = vunpack.c.h.b16 %v7831
      %v8164 = vunpack.c.l.b16 %v7832
      %v8165 = vunpack.c.h.b16 %v7832
      %v8166 = vunpack.c.l.b16 %v7833
      %v8167 = vunpack.c.h.b16 %v7833
      %v8168 = vunpack.c.l.b16 %v7834
      %v8169 = vunpack.c.h.b16 %v7834
      %v8170 = vunpack.c.l.b16 %v7835
      %v8171 = vunpack.c.h.b16 %v7835
      %v8172 = vunpack.c.l.b16 %v7836
      %v8173 = vunpack.c.h.b16 %v7836
      %v8174 = vpack.c.b16 %v8112, %v8110
      %v8175 = vpack.c.b16 %v8113, %v8111
      %v8176 = vpack.c.b16 %v8116, %v8114
      %v8177 = vpack.c.b16 %v8117, %v8115
      %v8178 = vpack.c.b16 %v8120, %v8118
      %v8179 = vpack.c.b16 %v8121, %v8119
      %v8180 = vpack.c.b16 %v8124, %v8122
      %v8181 = vpack.c.b16 %v8125, %v8123
      %v8182 = vpack.c.b16 %v8128, %v8126
      %v8183 = vpack.c.b16 %v8129, %v8127
      %v8184 = vpack.c.b16 %v8132, %v8130
      %v8185 = vpack.c.b16 %v8133, %v8131
      %v8186 = vpack.c.b16 %v8136, %v8134
      %v8187 = vpack.c.b16 %v8137, %v8135
      %v8188 = vpack.c.b16 %v8140, %v8138
      %v8189 = vpack.c.b16 %v8141, %v8139
      %v8190 = vpack.c.b16 %v8144, %v8142
      %v8191 = vpack.c.b16 %v8145, %v8143
      %v8192 = vpack.c.b16 %v8148, %v8146
      %v8193 = vpack.c.b16 %v8149, %v8147
      %v8194 = vpack.c.b16 %v8152, %v8150
      %v8195 = vpack.c.b16 %v8153, %v8151
      %v8196 = vpack.c.b16 %v8156, %v8154
      %v8197 = vpack.c.b16 %v8157, %v8155
      %v8198 = vpack.c.b16 %v8160, %v8158
      %v8199 = vpack.c.b16 %v8161, %v8159
      %v8200 = vpack.c.b16 %v8164, %v8162
      %v8201 = vpack.c.b16 %v8165, %v8163
      %v8202 = vpack.c.b16 %v8168, %v8166
      %v8203 = vpack.c.b16 %v8169, %v8167
      %v8204 = vpack.c.b16 %v8172, %v8170
      %v8205 = vpack.c.b16 %v8173, %v8171
      %8238 = vmatprep.subr.bf16.mxu0 %v8175
      %8239 = vmatpush1.bf16.msra.mxu0 %v8174
      %8240 = vmatprep.subr.bf16.mxu0 %v8177
      %8241 = vmatpush1.bf16.msra.mxu0 %v8176
      %8242 = vmatprep.subr.bf16.mxu0 %v8179
      %8243 = vmatpush1.bf16.msra.mxu0 %v8178
      %8244 = vmatprep.subr.bf16.mxu0 %v8181
      %8245 = vmatpush1.bf16.msra.mxu0 %v8180
      %8246 = vmatprep.subr.bf16.mxu0 %v8183
      %8247 = vmatpush1.bf16.msra.mxu0 %v8182
      %8248 = vmatprep.subr.bf16.mxu0 %v8185
      %8249 = vmatpush1.bf16.msra.mxu0 %v8184
      %8250 = vmatprep.subr.bf16.mxu0 %v8187
      %8251 = vmatpush1.bf16.msra.mxu0 %v8186
      %8252 = vmatprep.subr.bf16.mxu0 %v8189
      %8253 = vmatpush1.bf16.msra.mxu0 %v8188
      %8254 = vmatprep.subr.bf16.mxu0 %v8191
      %8255 = vmatpush1.bf16.msra.mxu0 %v8190
      %8256 = vmatprep.subr.bf16.mxu0 %v8193
      %8257 = vmatpush1.bf16.msra.mxu0 %v8192
      %8258 = vmatprep.subr.bf16.mxu0 %v8195
      %8259 = vmatpush1.bf16.msra.mxu0 %v8194
      %8260 = vmatprep.subr.bf16.mxu0 %v8197
      %8261 = vmatpush1.bf16.msra.mxu0 %v8196
      %8262 = vmatprep.subr.bf16.mxu0 %v8199
      %8263 = vmatpush1.bf16.msra.mxu0 %v8198
      %8264 = vmatprep.subr.bf16.mxu0 %v8201
      %8265 = vmatpush1.bf16.msra.mxu0 %v8200
      %8266 = vmatprep.subr.bf16.mxu0 %v8203
      %8267 = vmatpush1.bf16.msra.mxu0 %v8202
      %8268 = vmatprep.subr.bf16.mxu0 %v8205
      %8269 = vmatpush1.bf16.msra.mxu0 %v8204
      %8270 = vmatprep.mubr.bf16.mxu0 %v7804
      %8271 = vmatmul.mubr.bf16.gmra.mrb[0].mxu0 %v7803
      %v8272 = vpop.f32.mrb[0].mxu0
      %v8273 = vadd.f32 %v8072, %v8272
      %v8274 = vpop.f32.mrb[0].mxu0
      %v8275 = vadd.f32 %v8074, %v8274
      %v8276 = vpop.f32.mrb[0].mxu0
      %v8277 = vpop.f32.mrb[0].mxu0
      %8278 = vdwg.mxu0
      %v8279 = vld [vmem:[%s11 + $0x200] sm:$0xff]
      %v8280 = vld [vmem:[%s11 + $0x208] sm:$0xff]
      %v8281 = vld [vmem:[%s11 + $0x210] sm:$0xff]
      %v8282 = vld [vmem:[%s11 + $0x218] sm:$0xff]
      %v8283 = vld [vmem:[%s11 + $0x220] sm:$0xff]
      %v8284 = vld [vmem:[%s11 + $0x228] sm:$0xff]
      %v8285 = vld [vmem:[%s11 + $0x230] sm:$0xff]
      %v8286 = vld [vmem:[%s11 + $0x238] sm:$0xff]
      %v8287 = vld [vmem:[%s11 + $0x240] sm:$0xff]
      %v8288 = vld [vmem:[%s11 + $0x248] sm:$0xff]
      %v8289 = vld [vmem:[%s11 + $0x250] sm:$0xff]
      %v8290 = vld [vmem:[%s11 + $0x258] sm:$0xff]
      %v8291 = vld [vmem:[%s11 + $0x260] sm:$0xff]
      %v8292 = vld [vmem:[%s11 + $0x268] sm:$0xff]
      %v8293 = vld [vmem:[%s11 + $0x270] sm:$0xff]
      %v8294 = vld [vmem:[%s11 + $0x278] sm:$0xff]
      %v8295 = vld [vmem:[%s11 + $0x280] sm:$0xff]
      %v8296 = vld [vmem:[%s11 + $0x288] sm:$0xff]
      %v8297 = vld [vmem:[%s11 + $0x290] sm:$0xff]
      %v8298 = vld [vmem:[%s11 + $0x298] sm:$0xff]
      %v8299 = vld [vmem:[%s11 + $0x2a0] sm:$0xff]
      %v8300 = vld [vmem:[%s11 + $0x2a8] sm:$0xff]
      %v8301 = vld [vmem:[%s11 + $0x2b0] sm:$0xff]
      %v8302 = vld [vmem:[%s11 + $0x2b8] sm:$0xff]
      %v8303 = vld [vmem:[%s11 + $0x2c0] sm:$0xff]
      %v8304 = vld [vmem:[%s11 + $0x2c8] sm:$0xff]
      %v8305 = vld [vmem:[%s11 + $0x2d0] sm:$0xff]
      %v8306 = vld [vmem:[%s11 + $0x2d8] sm:$0xff]
      %v8307 = vld [vmem:[%s11 + $0x2e0] sm:$0xff]
      %v8308 = vld [vmem:[%s11 + $0x2e8] sm:$0xff]
      %v8309 = vld [vmem:[%s11 + $0x2f0] sm:$0xff]
      %v8310 = vld [vmem:[%s11 + $0x2f8] sm:$0xff]
      %v8313 = vrot.slane %v7803, 1
      %v8314 = vrot.slane %v7804, 1
      %v8349 = vunpack.c.l.b16 %v8279
      %v8350 = vunpack.c.h.b16 %v8279
      %v8351 = vunpack.c.l.b16 %v8280
      %v8352 = vunpack.c.h.b16 %v8280
      %v8353 = vunpack.c.l.b16 %v8281
      %v8354 = vunpack.c.h.b16 %v8281
      %v8355 = vunpack.c.l.b16 %v8282
      %v8356 = vunpack.c.h.b16 %v8282
      %v8357 = vunpack.c.l.b16 %v8283
      %v8358 = vunpack.c.h.b16 %v8283
      %v8359 = vunpack.c.l.b16 %v8284
      %v8360 = vunpack.c.h.b16 %v8284
      %v8361 = vunpack.c.l.b16 %v8285
      %v8362 = vunpack.c.h.b16 %v8285
      %v8363 = vunpack.c.l.b16 %v8286
      %v8364 = vunpack.c.h.b16 %v8286
      %v8365 = vunpack.c.l.b16 %v8287
      %v8366 = vunpack.c.h.b16 %v8287
      %v8367 = vunpack.c.l.b16 %v8288
      %v8368 = vunpack.c.h.b16 %v8288
      %v8369 = vunpack.c.l.b16 %v8289
      %v8370 = vunpack.c.h.b16 %v8289
      %v8371 = vunpack.c.l.b16 %v8290
      %v8372 = vunpack.c.h.b16 %v8290
      %v8373 = vunpack.c.l.b16 %v8291
      %v8374 = vunpack.c.h.b16 %v8291
      %v8375 = vunpack.c.l.b16 %v8292
      %v8376 = vunpack.c.h.b16 %v8292
      %v8377 = vunpack.c.l.b16 %v8293
      %v8378 = vunpack.c.h.b16 %v8293
      %v8379 = vunpack.c.l.b16 %v8294
      %v8380 = vunpack.c.h.b16 %v8294
      %v8381 = vunpack.c.l.b16 %v8295
      %v8382 = vunpack.c.h.b16 %v8295
      %v8383 = vunpack.c.l.b16 %v8296
      %v8384 = vunpack.c.h.b16 %v8296
      %v8385 = vunpack.c.l.b16 %v8297
      %v8386 = vunpack.c.h.b16 %v8297
      %v8387 = vunpack.c.l.b16 %v8298
      %v8388 = vunpack.c.h.b16 %v8298
      %v8389 = vunpack.c.l.b16 %v8299
      %v8390 = vunpack.c.h.b16 %v8299
      %v8391 = vunpack.c.l.b16 %v8300
      %v8392 = vunpack.c.h.b16 %v8300
      %v8393 = vunpack.c.l.b16 %v8301
      %v8394 = vunpack.c.h.b16 %v8301
      %v8395 = vunpack.c.l.b16 %v8302
      %v8396 = vunpack.c.h.b16 %v8302
      %v8397 = vunpack.c.l.b16 %v8303
      %v8398 = vunpack.c.h.b16 %v8303
      %v8399 = vunpack.c.l.b16 %v8304
      %v8400 = vunpack.c.h.b16 %v8304
      %v8401 = vunpack.c.l.b16 %v8305
      %v8402 = vunpack.c.h.b16 %v8305
      %v8403 = vunpack.c.l.b16 %v8306
      %v8404 = vunpack.c.h.b16 %v8306
      %v8405 = vunpack.c.l.b16 %v8307
      %v8406 = vunpack.c.h.b16 %v8307
      %v8407 = vunpack.c.l.b16 %v8308
      %v8408 = vunpack.c.h.b16 %v8308
      %v8409 = vunpack.c.l.b16 %v8309
      %v8410 = vunpack.c.h.b16 %v8309
      %v8411 = vunpack.c.l.b16 %v8310
      %v8412 = vunpack.c.h.b16 %v8310
      %v8413 = vpack.c.b16 %v8351, %v8349
      %v8414 = vpack.c.b16 %v8352, %v8350
      %v8415 = vpack.c.b16 %v8355, %v8353
      %v8416 = vpack.c.b16 %v8356, %v8354
      %v8417 = vpack.c.b16 %v8359, %v8357
      %v8418 = vpack.c.b16 %v8360, %v8358
      %v8419 = vpack.c.b16 %v8363, %v8361
      %v8420 = vpack.c.b16 %v8364, %v8362
      %v8421 = vpack.c.b16 %v8367, %v8365
      %v8422 = vpack.c.b16 %v8368, %v8366
      %v8423 = vpack.c.b16 %v8371, %v8369
      %v8424 = vpack.c.b16 %v8372, %v8370
      %v8425 = vpack.c.b16 %v8375, %v8373
      %v8426 = vpack.c.b16 %v8376, %v8374
      %v8427 = vpack.c.b16 %v8379, %v8377
      %v8428 = vpack.c.b16 %v8380, %v8378
      %v8429 = vpack.c.b16 %v8383, %v8381
      %v8430 = vpack.c.b16 %v8384, %v8382
      %v8431 = vpack.c.b16 %v8387, %v8385
      %v8432 = vpack.c.b16 %v8388, %v8386
      %v8433 = vpack.c.b16 %v8391, %v8389
      %v8434 = vpack.c.b16 %v8392, %v8390
      %v8435 = vpack.c.b16 %v8395, %v8393
      %v8436 = vpack.c.b16 %v8396, %v8394
      %v8437 = vpack.c.b16 %v8399, %v8397
      %v8438 = vpack.c.b16 %v8400, %v8398
      %v8439 = vpack.c.b16 %v8403, %v8401
      %v8440 = vpack.c.b16 %v8404, %v8402
      %v8441 = vpack.c.b16 %v8407, %v8405
      %v8442 = vpack.c.b16 %v8408, %v8406
      %v8443 = vpack.c.b16 %v8411, %v8409
      %v8444 = vpack.c.b16 %v8412, %v8410
      %8477 = vmatprep.subr.bf16.mxu0 %v8414
      %8478 = vmatpush1.bf16.msra.mxu0 %v8413
      %8479 = vmatprep.subr.bf16.mxu0 %v8416
      %8480 = vmatpush1.bf16.msra.mxu0 %v8415
      %8481 = vmatprep.subr.bf16.mxu0 %v8418
      %8482 = vmatpush1.bf16.msra.mxu0 %v8417
      %8483 = vmatprep.subr.bf16.mxu0 %v8420
      %8484 = vmatpush1.bf16.msra.mxu0 %v8419
      %8485 = vmatprep.subr.bf16.mxu0 %v8422
      %8486 = vmatpush1.bf16.msra.mxu0 %v8421
      %8487 = vmatprep.subr.bf16.mxu0 %v8424
      %8488 = vmatpush1.bf16.msra.mxu0 %v8423
      %8489 = vmatprep.subr.bf16.mxu0 %v8426
      %8490 = vmatpush1.bf16.msra.mxu0 %v8425
      %8491 = vmatprep.subr.bf16.mxu0 %v8428
      %8492 = vmatpush1.bf16.msra.mxu0 %v8427
      %8493 = vmatprep.subr.bf16.mxu0 %v8430
      %8494 = vmatpush1.bf16.msra.mxu0 %v8429
      %8495 = vmatprep.subr.bf16.mxu0 %v8432
      %8496 = vmatpush1.bf16.msra.mxu0 %v8431
      %8497 = vmatprep.subr.bf16.mxu0 %v8434
      %8498 = vmatpush1.bf16.msra.mxu0 %v8433
      %8499 = vmatprep.subr.bf16.mxu0 %v8436
      %8500 = vmatpush1.bf16.msra.mxu0 %v8435
      %8501 = vmatprep.subr.bf16.mxu0 %v8438
      %8502 = vmatpush1.bf16.msra.mxu0 %v8437
      %8503 = vmatprep.subr.bf16.mxu0 %v8440
      %8504 = vmatpush1.bf16.msra.mxu0 %v8439
      %8505 = vmatprep.subr.bf16.mxu0 %v8442
      %8506 = vmatpush1.bf16.msra.mxu0 %v8441
      %8507 = vmatprep.subr.bf16.mxu0 %v8444
      %8508 = vmatpush1.bf16.msra.mxu0 %v8443
      %8509 = vmatprep.mubr.bf16.mxu0 %v8314
      %8510 = vmatmul.mubr.bf16.gmra.mrb[0].mxu0 %v8313
      %v8511 = vpop.f32.mrb[0].mxu0
      %v8512 = vadd.f32 0.0, %v8511
      %v8513 = vpop.f32.mrb[0].mxu0
      %v8514 = vadd.f32 0.0, %v8513
      %v8515 = vpop.f32.mrb[0].mxu0
      %v8516 = vpop.f32.mrb[0].mxu0
      %8517 = vdwg.mxu0
      %v8518 = vadd.f32 %v8273, %v8512
      %v8519 = vadd.f32 %v8275, %v8514
      %v8520 = vld [vmem:[%s11 + $0x300] sm:$0xff]
      %v8521 = vld [vmem:[%s11 + $0x308] sm:$0xff]
      %v8522 = vld [vmem:[%s11 + $0x310] sm:$0xff]
      %v8523 = vld [vmem:[%s11 + $0x318] sm:$0xff]
      %v8524 = vld [vmem:[%s11 + $0x320] sm:$0xff]
      %v8525 = vld [vmem:[%s11 + $0x328] sm:$0xff]
      %v8526 = vld [vmem:[%s11 + $0x330] sm:$0xff]
      %v8527 = vld [vmem:[%s11 + $0x338] sm:$0xff]
      %v8528 = vld [vmem:[%s11 + $0x340] sm:$0xff]
      %v8529 = vld [vmem:[%s11 + $0x348] sm:$0xff]
      %v8530 = vld [vmem:[%s11 + $0x350] sm:$0xff]
      %v8531 = vld [vmem:[%s11 + $0x358] sm:$0xff]
      %v8532 = vld [vmem:[%s11 + $0x360] sm:$0xff]
      %v8533 = vld [vmem:[%s11 + $0x368] sm:$0xff]
      %v8534 = vld [vmem:[%s11 + $0x370] sm:$0xff]
      %v8535 = vld [vmem:[%s11 + $0x378] sm:$0xff]
      %v8536 = vld [vmem:[%s11 + $0x380] sm:$0xff]
      %v8537 = vld [vmem:[%s11 + $0x388] sm:$0xff]
      %v8538 = vld [vmem:[%s11 + $0x390] sm:$0xff]
      %v8539 = vld [vmem:[%s11 + $0x398] sm:$0xff]
      %v8540 = vld [vmem:[%s11 + $0x3a0] sm:$0xff]
      %v8541 = vld [vmem:[%s11 + $0x3a8] sm:$0xff]
      %v8542 = vld [vmem:[%s11 + $0x3b0] sm:$0xff]
      %v8543 = vld [vmem:[%s11 + $0x3b8] sm:$0xff]
      %v8544 = vld [vmem:[%s11 + $0x3c0] sm:$0xff]
      %v8545 = vld [vmem:[%s11 + $0x3c8] sm:$0xff]
      %v8546 = vld [vmem:[%s11 + $0x3d0] sm:$0xff]
      %v8547 = vld [vmem:[%s11 + $0x3d8] sm:$0xff]
      %v8548 = vld [vmem:[%s11 + $0x3e0] sm:$0xff]
      %v8549 = vld [vmem:[%s11 + $0x3e8] sm:$0xff]
      %v8550 = vld [vmem:[%s11 + $0x3f0] sm:$0xff]
      %v8551 = vld [vmem:[%s11 + $0x3f8] sm:$0xff]
      %v8552 = vrot.slane %v7870, 1
      %v8553 = vrot.slane %v7873, 1
      %v8588 = vunpack.c.l.b16 %v8520
      %v8589 = vunpack.c.h.b16 %v8520
      %v8590 = vunpack.c.l.b16 %v8521
      %v8591 = vunpack.c.h.b16 %v8521
      %v8592 = vunpack.c.l.b16 %v8522
      %v8593 = vunpack.c.h.b16 %v8522
      %v8594 = vunpack.c.l.b16 %v8523
      %v8595 = vunpack.c.h.b16 %v8523
      %v8596 = vunpack.c.l.b16 %v8524
      %v8597 = vunpack.c.h.b16 %v8524
      %v8598 = vunpack.c.l.b16 %v8525
      %v8599 = vunpack.c.h.b16 %v8525
      %v8600 = vunpack.c.l.b16 %v8526
      %v8601 = vunpack.c.h.b16 %v8526
      %v8602 = vunpack.c.l.b16 %v8527
      %v8603 = vunpack.c.h.b16 %v8527
      %v8604 = vunpack.c.l.b16 %v8528
      %v8605 = vunpack.c.h.b16 %v8528
      %v8606 = vunpack.c.l.b16 %v8529
      %v8607 = vunpack.c.h.b16 %v8529
      %v8608 = vunpack.c.l.b16 %v8530
      %v8609 = vunpack.c.h.b16 %v8530
      %v8610 = vunpack.c.l.b16 %v8531
      %v8611 = vunpack.c.h.b16 %v8531
      %v8612 = vunpack.c.l.b16 %v8532
      %v8613 = vunpack.c.h.b16 %v8532
      %v8614 = vunpack.c.l.b16 %v8533
      %v8615 = vunpack.c.h.b16 %v8533
      %v8616 = vunpack.c.l.b16 %v8534
      %v8617 = vunpack.c.h.b16 %v8534
      %v8618 = vunpack.c.l.b16 %v8535
      %v8619 = vunpack.c.h.b16 %v8535
      %v8620 = vunpack.c.l.b16 %v8536
      %v8621 = vunpack.c.h.b16 %v8536
      %v8622 = vunpack.c.l.b16 %v8537
      %v8623 = vunpack.c.h.b16 %v8537
      %v8624 = vunpack.c.l.b16 %v8538
      %v8625 = vunpack.c.h.b16 %v8538
      %v8626 = vunpack.c.l.b16 %v8539
      %v8627 = vunpack.c.h.b16 %v8539
      %v8628 = vunpack.c.l.b16 %v8540
      %v8629 = vunpack.c.h.b16 %v8540
      %v8630 = vunpack.c.l.b16 %v8541
      %v8631 = vunpack.c.h.b16 %v8541
      %v8632 = vunpack.c.l.b16 %v8542
      %v8633 = vunpack.c.h.b16 %v8542
      %v8634 = vunpack.c.l.b16 %v8543
      %v8635 = vunpack.c.h.b16 %v8543
      %v8636 = vunpack.c.l.b16 %v8544
      %v8637 = vunpack.c.h.b16 %v8544
      %v8638 = vunpack.c.l.b16 %v8545
      %v8639 = vunpack.c.h.b16 %v8545
      %v8640 = vunpack.c.l.b16 %v8546
      %v8641 = vunpack.c.h.b16 %v8546
      %v8642 = vunpack.c.l.b16 %v8547
      %v8643 = vunpack.c.h.b16 %v8547
      %v8644 = vunpack.c.l.b16 %v8548
      %v8645 = vunpack.c.h.b16 %v8548
      %v8646 = vunpack.c.l.b16 %v8549
      %v8647 = vunpack.c.h.b16 %v8549
      %v8648 = vunpack.c.l.b16 %v8550
      %v8649 = vunpack.c.h.b16 %v8550
      %v8650 = vunpack.c.l.b16 %v8551
      %v8651 = vunpack.c.h.b16 %v8551
      %v8652 = vpack.c.b16 %v8590, %v8588
      %v8653 = vpack.c.b16 %v8591, %v8589
      %v8654 = vpack.c.b16 %v8594, %v8592
      %v8655 = vpack.c.b16 %v8595, %v8593
      %v8656 = vpack.c.b16 %v8598, %v8596
      %v8657 = vpack.c.b16 %v8599, %v8597
      %v8658 = vpack.c.b16 %v8602, %v8600
      %v8659 = vpack.c.b16 %v8603, %v8601
      %v8660 = vpack.c.b16 %v8606, %v8604
      %v8661 = vpack.c.b16 %v8607, %v8605
      %v8662 = vpack.c.b16 %v8610, %v8608
      %v8663 = vpack.c.b16 %v8611, %v8609
      %v8664 = vpack.c.b16 %v8614, %v8612
      %v8665 = vpack.c.b16 %v8615, %v8613
      %v8666 = vpack.c.b16 %v8618, %v8616
      %v8667 = vpack.c.b16 %v8619, %v8617
      %v8668 = vpack.c.b16 %v8622, %v8620
      %v8669 = vpack.c.b16 %v8623, %v8621
      %v8670 = vpack.c.b16 %v8626, %v8624
      %v8671 = vpack.c.b16 %v8627, %v8625
      %v8672 = vpack.c.b16 %v8630, %v8628
      %v8673 = vpack.c.b16 %v8631, %v8629
      %v8674 = vpack.c.b16 %v8634, %v8632
      %v8675 = vpack.c.b16 %v8635, %v8633
      %v8676 = vpack.c.b16 %v8638, %v8636
      %v8677 = vpack.c.b16 %v8639, %v8637
      %v8678 = vpack.c.b16 %v8642, %v8640
      %v8679 = vpack.c.b16 %v8643, %v8641
      %v8680 = vpack.c.b16 %v8646, %v8644
      %v8681 = vpack.c.b16 %v8647, %v8645
      %v8682 = vpack.c.b16 %v8650, %v8648
      %v8683 = vpack.c.b16 %v8651, %v8649
      %8716 = vmatprep.subr.bf16.mxu0 %v8653
      %8717 = vmatpush1.bf16.msra.mxu0 %v8652
      %8718 = vmatprep.subr.bf16.mxu0 %v8655
      %8719 = vmatpush1.bf16.msra.mxu0 %v8654
      %8720 = vmatprep.subr.bf16.mxu0 %v8657
      %8721 = vmatpush1.bf16.msra.mxu0 %v8656
      %8722 = vmatprep.subr.bf16.mxu0 %v8659
      %8723 = vmatpush1.bf16.msra.mxu0 %v8658
      %8724 = vmatprep.subr.bf16.mxu0 %v8661
      %8725 = vmatpush1.bf16.msra.mxu0 %v8660
      %8726 = vmatprep.subr.bf16.mxu0 %v8663
      %8727 = vmatpush1.bf16.msra.mxu0 %v8662
      %8728 = vmatprep.subr.bf16.mxu0 %v8665
      %8729 = vmatpush1.bf16.msra.mxu0 %v8664
      %8730 = vmatprep.subr.bf16.mxu0 %v8667
      %8731 = vmatpush1.bf16.msra.mxu0 %v8666
      %8732 = vmatprep.subr.bf16.mxu0 %v8669
      %8733 = vmatpush1.bf16.msra.mxu0 %v8668
      %8734 = vmatprep.subr.bf16.mxu0 %v8671
      %8735 = vmatpush1.bf16.msra.mxu0 %v8670
      %8736 = vmatprep.subr.bf16.mxu0 %v8673
      %8737 = vmatpush1.bf16.msra.mxu0 %v8672
      %8738 = vmatprep.subr.bf16.mxu0 %v8675
      %8739 = vmatpush1.bf16.msra.mxu0 %v8674
      %8740 = vmatprep.subr.bf16.mxu0 %v8677
      %8741 = vmatpush1.bf16.msra.mxu0 %v8676
      %8742 = vmatprep.subr.bf16.mxu0 %v8679
      %8743 = vmatpush1.bf16.msra.mxu0 %v8678
      %8744 = vmatprep.subr.bf16.mxu0 %v8681
      %8745 = vmatpush1.bf16.msra.mxu0 %v8680
      %8746 = vmatprep.subr.bf16.mxu0 %v8683
      %8747 = vmatpush1.bf16.msra.mxu0 %v8682
      %8748 = vmatprep.mubr.bf16.mxu0 %v8553
      %8749 = vmatmul.mubr.bf16.gmra.mrb[0].mxu0 %v8552
      %v8750 = vpop.f32.mrb[0].mxu0
      %v8751 = vadd.f32 0.0, %v8750
      %v8752 = vpop.f32.mrb[0].mxu0
      %v8753 = vadd.f32 0.0, %v8752
      %v8754 = vpop.f32.mrb[0].mxu0
      %v8755 = vpop.f32.mrb[0].mxu0
      %8756 = vdwg.mxu0
      %v8757 = vadd.f32 %v8518, %v8751
      %v8758 = vadd.f32 %v8519, %v8753
      %v8759 = vld [vmem:[%s12] sm:$0x3]
      %v8761 = vlaneseq
      %v8762 = vshrl.u32 %v8761, 7
      %v8763 = vsub.s32 0, %v8762
      %v8764 = vrot.slane %v8759, %v8763
      %v8765 = vlaneseq
      %v8766 = vshrl.u32 %v8765, 7
      %v8767 = vsub.s32 1, %v8766
      %v8768 = vrot.slane %v8759, %v8767
      %v8771 = vadd.f32 %v8757, %v8764
      %v8772 = vadd.f32 %v8758, %v8768
      %v8773 = vmax.f32 %v8771, 0.0
      %v8774 = vmax.f32 %v8772, 0.0
      %v8775 = vpack.c.bf16 %v8773, %v8773
      %v8776 = vpack.c.bf16 %v8774, %v8774
      %v8777 = vld [vmem:[%s13] sm:$0xf]
      %v8778 = vld [vmem:[%s13 + $0x4] sm:$0xf]
      %v8779 = vld [vmem:[%s13 + $0x8] sm:$0xf]
      %v8780 = vld [vmem:[%s13 + $0xc] sm:$0xf]
      %v8781 = vld [vmem:[%s13 + $0x10] sm:$0xf]
      %v8782 = vld [vmem:[%s13 + $0x14] sm:$0xf]
      %v8783 = vld [vmem:[%s13 + $0x18] sm:$0xf]
      %v8784 = vld [vmem:[%s13 + $0x1c] sm:$0xf]
      %v8785 = vld [vmem:[%s13 + $0x20] sm:$0xf]
      %v8786 = vld [vmem:[%s13 + $0x24] sm:$0xf]
      %v8787 = vld [vmem:[%s13 + $0x28] sm:$0xf]
      %v8788 = vld [vmem:[%s13 + $0x2c] sm:$0xf]
      %v8789 = vld [vmem:[%s13 + $0x30] sm:$0xf]
      %v8790 = vld [vmem:[%s13 + $0x34] sm:$0xf]
      %v8791 = vld [vmem:[%s13 + $0x38] sm:$0xf]
      %v8792 = vld [vmem:[%s13 + $0x3c] sm:$0xf]
      %v8793 = vld [vmem:[%s13 + $0x40] sm:$0xf]
      %v8794 = vld [vmem:[%s13 + $0x44] sm:$0xf]
      %v8795 = vld [vmem:[%s13 + $0x48] sm:$0xf]
      %v8796 = vld [vmem:[%s13 + $0x4c] sm:$0xf]
      %v8797 = vld [vmem:[%s13 + $0x50] sm:$0xf]
      %v8798 = vld [vmem:[%s13 + $0x54] sm:$0xf]
      %v8799 = vld [vmem:[%s13 + $0x58] sm:$0xf]
      %v8800 = vld [vmem:[%s13 + $0x5c] sm:$0xf]
      %v8801 = vld [vmem:[%s13 + $0x60] sm:$0xf]
      %v8802 = vld [vmem:[%s13 + $0x64] sm:$0xf]
      %v8803 = vld [vmem:[%s13 + $0x68] sm:$0xf]
      %v8804 = vld [vmem:[%s13 + $0x6c] sm:$0xf]
      %v8805 = vld [vmem:[%s13 + $0x70] sm:$0xf]
      %v8806 = vld [vmem:[%s13 + $0x74] sm:$0xf]
      %v8807 = vld [vmem:[%s13 + $0x78] sm:$0xf]
      %v8808 = vld [vmem:[%s13 + $0x7c] sm:$0xf]
      %v8809 = vld [vmem:[%s14] sm:$0x1]
      %v8842 = vunpack.c.l.b16 %v8777
      %v8843 = vunpack.c.l.b16 %v8778
      %v8844 = vunpack.c.l.b16 %v8779
      %v8845 = vunpack.c.l.b16 %v8780
      %v8846 = vunpack.c.l.b16 %v8781
      %v8847 = vunpack.c.l.b16 %v8782
      %v8848 = vunpack.c.l.b16 %v8783
      %v8849 = vunpack.c.l.b16 %v8784
      %v8850 = vunpack.c.l.b16 %v8785
      %v8851 = vunpack.c.l.b16 %v8786
      %v8852 = vunpack.c.l.b16 %v8787
      %v8853 = vunpack.c.l.b16 %v8788
      %v8854 = vunpack.c.l.b16 %v8789
      %v8855 = vunpack.c.l.b16 %v8790
      %v8856 = vunpack.c.l.b16 %v8791
      %v8857 = vunpack.c.l.b16 %v8792
      %v8858 = vunpack.c.l.b16 %v8793
      %v8859 = vunpack.c.l.b16 %v8794
      %v8860 = vunpack.c.l.b16 %v8795
      %v8861 = vunpack.c.l.b16 %v8796
      %v8862 = vunpack.c.l.b16 %v8797
      %v8863 = vunpack.c.l.b16 %v8798
      %v8864 = vunpack.c.l.b16 %v8799
      %v8865 = vunpack.c.l.b16 %v8800
      %v8866 = vunpack.c.l.b16 %v8801
      %v8867 = vunpack.c.l.b16 %v8802
      %v8868 = vunpack.c.l.b16 %v8803
      %v8869 = vunpack.c.l.b16 %v8804
      %v8870 = vunpack.c.l.b16 %v8805
      %v8871 = vunpack.c.l.b16 %v8806
      %v8872 = vunpack.c.l.b16 %v8807
      %v8873 = vunpack.c.l.b16 %v8808
      %v8874 = vpack.c.b16 %v8843, %v8842
      %v8875 = vpack.c.b16 %v8845, %v8844
      %v8876 = vpack.c.b16 %v8847, %v8846
      %v8877 = vpack.c.b16 %v8849, %v8848
      %v8878 = vpack.c.b16 %v8851, %v8850
      %v8879 = vpack.c.b16 %v8853, %v8852
      %v8880 = vpack.c.b16 %v8855, %v8854
      %v8881 = vpack.c.b16 %v8857, %v8856
      %v8882 = vpack.c.b16 %v8859, %v8858
      %v8883 = vpack.c.b16 %v8861, %v8860
      %v8884 = vpack.c.b16 %v8863, %v8862
      %v8885 = vpack.c.b16 %v8865, %v8864
      %v8886 = vpack.c.b16 %v8867, %v8866
      %v8887 = vpack.c.b16 %v8869, %v8868
      %v8888 = vpack.c.b16 %v8871, %v8870
      %v8889 = vpack.c.b16 %v8873, %v8872
      %8906 = vmatprep.subr.bf16.mxu0 0
      %8907 = vmatpush1.bf16.msra.mxu0 %v8874
      %8908 = vmatprep.subr.bf16.mxu0 0
      %8909 = vmatpush1.bf16.msra.mxu0 %v8875
      %8910 = vmatprep.subr.bf16.mxu0 0
      %8911 = vmatpush1.bf16.msra.mxu0 %v8876
      %8912 = vmatprep.subr.bf16.mxu0 0
      %8913 = vmatpush1.bf16.msra.mxu0 %v8877
      %8914 = vmatprep.subr.bf16.mxu0 0
      %8915 = vmatpush1.bf16.msra.mxu0 %v8878
      %8916 = vmatprep.subr.bf16.mxu0 0
      %8917 = vmatpush1.bf16.msra.mxu0 %v8879
      %8918 = vmatprep.subr.bf16.mxu0 0
      %8919 = vmatpush1.bf16.msra.mxu0 %v8880
      %8920 = vmatprep.subr.bf16.mxu0 0
      %8921 = vmatpush1.bf16.msra.mxu0 %v8881
      %8922 = vmatprep.subr.bf16.mxu0 0
      %8923 = vmatpush1.bf16.msra.mxu0 %v8882
      %8924 = vmatprep.subr.bf16.mxu0 0
      %8925 = vmatpush1.bf16.msra.mxu0 %v8883
      %8926 = vmatprep.subr.bf16.mxu0 0
      %8927 = vmatpush1.bf16.msra.mxu0 %v8884
      %8928 = vmatprep.subr.bf16.mxu0 0
      %8929 = vmatpush1.bf16.msra.mxu0 %v8885
      %8930 = vmatprep.subr.bf16.mxu0 0
      %8931 = vmatpush1.bf16.msra.mxu0 %v8886
      %8932 = vmatprep.subr.bf16.mxu0 0
      %8933 = vmatpush1.bf16.msra.mxu0 %v8887
      %8934 = vmatprep.subr.bf16.mxu0 0
      %8935 = vmatpush1.bf16.msra.mxu0 %v8888
      %8936 = vmatprep.subr.bf16.mxu0 0
      %8937 = vmatpush1.bf16.msra.mxu0 %v8889
      %8938 = vmatprep.mubr.bf16.mxu0 %v8776
      %8939 = vmatmul.mubr.bf16.gmra.mrb[0].mxu0 %v8775
      %v8940 = vpop.f32.mrb[0].mxu0
      %v8941 = vadd.f32 %v8809, %v8940
      %v8942 = vpop.f32.mrb[0].mxu0
      %v8943 = vpop.f32.mrb[0].mxu0
      %v8944 = vpop.f32.mrb[0].mxu0
      %8945 = vdwg.mxu0
      %v8946 = vlaneseq
      %v8947 = vshrl.u32 %v8946, 7
      %v8948 = vsub.s32 0, %v8947
      %v8949 = vrot.slane %v8941, %v8948
      %8950 = vst [vmem:[%s492] sm:$0xff] %v8949
      %p8951 = scmp.lt.s32.totalorder %s26, 1
      %s8952 = scalar_select %p8951, %s26, 1
      %s8953 = smul.addr %s8952, 8
      %s8954 = scalar_lea.vmem %s15, %s8953
      // Predicated region
      $region81: #{repvgg_forward.1} parent=79 // pred_check
        %p8955 = pneg %p364
      $region82: #{repvgg_forward.1} parent=79 // pred_check_branch
        %8957 = sbr.rel (%p8955) target = $region84
      $region83: #{repvgg_forward.1} parent=79 // pred_region
        _
      $region84: #{repvgg_forward.1} parent=79 // pred_fallthru
        _
    $region80: #{repvgg_forward.1} parent=5 // pred_fallthru
      _
    %p8958 = scmp.le.s32.totalorder 2, %s21
    // Predicated region
    $region85: #{repvgg_forward.1} parent=5 // pred_check
      %p8959 = pneg %p8958
    $region86: #{repvgg_forward.1} parent=5 // pred_check_branch
      %8961 = sbr.rel (%p8959) target = $region88
    $region87: #{repvgg_forward.1} parent=5 // pred_region
      %s8962 = ssub.s32 %s21, 2
      // Predicated region
      $region89: #{repvgg_forward.1} parent=87 // pred_check
        %p8963 = pneg %p370
      $region90: #{repvgg_forward.1} parent=87 // pred_check_branch
        %8965 = sbr.rel (%p8963) target = $region92
      $region91: #{repvgg_forward.1} parent=87 // pred_region
        %p8966 = scmp.lt.s32.totalorder %s27, 1
        %s8967 = scalar_select %p8966, %s27, 1
        %s8968 = smul.addr %s8967, 8
        %s8969 = scalar_lea.vmem %s15, %s8968
      $region92: #{repvgg_forward.1} parent=87 // pred_fallthru
        _
    $region88: #{repvgg_forward.1} parent=5 // pred_fallthru
      _
  $region6: #{repvgg_forward.1} parent=0 // loop_footer
    %s25 = sadd.s32 1, %s21
  $region7: #{repvgg_forward.1} parent=0 // loop_footer_branch
    %20 = sbr.rel target = $region3
  $region8: #{repvgg_forward.1} parent=0 // loop_exit
    _

</llo_original>
